<compile_context>
chip_gen: v7x
topology: tpu7x:2x2x1
jax: 0.10.0
libtpu: 0.0.40
codegen_flags: <defaults>
</compile_context>

<pallas_src>
import numpy as np
import jax
import jax.numpy as jnp
from jax.experimental import pallas as pl
from jax.experimental.pallas import tpu as pltpu


def _make_kernel(metas):
    """Kernel computing all three hfft2 transforms in one gridless invocation."""
    n_t = len(metas)

    def kernel(*refs):
        in_refs = refs[:4 * n_t]
        out_refs = refs[4 * n_t:]
        for t in range(n_t):
            xs_ref, f_ref, ar_ref, ai_ref = in_refs[4 * t: 4 * t + 4]
            o_ref = out_refs[t]
            B = metas[t]['B']
            m = metas[t]['m']
            n0p = metas[t]['n0p']

            # Stage 1: one lane-dense MXU matmul.
            #   M = Fcat2 @ [x2r; x2i]  -> rows [0:n0p] = Re(F@X), rows [n0p:] = Im(F@X)
            M = jnp.dot(f_ref[...], xs_ref[...],
                        preferred_element_type=jnp.float32)     # (2*n0p, B*m)
            Mr = M[:n0p, :]                                      # tile-aligned sublane slice
            Mi = M[n0p:, :]
            Ar = ar_ref[...]                                     # scale *  HT.real  (m, n1)
            Ai = ai_ref[...]                                     # scale * -HT.imag  (m, n1)

            # Stage 2: per-batch small dots against the single resident HT block
            # (replaces the dense kron(eye(B), HT) matmul).
            parts = []
            for b in range(B):
                mr_b = Mr[:, b * m:(b + 1) * m]
                mi_b = Mi[:, b * m:(b + 1) * m]
                parts.append(
                    jnp.dot(mr_b, Ar, preferred_element_type=jnp.float32)
                    + jnp.dot(mi_b, Ai, preferred_element_type=jnp.float32))
            # Single lane-dense store (n0p, B*n1).
            o_ref[...] = jnp.concatenate(parts, axis=1).astype(o_ref.dtype)

    return kernel


def _round_up(v, mult):
    return -(-v // mult) * mult


def _prepare(x, dim, norm):
    """Build kernel operands (XS, Fcat2, Ar, Ai) and metadata for one hfft2."""
    ndim = x.ndim
    d0, d1 = dim[0] % ndim, dim[1] % ndim

    perm = [i for i in range(ndim) if i not in (d0, d1)] + [d0, d1]
    inv_perm = [int(i) for i in np.argsort(perm)]
    xt = jnp.transpose(x, perm)

    batch_shape = tuple(int(s) for s in xt.shape[:-2])
    n0, m = int(xt.shape[-2]), int(xt.shape[-1])
    n1 = 2 * (m - 1)
    B = int(np.prod(batch_shape)) if batch_shape else 1
    n0p = _round_up(n0, 8)          # output / Re-Im row blocks, sublane aligned
    Kp = _round_up(2 * n0, 8)       # stage-1 contraction dim, sublane aligned

    # (B, n0, m) -> (n0, B*m): batch stacked on the lane axis.
    x2 = jnp.transpose(xt.reshape(B, n0, m), (1, 0, 2)).reshape(n0, B * m)
    xs = jnp.concatenate([jnp.real(x2), jnp.imag(x2)], axis=0)   # (2*n0, B*m)
    if Kp > 2 * n0:
        xs = jnp.concatenate(
            [xs, jnp.zeros((Kp - 2 * n0, B * m), xs.dtype)], axis=0)
    xs = xs.astype(jnp.float32)

    # --- host-side constants (float64 then cast) ---
    k0 = np.arange(n0)
    F = np.exp(-2j * np.pi * np.outer(k0, k0) / n0)              # (n0, n0)
    Fcat2 = np.zeros((2 * n0p, Kp), dtype=np.float64)            # [[Fr,-Fi],[Fi,Fr]] padded
    Fcat2[:n0, :n0] = F.real
    Fcat2[:n0, n0:2 * n0] = -F.imag
    Fcat2[n0p:n0p + n0, :n0] = F.imag
    Fcat2[n0p:n0p + n0, n0:2 * n0] = F.real

    w = np.ones(m, dtype=np.float64)
    if m > 2:
        w[1:m - 1] = 2.0                                          # hermitian weights
    HT = w[:, None] * np.exp(
        -2j * np.pi * np.outer(np.arange(m), np.arange(n1)) / n1)  # (m, n1)

    if norm == 'backward':
        scale = 1.0
    elif norm == 'forward':
        scale = 1.0 / (n0 * n1)
    elif norm == 'ortho':
        scale = 1.0 / float(np.sqrt(n0 * n1))
    else:
        raise ValueError(f"unknown norm {norm}")

    Ar = scale * HT.real                                          # (m, n1)
    Ai = -scale * HT.imag                                         # (m, n1)

    meta = dict(batch_shape=batch_shape, inv_perm=inv_perm,
                B=B, n0=n0, n0p=n0p, n1=n1, m=m)
    arrs = (xs,
            jnp.asarray(Fcat2, jnp.float32),
            jnp.asarray(Ar, jnp.float32),
            jnp.asarray(Ai, jnp.float32))
    return arrs, meta


def _post(y2, meta):
    """(n0p, B*n1) lane-dense slab -> original torch hfft2 output layout."""
    n0, n1, B = meta['n0'], meta['n1'], meta['B']
    out = y2[:n0]                                                 # drop padded rows
    out = jnp.transpose(out.reshape(n0, B, n1), (1, 0, 2))        # (B, n0, n1)
    out = out.reshape(meta['batch_shape'] + (n0, n1))
    return jnp.transpose(out, meta['inv_perm'])


def _fused_pallas_call(ops):
    """One gridless pallas_call computing all three hfft2 transforms."""
    ins, metas, out_shapes = [], [], []
    for arrs, meta in ops:
        ins.extend(arrs)
        metas.append(meta)
        out_shapes.append(
            jax.ShapeDtypeStruct((meta['n0p'], meta['B'] * meta['n1']),
                                 jnp.float32))

    kernel = _make_kernel(metas)
    vmem = pltpu.MemorySpace.VMEM
    return pl.pallas_call(
        kernel,
        out_shape=tuple(out_shapes),
        in_specs=[pl.BlockSpec(memory_space=vmem) for _ in ins],
        out_specs=tuple(pl.BlockSpec(memory_space=vmem) for _ in out_shapes),
    )(*ins)


def model_forward(x, y, z):
    """Mirror of the PyTorch Model.forward."""
    px = _prepare(x, (-2, -1), 'backward')
    py = _prepare(y, (1, 3), 'forward')
    pz = _prepare(z, (-2, -1), 'ortho')
    outs = _fused_pallas_call([px, py, pz])
    return tuple(_post(o, p[1]) for o, p in zip(outs, (px, py, pz)))


def _hfft2_ref(x, dim=(-2, -1), norm='backward'):
    """Pure-JAX reference: hfftn == n0*n1 * irfftn(conj(x)) (norms swapped)."""
    ndim = x.ndim
    d0 = dim[0] % ndim
    d1 = dim[1] % ndim
    n0 = x.shape[d0]
    m = x.shape[d1]
    n1 = 2 * (m - 1)
    r = jnp.fft.irfft(jnp.fft.ifft(jnp.conj(x), axis=d0), n=n1, axis=d1) * (n0 * n1)
    if norm == 'forward':
        r = r / (n0 * n1)
    elif norm == 'ortho':
        r = r / np.sqrt(n0 * n1)
    return r.astype(jnp.float32)


if __name__ == "__main__":
    key = jax.random.PRNGKey(0)
    ks = jax.random.split(key, 6)

    def cplx(kr, ki, shape):
        return (jax.random.uniform(kr, shape, jnp.float32)
                + 1j * jax.random.uniform(ki, shape, jnp.float32)).astype(jnp.complex64)

    # small 4-D complex inputs consistent with the module (half-spectrum last dim)
    x = cplx(ks[0], ks[1], (2, 4, 16, 9))   # -> (2, 4, 16, 16)
    y = cplx(ks[2], ks[3], (2, 5, 8, 9))    # dim=(1,3) -> (2, 5, 8, 16)
    z = cplx(ks[4], ks[5], (2, 8, 8, 5))    # -> (2, 8, 8, 8)

    fwd = jax.jit(model_forward)
    xo, yo, zo = fwd(x, y, z)
    jax.block_until_ready((xo, yo, zo))

    # sanity check against a pure-JAX reference of torch.fft.hfft2 semantics
    for got, inp, d, nrm in (
        (xo, x, (-2, -1), 'backward'),
        (yo, y, (1, 3), 'forward'),
        (zo, z, (-2, -1), 'ortho'),
    ):
        ref = _hfft2_ref(inp, dim=d, norm=nrm)
        assert got.shape == ref.shape, (got.shape, ref.shape)
        assert got.dtype == jnp.float32
        assert np.allclose(np.asarray(got), np.asarray(ref), rtol=1e-3, atol=1e-2)

    print("KERNEL_OK")
</pallas_src>

<mosaic_0001>
module attributes {stable_mosaic.version = 11 : i64} {
  func.func @kernel(%arg0: memref<32x72xf32, #tpu.memory_space<vmem>>, %arg1: memref<32x32xf32, #tpu.memory_space<vmem>>, %arg2: memref<9x16xf32, #tpu.memory_space<vmem>>, %arg3: memref<9x16xf32, #tpu.memory_space<vmem>>, %arg4: memref<16x144xf32, #tpu.memory_space<vmem>>, %arg5: memref<16x16xf32, #tpu.memory_space<vmem>>, %arg6: memref<9x16xf32, #tpu.memory_space<vmem>>, %arg7: memref<9x16xf32, #tpu.memory_space<vmem>>, %arg8: memref<16x80xf32, #tpu.memory_space<vmem>>, %arg9: memref<16x16xf32, #tpu.memory_space<vmem>>, %arg10: memref<5x8xf32, #tpu.memory_space<vmem>>, %arg11: memref<5x8xf32, #tpu.memory_space<vmem>>, %arg12: memref<16x128xf32, #tpu.memory_space<vmem>>, %arg13: memref<8x256xf32, #tpu.memory_space<vmem>>, %arg14: memref<8x128xf32, #tpu.memory_space<vmem>>) attributes {dimension_semantics = [], scalar_prefetch = 0 : i64, scratch_operands = 0 : i64, tpu.core_type = #tpu.core_type<tc>} {
    %c0 = arith.constant 0 : index
    %c0_0 = arith.constant 0 : index
    %0 = vector.load %arg1[%c0, %c0_0] : memref<32x32xf32, #tpu.memory_space<vmem>>, vector<32x32xf32>
    %c0_1 = arith.constant 0 : index
    %c0_2 = arith.constant 0 : index
    %1 = vector.load %arg0[%c0_1, %c0_2] : memref<32x72xf32, #tpu.memory_space<vmem>>, vector<32x72xf32>
    %cst = arith.constant dense<0.000000e+00> : vector<32x72xf32>
    %2 = tpu.matmul %0, %1, %cst {dimension_numbers = #tpu.dot_dimension_numbers<[1], [0], [0], [1], [0, 0, 1, 1], [], []>} : vector<32x32xf32>, vector<32x72xf32>, vector<32x72xf32> -> vector<32x72xf32>
    %3 = vector.extract_strided_slice %2 {offsets = [0, 0], sizes = [16, 72], strides = [1, 1]} : vector<32x72xf32> to vector<16x72xf32>
    %4 = vector.extract_strided_slice %2 {offsets = [16, 0], sizes = [16, 72], strides = [1, 1]} : vector<32x72xf32> to vector<16x72xf32>
    %c0_3 = arith.constant 0 : index
    %c0_4 = arith.constant 0 : index
    %5 = vector.load %arg2[%c0_3, %c0_4] : memref<9x16xf32, #tpu.memory_space<vmem>>, vector<9x16xf32>
    %c0_5 = arith.constant 0 : index
    %c0_6 = arith.constant 0 : index
    %6 = vector.load %arg3[%c0_5, %c0_6] : memref<9x16xf32, #tpu.memory_space<vmem>>, vector<9x16xf32>
    %7 = vector.extract_strided_slice %3 {offsets = [0, 0], sizes = [16, 9], strides = [1, 1]} : vector<16x72xf32> to vector<16x9xf32>
    %8 = vector.extract_strided_slice %4 {offsets = [0, 0], sizes = [16, 9], strides = [1, 1]} : vector<16x72xf32> to vector<16x9xf32>
    %cst_7 = arith.constant dense<0.000000e+00> : vector<16x16xf32>
    %9 = tpu.matmul %7, %5, %cst_7 {dimension_numbers = #tpu.dot_dimension_numbers<[1], [0], [0], [1], [0, 0, 1, 1], [], []>} : vector<16x9xf32>, vector<9x16xf32>, vector<16x16xf32> -> vector<16x16xf32>
    %cst_8 = arith.constant dense<0.000000e+00> : vector<16x16xf32>
    %10 = tpu.matmul %8, %6, %cst_8 {dimension_numbers = #tpu.dot_dimension_numbers<[1], [0], [0], [1], [0, 0, 1, 1], [], []>} : vector<16x9xf32>, vector<9x16xf32>, vector<16x16xf32> -> vector<16x16xf32>
    %11 = arith.addf %9, %10 : vector<16x16xf32>
    %12 = vector.extract_strided_slice %3 {offsets = [0, 9], sizes = [16, 9], strides = [1, 1]} : vector<16x72xf32> to vector<16x9xf32>
    %13 = vector.extract_strided_slice %4 {offsets = [0, 9], sizes = [16, 9], strides = [1, 1]} : vector<16x72xf32> to vector<16x9xf32>
    %cst_9 = arith.constant dense<0.000000e+00> : vector<16x16xf32>
    %14 = tpu.matmul %12, %5, %cst_9 {dimension_numbers = #tpu.dot_dimension_numbers<[1], [0], [0], [1], [0, 0, 1, 1], [], []>} : vector<16x9xf32>, vector<9x16xf32>, vector<16x16xf32> -> vector<16x16xf32>
    %cst_10 = arith.constant dense<0.000000e+00> : vector<16x16xf32>
    %15 = tpu.matmul %13, %6, %cst_10 {dimension_numbers = #tpu.dot_dimension_numbers<[1], [0], [0], [1], [0, 0, 1, 1], [], []>} : vector<16x9xf32>, vector<9x16xf32>, vector<16x16xf32> -> vector<16x16xf32>
    %16 = arith.addf %14, %15 : vector<16x16xf32>
    %17 = vector.extract_strided_slice %3 {offsets = [0, 18], sizes = [16, 9], strides = [1, 1]} : vector<16x72xf32> to vector<16x9xf32>
    %18 = vector.extract_strided_slice %4 {offsets = [0, 18], sizes = [16, 9], strides = [1, 1]} : vector<16x72xf32> to vector<16x9xf32>
    %cst_11 = arith.constant dense<0.000000e+00> : vector<16x16xf32>
    %19 = tpu.matmul %17, %5, %cst_11 {dimension_numbers = #tpu.dot_dimension_numbers<[1], [0], [0], [1], [0, 0, 1, 1], [], []>} : vector<16x9xf32>, vector<9x16xf32>, vector<16x16xf32> -> vector<16x16xf32>
    %cst_12 = arith.constant dense<0.000000e+00> : vector<16x16xf32>
    %20 = tpu.matmul %18, %6, %cst_12 {dimension_numbers = #tpu.dot_dimension_numbers<[1], [0], [0], [1], [0, 0, 1, 1], [], []>} : vector<16x9xf32>, vector<9x16xf32>, vector<16x16xf32> -> vector<16x16xf32>
    %21 = arith.addf %19, %20 : vector<16x16xf32>
    %22 = vector.extract_strided_slice %3 {offsets = [0, 27], sizes = [16, 9], strides = [1, 1]} : vector<16x72xf32> to vector<16x9xf32>
    %23 = vector.extract_strided_slice %4 {offsets = [0, 27], sizes = [16, 9], strides = [1, 1]} : vector<16x72xf32> to vector<16x9xf32>
    %cst_13 = arith.constant dense<0.000000e+00> : vector<16x16xf32>
    %24 = tpu.matmul %22, %5, %cst_13 {dimension_numbers = #tpu.dot_dimension_numbers<[1], [0], [0], [1], [0, 0, 1, 1], [], []>} : vector<16x9xf32>, vector<9x16xf32>, vector<16x16xf32> -> vector<16x16xf32>
    %cst_14 = arith.constant dense<0.000000e+00> : vector<16x16xf32>
    %25 = tpu.matmul %23, %6, %cst_14 {dimension_numbers = #tpu.dot_dimension_numbers<[1], [0], [0], [1], [0, 0, 1, 1], [], []>} : vector<16x9xf32>, vector<9x16xf32>, vector<16x16xf32> -> vector<16x16xf32>
    %26 = arith.addf %24, %25 : vector<16x16xf32>
    %27 = vector.extract_strided_slice %3 {offsets = [0, 36], sizes = [16, 9], strides = [1, 1]} : vector<16x72xf32> to vector<16x9xf32>
    %28 = vector.extract_strided_slice %4 {offsets = [0, 36], sizes = [16, 9], strides = [1, 1]} : vector<16x72xf32> to vector<16x9xf32>
    %cst_15 = arith.constant dense<0.000000e+00> : vector<16x16xf32>
    %29 = tpu.matmul %27, %5, %cst_15 {dimension_numbers = #tpu.dot_dimension_numbers<[1], [0], [0], [1], [0, 0, 1, 1], [], []>} : vector<16x9xf32>, vector<9x16xf32>, vector<16x16xf32> -> vector<16x16xf32>
    %cst_16 = arith.constant dense<0.000000e+00> : vector<16x16xf32>
    %30 = tpu.matmul %28, %6, %cst_16 {dimension_numbers = #tpu.dot_dimension_numbers<[1], [0], [0], [1], [0, 0, 1, 1], [], []>} : vector<16x9xf32>, vector<9x16xf32>, vector<16x16xf32> -> vector<16x16xf32>
    %31 = arith.addf %29, %30 : vector<16x16xf32>
    %32 = vector.extract_strided_slice %3 {offsets = [0, 45], sizes = [16, 9], strides = [1, 1]} : vector<16x72xf32> to vector<16x9xf32>
    %33 = vector.extract_strided_slice %4 {offsets = [0, 45], sizes = [16, 9], strides = [1, 1]} : vector<16x72xf32> to vector<16x9xf32>
    %cst_17 = arith.constant dense<0.000000e+00> : vector<16x16xf32>
    %34 = tpu.matmul %32, %5, %cst_17 {dimension_numbers = #tpu.dot_dimension_numbers<[1], [0], [0], [1], [0, 0, 1, 1], [], []>} : vector<16x9xf32>, vector<9x16xf32>, vector<16x16xf32> -> vector<16x16xf32>
    %cst_18 = arith.constant dense<0.000000e+00> : vector<16x16xf32>
    %35 = tpu.matmul %33, %6, %cst_18 {dimension_numbers = #tpu.dot_dimension_numbers<[1], [0], [0], [1], [0, 0, 1, 1], [], []>} : vector<16x9xf32>, vector<9x16xf32>, vector<16x16xf32> -> vector<16x16xf32>
    %36 = arith.addf %34, %35 : vector<16x16xf32>
    %37 = vector.extract_strided_slice %3 {offsets = [0, 54], sizes = [16, 9], strides = [1, 1]} : vector<16x72xf32> to vector<16x9xf32>
    %38 = vector.extract_strided_slice %4 {offsets = [0, 54], sizes = [16, 9], strides = [1, 1]} : vector<16x72xf32> to vector<16x9xf32>
    %cst_19 = arith.constant dense<0.000000e+00> : vector<16x16xf32>
    %39 = tpu.matmul %37, %5, %cst_19 {dimension_numbers = #tpu.dot_dimension_numbers<[1], [0], [0], [1], [0, 0, 1, 1], [], []>} : vector<16x9xf32>, vector<9x16xf32>, vector<16x16xf32> -> vector<16x16xf32>
    %cst_20 = arith.constant dense<0.000000e+00> : vector<16x16xf32>
    %40 = tpu.matmul %38, %6, %cst_20 {dimension_numbers = #tpu.dot_dimension_numbers<[1], [0], [0], [1], [0, 0, 1, 1], [], []>} : vector<16x9xf32>, vector<9x16xf32>, vector<16x16xf32> -> vector<16x16xf32>
    %41 = arith.addf %39, %40 : vector<16x16xf32>
    %42 = vector.extract_strided_slice %3 {offsets = [0, 63], sizes = [16, 9], strides = [1, 1]} : vector<16x72xf32> to vector<16x9xf32>
    %43 = vector.extract_strided_slice %4 {offsets = [0, 63], sizes = [16, 9], strides = [1, 1]} : vector<16x72xf32> to vector<16x9xf32>
    %cst_21 = arith.constant dense<0.000000e+00> : vector<16x16xf32>
    %44 = tpu.matmul %42, %5, %cst_21 {dimension_numbers = #tpu.dot_dimension_numbers<[1], [0], [0], [1], [0, 0, 1, 1], [], []>} : vector<16x9xf32>, vector<9x16xf32>, vector<16x16xf32> -> vector<16x16xf32>
    %cst_22 = arith.constant dense<0.000000e+00> : vector<16x16xf32>
    %45 = tpu.matmul %43, %6, %cst_22 {dimension_numbers = #tpu.dot_dimension_numbers<[1], [0], [0], [1], [0, 0, 1, 1], [], []>} : vector<16x9xf32>, vector<9x16xf32>, vector<16x16xf32> -> vector<16x16xf32>
    %46 = arith.addf %44, %45 : vector<16x16xf32>
    %47 = tpu.concatenate %11, %16, %21, %26, %31, %36, %41, %46 in 1 : vector<16x16xf32>, vector<16x16xf32>, vector<16x16xf32>, vector<16x16xf32>, vector<16x16xf32>, vector<16x16xf32>, vector<16x16xf32>, vector<16x16xf32> -> vector<16x128xf32>
    %c0_23 = arith.constant 0 : index
    %c0_24 = arith.constant 0 : index
    %48 = vector.load %arg12[%c0_23, %c0_24] : memref<16x128xf32, #tpu.memory_space<vmem>>, vector<16x128xf32>
    tpu.vector_store %arg12[%c0_23, %c0_24], %47 {strides = array<i32>} : memref<16x128xf32, #tpu.memory_space<vmem>>, vector<16x128xf32>,
    %c0_25 = arith.constant 0 : index
    %c0_26 = arith.constant 0 : index
    %49 = vector.load %arg5[%c0_25, %c0_26] : memref<16x16xf32, #tpu.memory_space<vmem>>, vector<16x16xf32>
    %c0_27 = arith.constant 0 : index
    %c0_28 = arith.constant 0 : index
    %50 = vector.load %arg4[%c0_27, %c0_28] : memref<16x144xf32, #tpu.memory_space<vmem>>, vector<16x144xf32>
    %cst_29 = arith.constant dense<0.000000e+00> : vector<16x144xf32>
    %51 = tpu.matmul %49, %50, %cst_29 {dimension_numbers = #tpu.dot_dimension_numbers<[1], [0], [0], [1], [0, 0, 1, 1], [], []>} : vector<16x16xf32>, vector<16x144xf32>, vector<16x144xf32> -> vector<16x144xf32>
    %52 = vector.extract_strided_slice %51 {offsets = [0, 0], sizes = [8, 144], strides = [1, 1]} : vector<16x144xf32> to vector<8x144xf32>
    %53 = vector.extract_strided_slice %51 {offsets = [8, 0], sizes = [8, 144], strides = [1, 1]} : vector<16x144xf32> to vector<8x144xf32>
    %c0_30 = arith.constant 0 : index
    %c0_31 = arith.constant 0 : index
    %54 = vector.load %arg6[%c0_30, %c0_31] : memref<9x16xf32, #tpu.memory_space<vmem>>, vector<9x16xf32>
    %c0_32 = arith.constant 0 : index
    %c0_33 = arith.constant 0 : index
    %55 = vector.load %arg7[%c0_32, %c0_33] : memref<9x16xf32, #tpu.memory_space<vmem>>, vector<9x16xf32>
    %56 = vector.extract_strided_slice %52 {offsets = [0, 0], sizes = [8, 9], strides = [1, 1]} : vector<8x144xf32> to vector<8x9xf32>
    %57 = vector.extract_strided_slice %53 {offsets = [0, 0], sizes = [8, 9], strides = [1, 1]} : vector<8x144xf32> to vector<8x9xf32>
    %cst_34 = arith.constant dense<0.000000e+00> : vector<8x16xf32>
    %58 = tpu.matmul %56, %54, %cst_34 {dimension_numbers = #tpu.dot_dimension_numbers<[1], [0], [0], [1], [0, 0, 1, 1], [], []>} : vector<8x9xf32>, vector<9x16xf32>, vector<8x16xf32> -> vector<8x16xf32>
    %cst_35 = arith.constant dense<0.000000e+00> : vector<8x16xf32>
    %59 = tpu.matmul %57, %55, %cst_35 {dimension_numbers = #tpu.dot_dimension_numbers<[1], [0], [0], [1], [0, 0, 1, 1], [], []>} : vector<8x9xf32>, vector<9x16xf32>, vector<8x16xf32> -> vector<8x16xf32>
    %60 = arith.addf %58, %59 : vector<8x16xf32>
    %61 = vector.extract_strided_slice %52 {offsets = [0, 9], sizes = [8, 9], strides = [1, 1]} : vector<8x144xf32> to vector<8x9xf32>
    %62 = vector.extract_strided_slice %53 {offsets = [0, 9], sizes = [8, 9], strides = [1, 1]} : vector<8x144xf32> to vector<8x9xf32>
    %cst_36 = arith.constant dense<0.000000e+00> : vector<8x16xf32>
    %63 = tpu.matmul %61, %54, %cst_36 {dimension_numbers = #tpu.dot_dimension_numbers<[1], [0], [0], [1], [0, 0, 1, 1], [], []>} : vector<8x9xf32>, vector<9x16xf32>, vector<8x16xf32> -> vector<8x16xf32>
    %cst_37 = arith.constant dense<0.000000e+00> : vector<8x16xf32>
    %64 = tpu.matmul %62, %55, %cst_37 {dimension_numbers = #tpu.dot_dimension_numbers<[1], [0], [0], [1], [0, 0, 1, 1], [], []>} : vector<8x9xf32>, vector<9x16xf32>, vector<8x16xf32> -> vector<8x16xf32>
    %65 = arith.addf %63, %64 : vector<8x16xf32>
    %66 = vector.extract_strided_slice %52 {offsets = [0, 18], sizes = [8, 9], strides = [1, 1]} : vector<8x144xf32> to vector<8x9xf32>
    %67 = vector.extract_strided_slice %53 {offsets = [0, 18], sizes = [8, 9], strides = [1, 1]} : vector<8x144xf32> to vector<8x9xf32>
    %cst_38 = arith.constant dense<0.000000e+00> : vector<8x16xf32>
    %68 = tpu.matmul %66, %54, %cst_38 {dimension_numbers = #tpu.dot_dimension_numbers<[1], [0], [0], [1], [0, 0, 1, 1], [], []>} : vector<8x9xf32>, vector<9x16xf32>, vector<8x16xf32> -> vector<8x16xf32>
    %cst_39 = arith.constant dense<0.000000e+00> : vector<8x16xf32>
    %69 = tpu.matmul %67, %55, %cst_39 {dimension_numbers = #tpu.dot_dimension_numbers<[1], [0], [0], [1], [0, 0, 1, 1], [], []>} : vector<8x9xf32>, vector<9x16xf32>, vector<8x16xf32> -> vector<8x16xf32>
    %70 = arith.addf %68, %69 : vector<8x16xf32>
    %71 = vector.extract_strided_slice %52 {offsets = [0, 27], sizes = [8, 9], strides = [1, 1]} : vector<8x144xf32> to vector<8x9xf32>
    %72 = vector.extract_strided_slice %53 {offsets = [0, 27], sizes = [8, 9], strides = [1, 1]} : vector<8x144xf32> to vector<8x9xf32>
    %cst_40 = arith.constant dense<0.000000e+00> : vector<8x16xf32>
    %73 = tpu.matmul %71, %54, %cst_40 {dimension_numbers = #tpu.dot_dimension_numbers<[1], [0], [0], [1], [0, 0, 1, 1], [], []>} : vector<8x9xf32>, vector<9x16xf32>, vector<8x16xf32> -> vector<8x16xf32>
    %cst_41 = arith.constant dense<0.000000e+00> : vector<8x16xf32>
    %74 = tpu.matmul %72, %55, %cst_41 {dimension_numbers = #tpu.dot_dimension_numbers<[1], [0], [0], [1], [0, 0, 1, 1], [], []>} : vector<8x9xf32>, vector<9x16xf32>, vector<8x16xf32> -> vector<8x16xf32>
    %75 = arith.addf %73, %74 : vector<8x16xf32>
    %76 = vector.extract_strided_slice %52 {offsets = [0, 36], sizes = [8, 9], strides = [1, 1]} : vector<8x144xf32> to vector<8x9xf32>
    %77 = vector.extract_strided_slice %53 {offsets = [0, 36], sizes = [8, 9], strides = [1, 1]} : vector<8x144xf32> to vector<8x9xf32>
    %cst_42 = arith.constant dense<0.000000e+00> : vector<8x16xf32>
    %78 = tpu.matmul %76, %54, %cst_42 {dimension_numbers = #tpu.dot_dimension_numbers<[1], [0], [0], [1], [0, 0, 1, 1], [], []>} : vector<8x9xf32>, vector<9x16xf32>, vector<8x16xf32> -> vector<8x16xf32>
    %cst_43 = arith.constant dense<0.000000e+00> : vector<8x16xf32>
    %79 = tpu.matmul %77, %55, %cst_43 {dimension_numbers = #tpu.dot_dimension_numbers<[1], [0], [0], [1], [0, 0, 1, 1], [], []>} : vector<8x9xf32>, vector<9x16xf32>, vector<8x16xf32> -> vector<8x16xf32>
    %80 = arith.addf %78, %79 : vector<8x16xf32>
    %81 = vector.extract_strided_slice %52 {offsets = [0, 45], sizes = [8, 9], strides = [1, 1]} : vector<8x144xf32> to vector<8x9xf32>
    %82 = vector.extract_strided_slice %53 {offsets = [0, 45], sizes = [8, 9], strides = [1, 1]} : vector<8x144xf32> to vector<8x9xf32>
    %cst_44 = arith.constant dense<0.000000e+00> : vector<8x16xf32>
    %83 = tpu.matmul %81, %54, %cst_44 {dimension_numbers = #tpu.dot_dimension_numbers<[1], [0], [0], [1], [0, 0, 1, 1], [], []>} : vector<8x9xf32>, vector<9x16xf32>, vector<8x16xf32> -> vector<8x16xf32>
    %cst_45 = arith.constant dense<0.000000e+00> : vector<8x16xf32>
    %84 = tpu.matmul %82, %55, %cst_45 {dimension_numbers = #tpu.dot_dimension_numbers<[1], [0], [0], [1], [0, 0, 1, 1], [], []>} : vector<8x9xf32>, vector<9x16xf32>, vector<8x16xf32> -> vector<8x16xf32>
    %85 = arith.addf %83, %84 : vector<8x16xf32>
    %86 = vector.extract_strided_slice %52 {offsets = [0, 54], sizes = [8, 9], strides = [1, 1]} : vector<8x144xf32> to vector<8x9xf32>
    %87 = vector.extract_strided_slice %53 {offsets = [0, 54], sizes = [8, 9], strides = [1, 1]} : vector<8x144xf32> to vector<8x9xf32>
    %cst_46 = arith.constant dense<0.000000e+00> : vector<8x16xf32>
    %88 = tpu.matmul %86, %54, %cst_46 {dimension_numbers = #tpu.dot_dimension_numbers<[1], [0], [0], [1], [0, 0, 1, 1], [], []>} : vector<8x9xf32>, vector<9x16xf32>, vector<8x16xf32> -> vector<8x16xf32>
    %cst_47 = arith.constant dense<0.000000e+00> : vector<8x16xf32>
    %89 = tpu.matmul %87, %55, %cst_47 {dimension_numbers = #tpu.dot_dimension_numbers<[1], [0], [0], [1], [0, 0, 1, 1], [], []>} : vector<8x9xf32>, vector<9x16xf32>, vector<8x16xf32> -> vector<8x16xf32>
    %90 = arith.addf %88, %89 : vector<8x16xf32>
    %91 = vector.extract_strided_slice %52 {offsets = [0, 63], sizes = [8, 9], strides = [1, 1]} : vector<8x144xf32> to vector<8x9xf32>
    %92 = vector.extract_strided_slice %53 {offsets = [0, 63], sizes = [8, 9], strides = [1, 1]} : vector<8x144xf32> to vector<8x9xf32>
    %cst_48 = arith.constant dense<0.000000e+00> : vector<8x16xf32>
    %93 = tpu.matmul %91, %54, %cst_48 {dimension_numbers = #tpu.dot_dimension_numbers<[1], [0], [0], [1], [0, 0, 1, 1], [], []>} : vector<8x9xf32>, vector<9x16xf32>, vector<8x16xf32> -> vector<8x16xf32>
    %cst_49 = arith.constant dense<0.000000e+00> : vector<8x16xf32>
    %94 = tpu.matmul %92, %55, %cst_49 {dimension_numbers = #tpu.dot_dimension_numbers<[1], [0], [0], [1], [0, 0, 1, 1], [], []>} : vector<8x9xf32>, vector<9x16xf32>, vector<8x16xf32> -> vector<8x16xf32>
    %95 = arith.addf %93, %94 : vector<8x16xf32>
    %96 = vector.extract_strided_slice %52 {offsets = [0, 72], sizes = [8, 9], strides = [1, 1]} : vector<8x144xf32> to vector<8x9xf32>
    %97 = vector.extract_strided_slice %53 {offsets = [0, 72], sizes = [8, 9], strides = [1, 1]} : vector<8x144xf32> to vector<8x9xf32>
    %cst_50 = arith.constant dense<0.000000e+00> : vector<8x16xf32>
    %98 = tpu.matmul %96, %54, %cst_50 {dimension_numbers = #tpu.dot_dimension_numbers<[1], [0], [0], [1], [0, 0, 1, 1], [], []>} : vector<8x9xf32>, vector<9x16xf32>, vector<8x16xf32> -> vector<8x16xf32>
    %cst_51 = arith.constant dense<0.000000e+00> : vector<8x16xf32>
    %99 = tpu.matmul %97, %55, %cst_51 {dimension_numbers = #tpu.dot_dimension_numbers<[1], [0], [0], [1], [0, 0, 1, 1], [], []>} : vector<8x9xf32>, vector<9x16xf32>, vector<8x16xf32> -> vector<8x16xf32>
    %100 = arith.addf %98, %99 : vector<8x16xf32>
    %101 = vector.extract_strided_slice %52 {offsets = [0, 81], sizes = [8, 9], strides = [1, 1]} : vector<8x144xf32> to vector<8x9xf32>
    %102 = vector.extract_strided_slice %53 {offsets = [0, 81], sizes = [8, 9], strides = [1, 1]} : vector<8x144xf32> to vector<8x9xf32>
    %cst_52 = arith.constant dense<0.000000e+00> : vector<8x16xf32>
    %103 = tpu.matmul %101, %54, %cst_52 {dimension_numbers = #tpu.dot_dimension_numbers<[1], [0], [0], [1], [0, 0, 1, 1], [], []>} : vector<8x9xf32>, vector<9x16xf32>, vector<8x16xf32> -> vector<8x16xf32>
    %cst_53 = arith.constant dense<0.000000e+00> : vector<8x16xf32>
    %104 = tpu.matmul %102, %55, %cst_53 {dimension_numbers = #tpu.dot_dimension_numbers<[1], [0], [0], [1], [0, 0, 1, 1], [], []>} : vector<8x9xf32>, vector<9x16xf32>, vector<8x16xf32> -> vector<8x16xf32>
    %105 = arith.addf %103, %104 : vector<8x16xf32>
    %106 = vector.extract_strided_slice %52 {offsets = [0, 90], sizes = [8, 9], strides = [1, 1]} : vector<8x144xf32> to vector<8x9xf32>
    %107 = vector.extract_strided_slice %53 {offsets = [0, 90], sizes = [8, 9], strides = [1, 1]} : vector<8x144xf32> to vector<8x9xf32>
    %cst_54 = arith.constant dense<0.000000e+00> : vector<8x16xf32>
    %108 = tpu.matmul %106, %54, %cst_54 {dimension_numbers = #tpu.dot_dimension_numbers<[1], [0], [0], [1], [0, 0, 1, 1], [], []>} : vector<8x9xf32>, vector<9x16xf32>, vector<8x16xf32> -> vector<8x16xf32>
    %cst_55 = arith.constant dense<0.000000e+00> : vector<8x16xf32>
    %109 = tpu.matmul %107, %55, %cst_55 {dimension_numbers = #tpu.dot_dimension_numbers<[1], [0], [0], [1], [0, 0, 1, 1], [], []>} : vector<8x9xf32>, vector<9x16xf32>, vector<8x16xf32> -> vector<8x16xf32>
    %110 = arith.addf %108, %109 : vector<8x16xf32>
    %111 = vector.extract_strided_slice %52 {offsets = [0, 99], sizes = [8, 9], strides = [1, 1]} : vector<8x144xf32> to vector<8x9xf32>
    %112 = vector.extract_strided_slice %53 {offsets = [0, 99], sizes = [8, 9], strides = [1, 1]} : vector<8x144xf32> to vector<8x9xf32>
    %cst_56 = arith.constant dense<0.000000e+00> : vector<8x16xf32>
    %113 = tpu.matmul %111, %54, %cst_56 {dimension_numbers = #tpu.dot_dimension_numbers<[1], [0], [0], [1], [0, 0, 1, 1], [], []>} : vector<8x9xf32>, vector<9x16xf32>, vector<8x16xf32> -> vector<8x16xf32>
    %cst_57 = arith.constant dense<0.000000e+00> : vector<8x16xf32>
    %114 = tpu.matmul %112, %55, %cst_57 {dimension_numbers = #tpu.dot_dimension_numbers<[1], [0], [0], [1], [0, 0, 1, 1], [], []>} : vector<8x9xf32>, vector<9x16xf32>, vector<8x16xf32> -> vector<8x16xf32>
    %115 = arith.addf %113, %114 : vector<8x16xf32>
    %116 = vector.extract_strided_slice %52 {offsets = [0, 108], sizes = [8, 9], strides = [1, 1]} : vector<8x144xf32> to vector<8x9xf32>
    %117 = vector.extract_strided_slice %53 {offsets = [0, 108], sizes = [8, 9], strides = [1, 1]} : vector<8x144xf32> to vector<8x9xf32>
    %cst_58 = arith.constant dense<0.000000e+00> : vector<8x16xf32>
    %118 = tpu.matmul %116, %54, %cst_58 {dimension_numbers = #tpu.dot_dimension_numbers<[1], [0], [0], [1], [0, 0, 1, 1], [], []>} : vector<8x9xf32>, vector<9x16xf32>, vector<8x16xf32> -> vector<8x16xf32>
    %cst_59 = arith.constant dense<0.000000e+00> : vector<8x16xf32>
    %119 = tpu.matmul %117, %55, %cst_59 {dimension_numbers = #tpu.dot_dimension_numbers<[1], [0], [0], [1], [0, 0, 1, 1], [], []>} : vector<8x9xf32>, vector<9x16xf32>, vector<8x16xf32> -> vector<8x16xf32>
    %120 = arith.addf %118, %119 : vector<8x16xf32>
    %121 = vector.extract_strided_slice %52 {offsets = [0, 117], sizes = [8, 9], strides = [1, 1]} : vector<8x144xf32> to vector<8x9xf32>
    %122 = vector.extract_strided_slice %53 {offsets = [0, 117], sizes = [8, 9], strides = [1, 1]} : vector<8x144xf32> to vector<8x9xf32>
    %cst_60 = arith.constant dense<0.000000e+00> : vector<8x16xf32>
    %123 = tpu.matmul %121, %54, %cst_60 {dimension_numbers = #tpu.dot_dimension_numbers<[1], [0], [0], [1], [0, 0, 1, 1], [], []>} : vector<8x9xf32>, vector<9x16xf32>, vector<8x16xf32> -> vector<8x16xf32>
    %cst_61 = arith.constant dense<0.000000e+00> : vector<8x16xf32>
    %124 = tpu.matmul %122, %55, %cst_61 {dimension_numbers = #tpu.dot_dimension_numbers<[1], [0], [0], [1], [0, 0, 1, 1], [], []>} : vector<8x9xf32>, vector<9x16xf32>, vector<8x16xf32> -> vector<8x16xf32>
    %125 = arith.addf %123, %124 : vector<8x16xf32>
    %126 = vector.extract_strided_slice %52 {offsets = [0, 126], sizes = [8, 9], strides = [1, 1]} : vector<8x144xf32> to vector<8x9xf32>
    %127 = vector.extract_strided_slice %53 {offsets = [0, 126], sizes = [8, 9], strides = [1, 1]} : vector<8x144xf32> to vector<8x9xf32>
    %cst_62 = arith.constant dense<0.000000e+00> : vector<8x16xf32>
    %128 = tpu.matmul %126, %54, %cst_62 {dimension_numbers = #tpu.dot_dimension_numbers<[1], [0], [0], [1], [0, 0, 1, 1], [], []>} : vector<8x9xf32>, vector<9x16xf32>, vector<8x16xf32> -> vector<8x16xf32>
    %cst_63 = arith.constant dense<0.000000e+00> : vector<8x16xf32>
    %129 = tpu.matmul %127, %55, %cst_63 {dimension_numbers = #tpu.dot_dimension_numbers<[1], [0], [0], [1], [0, 0, 1, 1], [], []>} : vector<8x9xf32>, vector<9x16xf32>, vector<8x16xf32> -> vector<8x16xf32>
    %130 = arith.addf %128, %129 : vector<8x16xf32>
    %131 = vector.extract_strided_slice %52 {offsets = [0, 135], sizes = [8, 9], strides = [1, 1]} : vector<8x144xf32> to vector<8x9xf32>
    %132 = vector.extract_strided_slice %53 {offsets = [0, 135], sizes = [8, 9], strides = [1, 1]} : vector<8x144xf32> to vector<8x9xf32>
    %cst_64 = arith.constant dense<0.000000e+00> : vector<8x16xf32>
    %133 = tpu.matmul %131, %54, %cst_64 {dimension_numbers = #tpu.dot_dimension_numbers<[1], [0], [0], [1], [0, 0, 1, 1], [], []>} : vector<8x9xf32>, vector<9x16xf32>, vector<8x16xf32> -> vector<8x16xf32>
    %cst_65 = arith.constant dense<0.000000e+00> : vector<8x16xf32>
    %134 = tpu.matmul %132, %55, %cst_65 {dimension_numbers = #tpu.dot_dimension_numbers<[1], [0], [0], [1], [0, 0, 1, 1], [], []>} : vector<8x9xf32>, vector<9x16xf32>, vector<8x16xf32> -> vector<8x16xf32>
    %135 = arith.addf %133, %134 : vector<8x16xf32>
    %136 = tpu.concatenate %60, %65, %70, %75, %80, %85, %90, %95, %100, %105, %110, %115, %120, %125, %130, %135 in 1 : vector<8x16xf32>, vector<8x16xf32>, vector<8x16xf32>, vector<8x16xf32>, vector<8x16xf32>, vector<8x16xf32>, vector<8x16xf32>, vector<8x16xf32>, vector<8x16xf32>, vector<8x16xf32>, vector<8x16xf32>, vector<8x16xf32>, vector<8x16xf32>, vector<8x16xf32>, vector<8x16xf32>, vector<8x16xf32> -> vector<8x256xf32>
    %c0_66 = arith.constant 0 : index
    %c0_67 = arith.constant 0 : index
    %137 = vector.load %arg13[%c0_66, %c0_67] : memref<8x256xf32, #tpu.memory_space<vmem>>, vector<8x256xf32>
    tpu.vector_store %arg13[%c0_66, %c0_67], %136 {strides = array<i32>} : memref<8x256xf32, #tpu.memory_space<vmem>>, vector<8x256xf32>,
    %c0_68 = arith.constant 0 : index
    %c0_69 = arith.constant 0 : index
    %138 = vector.load %arg9[%c0_68, %c0_69] : memref<16x16xf32, #tpu.memory_space<vmem>>, vector<16x16xf32>
    %c0_70 = arith.constant 0 : index
    %c0_71 = arith.constant 0 : index
    %139 = vector.load %arg8[%c0_70, %c0_71] : memref<16x80xf32, #tpu.memory_space<vmem>>, vector<16x80xf32>
    %cst_72 = arith.constant dense<0.000000e+00> : vector<16x80xf32>
    %140 = tpu.matmul %138, %139, %cst_72 {dimension_numbers = #tpu.dot_dimension_numbers<[1], [0], [0], [1], [0, 0, 1, 1], [], []>} : vector<16x16xf32>, vector<16x80xf32>, vector<16x80xf32> -> vector<16x80xf32>
    %141 = vector.extract_strided_slice %140 {offsets = [0, 0], sizes = [8, 80], strides = [1, 1]} : vector<16x80xf32> to vector<8x80xf32>
    %142 = vector.extract_strided_slice %140 {offsets = [8, 0], sizes = [8, 80], strides = [1, 1]} : vector<16x80xf32> to vector<8x80xf32>
    %c0_73 = arith.constant 0 : index
    %c0_74 = arith.constant 0 : index
    %143 = vector.load %arg10[%c0_73, %c0_74] : memref<5x8xf32, #tpu.memory_space<vmem>>, vector<5x8xf32>
    %c0_75 = arith.constant 0 : index
    %c0_76 = arith.constant 0 : index
    %144 = vector.load %arg11[%c0_75, %c0_76] : memref<5x8xf32, #tpu.memory_space<vmem>>, vector<5x8xf32>
    %145 = vector.extract_strided_slice %141 {offsets = [0, 0], sizes = [8, 5], strides = [1, 1]} : vector<8x80xf32> to vector<8x5xf32>
    %146 = vector.extract_strided_slice %142 {offsets = [0, 0], sizes = [8, 5], strides = [1, 1]} : vector<8x80xf32> to vector<8x5xf32>
    %cst_77 = arith.constant dense<0.000000e+00> : vector<8x8xf32>
    %147 = tpu.matmul %145, %143, %cst_77 {dimension_numbers = #tpu.dot_dimension_numbers<[1], [0], [0], [1], [0, 0, 1, 1], [], []>} : vector<8x5xf32>, vector<5x8xf32>, vector<8x8xf32> -> vector<8x8xf32>
    %cst_78 = arith.constant dense<0.000000e+00> : vector<8x8xf32>
    %148 = tpu.matmul %146, %144, %cst_78 {dimension_numbers = #tpu.dot_dimension_numbers<[1], [0], [0], [1], [0, 0, 1, 1], [], []>} : vector<8x5xf32>, vector<5x8xf32>, vector<8x8xf32> -> vector<8x8xf32>
    %149 = arith.addf %147, %148 : vector<8x8xf32>
    %150 = vector.extract_strided_slice %141 {offsets = [0, 5], sizes = [8, 5], strides = [1, 1]} : vector<8x80xf32> to vector<8x5xf32>
    %151 = vector.extract_strided_slice %142 {offsets = [0, 5], sizes = [8, 5], strides = [1, 1]} : vector<8x80xf32> to vector<8x5xf32>
    %cst_79 = arith.constant dense<0.000000e+00> : vector<8x8xf32>
    %152 = tpu.matmul %150, %143, %cst_79 {dimension_numbers = #tpu.dot_dimension_numbers<[1], [0], [0], [1], [0, 0, 1, 1], [], []>} : vector<8x5xf32>, vector<5x8xf32>, vector<8x8xf32> -> vector<8x8xf32>
    %cst_80 = arith.constant dense<0.000000e+00> : vector<8x8xf32>
    %153 = tpu.matmul %151, %144, %cst_80 {dimension_numbers = #tpu.dot_dimension_numbers<[1], [0], [0], [1], [0, 0, 1, 1], [], []>} : vector<8x5xf32>, vector<5x8xf32>, vector<8x8xf32> -> vector<8x8xf32>
    %154 = arith.addf %152, %153 : vector<8x8xf32>
    %155 = vector.extract_strided_slice %141 {offsets = [0, 10], sizes = [8, 5], strides = [1, 1]} : vector<8x80xf32> to vector<8x5xf32>
    %156 = vector.extract_strided_slice %142 {offsets = [0, 10], sizes = [8, 5], strides = [1, 1]} : vector<8x80xf32> to vector<8x5xf32>
    %cst_81 = arith.constant dense<0.000000e+00> : vector<8x8xf32>
    %157 = tpu.matmul %155, %143, %cst_81 {dimension_numbers = #tpu.dot_dimension_numbers<[1], [0], [0], [1], [0, 0, 1, 1], [], []>} : vector<8x5xf32>, vector<5x8xf32>, vector<8x8xf32> -> vector<8x8xf32>
    %cst_82 = arith.constant dense<0.000000e+00> : vector<8x8xf32>
    %158 = tpu.matmul %156, %144, %cst_82 {dimension_numbers = #tpu.dot_dimension_numbers<[1], [0], [0], [1], [0, 0, 1, 1], [], []>} : vector<8x5xf32>, vector<5x8xf32>, vector<8x8xf32> -> vector<8x8xf32>
    %159 = arith.addf %157, %158 : vector<8x8xf32>
    %160 = vector.extract_strided_slice %141 {offsets = [0, 15], sizes = [8, 5], strides = [1, 1]} : vector<8x80xf32> to vector<8x5xf32>
    %161 = vector.extract_strided_slice %142 {offsets = [0, 15], sizes = [8, 5], strides = [1, 1]} : vector<8x80xf32> to vector<8x5xf32>
    %cst_83 = arith.constant dense<0.000000e+00> : vector<8x8xf32>
    %162 = tpu.matmul %160, %143, %cst_83 {dimension_numbers = #tpu.dot_dimension_numbers<[1], [0], [0], [1], [0, 0, 1, 1], [], []>} : vector<8x5xf32>, vector<5x8xf32>, vector<8x8xf32> -> vector<8x8xf32>
    %cst_84 = arith.constant dense<0.000000e+00> : vector<8x8xf32>
    %163 = tpu.matmul %161, %144, %cst_84 {dimension_numbers = #tpu.dot_dimension_numbers<[1], [0], [0], [1], [0, 0, 1, 1], [], []>} : vector<8x5xf32>, vector<5x8xf32>, vector<8x8xf32> -> vector<8x8xf32>
    %164 = arith.addf %162, %163 : vector<8x8xf32>
    %165 = vector.extract_strided_slice %141 {offsets = [0, 20], sizes = [8, 5], strides = [1, 1]} : vector<8x80xf32> to vector<8x5xf32>
    %166 = vector.extract_strided_slice %142 {offsets = [0, 20], sizes = [8, 5], strides = [1, 1]} : vector<8x80xf32> to vector<8x5xf32>
    %cst_85 = arith.constant dense<0.000000e+00> : vector<8x8xf32>
    %167 = tpu.matmul %165, %143, %cst_85 {dimension_numbers = #tpu.dot_dimension_numbers<[1], [0], [0], [1], [0, 0, 1, 1], [], []>} : vector<8x5xf32>, vector<5x8xf32>, vector<8x8xf32> -> vector<8x8xf32>
    %cst_86 = arith.constant dense<0.000000e+00> : vector<8x8xf32>
    %168 = tpu.matmul %166, %144, %cst_86 {dimension_numbers = #tpu.dot_dimension_numbers<[1], [0], [0], [1], [0, 0, 1, 1], [], []>} : vector<8x5xf32>, vector<5x8xf32>, vector<8x8xf32> -> vector<8x8xf32>
    %169 = arith.addf %167, %168 : vector<8x8xf32>
    %170 = vector.extract_strided_slice %141 {offsets = [0, 25], sizes = [8, 5], strides = [1, 1]} : vector<8x80xf32> to vector<8x5xf32>
    %171 = vector.extract_strided_slice %142 {offsets = [0, 25], sizes = [8, 5], strides = [1, 1]} : vector<8x80xf32> to vector<8x5xf32>
    %cst_87 = arith.constant dense<0.000000e+00> : vector<8x8xf32>
    %172 = tpu.matmul %170, %143, %cst_87 {dimension_numbers = #tpu.dot_dimension_numbers<[1], [0], [0], [1], [0, 0, 1, 1], [], []>} : vector<8x5xf32>, vector<5x8xf32>, vector<8x8xf32> -> vector<8x8xf32>
    %cst_88 = arith.constant dense<0.000000e+00> : vector<8x8xf32>
    %173 = tpu.matmul %171, %144, %cst_88 {dimension_numbers = #tpu.dot_dimension_numbers<[1], [0], [0], [1], [0, 0, 1, 1], [], []>} : vector<8x5xf32>, vector<5x8xf32>, vector<8x8xf32> -> vector<8x8xf32>
    %174 = arith.addf %172, %173 : vector<8x8xf32>
    %175 = vector.extract_strided_slice %141 {offsets = [0, 30], sizes = [8, 5], strides = [1, 1]} : vector<8x80xf32> to vector<8x5xf32>
    %176 = vector.extract_strided_slice %142 {offsets = [0, 30], sizes = [8, 5], strides = [1, 1]} : vector<8x80xf32> to vector<8x5xf32>
    %cst_89 = arith.constant dense<0.000000e+00> : vector<8x8xf32>
    %177 = tpu.matmul %175, %143, %cst_89 {dimension_numbers = #tpu.dot_dimension_numbers<[1], [0], [0], [1], [0, 0, 1, 1], [], []>} : vector<8x5xf32>, vector<5x8xf32>, vector<8x8xf32> -> vector<8x8xf32>
    %cst_90 = arith.constant dense<0.000000e+00> : vector<8x8xf32>
    %178 = tpu.matmul %176, %144, %cst_90 {dimension_numbers = #tpu.dot_dimension_numbers<[1], [0], [0], [1], [0, 0, 1, 1], [], []>} : vector<8x5xf32>, vector<5x8xf32>, vector<8x8xf32> -> vector<8x8xf32>
    %179 = arith.addf %177, %178 : vector<8x8xf32>
    %180 = vector.extract_strided_slice %141 {offsets = [0, 35], sizes = [8, 5], strides = [1, 1]} : vector<8x80xf32> to vector<8x5xf32>
    %181 = vector.extract_strided_slice %142 {offsets = [0, 35], sizes = [8, 5], strides = [1, 1]} : vector<8x80xf32> to vector<8x5xf32>
    %cst_91 = arith.constant dense<0.000000e+00> : vector<8x8xf32>
    %182 = tpu.matmul %180, %143, %cst_91 {dimension_numbers = #tpu.dot_dimension_numbers<[1], [0], [0], [1], [0, 0, 1, 1], [], []>} : vector<8x5xf32>, vector<5x8xf32>, vector<8x8xf32> -> vector<8x8xf32>
    %cst_92 = arith.constant dense<0.000000e+00> : vector<8x8xf32>
    %183 = tpu.matmul %181, %144, %cst_92 {dimension_numbers = #tpu.dot_dimension_numbers<[1], [0], [0], [1], [0, 0, 1, 1], [], []>} : vector<8x5xf32>, vector<5x8xf32>, vector<8x8xf32> -> vector<8x8xf32>
    %184 = arith.addf %182, %183 : vector<8x8xf32>
    %185 = vector.extract_strided_slice %141 {offsets = [0, 40], sizes = [8, 5], strides = [1, 1]} : vector<8x80xf32> to vector<8x5xf32>
    %186 = vector.extract_strided_slice %142 {offsets = [0, 40], sizes = [8, 5], strides = [1, 1]} : vector<8x80xf32> to vector<8x5xf32>
    %cst_93 = arith.constant dense<0.000000e+00> : vector<8x8xf32>
    %187 = tpu.matmul %185, %143, %cst_93 {dimension_numbers = #tpu.dot_dimension_numbers<[1], [0], [0], [1], [0, 0, 1, 1], [], []>} : vector<8x5xf32>, vector<5x8xf32>, vector<8x8xf32> -> vector<8x8xf32>
    %cst_94 = arith.constant dense<0.000000e+00> : vector<8x8xf32>
    %188 = tpu.matmul %186, %144, %cst_94 {dimension_numbers = #tpu.dot_dimension_numbers<[1], [0], [0], [1], [0, 0, 1, 1], [], []>} : vector<8x5xf32>, vector<5x8xf32>, vector<8x8xf32> -> vector<8x8xf32>
    %189 = arith.addf %187, %188 : vector<8x8xf32>
    %190 = vector.extract_strided_slice %141 {offsets = [0, 45], sizes = [8, 5], strides = [1, 1]} : vector<8x80xf32> to vector<8x5xf32>
    %191 = vector.extract_strided_slice %142 {offsets = [0, 45], sizes = [8, 5], strides = [1, 1]} : vector<8x80xf32> to vector<8x5xf32>
    %cst_95 = arith.constant dense<0.000000e+00> : vector<8x8xf32>
    %192 = tpu.matmul %190, %143, %cst_95 {dimension_numbers = #tpu.dot_dimension_numbers<[1], [0], [0], [1], [0, 0, 1, 1], [], []>} : vector<8x5xf32>, vector<5x8xf32>, vector<8x8xf32> -> vector<8x8xf32>
    %cst_96 = arith.constant dense<0.000000e+00> : vector<8x8xf32>
    %193 = tpu.matmul %191, %144, %cst_96 {dimension_numbers = #tpu.dot_dimension_numbers<[1], [0], [0], [1], [0, 0, 1, 1], [], []>} : vector<8x5xf32>, vector<5x8xf32>, vector<8x8xf32> -> vector<8x8xf32>
    %194 = arith.addf %192, %193 : vector<8x8xf32>
    %195 = vector.extract_strided_slice %141 {offsets = [0, 50], sizes = [8, 5], strides = [1, 1]} : vector<8x80xf32> to vector<8x5xf32>
    %196 = vector.extract_strided_slice %142 {offsets = [0, 50], sizes = [8, 5], strides = [1, 1]} : vector<8x80xf32> to vector<8x5xf32>
    %cst_97 = arith.constant dense<0.000000e+00> : vector<8x8xf32>
    %197 = tpu.matmul %195, %143, %cst_97 {dimension_numbers = #tpu.dot_dimension_numbers<[1], [0], [0], [1], [0, 0, 1, 1], [], []>} : vector<8x5xf32>, vector<5x8xf32>, vector<8x8xf32> -> vector<8x8xf32>
    %cst_98 = arith.constant dense<0.000000e+00> : vector<8x8xf32>
    %198 = tpu.matmul %196, %144, %cst_98 {dimension_numbers = #tpu.dot_dimension_numbers<[1], [0], [0], [1], [0, 0, 1, 1], [], []>} : vector<8x5xf32>, vector<5x8xf32>, vector<8x8xf32> -> vector<8x8xf32>
    %199 = arith.addf %197, %198 : vector<8x8xf32>
    %200 = vector.extract_strided_slice %141 {offsets = [0, 55], sizes = [8, 5], strides = [1, 1]} : vector<8x80xf32> to vector<8x5xf32>
    %201 = vector.extract_strided_slice %142 {offsets = [0, 55], sizes = [8, 5], strides = [1, 1]} : vector<8x80xf32> to vector<8x5xf32>
    %cst_99 = arith.constant dense<0.000000e+00> : vector<8x8xf32>
    %202 = tpu.matmul %200, %143, %cst_99 {dimension_numbers = #tpu.dot_dimension_numbers<[1], [0], [0], [1], [0, 0, 1, 1], [], []>} : vector<8x5xf32>, vector<5x8xf32>, vector<8x8xf32> -> vector<8x8xf32>
    %cst_100 = arith.constant dense<0.000000e+00> : vector<8x8xf32>
    %203 = tpu.matmul %201, %144, %cst_100 {dimension_numbers = #tpu.dot_dimension_numbers<[1], [0], [0], [1], [0, 0, 1, 1], [], []>} : vector<8x5xf32>, vector<5x8xf32>, vector<8x8xf32> -> vector<8x8xf32>
    %204 = arith.addf %202, %203 : vector<8x8xf32>
    %205 = vector.extract_strided_slice %141 {offsets = [0, 60], sizes = [8, 5], strides = [1, 1]} : vector<8x80xf32> to vector<8x5xf32>
    %206 = vector.extract_strided_slice %142 {offsets = [0, 60], sizes = [8, 5], strides = [1, 1]} : vector<8x80xf32> to vector<8x5xf32>
    %cst_101 = arith.constant dense<0.000000e+00> : vector<8x8xf32>
    %207 = tpu.matmul %205, %143, %cst_101 {dimension_numbers = #tpu.dot_dimension_numbers<[1], [0], [0], [1], [0, 0, 1, 1], [], []>} : vector<8x5xf32>, vector<5x8xf32>, vector<8x8xf32> -> vector<8x8xf32>
    %cst_102 = arith.constant dense<0.000000e+00> : vector<8x8xf32>
    %208 = tpu.matmul %206, %144, %cst_102 {dimension_numbers = #tpu.dot_dimension_numbers<[1], [0], [0], [1], [0, 0, 1, 1], [], []>} : vector<8x5xf32>, vector<5x8xf32>, vector<8x8xf32> -> vector<8x8xf32>
    %209 = arith.addf %207, %208 : vector<8x8xf32>
    %210 = vector.extract_strided_slice %141 {offsets = [0, 65], sizes = [8, 5], strides = [1, 1]} : vector<8x80xf32> to vector<8x5xf32>
    %211 = vector.extract_strided_slice %142 {offsets = [0, 65], sizes = [8, 5], strides = [1, 1]} : vector<8x80xf32> to vector<8x5xf32>
    %cst_103 = arith.constant dense<0.000000e+00> : vector<8x8xf32>
    %212 = tpu.matmul %210, %143, %cst_103 {dimension_numbers = #tpu.dot_dimension_numbers<[1], [0], [0], [1], [0, 0, 1, 1], [], []>} : vector<8x5xf32>, vector<5x8xf32>, vector<8x8xf32> -> vector<8x8xf32>
    %cst_104 = arith.constant dense<0.000000e+00> : vector<8x8xf32>
    %213 = tpu.matmul %211, %144, %cst_104 {dimension_numbers = #tpu.dot_dimension_numbers<[1], [0], [0], [1], [0, 0, 1, 1], [], []>} : vector<8x5xf32>, vector<5x8xf32>, vector<8x8xf32> -> vector<8x8xf32>
    %214 = arith.addf %212, %213 : vector<8x8xf32>
    %215 = vector.extract_strided_slice %141 {offsets = [0, 70], sizes = [8, 5], strides = [1, 1]} : vector<8x80xf32> to vector<8x5xf32>
    %216 = vector.extract_strided_slice %142 {offsets = [0, 70], sizes = [8, 5], strides = [1, 1]} : vector<8x80xf32> to vector<8x5xf32>
    %cst_105 = arith.constant dense<0.000000e+00> : vector<8x8xf32>
    %217 = tpu.matmul %215, %143, %cst_105 {dimension_numbers = #tpu.dot_dimension_numbers<[1], [0], [0], [1], [0, 0, 1, 1], [], []>} : vector<8x5xf32>, vector<5x8xf32>, vector<8x8xf32> -> vector<8x8xf32>
    %cst_106 = arith.constant dense<0.000000e+00> : vector<8x8xf32>
    %218 = tpu.matmul %216, %144, %cst_106 {dimension_numbers = #tpu.dot_dimension_numbers<[1], [0], [0], [1], [0, 0, 1, 1], [], []>} : vector<8x5xf32>, vector<5x8xf32>, vector<8x8xf32> -> vector<8x8xf32>
    %219 = arith.addf %217, %218 : vector<8x8xf32>
    %220 = vector.extract_strided_slice %141 {offsets = [0, 75], sizes = [8, 5], strides = [1, 1]} : vector<8x80xf32> to vector<8x5xf32>
    %221 = vector.extract_strided_slice %142 {offsets = [0, 75], sizes = [8, 5], strides = [1, 1]} : vector<8x80xf32> to vector<8x5xf32>
    %cst_107 = arith.constant dense<0.000000e+00> : vector<8x8xf32>
    %222 = tpu.matmul %220, %143, %cst_107 {dimension_numbers = #tpu.dot_dimension_numbers<[1], [0], [0], [1], [0, 0, 1, 1], [], []>} : vector<8x5xf32>, vector<5x8xf32>, vector<8x8xf32> -> vector<8x8xf32>
    %cst_108 = arith.constant dense<0.000000e+00> : vector<8x8xf32>
    %223 = tpu.matmul %221, %144, %cst_108 {dimension_numbers = #tpu.dot_dimension_numbers<[1], [0], [0], [1], [0, 0, 1, 1], [], []>} : vector<8x5xf32>, vector<5x8xf32>, vector<8x8xf32> -> vector<8x8xf32>
    %224 = arith.addf %222, %223 : vector<8x8xf32>
    %225 = tpu.concatenate %149, %154, %159, %164, %169, %174, %179, %184, %189, %194, %199, %204, %209, %214, %219, %224 in 1 : vector<8x8xf32>, vector<8x8xf32>, vector<8x8xf32>, vector<8x8xf32>, vector<8x8xf32>, vector<8x8xf32>, vector<8x8xf32>, vector<8x8xf32>, vector<8x8xf32>, vector<8x8xf32>, vector<8x8xf32>, vector<8x8xf32>, vector<8x8xf32>, vector<8x8xf32>, vector<8x8xf32>, vector<8x8xf32> -> vector<8x128xf32>
    %c0_109 = arith.constant 0 : index
    %c0_110 = arith.constant 0 : index
    %226 = vector.load %arg14[%c0_109, %c0_110] : memref<8x128xf32, #tpu.memory_space<vmem>>, vector<8x128xf32>
    tpu.vector_store %arg14[%c0_109, %c0_110], %225 {strides = array<i32>} : memref<8x128xf32, #tpu.memory_space<vmem>>, vector<8x128xf32>,
    return
  }
}

</mosaic_0001>

<llo_original>
// kernel: custom-call.4
$region0: #{custom-call.4}
  %s0 = inlined_call_operand.hbm [shape: c64[2,8,8,5], index: 0, kind: input, shape index: {}]
  %s1 = inlined_call_operand.vmem [shape: f32[2,8,8,5], index: 1, kind: output, shape index: {}]
  $region1: #{custom-call.4} parent=0
    #allocation0 [shape = 's32[1]{0}', space=sflag, size = 0x4, scoped, tag = 'scoped memory for custom-call.4']
    %2 = vsyncpa [#allocation0], 0
    %s3 = sshll.u32 %s1, 4
    %s4 = int_to_ptr.vmem [resolvable:$true] %s3
    %6 = dma.hbm_to_vmem [thread:$0]  %s0, 1280, %s4, [#allocation0]
    %7 = dma.done [#allocation0], 1280
    %8 = vsyncpa [#allocation0], 1

// kernel: custom-call.5
$region0: #{custom-call.5}
  %s0 = inlined_call_operand.hbm [shape: c64[2,8,8,5], index: 0, kind: input, shape index: {}]
  %s1 = inlined_call_operand.vmem [shape: f32[2,8,8,5], index: 1, kind: output, shape index: {}]
  %s2 = scalar_lea.hbm %s0, 1280
  $region1: #{custom-call.5} parent=0
    #allocation0 [shape = 's32[1]{0}', space=sflag, size = 0x4, scoped, tag = 'scoped memory for custom-call.5']
    %3 = vsyncpa [#allocation0], 0
    %s4 = sshll.u32 %s1, 4
    %s5 = int_to_ptr.vmem [resolvable:$true] %s4
    %7 = dma.hbm_to_vmem [thread:$0]  %s2, 1280, %s5, [#allocation0]
    %8 = dma.done [#allocation0], 1280
    %9 = vsyncpa [#allocation0], 1

// kernel: custom-call.1
$region0: #{custom-call.1}
  %s0 = inlined_call_operand.hbm [shape: c64[2,4,16,9], index: 0, kind: input, shape index: {}]
  %s1 = inlined_call_operand.vmem [shape: f32[2,4,16,9], index: 1, kind: output, shape index: {}]
  %s2 = scalar_lea.hbm %s0, 1152
  $region1: #{custom-call.1} parent=0
    #allocation0 [shape = 's32[1]{0}', space=sflag, size = 0x4, scoped, tag = 'scoped memory for custom-call.1']
    %3 = vsyncpa [#allocation0], 0
    %s4 = sshll.u32 %s1, 4
    %s5 = int_to_ptr.vmem [resolvable:$true] %s4
    %7 = dma.hbm_to_vmem [thread:$0]  %s2, 1152, %s5, [#allocation0]
    %8 = dma.done [#allocation0], 1152
    %9 = vsyncpa [#allocation0], 1

// kernel: custom-call
$region0: #{custom-call}
  %s0 = inlined_call_operand.hbm [shape: c64[2,4,16,9], index: 0, kind: input, shape index: {}]
  %s1 = inlined_call_operand.vmem [shape: f32[2,4,16,9], index: 1, kind: output, shape index: {}]
  $region1: #{custom-call} parent=0
    #allocation0 [shape = 's32[1]{0}', space=sflag, size = 0x4, scoped, tag = 'scoped memory for custom-call']
    %2 = vsyncpa [#allocation0], 0
    %s3 = sshll.u32 %s1, 4
    %s4 = int_to_ptr.vmem [resolvable:$true] %s3
    %6 = dma.hbm_to_vmem [thread:$0]  %s0, 1152, %s4, [#allocation0]
    %7 = dma.done [#allocation0], 1152
    %8 = vsyncpa [#allocation0], 1

// kernel: custom-call.2
$region0: #{custom-call.2}
  %s0 = inlined_call_operand.hbm [shape: c64[2,5,8,9], index: 0, kind: input, shape index: {}]
  %s1 = inlined_call_operand.vmem [shape: f32[2,5,8,9], index: 1, kind: output, shape index: {}]
  $region1: #{custom-call.2} parent=0
    #allocation0 [shape = 's32[1]{0}', space=sflag, size = 0x4, scoped, tag = 'scoped memory for custom-call.2']
    %2 = vsyncpa [#allocation0], 0
    %s3 = sshll.u32 %s1, 4
    %s4 = int_to_ptr.vmem [resolvable:$true] %s3
    %6 = dma.hbm_to_vmem [thread:$0]  %s0, 1280, %s4, [#allocation0]
    %7 = dma.done [#allocation0], 1280
    %8 = vsyncpa [#allocation0], 1

// kernel: custom-call.3
$region0: #{custom-call.3}
  %s0 = inlined_call_operand.hbm [shape: c64[2,5,8,9], index: 0, kind: input, shape index: {}]
  %s1 = inlined_call_operand.vmem [shape: f32[2,5,8,9], index: 1, kind: output, shape index: {}]
  %s2 = scalar_lea.hbm %s0, 1280
  $region1: #{custom-call.3} parent=0
    #allocation0 [shape = 's32[1]{0}', space=sflag, size = 0x4, scoped, tag = 'scoped memory for custom-call.3']
    %3 = vsyncpa [#allocation0], 0
    %s4 = sshll.u32 %s1, 4
    %s5 = int_to_ptr.vmem [resolvable:$true] %s4
    %7 = dma.hbm_to_vmem [thread:$0]  %s2, 1280, %s5, [#allocation0]
    %8 = dma.done [#allocation0], 1280
    %9 = vsyncpa [#allocation0], 1

// kernel: model_forward.1
$region0: #{model_forward.1}
  #allocation0 [shape = 'u32[]', space=smem, size = 0x4, offset = 0x4, fixed_abs, tag = 'smem constant byte address 0x4 - core index']
  #allocation1 [shape = 'u32[144,128]{1,0:T(1,128)}', space=vmem, size = 0x12000, scoped, tag = 'internal scratch']
  %s0 = inlined_call_operand.vmem [shape: f32[32,72], index: 0, kind: input, shape index: {}]
  %s1 = inlined_call_operand.vmem [shape: f32[32,32], index: 1, kind: input, shape index: {}]
  %s2 = inlined_call_operand.vmem [shape: f32[9,16], index: 2, kind: input, shape index: {}]
  %s3 = inlined_call_operand.vmem [shape: f32[9,16], index: 3, kind: input, shape index: {}]
  %s4 = inlined_call_operand.vmem [shape: f32[16,144], index: 4, kind: input, shape index: {}]
  %s5 = inlined_call_operand.vmem [shape: f32[16,16], index: 5, kind: input, shape index: {}]
  %s6 = inlined_call_operand.vmem [shape: f32[9,16], index: 6, kind: input, shape index: {}]
  %s7 = inlined_call_operand.vmem [shape: f32[9,16], index: 7, kind: input, shape index: {}]
  %s8 = inlined_call_operand.vmem [shape: f32[16,80], index: 8, kind: input, shape index: {}]
  %s9 = inlined_call_operand.vmem [shape: f32[16,16], index: 9, kind: input, shape index: {}]
  %s10 = inlined_call_operand.vmem [shape: f32[5,8], index: 10, kind: input, shape index: {}]
  %s11 = inlined_call_operand.vmem [shape: f32[5,8], index: 11, kind: input, shape index: {}]
  %s12 = inlined_call_operand.vmem [shape: f32[16,128], index: 12, kind: output, shape index: {0}]
  %s13 = inlined_call_operand.vmem [shape: f32[8,256], index: 13, kind: output, shape index: {1}]
  %s14 = inlined_call_operand.vmem [shape: f32[8,128], index: 14, kind: output, shape index: {2}]
  %15 = xla_tuple %s12, %s13, %s14
  %s16 = sld [smem:[#allocation0]]
  $region74: #{model_forward.1} parent=0
    _
  %s18 = ssub.s32 1, %s16
  %s19 = scalar_select 0, %s18, %s16
  // Predicated region
  $region2: #{model_forward.1} parent=0 // pred_check
    _
  $region3: #{model_forward.1} parent=0 // pred_check_branch
    %21 = sbr.rel (0) target = $region5
  $region4: #{model_forward.1} parent=0 // pred_region
    _
  $region5: #{model_forward.1} parent=0 // pred_fallthru
    _
  // Predicated region
  $region6: #{model_forward.1} parent=0 // pred_check
    _
  $region7: #{model_forward.1} parent=0 // pred_check_branch
    %23 = sbr.rel (0) target = $region9
  $region8: #{model_forward.1} parent=0 // pred_region
    _
  $region9: #{model_forward.1} parent=0 // pred_fallthru
    _
  // Predicated region
  $region10: #{model_forward.1} parent=0 // pred_check
    _
  $region11: #{model_forward.1} parent=0 // pred_check_branch
    %25 = sbr.rel (0) target = $region13
  $region12: #{model_forward.1} parent=0 // pred_region
    _
  $region13: #{model_forward.1} parent=0 // pred_fallthru
    _
  // Predicated region
  $region14: #{model_forward.1} parent=0 // pred_check
    _
  $region15: #{model_forward.1} parent=0 // pred_check_branch
    %27 = sbr.rel (0) target = $region17
  $region16: #{model_forward.1} parent=0 // pred_region
    _
  $region17: #{model_forward.1} parent=0 // pred_fallthru
    _
  // Predicated region
  $region18: #{model_forward.1} parent=0 // pred_check
    _
  $region19: #{model_forward.1} parent=0 // pred_check_branch
    %29 = sbr.rel (0) target = $region21
  $region20: #{model_forward.1} parent=0 // pred_region
    _
  $region21: #{model_forward.1} parent=0 // pred_fallthru
    _
  // Predicated region
  $region22: #{model_forward.1} parent=0 // pred_check
    _
  $region23: #{model_forward.1} parent=0 // pred_check_branch
    %31 = sbr.rel (0) target = $region25
  $region24: #{model_forward.1} parent=0 // pred_region
    _
  $region25: #{model_forward.1} parent=0 // pred_fallthru
    _
  // Predicated region
  $region26: #{model_forward.1} parent=0 // pred_check
    _
  $region27: #{model_forward.1} parent=0 // pred_check_branch
    %33 = sbr.rel (0) target = $region29
  $region28: #{model_forward.1} parent=0 // pred_region
    _
  $region29: #{model_forward.1} parent=0 // pred_fallthru
    _
  // Predicated region
  $region30: #{model_forward.1} parent=0 // pred_check
    _
  $region31: #{model_forward.1} parent=0 // pred_check_branch
    %35 = sbr.rel (0) target = $region33
  $region32: #{model_forward.1} parent=0 // pred_region
    _
  $region33: #{model_forward.1} parent=0 // pred_fallthru
    _
  // Predicated region
  $region34: #{model_forward.1} parent=0 // pred_check
    _
  $region35: #{model_forward.1} parent=0 // pred_check_branch
    %37 = sbr.rel (0) target = $region37
  $region36: #{model_forward.1} parent=0 // pred_region
    _
  $region37: #{model_forward.1} parent=0 // pred_fallthru
    _
  // Predicated region
  $region38: #{model_forward.1} parent=0 // pred_check
    _
  $region39: #{model_forward.1} parent=0 // pred_check_branch
    %39 = sbr.rel (0) target = $region41
  $region40: #{model_forward.1} parent=0 // pred_region
    _
  $region41: #{model_forward.1} parent=0 // pred_fallthru
    _
  // Predicated region
  $region42: #{model_forward.1} parent=0 // pred_check
    _
  $region43: #{model_forward.1} parent=0 // pred_check_branch
    %41 = sbr.rel (0) target = $region45
  $region44: #{model_forward.1} parent=0 // pred_region
    _
  $region45: #{model_forward.1} parent=0 // pred_fallthru
    _
  // Predicated region
  $region46: #{model_forward.1} parent=0 // pred_check
    _
  $region47: #{model_forward.1} parent=0 // pred_check_branch
    %43 = sbr.rel (0) target = $region49
  $region48: #{model_forward.1} parent=0 // pred_region
    _
  $region49: #{model_forward.1} parent=0 // pred_fallthru
    _
  %v44 = vld [vmem:[%s1] sm:$0xff]
  %v45 = vld [vmem:[%s1 + $0x8] sm:$0xff]
  %v46 = vld [vmem:[%s1 + $0x10] sm:$0xff]
  %v47 = vld [vmem:[%s1 + $0x18] sm:$0xff]
  %v48 = vld [vmem:[%s0] sm:$0xff]
  %v49 = vld [vmem:[%s0 + $0x8] sm:$0xff]
  %v50 = vld [vmem:[%s0 + $0x10] sm:$0xff]
  %v51 = vld [vmem:[%s0 + $0x18] sm:$0xff]
  %vm52 = vcmask 261120
  %v54 = vsel %vm52, %v44, 0
  %v57 = vsel %vm52, %v45, 0
  %v60 = vsel %vm52, %v46, 0
  %v63 = vsel %vm52, %v47, 0
  %65 = vmatprep.subr.mxu0 0.0
  %66 = vmatpush1.msra.mxu0 %v48
  %67 = vmatprep.subr.mxu0 0.0
  %68 = vmatpush1.msra.mxu0 %v49
  %69 = vmatprep.subr.mxu0 0.0
  %70 = vmatpush1.msra.mxu0 %v50
  %71 = vmatprep.subr.mxu0 0.0
  %72 = vmatpush1.msra.mxu0 %v51
  %73 = vmatprep.subr.mxu0 0.0
  %74 = vmatpush1.msra.mxu0 0.0
  %75 = vmatprep.subr.mxu0 0.0
  %76 = vmatpush1.msra.mxu0 0.0
  %77 = vmatprep.subr.mxu0 0.0
  %78 = vmatpush1.msra.mxu0 0.0
  %79 = vmatprep.subr.mxu0 0.0
  %80 = vmatpush1.msra.mxu0 0.0
  %81 = vmatprep.subr.mxu0 0.0
  %82 = vmatpush1.msra.mxu0 0.0
  %83 = vmatprep.subr.mxu0 0.0
  %84 = vmatpush1.msra.mxu0 0.0
  %85 = vmatprep.subr.mxu0 0.0
  %86 = vmatpush1.msra.mxu0 0.0
  %87 = vmatprep.subr.mxu0 0.0
  %88 = vmatpush1.msra.mxu0 0.0
  %89 = vmatprep.subr.mxu0 0.0
  %90 = vmatpush1.msra.mxu0 0.0
  %91 = vmatprep.subr.mxu0 0.0
  %92 = vmatpush1.msra.mxu0 0.0
  %93 = vmatprep.subr.mxu0 0.0
  %94 = vmatpush1.msra.mxu0 0.0
  %95 = vmatprep.subr.mxu0 0.0
  %96 = vmatpush1.msra.mxu0 0.0
  %97 = vmatprep.subr.mxu0 0.0
  %98 = vmatpush1.msra.mxu0 0.0
  %99 = vmatprep.subr.mxu0 0.0
  %100 = vmatpush1.msra.mxu0 0.0
  %101 = vmatprep.subr.mxu0 0.0
  %102 = vmatpush1.msra.mxu0 0.0
  %103 = vmatprep.subr.mxu0 0.0
  %104 = vmatpush1.msra.mxu0 0.0
  %105 = vmatprep.subr.mxu0 0.0
  %106 = vmatpush1.msra.mxu0 0.0
  %107 = vmatprep.subr.mxu0 0.0
  %108 = vmatpush1.msra.mxu0 0.0
  %109 = vmatprep.subr.mxu0 0.0
  %110 = vmatpush1.msra.mxu0 0.0
  %111 = vmatprep.subr.mxu0 0.0
  %112 = vmatpush1.msra.mxu0 0.0
  %113 = vmatprep.subr.mxu0 0.0
  %114 = vmatpush1.msra.mxu0 0.0
  %115 = vmatprep.subr.mxu0 0.0
  %116 = vmatpush1.msra.mxu0 0.0
  %117 = vmatprep.subr.mxu0 0.0
  %118 = vmatpush1.msra.mxu0 0.0
  %119 = vmatprep.subr.mxu0 0.0
  %120 = vmatpush1.msra.mxu0 0.0
  %121 = vmatprep.subr.mxu0 0.0
  %122 = vmatpush1.msra.mxu0 0.0
  %123 = vmatprep.subr.mxu0 0.0
  %124 = vmatpush1.msra.mxu0 0.0
  %125 = vmatprep.subr.mxu0 0.0
  %126 = vmatpush1.msra.mxu0 0.0
  %127 = vmatprep.subr.mxu0 0.0
  %128 = vmatpush1.msra.mxu0 0.0
  %129 = vmatprep.mubr.f32.mxu0 0.0
  %130 = vmatmul.mubr.f32.gmra.mrb[0].mxu0 %v54
  %v131 = vpop.f32.mrb[0].mxu0
  %v132 = vadd.f32 0.0, %v131
  %v133 = vpop.f32.mrb[0].mxu0
  %134 = vmatprep.mubr.f32.mxu0 0.0
  %135 = vmatmul.mubr.f32.gmra.mrb[0].mxu0 %v57
  %v136 = vpop.f32.mrb[0].mxu0
  %v137 = vadd.f32 0.0, %v136
  %v138 = vpop.f32.mrb[0].mxu0
  %139 = vmatprep.mubr.f32.mxu0 0.0
  %140 = vmatmul.mubr.f32.gmra.mrb[0].mxu0 %v60
  %v141 = vpop.f32.mrb[0].mxu0
  %v142 = vadd.f32 0.0, %v141
  %v143 = vpop.f32.mrb[0].mxu0
  %144 = vmatprep.mubr.f32.mxu0 0.0
  %145 = vmatmul.mubr.f32.gmra.mrb[0].mxu0 %v63
  %v146 = vpop.f32.mrb[0].mxu0
  %v147 = vadd.f32 0.0, %v146
  %v148 = vpop.f32.mrb[0].mxu0
  %149 = vdwg.mxu0
  %v150 = vld [vmem:[%s2] sm:$0xff]
  %v151 = vld [vmem:[%s2 + $0x8] sm:$0x1]
  %v152 = vld [vmem:[%s3] sm:$0xff]
  %v153 = vld [vmem:[%s3 + $0x8] sm:$0x1]
  %vm154 = vcmask 72704
  %v156 = vsel %vm154, %v142, 0
  %v159 = vsel %vm154, %v147, 0
  %vm161 = vcmask 1040384
  %v163 = vsel %vm161, %v153, 0
  %165 = vmatprep.subr.mxu0 0.0
  %166 = vmatpush1.msra.mxu0 %v152
  %167 = vmatprep.subr.mxu0 0.0
  %168 = vmatpush1.msra.mxu0 %v163
  %169 = vmatprep.subr.mxu0 0.0
  %170 = vmatpush1.msra.mxu0 0.0
  %171 = vmatprep.subr.mxu0 0.0
  %172 = vmatpush1.msra.mxu0 0.0
  %173 = vmatprep.subr.mxu0 0.0
  %174 = vmatpush1.msra.mxu0 0.0
  %175 = vmatprep.subr.mxu0 0.0
  %176 = vmatpush1.msra.mxu0 0.0
  %177 = vmatprep.subr.mxu0 0.0
  %178 = vmatpush1.msra.mxu0 0.0
  %179 = vmatprep.subr.mxu0 0.0
  %180 = vmatpush1.msra.mxu0 0.0
  %181 = vmatprep.subr.mxu0 0.0
  %182 = vmatpush1.msra.mxu0 0.0
  %183 = vmatprep.subr.mxu0 0.0
  %184 = vmatpush1.msra.mxu0 0.0
  %185 = vmatprep.subr.mxu0 0.0
  %186 = vmatpush1.msra.mxu0 0.0
  %187 = vmatprep.subr.mxu0 0.0
  %188 = vmatpush1.msra.mxu0 0.0
  %189 = vmatprep.subr.mxu0 0.0
  %190 = vmatpush1.msra.mxu0 0.0
  %191 = vmatprep.subr.mxu0 0.0
  %192 = vmatpush1.msra.mxu0 0.0
  %193 = vmatprep.subr.mxu0 0.0
  %194 = vmatpush1.msra.mxu0 0.0
  %195 = vmatprep.subr.mxu0 0.0
  %196 = vmatpush1.msra.mxu0 0.0
  %197 = vmatprep.subr.mxu0 0.0
  %198 = vmatpush1.msra.mxu0 0.0
  %199 = vmatprep.subr.mxu0 0.0
  %200 = vmatpush1.msra.mxu0 0.0
  %201 = vmatprep.subr.mxu0 0.0
  %202 = vmatpush1.msra.mxu0 0.0
  %203 = vmatprep.subr.mxu0 0.0
  %204 = vmatpush1.msra.mxu0 0.0
  %205 = vmatprep.subr.mxu0 0.0
  %206 = vmatpush1.msra.mxu0 0.0
  %207 = vmatprep.subr.mxu0 0.0
  %208 = vmatpush1.msra.mxu0 0.0
  %209 = vmatprep.subr.mxu0 0.0
  %210 = vmatpush1.msra.mxu0 0.0
  %211 = vmatprep.subr.mxu0 0.0
  %212 = vmatpush1.msra.mxu0 0.0
  %213 = vmatprep.subr.mxu0 0.0
  %214 = vmatpush1.msra.mxu0 0.0
  %215 = vmatprep.subr.mxu0 0.0
  %216 = vmatpush1.msra.mxu0 0.0
  %217 = vmatprep.subr.mxu0 0.0
  %218 = vmatpush1.msra.mxu0 0.0
  %219 = vmatprep.subr.mxu0 0.0
  %220 = vmatpush1.msra.mxu0 0.0
  %221 = vmatprep.subr.mxu0 0.0
  %222 = vmatpush1.msra.mxu0 0.0
  %223 = vmatprep.subr.mxu0 0.0
  %224 = vmatpush1.msra.mxu0 0.0
  %225 = vmatprep.subr.mxu0 0.0
  %226 = vmatpush1.msra.mxu0 0.0
  %227 = vmatprep.subr.mxu0 0.0
  %228 = vmatpush1.msra.mxu0 0.0
  %229 = vmatprep.mubr.f32.mxu0 0.0
  %230 = vmatmul.mubr.f32.gmra.mrb[0].mxu0 %v156
  %v231 = vpop.f32.mrb[0].mxu0
  %v232 = vadd.f32 0.0, %v231
  %v233 = vpop.f32.mrb[0].mxu0
  %234 = vmatprep.mubr.f32.mxu0 0.0
  %235 = vmatmul.mubr.f32.gmra.mrb[0].mxu0 %v159
  %v236 = vpop.f32.mrb[0].mxu0
  %v237 = vadd.f32 0.0, %v236
  %v238 = vpop.f32.mrb[0].mxu0
  %239 = vdwg.mxu0
  %v241 = vsel %vm154, %v132, 0
  %v244 = vsel %vm154, %v137, 0
  %v247 = vsel %vm161, %v151, 0
  %249 = vmatprep.subr.mxu0 0.0
  %250 = vmatpush1.msra.mxu0 %v150
  %251 = vmatprep.subr.mxu0 0.0
  %252 = vmatpush1.msra.mxu0 %v247
  %253 = vmatprep.subr.mxu0 0.0
  %254 = vmatpush1.msra.mxu0 0.0
  %255 = vmatprep.subr.mxu0 0.0
  %256 = vmatpush1.msra.mxu0 0.0
  %257 = vmatprep.subr.mxu0 0.0
  %258 = vmatpush1.msra.mxu0 0.0
  %259 = vmatprep.subr.mxu0 0.0
  %260 = vmatpush1.msra.mxu0 0.0
  %261 = vmatprep.subr.mxu0 0.0
  %262 = vmatpush1.msra.mxu0 0.0
  %263 = vmatprep.subr.mxu0 0.0
  %264 = vmatpush1.msra.mxu0 0.0
  %265 = vmatprep.subr.mxu0 0.0
  %266 = vmatpush1.msra.mxu0 0.0
  %267 = vmatprep.subr.mxu0 0.0
  %268 = vmatpush1.msra.mxu0 0.0
  %269 = vmatprep.subr.mxu0 0.0
  %270 = vmatpush1.msra.mxu0 0.0
  %271 = vmatprep.subr.mxu0 0.0
  %272 = vmatpush1.msra.mxu0 0.0
  %273 = vmatprep.subr.mxu0 0.0
  %274 = vmatpush1.msra.mxu0 0.0
  %275 = vmatprep.subr.mxu0 0.0
  %276 = vmatpush1.msra.mxu0 0.0
  %277 = vmatprep.subr.mxu0 0.0
  %278 = vmatpush1.msra.mxu0 0.0
  %279 = vmatprep.subr.mxu0 0.0
  %280 = vmatpush1.msra.mxu0 0.0
  %281 = vmatprep.subr.mxu0 0.0
  %282 = vmatpush1.msra.mxu0 0.0
  %283 = vmatprep.subr.mxu0 0.0
  %284 = vmatpush1.msra.mxu0 0.0
  %285 = vmatprep.subr.mxu0 0.0
  %286 = vmatpush1.msra.mxu0 0.0
  %287 = vmatprep.subr.mxu0 0.0
  %288 = vmatpush1.msra.mxu0 0.0
  %289 = vmatprep.subr.mxu0 0.0
  %290 = vmatpush1.msra.mxu0 0.0
  %291 = vmatprep.subr.mxu0 0.0
  %292 = vmatpush1.msra.mxu0 0.0
  %293 = vmatprep.subr.mxu0 0.0
  %294 = vmatpush1.msra.mxu0 0.0
  %295 = vmatprep.subr.mxu0 0.0
  %296 = vmatpush1.msra.mxu0 0.0
  %297 = vmatprep.subr.mxu0 0.0
  %298 = vmatpush1.msra.mxu0 0.0
  %299 = vmatprep.subr.mxu0 0.0
  %300 = vmatpush1.msra.mxu0 0.0
  %301 = vmatprep.subr.mxu0 0.0
  %302 = vmatpush1.msra.mxu0 0.0
  %303 = vmatprep.subr.mxu0 0.0
  %304 = vmatpush1.msra.mxu0 0.0
  %305 = vmatprep.subr.mxu0 0.0
  %306 = vmatpush1.msra.mxu0 0.0
  %307 = vmatprep.subr.mxu0 0.0
  %308 = vmatpush1.msra.mxu0 0.0
  %309 = vmatprep.subr.mxu0 0.0
  %310 = vmatpush1.msra.mxu0 0.0
  %311 = vmatprep.subr.mxu0 0.0
  %312 = vmatpush1.msra.mxu0 0.0
  %313 = vmatprep.mubr.f32.mxu0 0.0
  %314 = vmatmul.mubr.f32.gmra.mrb[0].mxu0 %v241
  %v315 = vpop.f32.mrb[0].mxu0
  %v316 = vadd.f32 %v232, %v315
  %v317 = vpop.f32.mrb[0].mxu0
  %318 = vmatprep.mubr.f32.mxu0 0.0
  %319 = vmatmul.mubr.f32.gmra.mrb[0].mxu0 %v244
  %v320 = vpop.f32.mrb[0].mxu0
  %v321 = vadd.f32 %v237, %v320
  %v322 = vpop.f32.mrb[0].mxu0
  %323 = vdwg.mxu0
  %324 = vrot.lane.b32.xlu0 %v142, 119
  %v325 = vpop.permute.xlu0 %324
  %326 = vrot.lane.b32.xlu0 %v147, 119
  %v327 = vpop.permute.xlu0 %326
  %v328 = vsel %vm154, %v325, 0
  %v330 = vsel %vm154, %v327, 0
  %332 = vmatprep.subr.mxu0 0.0
  %333 = vmatpush1.msra.mxu0 %v152
  %334 = vmatprep.subr.mxu0 0.0
  %335 = vmatpush1.msra.mxu0 %v163
  %336 = vmatprep.subr.mxu0 0.0
  %337 = vmatpush1.msra.mxu0 0.0
  %338 = vmatprep.subr.mxu0 0.0
  %339 = vmatpush1.msra.mxu0 0.0
  %340 = vmatprep.subr.mxu0 0.0
  %341 = vmatpush1.msra.mxu0 0.0
  %342 = vmatprep.subr.mxu0 0.0
  %343 = vmatpush1.msra.mxu0 0.0
  %344 = vmatprep.subr.mxu0 0.0
  %345 = vmatpush1.msra.mxu0 0.0
  %346 = vmatprep.subr.mxu0 0.0
  %347 = vmatpush1.msra.mxu0 0.0
  %348 = vmatprep.subr.mxu0 0.0
  %349 = vmatpush1.msra.mxu0 0.0
  %350 = vmatprep.subr.mxu0 0.0
  %351 = vmatpush1.msra.mxu0 0.0
  %352 = vmatprep.subr.mxu0 0.0
  %353 = vmatpush1.msra.mxu0 0.0
  %354 = vmatprep.subr.mxu0 0.0
  %355 = vmatpush1.msra.mxu0 0.0
  %356 = vmatprep.subr.mxu0 0.0
  %357 = vmatpush1.msra.mxu0 0.0
  %358 = vmatprep.subr.mxu0 0.0
  %359 = vmatpush1.msra.mxu0 0.0
  %360 = vmatprep.subr.mxu0 0.0
  %361 = vmatpush1.msra.mxu0 0.0
  %362 = vmatprep.subr.mxu0 0.0
  %363 = vmatpush1.msra.mxu0 0.0
  %364 = vmatprep.subr.mxu0 0.0
  %365 = vmatpush1.msra.mxu0 0.0
  %366 = vmatprep.subr.mxu0 0.0
  %367 = vmatpush1.msra.mxu0 0.0
  %368 = vmatprep.subr.mxu0 0.0
  %369 = vmatpush1.msra.mxu0 0.0
  %370 = vmatprep.subr.mxu0 0.0
  %371 = vmatpush1.msra.mxu0 0.0
  %372 = vmatprep.subr.mxu0 0.0
  %373 = vmatpush1.msra.mxu0 0.0
  %374 = vmatprep.subr.mxu0 0.0
  %375 = vmatpush1.msra.mxu0 0.0
  %376 = vmatprep.subr.mxu0 0.0
  %377 = vmatpush1.msra.mxu0 0.0
  %378 = vmatprep.subr.mxu0 0.0
  %379 = vmatpush1.msra.mxu0 0.0
  %380 = vmatprep.subr.mxu0 0.0
  %381 = vmatpush1.msra.mxu0 0.0
  %382 = vmatprep.subr.mxu0 0.0
  %383 = vmatpush1.msra.mxu0 0.0
  %384 = vmatprep.subr.mxu0 0.0
  %385 = vmatpush1.msra.mxu0 0.0
  %386 = vmatprep.subr.mxu0 0.0
  %387 = vmatpush1.msra.mxu0 0.0
  %388 = vmatprep.subr.mxu0 0.0
  %389 = vmatpush1.msra.mxu0 0.0
  %390 = vmatprep.subr.mxu0 0.0
  %391 = vmatpush1.msra.mxu0 0.0
  %392 = vmatprep.subr.mxu0 0.0
  %393 = vmatpush1.msra.mxu0 0.0
  %394 = vmatprep.subr.mxu0 0.0
  %395 = vmatpush1.msra.mxu0 0.0
  %396 = vmatprep.mubr.f32.mxu0 0.0
  %397 = vmatmul.mubr.f32.gmra.mrb[0].mxu0 %v328
  %v398 = vpop.f32.mrb[0].mxu0
  %v399 = vadd.f32 0.0, %v398
  %v400 = vpop.f32.mrb[0].mxu0
  %401 = vmatprep.mubr.f32.mxu0 0.0
  %402 = vmatmul.mubr.f32.gmra.mrb[0].mxu0 %v330
  %v403 = vpop.f32.mrb[0].mxu0
  %v404 = vadd.f32 0.0, %v403
  %v405 = vpop.f32.mrb[0].mxu0
  %406 = vdwg.mxu0
  %407 = vrot.lane.b32.xlu0 %v132, 119
  %v408 = vpop.permute.xlu0 %407
  %409 = vrot.lane.b32.xlu0 %v137, 119
  %v410 = vpop.permute.xlu0 %409
  %v411 = vsel %vm154, %v408, 0
  %v413 = vsel %vm154, %v410, 0
  %415 = vmatprep.subr.mxu0 0.0
  %416 = vmatpush1.msra.mxu0 %v150
  %417 = vmatprep.subr.mxu0 0.0
  %418 = vmatpush1.msra.mxu0 %v247
  %419 = vmatprep.subr.mxu0 0.0
  %420 = vmatpush1.msra.mxu0 0.0
  %421 = vmatprep.subr.mxu0 0.0
  %422 = vmatpush1.msra.mxu0 0.0
  %423 = vmatprep.subr.mxu0 0.0
  %424 = vmatpush1.msra.mxu0 0.0
  %425 = vmatprep.subr.mxu0 0.0
  %426 = vmatpush1.msra.mxu0 0.0
  %427 = vmatprep.subr.mxu0 0.0
  %428 = vmatpush1.msra.mxu0 0.0
  %429 = vmatprep.subr.mxu0 0.0
  %430 = vmatpush1.msra.mxu0 0.0
  %431 = vmatprep.subr.mxu0 0.0
  %432 = vmatpush1.msra.mxu0 0.0
  %433 = vmatprep.subr.mxu0 0.0
  %434 = vmatpush1.msra.mxu0 0.0
  %435 = vmatprep.subr.mxu0 0.0
  %436 = vmatpush1.msra.mxu0 0.0
  %437 = vmatprep.subr.mxu0 0.0
  %438 = vmatpush1.msra.mxu0 0.0
  %439 = vmatprep.subr.mxu0 0.0
  %440 = vmatpush1.msra.mxu0 0.0
  %441 = vmatprep.subr.mxu0 0.0
  %442 = vmatpush1.msra.mxu0 0.0
  %443 = vmatprep.subr.mxu0 0.0
  %444 = vmatpush1.msra.mxu0 0.0
  %445 = vmatprep.subr.mxu0 0.0
  %446 = vmatpush1.msra.mxu0 0.0
  %447 = vmatprep.subr.mxu0 0.0
  %448 = vmatpush1.msra.mxu0 0.0
  %449 = vmatprep.subr.mxu0 0.0
  %450 = vmatpush1.msra.mxu0 0.0
  %451 = vmatprep.subr.mxu0 0.0
  %452 = vmatpush1.msra.mxu0 0.0
  %453 = vmatprep.subr.mxu0 0.0
  %454 = vmatpush1.msra.mxu0 0.0
  %455 = vmatprep.subr.mxu0 0.0
  %456 = vmatpush1.msra.mxu0 0.0
  %457 = vmatprep.subr.mxu0 0.0
  %458 = vmatpush1.msra.mxu0 0.0
  %459 = vmatprep.subr.mxu0 0.0
  %460 = vmatpush1.msra.mxu0 0.0
  %461 = vmatprep.subr.mxu0 0.0
  %462 = vmatpush1.msra.mxu0 0.0
  %463 = vmatprep.subr.mxu0 0.0
  %464 = vmatpush1.msra.mxu0 0.0
  %465 = vmatprep.subr.mxu0 0.0
  %466 = vmatpush1.msra.mxu0 0.0
  %467 = vmatprep.subr.mxu0 0.0
  %468 = vmatpush1.msra.mxu0 0.0
  %469 = vmatprep.subr.mxu0 0.0
  %470 = vmatpush1.msra.mxu0 0.0
  %471 = vmatprep.subr.mxu0 0.0
  %472 = vmatpush1.msra.mxu0 0.0
  %473 = vmatprep.subr.mxu0 0.0
  %474 = vmatpush1.msra.mxu0 0.0
  %475 = vmatprep.subr.mxu0 0.0
  %476 = vmatpush1.msra.mxu0 0.0
  %477 = vmatprep.subr.mxu0 0.0
  %478 = vmatpush1.msra.mxu0 0.0
  %479 = vmatprep.mubr.f32.mxu0 0.0
  %480 = vmatmul.mubr.f32.gmra.mrb[0].mxu0 %v411
  %v481 = vpop.f32.mrb[0].mxu0
  %v482 = vadd.f32 %v399, %v481
  %v483 = vpop.f32.mrb[0].mxu0
  %484 = vmatprep.mubr.f32.mxu0 0.0
  %485 = vmatmul.mubr.f32.gmra.mrb[0].mxu0 %v413
  %v486 = vpop.f32.mrb[0].mxu0
  %v487 = vadd.f32 %v404, %v486
  %v488 = vpop.f32.mrb[0].mxu0
  %489 = vdwg.mxu0
  %490 = vrot.lane.b32.xlu0 %v142, 110
  %v491 = vpop.permute.xlu0 %490
  %492 = vrot.lane.b32.xlu0 %v147, 110
  %v493 = vpop.permute.xlu0 %492
  %v494 = vsel %vm154, %v491, 0
  %v496 = vsel %vm154, %v493, 0
  %498 = vmatprep.subr.mxu0 0.0
  %499 = vmatpush1.msra.mxu0 %v152
  %500 = vmatprep.subr.mxu0 0.0
  %501 = vmatpush1.msra.mxu0 %v163
  %502 = vmatprep.subr.mxu0 0.0
  %503 = vmatpush1.msra.mxu0 0.0
  %504 = vmatprep.subr.mxu0 0.0
  %505 = vmatpush1.msra.mxu0 0.0
  %506 = vmatprep.subr.mxu0 0.0
  %507 = vmatpush1.msra.mxu0 0.0
  %508 = vmatprep.subr.mxu0 0.0
  %509 = vmatpush1.msra.mxu0 0.0
  %510 = vmatprep.subr.mxu0 0.0
  %511 = vmatpush1.msra.mxu0 0.0
  %512 = vmatprep.subr.mxu0 0.0
  %513 = vmatpush1.msra.mxu0 0.0
  %514 = vmatprep.subr.mxu0 0.0
  %515 = vmatpush1.msra.mxu0 0.0
  %516 = vmatprep.subr.mxu0 0.0
  %517 = vmatpush1.msra.mxu0 0.0
  %518 = vmatprep.subr.mxu0 0.0
  %519 = vmatpush1.msra.mxu0 0.0
  %520 = vmatprep.subr.mxu0 0.0
  %521 = vmatpush1.msra.mxu0 0.0
  %522 = vmatprep.subr.mxu0 0.0
  %523 = vmatpush1.msra.mxu0 0.0
  %524 = vmatprep.subr.mxu0 0.0
  %525 = vmatpush1.msra.mxu0 0.0
  %526 = vmatprep.subr.mxu0 0.0
  %527 = vmatpush1.msra.mxu0 0.0
  %528 = vmatprep.subr.mxu0 0.0
  %529 = vmatpush1.msra.mxu0 0.0
  %530 = vmatprep.subr.mxu0 0.0
  %531 = vmatpush1.msra.mxu0 0.0
  %532 = vmatprep.subr.mxu0 0.0
  %533 = vmatpush1.msra.mxu0 0.0
  %534 = vmatprep.subr.mxu0 0.0
  %535 = vmatpush1.msra.mxu0 0.0
  %536 = vmatprep.subr.mxu0 0.0
  %537 = vmatpush1.msra.mxu0 0.0
  %538 = vmatprep.subr.mxu0 0.0
  %539 = vmatpush1.msra.mxu0 0.0
  %540 = vmatprep.subr.mxu0 0.0
  %541 = vmatpush1.msra.mxu0 0.0
  %542 = vmatprep.subr.mxu0 0.0
  %543 = vmatpush1.msra.mxu0 0.0
  %544 = vmatprep.subr.mxu0 0.0
  %545 = vmatpush1.msra.mxu0 0.0
  %546 = vmatprep.subr.mxu0 0.0
  %547 = vmatpush1.msra.mxu0 0.0
  %548 = vmatprep.subr.mxu0 0.0
  %549 = vmatpush1.msra.mxu0 0.0
  %550 = vmatprep.subr.mxu0 0.0
  %551 = vmatpush1.msra.mxu0 0.0
  %552 = vmatprep.subr.mxu0 0.0
  %553 = vmatpush1.msra.mxu0 0.0
  %554 = vmatprep.subr.mxu0 0.0
  %555 = vmatpush1.msra.mxu0 0.0
  %556 = vmatprep.subr.mxu0 0.0
  %557 = vmatpush1.msra.mxu0 0.0
  %558 = vmatprep.subr.mxu0 0.0
  %559 = vmatpush1.msra.mxu0 0.0
  %560 = vmatprep.subr.mxu0 0.0
  %561 = vmatpush1.msra.mxu0 0.0
  %562 = vmatprep.mubr.f32.mxu0 0.0
  %563 = vmatmul.mubr.f32.gmra.mrb[0].mxu0 %v494
  %v564 = vpop.f32.mrb[0].mxu0
  %v565 = vadd.f32 0.0, %v564
  %v566 = vpop.f32.mrb[0].mxu0
  %567 = vmatprep.mubr.f32.mxu0 0.0
  %568 = vmatmul.mubr.f32.gmra.mrb[0].mxu0 %v496
  %v569 = vpop.f32.mrb[0].mxu0
  %v570 = vadd.f32 0.0, %v569
  %v571 = vpop.f32.mrb[0].mxu0
  %572 = vdwg.mxu0
  %573 = vrot.lane.b32.xlu0 %v132, 110
  %v574 = vpop.permute.xlu0 %573
  %575 = vrot.lane.b32.xlu0 %v137, 110
  %v576 = vpop.permute.xlu0 %575
  %v577 = vsel %vm154, %v574, 0
  %v579 = vsel %vm154, %v576, 0
  %581 = vmatprep.subr.mxu0 0.0
  %582 = vmatpush1.msra.mxu0 %v150
  %583 = vmatprep.subr.mxu0 0.0
  %584 = vmatpush1.msra.mxu0 %v247
  %585 = vmatprep.subr.mxu0 0.0
  %586 = vmatpush1.msra.mxu0 0.0
  %587 = vmatprep.subr.mxu0 0.0
  %588 = vmatpush1.msra.mxu0 0.0
  %589 = vmatprep.subr.mxu0 0.0
  %590 = vmatpush1.msra.mxu0 0.0
  %591 = vmatprep.subr.mxu0 0.0
  %592 = vmatpush1.msra.mxu0 0.0
  %593 = vmatprep.subr.mxu0 0.0
  %594 = vmatpush1.msra.mxu0 0.0
  %595 = vmatprep.subr.mxu0 0.0
  %596 = vmatpush1.msra.mxu0 0.0
  %597 = vmatprep.subr.mxu0 0.0
  %598 = vmatpush1.msra.mxu0 0.0
  %599 = vmatprep.subr.mxu0 0.0
  %600 = vmatpush1.msra.mxu0 0.0
  %601 = vmatprep.subr.mxu0 0.0
  %602 = vmatpush1.msra.mxu0 0.0
  %603 = vmatprep.subr.mxu0 0.0
  %604 = vmatpush1.msra.mxu0 0.0
  %605 = vmatprep.subr.mxu0 0.0
  %606 = vmatpush1.msra.mxu0 0.0
  %607 = vmatprep.subr.mxu0 0.0
  %608 = vmatpush1.msra.mxu0 0.0
  %609 = vmatprep.subr.mxu0 0.0
  %610 = vmatpush1.msra.mxu0 0.0
  %611 = vmatprep.subr.mxu0 0.0
  %612 = vmatpush1.msra.mxu0 0.0
  %613 = vmatprep.subr.mxu0 0.0
  %614 = vmatpush1.msra.mxu0 0.0
  %615 = vmatprep.subr.mxu0 0.0
  %616 = vmatpush1.msra.mxu0 0.0
  %617 = vmatprep.subr.mxu0 0.0
  %618 = vmatpush1.msra.mxu0 0.0
  %619 = vmatprep.subr.mxu0 0.0
  %620 = vmatpush1.msra.mxu0 0.0
  %621 = vmatprep.subr.mxu0 0.0
  %622 = vmatpush1.msra.mxu0 0.0
  %623 = vmatprep.subr.mxu0 0.0
  %624 = vmatpush1.msra.mxu0 0.0
  %625 = vmatprep.subr.mxu0 0.0
  %626 = vmatpush1.msra.mxu0 0.0
  %627 = vmatprep.subr.mxu0 0.0
  %628 = vmatpush1.msra.mxu0 0.0
  %629 = vmatprep.subr.mxu0 0.0
  %630 = vmatpush1.msra.mxu0 0.0
  %631 = vmatprep.subr.mxu0 0.0
  %632 = vmatpush1.msra.mxu0 0.0
  %633 = vmatprep.subr.mxu0 0.0
  %634 = vmatpush1.msra.mxu0 0.0
  %635 = vmatprep.subr.mxu0 0.0
  %636 = vmatpush1.msra.mxu0 0.0
  %637 = vmatprep.subr.mxu0 0.0
  %638 = vmatpush1.msra.mxu0 0.0
  %639 = vmatprep.subr.mxu0 0.0
  %640 = vmatpush1.msra.mxu0 0.0
  %641 = vmatprep.subr.mxu0 0.0
  %642 = vmatpush1.msra.mxu0 0.0
  %643 = vmatprep.subr.mxu0 0.0
  %644 = vmatpush1.msra.mxu0 0.0
  %645 = vmatprep.mubr.f32.mxu0 0.0
  %646 = vmatmul.mubr.f32.gmra.mrb[0].mxu0 %v577
  %v647 = vpop.f32.mrb[0].mxu0
  %v648 = vadd.f32 %v565, %v647
  %v649 = vpop.f32.mrb[0].mxu0
  %650 = vmatprep.mubr.f32.mxu0 0.0
  %651 = vmatmul.mubr.f32.gmra.mrb[0].mxu0 %v579
  %v652 = vpop.f32.mrb[0].mxu0
  %v653 = vadd.f32 %v570, %v652
  %v654 = vpop.f32.mrb[0].mxu0
  %655 = vdwg.mxu0
  %656 = vrot.lane.b32.xlu0 %v142, 101
  %v657 = vpop.permute.xlu0 %656
  %658 = vrot.lane.b32.xlu0 %v147, 101
  %v659 = vpop.permute.xlu0 %658
  %v660 = vsel %vm154, %v657, 0
  %v662 = vsel %vm154, %v659, 0
  %664 = vmatprep.subr.mxu0 0.0
  %665 = vmatpush1.msra.mxu0 %v152
  %666 = vmatprep.subr.mxu0 0.0
  %667 = vmatpush1.msra.mxu0 %v163
  %668 = vmatprep.subr.mxu0 0.0
  %669 = vmatpush1.msra.mxu0 0.0
  %670 = vmatprep.subr.mxu0 0.0
  %671 = vmatpush1.msra.mxu0 0.0
  %672 = vmatprep.subr.mxu0 0.0
  %673 = vmatpush1.msra.mxu0 0.0
  %674 = vmatprep.subr.mxu0 0.0
  %675 = vmatpush1.msra.mxu0 0.0
  %676 = vmatprep.subr.mxu0 0.0
  %677 = vmatpush1.msra.mxu0 0.0
  %678 = vmatprep.subr.mxu0 0.0
  %679 = vmatpush1.msra.mxu0 0.0
  %680 = vmatprep.subr.mxu0 0.0
  %681 = vmatpush1.msra.mxu0 0.0
  %682 = vmatprep.subr.mxu0 0.0
  %683 = vmatpush1.msra.mxu0 0.0
  %684 = vmatprep.subr.mxu0 0.0
  %685 = vmatpush1.msra.mxu0 0.0
  %686 = vmatprep.subr.mxu0 0.0
  %687 = vmatpush1.msra.mxu0 0.0
  %688 = vmatprep.subr.mxu0 0.0
  %689 = vmatpush1.msra.mxu0 0.0
  %690 = vmatprep.subr.mxu0 0.0
  %691 = vmatpush1.msra.mxu0 0.0
  %692 = vmatprep.subr.mxu0 0.0
  %693 = vmatpush1.msra.mxu0 0.0
  %694 = vmatprep.subr.mxu0 0.0
  %695 = vmatpush1.msra.mxu0 0.0
  %696 = vmatprep.subr.mxu0 0.0
  %697 = vmatpush1.msra.mxu0 0.0
  %698 = vmatprep.subr.mxu0 0.0
  %699 = vmatpush1.msra.mxu0 0.0
  %700 = vmatprep.subr.mxu0 0.0
  %701 = vmatpush1.msra.mxu0 0.0
  %702 = vmatprep.subr.mxu0 0.0
  %703 = vmatpush1.msra.mxu0 0.0
  %704 = vmatprep.subr.mxu0 0.0
  %705 = vmatpush1.msra.mxu0 0.0
  %706 = vmatprep.subr.mxu0 0.0
  %707 = vmatpush1.msra.mxu0 0.0
  %708 = vmatprep.subr.mxu0 0.0
  %709 = vmatpush1.msra.mxu0 0.0
  %710 = vmatprep.subr.mxu0 0.0
  %711 = vmatpush1.msra.mxu0 0.0
  %712 = vmatprep.subr.mxu0 0.0
  %713 = vmatpush1.msra.mxu0 0.0
  %714 = vmatprep.subr.mxu0 0.0
  %715 = vmatpush1.msra.mxu0 0.0
  %716 = vmatprep.subr.mxu0 0.0
  %717 = vmatpush1.msra.mxu0 0.0
  %718 = vmatprep.subr.mxu0 0.0
  %719 = vmatpush1.msra.mxu0 0.0
  %720 = vmatprep.subr.mxu0 0.0
  %721 = vmatpush1.msra.mxu0 0.0
  %722 = vmatprep.subr.mxu0 0.0
  %723 = vmatpush1.msra.mxu0 0.0
  %724 = vmatprep.subr.mxu0 0.0
  %725 = vmatpush1.msra.mxu0 0.0
  %726 = vmatprep.subr.mxu0 0.0
  %727 = vmatpush1.msra.mxu0 0.0
  %728 = vmatprep.mubr.f32.mxu0 0.0
  %729 = vmatmul.mubr.f32.gmra.mrb[0].mxu0 %v660
  %v730 = vpop.f32.mrb[0].mxu0
  %v731 = vadd.f32 0.0, %v730
  %v732 = vpop.f32.mrb[0].mxu0
  %733 = vmatprep.mubr.f32.mxu0 0.0
  %734 = vmatmul.mubr.f32.gmra.mrb[0].mxu0 %v662
  %v735 = vpop.f32.mrb[0].mxu0
  %v736 = vadd.f32 0.0, %v735
  %v737 = vpop.f32.mrb[0].mxu0
  %738 = vdwg.mxu0
  %739 = vrot.lane.b32.xlu0 %v132, 101
  %v740 = vpop.permute.xlu0 %739
  %741 = vrot.lane.b32.xlu0 %v137, 101
  %v742 = vpop.permute.xlu0 %741
  %v743 = vsel %vm154, %v740, 0
  %v745 = vsel %vm154, %v742, 0
  %747 = vmatprep.subr.mxu0 0.0
  %748 = vmatpush1.msra.mxu0 %v150
  %749 = vmatprep.subr.mxu0 0.0
  %750 = vmatpush1.msra.mxu0 %v247
  %751 = vmatprep.subr.mxu0 0.0
  %752 = vmatpush1.msra.mxu0 0.0
  %753 = vmatprep.subr.mxu0 0.0
  %754 = vmatpush1.msra.mxu0 0.0
  %755 = vmatprep.subr.mxu0 0.0
  %756 = vmatpush1.msra.mxu0 0.0
  %757 = vmatprep.subr.mxu0 0.0
  %758 = vmatpush1.msra.mxu0 0.0
  %759 = vmatprep.subr.mxu0 0.0
  %760 = vmatpush1.msra.mxu0 0.0
  %761 = vmatprep.subr.mxu0 0.0
  %762 = vmatpush1.msra.mxu0 0.0
  %763 = vmatprep.subr.mxu0 0.0
  %764 = vmatpush1.msra.mxu0 0.0
  %765 = vmatprep.subr.mxu0 0.0
  %766 = vmatpush1.msra.mxu0 0.0
  %767 = vmatprep.subr.mxu0 0.0
  %768 = vmatpush1.msra.mxu0 0.0
  %769 = vmatprep.subr.mxu0 0.0
  %770 = vmatpush1.msra.mxu0 0.0
  %771 = vmatprep.subr.mxu0 0.0
  %772 = vmatpush1.msra.mxu0 0.0
  %773 = vmatprep.subr.mxu0 0.0
  %774 = vmatpush1.msra.mxu0 0.0
  %775 = vmatprep.subr.mxu0 0.0
  %776 = vmatpush1.msra.mxu0 0.0
  %777 = vmatprep.subr.mxu0 0.0
  %778 = vmatpush1.msra.mxu0 0.0
  %779 = vmatprep.subr.mxu0 0.0
  %780 = vmatpush1.msra.mxu0 0.0
  %781 = vmatprep.subr.mxu0 0.0
  %782 = vmatpush1.msra.mxu0 0.0
  %783 = vmatprep.subr.mxu0 0.0
  %784 = vmatpush1.msra.mxu0 0.0
  %785 = vmatprep.subr.mxu0 0.0
  %786 = vmatpush1.msra.mxu0 0.0
  %787 = vmatprep.subr.mxu0 0.0
  %788 = vmatpush1.msra.mxu0 0.0
  %789 = vmatprep.subr.mxu0 0.0
  %790 = vmatpush1.msra.mxu0 0.0
  %791 = vmatprep.subr.mxu0 0.0
  %792 = vmatpush1.msra.mxu0 0.0
  %793 = vmatprep.subr.mxu0 0.0
  %794 = vmatpush1.msra.mxu0 0.0
  %795 = vmatprep.subr.mxu0 0.0
  %796 = vmatpush1.msra.mxu0 0.0
  %797 = vmatprep.subr.mxu0 0.0
  %798 = vmatpush1.msra.mxu0 0.0
  %799 = vmatprep.subr.mxu0 0.0
  %800 = vmatpush1.msra.mxu0 0.0
  %801 = vmatprep.subr.mxu0 0.0
  %802 = vmatpush1.msra.mxu0 0.0
  %803 = vmatprep.subr.mxu0 0.0
  %804 = vmatpush1.msra.mxu0 0.0
  %805 = vmatprep.subr.mxu0 0.0
  %806 = vmatpush1.msra.mxu0 0.0
  %807 = vmatprep.subr.mxu0 0.0
  %808 = vmatpush1.msra.mxu0 0.0
  %809 = vmatprep.subr.mxu0 0.0
  %810 = vmatpush1.msra.mxu0 0.0
  %811 = vmatprep.mubr.f32.mxu0 0.0
  %812 = vmatmul.mubr.f32.gmra.mrb[0].mxu0 %v743
  %v813 = vpop.f32.mrb[0].mxu0
  %v814 = vadd.f32 %v731, %v813
  %v815 = vpop.f32.mrb[0].mxu0
  %816 = vmatprep.mubr.f32.mxu0 0.0
  %817 = vmatmul.mubr.f32.gmra.mrb[0].mxu0 %v745
  %v818 = vpop.f32.mrb[0].mxu0
  %v819 = vadd.f32 %v736, %v818
  %v820 = vpop.f32.mrb[0].mxu0
  %821 = vdwg.mxu0
  %822 = vrot.lane.b32.xlu0 %v142, 92
  %v823 = vpop.permute.xlu0 %822
  %824 = vrot.lane.b32.xlu0 %v147, 92
  %v825 = vpop.permute.xlu0 %824
  %v826 = vsel %vm154, %v823, 0
  %v828 = vsel %vm154, %v825, 0
  %830 = vmatprep.subr.mxu0 0.0
  %831 = vmatpush1.msra.mxu0 %v152
  %832 = vmatprep.subr.mxu0 0.0
  %833 = vmatpush1.msra.mxu0 %v163
  %834 = vmatprep.subr.mxu0 0.0
  %835 = vmatpush1.msra.mxu0 0.0
  %836 = vmatprep.subr.mxu0 0.0
  %837 = vmatpush1.msra.mxu0 0.0
  %838 = vmatprep.subr.mxu0 0.0
  %839 = vmatpush1.msra.mxu0 0.0
  %840 = vmatprep.subr.mxu0 0.0
  %841 = vmatpush1.msra.mxu0 0.0
  %842 = vmatprep.subr.mxu0 0.0
  %843 = vmatpush1.msra.mxu0 0.0
  %844 = vmatprep.subr.mxu0 0.0
  %845 = vmatpush1.msra.mxu0 0.0
  %846 = vmatprep.subr.mxu0 0.0
  %847 = vmatpush1.msra.mxu0 0.0
  %848 = vmatprep.subr.mxu0 0.0
  %849 = vmatpush1.msra.mxu0 0.0
  %850 = vmatprep.subr.mxu0 0.0
  %851 = vmatpush1.msra.mxu0 0.0
  %852 = vmatprep.subr.mxu0 0.0
  %853 = vmatpush1.msra.mxu0 0.0
  %854 = vmatprep.subr.mxu0 0.0
  %855 = vmatpush1.msra.mxu0 0.0
  %856 = vmatprep.subr.mxu0 0.0
  %857 = vmatpush1.msra.mxu0 0.0
  %858 = vmatprep.subr.mxu0 0.0
  %859 = vmatpush1.msra.mxu0 0.0
  %860 = vmatprep.subr.mxu0 0.0
  %861 = vmatpush1.msra.mxu0 0.0
  %862 = vmatprep.subr.mxu0 0.0
  %863 = vmatpush1.msra.mxu0 0.0
  %864 = vmatprep.subr.mxu0 0.0
  %865 = vmatpush1.msra.mxu0 0.0
  %866 = vmatprep.subr.mxu0 0.0
  %867 = vmatpush1.msra.mxu0 0.0
  %868 = vmatprep.subr.mxu0 0.0
  %869 = vmatpush1.msra.mxu0 0.0
  %870 = vmatprep.subr.mxu0 0.0
  %871 = vmatpush1.msra.mxu0 0.0
  %872 = vmatprep.subr.mxu0 0.0
  %873 = vmatpush1.msra.mxu0 0.0
  %874 = vmatprep.subr.mxu0 0.0
  %875 = vmatpush1.msra.mxu0 0.0
  %876 = vmatprep.subr.mxu0 0.0
  %877 = vmatpush1.msra.mxu0 0.0
  %878 = vmatprep.subr.mxu0 0.0
  %879 = vmatpush1.msra.mxu0 0.0
  %880 = vmatprep.subr.mxu0 0.0
  %881 = vmatpush1.msra.mxu0 0.0
  %882 = vmatprep.subr.mxu0 0.0
  %883 = vmatpush1.msra.mxu0 0.0
  %884 = vmatprep.subr.mxu0 0.0
  %885 = vmatpush1.msra.mxu0 0.0
  %886 = vmatprep.subr.mxu0 0.0
  %887 = vmatpush1.msra.mxu0 0.0
  %888 = vmatprep.subr.mxu0 0.0
  %889 = vmatpush1.msra.mxu0 0.0
  %890 = vmatprep.subr.mxu0 0.0
  %891 = vmatpush1.msra.mxu0 0.0
  %892 = vmatprep.subr.mxu0 0.0
  %893 = vmatpush1.msra.mxu0 0.0
  %894 = vmatprep.mubr.f32.mxu0 0.0
  %895 = vmatmul.mubr.f32.gmra.mrb[0].mxu0 %v826
  %v896 = vpop.f32.mrb[0].mxu0
  %v897 = vadd.f32 0.0, %v896
  %v898 = vpop.f32.mrb[0].mxu0
  %899 = vmatprep.mubr.f32.mxu0 0.0
  %900 = vmatmul.mubr.f32.gmra.mrb[0].mxu0 %v828
  %v901 = vpop.f32.mrb[0].mxu0
  %v902 = vadd.f32 0.0, %v901
  %v903 = vpop.f32.mrb[0].mxu0
  %904 = vdwg.mxu0
  %905 = vrot.lane.b32.xlu0 %v132, 92
  %v906 = vpop.permute.xlu0 %905
  %907 = vrot.lane.b32.xlu0 %v137, 92
  %v908 = vpop.permute.xlu0 %907
  %v909 = vsel %vm154, %v906, 0
  %v911 = vsel %vm154, %v908, 0
  %913 = vmatprep.subr.mxu0 0.0
  %914 = vmatpush1.msra.mxu0 %v150
  %915 = vmatprep.subr.mxu0 0.0
  %916 = vmatpush1.msra.mxu0 %v247
  %917 = vmatprep.subr.mxu0 0.0
  %918 = vmatpush1.msra.mxu0 0.0
  %919 = vmatprep.subr.mxu0 0.0
  %920 = vmatpush1.msra.mxu0 0.0
  %921 = vmatprep.subr.mxu0 0.0
  %922 = vmatpush1.msra.mxu0 0.0
  %923 = vmatprep.subr.mxu0 0.0
  %924 = vmatpush1.msra.mxu0 0.0
  %925 = vmatprep.subr.mxu0 0.0
  %926 = vmatpush1.msra.mxu0 0.0
  %927 = vmatprep.subr.mxu0 0.0
  %928 = vmatpush1.msra.mxu0 0.0
  %929 = vmatprep.subr.mxu0 0.0
  %930 = vmatpush1.msra.mxu0 0.0
  %931 = vmatprep.subr.mxu0 0.0
  %932 = vmatpush1.msra.mxu0 0.0
  %933 = vmatprep.subr.mxu0 0.0
  %934 = vmatpush1.msra.mxu0 0.0
  %935 = vmatprep.subr.mxu0 0.0
  %936 = vmatpush1.msra.mxu0 0.0
  %937 = vmatprep.subr.mxu0 0.0
  %938 = vmatpush1.msra.mxu0 0.0
  %939 = vmatprep.subr.mxu0 0.0
  %940 = vmatpush1.msra.mxu0 0.0
  %941 = vmatprep.subr.mxu0 0.0
  %942 = vmatpush1.msra.mxu0 0.0
  %943 = vmatprep.subr.mxu0 0.0
  %944 = vmatpush1.msra.mxu0 0.0
  %945 = vmatprep.subr.mxu0 0.0
  %946 = vmatpush1.msra.mxu0 0.0
  %947 = vmatprep.subr.mxu0 0.0
  %948 = vmatpush1.msra.mxu0 0.0
  %949 = vmatprep.subr.mxu0 0.0
  %950 = vmatpush1.msra.mxu0 0.0
  %951 = vmatprep.subr.mxu0 0.0
  %952 = vmatpush1.msra.mxu0 0.0
  %953 = vmatprep.subr.mxu0 0.0
  %954 = vmatpush1.msra.mxu0 0.0
  %955 = vmatprep.subr.mxu0 0.0
  %956 = vmatpush1.msra.mxu0 0.0
  %957 = vmatprep.subr.mxu0 0.0
  %958 = vmatpush1.msra.mxu0 0.0
  %959 = vmatprep.subr.mxu0 0.0
  %960 = vmatpush1.msra.mxu0 0.0
  %961 = vmatprep.subr.mxu0 0.0
  %962 = vmatpush1.msra.mxu0 0.0
  %963 = vmatprep.subr.mxu0 0.0
  %964 = vmatpush1.msra.mxu0 0.0
  %965 = vmatprep.subr.mxu0 0.0
  %966 = vmatpush1.msra.mxu0 0.0
  %967 = vmatprep.subr.mxu0 0.0
  %968 = vmatpush1.msra.mxu0 0.0
  %969 = vmatprep.subr.mxu0 0.0
  %970 = vmatpush1.msra.mxu0 0.0
  %971 = vmatprep.subr.mxu0 0.0
  %972 = vmatpush1.msra.mxu0 0.0
  %973 = vmatprep.subr.mxu0 0.0
  %974 = vmatpush1.msra.mxu0 0.0
  %975 = vmatprep.subr.mxu0 0.0
  %976 = vmatpush1.msra.mxu0 0.0
  %977 = vmatprep.mubr.f32.mxu0 0.0
  %978 = vmatmul.mubr.f32.gmra.mrb[0].mxu0 %v909
  %v979 = vpop.f32.mrb[0].mxu0
  %v980 = vadd.f32 %v897, %v979
  %v981 = vpop.f32.mrb[0].mxu0
  %982 = vmatprep.mubr.f32.mxu0 0.0
  %983 = vmatmul.mubr.f32.gmra.mrb[0].mxu0 %v911
  %v984 = vpop.f32.mrb[0].mxu0
  %v985 = vadd.f32 %v902, %v984
  %v986 = vpop.f32.mrb[0].mxu0
  %987 = vdwg.mxu0
  %988 = vrot.lane.b32.xlu0 %v142, 83
  %v989 = vpop.permute.xlu0 %988
  %990 = vrot.lane.b32.xlu0 %v147, 83
  %v991 = vpop.permute.xlu0 %990
  %v992 = vsel %vm154, %v989, 0
  %v994 = vsel %vm154, %v991, 0
  %996 = vmatprep.subr.mxu0 0.0
  %997 = vmatpush1.msra.mxu0 %v152
  %998 = vmatprep.subr.mxu0 0.0
  %999 = vmatpush1.msra.mxu0 %v163
  %1000 = vmatprep.subr.mxu0 0.0
  %1001 = vmatpush1.msra.mxu0 0.0
  %1002 = vmatprep.subr.mxu0 0.0
  %1003 = vmatpush1.msra.mxu0 0.0
  %1004 = vmatprep.subr.mxu0 0.0
  %1005 = vmatpush1.msra.mxu0 0.0
  %1006 = vmatprep.subr.mxu0 0.0
  %1007 = vmatpush1.msra.mxu0 0.0
  %1008 = vmatprep.subr.mxu0 0.0
  %1009 = vmatpush1.msra.mxu0 0.0
  %1010 = vmatprep.subr.mxu0 0.0
  %1011 = vmatpush1.msra.mxu0 0.0
  %1012 = vmatprep.subr.mxu0 0.0
  %1013 = vmatpush1.msra.mxu0 0.0
  %1014 = vmatprep.subr.mxu0 0.0
  %1015 = vmatpush1.msra.mxu0 0.0
  %1016 = vmatprep.subr.mxu0 0.0
  %1017 = vmatpush1.msra.mxu0 0.0
  %1018 = vmatprep.subr.mxu0 0.0
  %1019 = vmatpush1.msra.mxu0 0.0
  %1020 = vmatprep.subr.mxu0 0.0
  %1021 = vmatpush1.msra.mxu0 0.0
  %1022 = vmatprep.subr.mxu0 0.0
  %1023 = vmatpush1.msra.mxu0 0.0
  %1024 = vmatprep.subr.mxu0 0.0
  %1025 = vmatpush1.msra.mxu0 0.0
  %1026 = vmatprep.subr.mxu0 0.0
  %1027 = vmatpush1.msra.mxu0 0.0
  %1028 = vmatprep.subr.mxu0 0.0
  %1029 = vmatpush1.msra.mxu0 0.0
  %1030 = vmatprep.subr.mxu0 0.0
  %1031 = vmatpush1.msra.mxu0 0.0
  %1032 = vmatprep.subr.mxu0 0.0
  %1033 = vmatpush1.msra.mxu0 0.0
  %1034 = vmatprep.subr.mxu0 0.0
  %1035 = vmatpush1.msra.mxu0 0.0
  %1036 = vmatprep.subr.mxu0 0.0
  %1037 = vmatpush1.msra.mxu0 0.0
  %1038 = vmatprep.subr.mxu0 0.0
  %1039 = vmatpush1.msra.mxu0 0.0
  %1040 = vmatprep.subr.mxu0 0.0
  %1041 = vmatpush1.msra.mxu0 0.0
  %1042 = vmatprep.subr.mxu0 0.0
  %1043 = vmatpush1.msra.mxu0 0.0
  %1044 = vmatprep.subr.mxu0 0.0
  %1045 = vmatpush1.msra.mxu0 0.0
  %1046 = vmatprep.subr.mxu0 0.0
  %1047 = vmatpush1.msra.mxu0 0.0
  %1048 = vmatprep.subr.mxu0 0.0
  %1049 = vmatpush1.msra.mxu0 0.0
  %1050 = vmatprep.subr.mxu0 0.0
  %1051 = vmatpush1.msra.mxu0 0.0
  %1052 = vmatprep.subr.mxu0 0.0
  %1053 = vmatpush1.msra.mxu0 0.0
  %1054 = vmatprep.subr.mxu0 0.0
  %1055 = vmatpush1.msra.mxu0 0.0
  %1056 = vmatprep.subr.mxu0 0.0
  %1057 = vmatpush1.msra.mxu0 0.0
  %1058 = vmatprep.subr.mxu0 0.0
  %1059 = vmatpush1.msra.mxu0 0.0
  %1060 = vmatprep.mubr.f32.mxu0 0.0
  %1061 = vmatmul.mubr.f32.gmra.mrb[0].mxu0 %v992
  %v1062 = vpop.f32.mrb[0].mxu0
  %v1063 = vadd.f32 0.0, %v1062
  %v1064 = vpop.f32.mrb[0].mxu0
  %1065 = vmatprep.mubr.f32.mxu0 0.0
  %1066 = vmatmul.mubr.f32.gmra.mrb[0].mxu0 %v994
  %v1067 = vpop.f32.mrb[0].mxu0
  %v1068 = vadd.f32 0.0, %v1067
  %v1069 = vpop.f32.mrb[0].mxu0
  %1070 = vdwg.mxu0
  %1071 = vrot.lane.b32.xlu0 %v132, 83
  %v1072 = vpop.permute.xlu0 %1071
  %1073 = vrot.lane.b32.xlu0 %v137, 83
  %v1074 = vpop.permute.xlu0 %1073
  %v1075 = vsel %vm154, %v1072, 0
  %v1077 = vsel %vm154, %v1074, 0
  %1079 = vmatprep.subr.mxu0 0.0
  %1080 = vmatpush1.msra.mxu0 %v150
  %1081 = vmatprep.subr.mxu0 0.0
  %1082 = vmatpush1.msra.mxu0 %v247
  %1083 = vmatprep.subr.mxu0 0.0
  %1084 = vmatpush1.msra.mxu0 0.0
  %1085 = vmatprep.subr.mxu0 0.0
  %1086 = vmatpush1.msra.mxu0 0.0
  %1087 = vmatprep.subr.mxu0 0.0
  %1088 = vmatpush1.msra.mxu0 0.0
  %1089 = vmatprep.subr.mxu0 0.0
  %1090 = vmatpush1.msra.mxu0 0.0
  %1091 = vmatprep.subr.mxu0 0.0
  %1092 = vmatpush1.msra.mxu0 0.0
  %1093 = vmatprep.subr.mxu0 0.0
  %1094 = vmatpush1.msra.mxu0 0.0
  %1095 = vmatprep.subr.mxu0 0.0
  %1096 = vmatpush1.msra.mxu0 0.0
  %1097 = vmatprep.subr.mxu0 0.0
  %1098 = vmatpush1.msra.mxu0 0.0
  %1099 = vmatprep.subr.mxu0 0.0
  %1100 = vmatpush1.msra.mxu0 0.0
  %1101 = vmatprep.subr.mxu0 0.0
  %1102 = vmatpush1.msra.mxu0 0.0
  %1103 = vmatprep.subr.mxu0 0.0
  %1104 = vmatpush1.msra.mxu0 0.0
  %1105 = vmatprep.subr.mxu0 0.0
  %1106 = vmatpush1.msra.mxu0 0.0
  %1107 = vmatprep.subr.mxu0 0.0
  %1108 = vmatpush1.msra.mxu0 0.0
  %1109 = vmatprep.subr.mxu0 0.0
  %1110 = vmatpush1.msra.mxu0 0.0
  %1111 = vmatprep.subr.mxu0 0.0
  %1112 = vmatpush1.msra.mxu0 0.0
  %1113 = vmatprep.subr.mxu0 0.0
  %1114 = vmatpush1.msra.mxu0 0.0
  %1115 = vmatprep.subr.mxu0 0.0
  %1116 = vmatpush1.msra.mxu0 0.0
  %1117 = vmatprep.subr.mxu0 0.0
  %1118 = vmatpush1.msra.mxu0 0.0
  %1119 = vmatprep.subr.mxu0 0.0
  %1120 = vmatpush1.msra.mxu0 0.0
  %1121 = vmatprep.subr.mxu0 0.0
  %1122 = vmatpush1.msra.mxu0 0.0
  %1123 = vmatprep.subr.mxu0 0.0
  %1124 = vmatpush1.msra.mxu0 0.0
  %1125 = vmatprep.subr.mxu0 0.0
  %1126 = vmatpush1.msra.mxu0 0.0
  %1127 = vmatprep.subr.mxu0 0.0
  %1128 = vmatpush1.msra.mxu0 0.0
  %1129 = vmatprep.subr.mxu0 0.0
  %1130 = vmatpush1.msra.mxu0 0.0
  %1131 = vmatprep.subr.mxu0 0.0
  %1132 = vmatpush1.msra.mxu0 0.0
  %1133 = vmatprep.subr.mxu0 0.0
  %1134 = vmatpush1.msra.mxu0 0.0
  %1135 = vmatprep.subr.mxu0 0.0
  %1136 = vmatpush1.msra.mxu0 0.0
  %1137 = vmatprep.subr.mxu0 0.0
  %1138 = vmatpush1.msra.mxu0 0.0
  %1139 = vmatprep.subr.mxu0 0.0
  %1140 = vmatpush1.msra.mxu0 0.0
  %1141 = vmatprep.subr.mxu0 0.0
  %1142 = vmatpush1.msra.mxu0 0.0
  %1143 = vmatprep.mubr.f32.mxu0 0.0
  %1144 = vmatmul.mubr.f32.gmra.mrb[0].mxu0 %v1075
  %v1145 = vpop.f32.mrb[0].mxu0
  %v1146 = vadd.f32 %v1063, %v1145
  %v1147 = vpop.f32.mrb[0].mxu0
  %1148 = vmatprep.mubr.f32.mxu0 0.0
  %1149 = vmatmul.mubr.f32.gmra.mrb[0].mxu0 %v1077
  %v1150 = vpop.f32.mrb[0].mxu0
  %v1151 = vadd.f32 %v1068, %v1150
  %v1152 = vpop.f32.mrb[0].mxu0
  %1153 = vdwg.mxu0
  %1154 = vrot.lane.b32.xlu0 %v142, 74
  %v1155 = vpop.permute.xlu0 %1154
  %1156 = vrot.lane.b32.xlu0 %v147, 74
  %v1157 = vpop.permute.xlu0 %1156
  %v1158 = vsel %vm154, %v1155, 0
  %v1160 = vsel %vm154, %v1157, 0
  %1162 = vmatprep.subr.mxu0 0.0
  %1163 = vmatpush1.msra.mxu0 %v152
  %1164 = vmatprep.subr.mxu0 0.0
  %1165 = vmatpush1.msra.mxu0 %v163
  %1166 = vmatprep.subr.mxu0 0.0
  %1167 = vmatpush1.msra.mxu0 0.0
  %1168 = vmatprep.subr.mxu0 0.0
  %1169 = vmatpush1.msra.mxu0 0.0
  %1170 = vmatprep.subr.mxu0 0.0
  %1171 = vmatpush1.msra.mxu0 0.0
  %1172 = vmatprep.subr.mxu0 0.0
  %1173 = vmatpush1.msra.mxu0 0.0
  %1174 = vmatprep.subr.mxu0 0.0
  %1175 = vmatpush1.msra.mxu0 0.0
  %1176 = vmatprep.subr.mxu0 0.0
  %1177 = vmatpush1.msra.mxu0 0.0
  %1178 = vmatprep.subr.mxu0 0.0
  %1179 = vmatpush1.msra.mxu0 0.0
  %1180 = vmatprep.subr.mxu0 0.0
  %1181 = vmatpush1.msra.mxu0 0.0
  %1182 = vmatprep.subr.mxu0 0.0
  %1183 = vmatpush1.msra.mxu0 0.0
  %1184 = vmatprep.subr.mxu0 0.0
  %1185 = vmatpush1.msra.mxu0 0.0
  %1186 = vmatprep.subr.mxu0 0.0
  %1187 = vmatpush1.msra.mxu0 0.0
  %1188 = vmatprep.subr.mxu0 0.0
  %1189 = vmatpush1.msra.mxu0 0.0
  %1190 = vmatprep.subr.mxu0 0.0
  %1191 = vmatpush1.msra.mxu0 0.0
  %1192 = vmatprep.subr.mxu0 0.0
  %1193 = vmatpush1.msra.mxu0 0.0
  %1194 = vmatprep.subr.mxu0 0.0
  %1195 = vmatpush1.msra.mxu0 0.0
  %1196 = vmatprep.subr.mxu0 0.0
  %1197 = vmatpush1.msra.mxu0 0.0
  %1198 = vmatprep.subr.mxu0 0.0
  %1199 = vmatpush1.msra.mxu0 0.0
  %1200 = vmatprep.subr.mxu0 0.0
  %1201 = vmatpush1.msra.mxu0 0.0
  %1202 = vmatprep.subr.mxu0 0.0
  %1203 = vmatpush1.msra.mxu0 0.0
  %1204 = vmatprep.subr.mxu0 0.0
  %1205 = vmatpush1.msra.mxu0 0.0
  %1206 = vmatprep.subr.mxu0 0.0
  %1207 = vmatpush1.msra.mxu0 0.0
  %1208 = vmatprep.subr.mxu0 0.0
  %1209 = vmatpush1.msra.mxu0 0.0
  %1210 = vmatprep.subr.mxu0 0.0
  %1211 = vmatpush1.msra.mxu0 0.0
  %1212 = vmatprep.subr.mxu0 0.0
  %1213 = vmatpush1.msra.mxu0 0.0
  %1214 = vmatprep.subr.mxu0 0.0
  %1215 = vmatpush1.msra.mxu0 0.0
  %1216 = vmatprep.subr.mxu0 0.0
  %1217 = vmatpush1.msra.mxu0 0.0
  %1218 = vmatprep.subr.mxu0 0.0
  %1219 = vmatpush1.msra.mxu0 0.0
  %1220 = vmatprep.subr.mxu0 0.0
  %1221 = vmatpush1.msra.mxu0 0.0
  %1222 = vmatprep.subr.mxu0 0.0
  %1223 = vmatpush1.msra.mxu0 0.0
  %1224 = vmatprep.subr.mxu0 0.0
  %1225 = vmatpush1.msra.mxu0 0.0
  %1226 = vmatprep.mubr.f32.mxu0 0.0
  %1227 = vmatmul.mubr.f32.gmra.mrb[0].mxu0 %v1158
  %v1228 = vpop.f32.mrb[0].mxu0
  %v1229 = vadd.f32 0.0, %v1228
  %v1230 = vpop.f32.mrb[0].mxu0
  %1231 = vmatprep.mubr.f32.mxu0 0.0
  %1232 = vmatmul.mubr.f32.gmra.mrb[0].mxu0 %v1160
  %v1233 = vpop.f32.mrb[0].mxu0
  %v1234 = vadd.f32 0.0, %v1233
  %v1235 = vpop.f32.mrb[0].mxu0
  %1236 = vdwg.mxu0
  %1237 = vrot.lane.b32.xlu0 %v132, 74
  %v1238 = vpop.permute.xlu0 %1237
  %1239 = vrot.lane.b32.xlu0 %v137, 74
  %v1240 = vpop.permute.xlu0 %1239
  %v1241 = vsel %vm154, %v1238, 0
  %v1243 = vsel %vm154, %v1240, 0
  %1245 = vmatprep.subr.mxu0 0.0
  %1246 = vmatpush1.msra.mxu0 %v150
  %1247 = vmatprep.subr.mxu0 0.0
  %1248 = vmatpush1.msra.mxu0 %v247
  %1249 = vmatprep.subr.mxu0 0.0
  %1250 = vmatpush1.msra.mxu0 0.0
  %1251 = vmatprep.subr.mxu0 0.0
  %1252 = vmatpush1.msra.mxu0 0.0
  %1253 = vmatprep.subr.mxu0 0.0
  %1254 = vmatpush1.msra.mxu0 0.0
  %1255 = vmatprep.subr.mxu0 0.0
  %1256 = vmatpush1.msra.mxu0 0.0
  %1257 = vmatprep.subr.mxu0 0.0
  %1258 = vmatpush1.msra.mxu0 0.0
  %1259 = vmatprep.subr.mxu0 0.0
  %1260 = vmatpush1.msra.mxu0 0.0
  %1261 = vmatprep.subr.mxu0 0.0
  %1262 = vmatpush1.msra.mxu0 0.0
  %1263 = vmatprep.subr.mxu0 0.0
  %1264 = vmatpush1.msra.mxu0 0.0
  %1265 = vmatprep.subr.mxu0 0.0
  %1266 = vmatpush1.msra.mxu0 0.0
  %1267 = vmatprep.subr.mxu0 0.0
  %1268 = vmatpush1.msra.mxu0 0.0
  %1269 = vmatprep.subr.mxu0 0.0
  %1270 = vmatpush1.msra.mxu0 0.0
  %1271 = vmatprep.subr.mxu0 0.0
  %1272 = vmatpush1.msra.mxu0 0.0
  %1273 = vmatprep.subr.mxu0 0.0
  %1274 = vmatpush1.msra.mxu0 0.0
  %1275 = vmatprep.subr.mxu0 0.0
  %1276 = vmatpush1.msra.mxu0 0.0
  %1277 = vmatprep.subr.mxu0 0.0
  %1278 = vmatpush1.msra.mxu0 0.0
  %1279 = vmatprep.subr.mxu0 0.0
  %1280 = vmatpush1.msra.mxu0 0.0
  %1281 = vmatprep.subr.mxu0 0.0
  %1282 = vmatpush1.msra.mxu0 0.0
  %1283 = vmatprep.subr.mxu0 0.0
  %1284 = vmatpush1.msra.mxu0 0.0
  %1285 = vmatprep.subr.mxu0 0.0
  %1286 = vmatpush1.msra.mxu0 0.0
  %1287 = vmatprep.subr.mxu0 0.0
  %1288 = vmatpush1.msra.mxu0 0.0
  %1289 = vmatprep.subr.mxu0 0.0
  %1290 = vmatpush1.msra.mxu0 0.0
  %1291 = vmatprep.subr.mxu0 0.0
  %1292 = vmatpush1.msra.mxu0 0.0
  %1293 = vmatprep.subr.mxu0 0.0
  %1294 = vmatpush1.msra.mxu0 0.0
  %1295 = vmatprep.subr.mxu0 0.0
  %1296 = vmatpush1.msra.mxu0 0.0
  %1297 = vmatprep.subr.mxu0 0.0
  %1298 = vmatpush1.msra.mxu0 0.0
  %1299 = vmatprep.subr.mxu0 0.0
  %1300 = vmatpush1.msra.mxu0 0.0
  %1301 = vmatprep.subr.mxu0 0.0
  %1302 = vmatpush1.msra.mxu0 0.0
  %1303 = vmatprep.subr.mxu0 0.0
  %1304 = vmatpush1.msra.mxu0 0.0
  %1305 = vmatprep.subr.mxu0 0.0
  %1306 = vmatpush1.msra.mxu0 0.0
  %1307 = vmatprep.subr.mxu0 0.0
  %1308 = vmatpush1.msra.mxu0 0.0
  %1309 = vmatprep.mubr.f32.mxu0 0.0
  %1310 = vmatmul.mubr.f32.gmra.mrb[0].mxu0 %v1241
  %v1311 = vpop.f32.mrb[0].mxu0
  %v1312 = vadd.f32 %v1229, %v1311
  %v1313 = vpop.f32.mrb[0].mxu0
  %1314 = vmatprep.mubr.f32.mxu0 0.0
  %1315 = vmatmul.mubr.f32.gmra.mrb[0].mxu0 %v1243
  %v1316 = vpop.f32.mrb[0].mxu0
  %v1317 = vadd.f32 %v1234, %v1316
  %v1318 = vpop.f32.mrb[0].mxu0
  %1319 = vdwg.mxu0
  %1320 = vrot.lane.b32.xlu0 %v142, 65
  %v1321 = vpop.permute.xlu0 %1320
  %1322 = vrot.lane.b32.xlu0 %v147, 65
  %v1323 = vpop.permute.xlu0 %1322
  %v1324 = vsel %vm154, %v1321, 0
  %v1326 = vsel %vm154, %v1323, 0
  %1328 = vmatprep.subr.mxu0 0.0
  %1329 = vmatpush1.msra.mxu0 %v152
  %1330 = vmatprep.subr.mxu0 0.0
  %1331 = vmatpush1.msra.mxu0 %v163
  %1332 = vmatprep.subr.mxu0 0.0
  %1333 = vmatpush1.msra.mxu0 0.0
  %1334 = vmatprep.subr.mxu0 0.0
  %1335 = vmatpush1.msra.mxu0 0.0
  %1336 = vmatprep.subr.mxu0 0.0
  %1337 = vmatpush1.msra.mxu0 0.0
  %1338 = vmatprep.subr.mxu0 0.0
  %1339 = vmatpush1.msra.mxu0 0.0
  %1340 = vmatprep.subr.mxu0 0.0
  %1341 = vmatpush1.msra.mxu0 0.0
  %1342 = vmatprep.subr.mxu0 0.0
  %1343 = vmatpush1.msra.mxu0 0.0
  %1344 = vmatprep.subr.mxu0 0.0
  %1345 = vmatpush1.msra.mxu0 0.0
  %1346 = vmatprep.subr.mxu0 0.0
  %1347 = vmatpush1.msra.mxu0 0.0
  %1348 = vmatprep.subr.mxu0 0.0
  %1349 = vmatpush1.msra.mxu0 0.0
  %1350 = vmatprep.subr.mxu0 0.0
  %1351 = vmatpush1.msra.mxu0 0.0
  %1352 = vmatprep.subr.mxu0 0.0
  %1353 = vmatpush1.msra.mxu0 0.0
  %1354 = vmatprep.subr.mxu0 0.0
  %1355 = vmatpush1.msra.mxu0 0.0
  %1356 = vmatprep.subr.mxu0 0.0
  %1357 = vmatpush1.msra.mxu0 0.0
  %1358 = vmatprep.subr.mxu0 0.0
  %1359 = vmatpush1.msra.mxu0 0.0
  %1360 = vmatprep.subr.mxu0 0.0
  %1361 = vmatpush1.msra.mxu0 0.0
  %1362 = vmatprep.subr.mxu0 0.0
  %1363 = vmatpush1.msra.mxu0 0.0
  %1364 = vmatprep.subr.mxu0 0.0
  %1365 = vmatpush1.msra.mxu0 0.0
  %1366 = vmatprep.subr.mxu0 0.0
  %1367 = vmatpush1.msra.mxu0 0.0
  %1368 = vmatprep.subr.mxu0 0.0
  %1369 = vmatpush1.msra.mxu0 0.0
  %1370 = vmatprep.subr.mxu0 0.0
  %1371 = vmatpush1.msra.mxu0 0.0
  %1372 = vmatprep.subr.mxu0 0.0
  %1373 = vmatpush1.msra.mxu0 0.0
  %1374 = vmatprep.subr.mxu0 0.0
  %1375 = vmatpush1.msra.mxu0 0.0
  %1376 = vmatprep.subr.mxu0 0.0
  %1377 = vmatpush1.msra.mxu0 0.0
  %1378 = vmatprep.subr.mxu0 0.0
  %1379 = vmatpush1.msra.mxu0 0.0
  %1380 = vmatprep.subr.mxu0 0.0
  %1381 = vmatpush1.msra.mxu0 0.0
  %1382 = vmatprep.subr.mxu0 0.0
  %1383 = vmatpush1.msra.mxu0 0.0
  %1384 = vmatprep.subr.mxu0 0.0
  %1385 = vmatpush1.msra.mxu0 0.0
  %1386 = vmatprep.subr.mxu0 0.0
  %1387 = vmatpush1.msra.mxu0 0.0
  %1388 = vmatprep.subr.mxu0 0.0
  %1389 = vmatpush1.msra.mxu0 0.0
  %1390 = vmatprep.subr.mxu0 0.0
  %1391 = vmatpush1.msra.mxu0 0.0
  %1392 = vmatprep.mubr.f32.mxu0 0.0
  %1393 = vmatmul.mubr.f32.gmra.mrb[0].mxu0 %v1324
  %v1394 = vpop.f32.mrb[0].mxu0
  %v1395 = vadd.f32 0.0, %v1394
  %v1396 = vpop.f32.mrb[0].mxu0
  %1397 = vmatprep.mubr.f32.mxu0 0.0
  %1398 = vmatmul.mubr.f32.gmra.mrb[0].mxu0 %v1326
  %v1399 = vpop.f32.mrb[0].mxu0
  %v1400 = vadd.f32 0.0, %v1399
  %v1401 = vpop.f32.mrb[0].mxu0
  %1402 = vdwg.mxu0
  %1403 = vrot.lane.b32.xlu0 %v132, 65
  %v1404 = vpop.permute.xlu0 %1403
  %1405 = vrot.lane.b32.xlu0 %v137, 65
  %v1406 = vpop.permute.xlu0 %1405
  %v1407 = vsel %vm154, %v1404, 0
  %v1409 = vsel %vm154, %v1406, 0
  %1411 = vmatprep.subr.mxu0 0.0
  %1412 = vmatpush1.msra.mxu0 %v150
  %1413 = vmatprep.subr.mxu0 0.0
  %1414 = vmatpush1.msra.mxu0 %v247
  %1415 = vmatprep.subr.mxu0 0.0
  %1416 = vmatpush1.msra.mxu0 0.0
  %1417 = vmatprep.subr.mxu0 0.0
  %1418 = vmatpush1.msra.mxu0 0.0
  %1419 = vmatprep.subr.mxu0 0.0
  %1420 = vmatpush1.msra.mxu0 0.0
  %1421 = vmatprep.subr.mxu0 0.0
  %1422 = vmatpush1.msra.mxu0 0.0
  %1423 = vmatprep.subr.mxu0 0.0
  %1424 = vmatpush1.msra.mxu0 0.0
  %1425 = vmatprep.subr.mxu0 0.0
  %1426 = vmatpush1.msra.mxu0 0.0
  %1427 = vmatprep.subr.mxu0 0.0
  %1428 = vmatpush1.msra.mxu0 0.0
  %1429 = vmatprep.subr.mxu0 0.0
  %1430 = vmatpush1.msra.mxu0 0.0
  %1431 = vmatprep.subr.mxu0 0.0
  %1432 = vmatpush1.msra.mxu0 0.0
  %1433 = vmatprep.subr.mxu0 0.0
  %1434 = vmatpush1.msra.mxu0 0.0
  %1435 = vmatprep.subr.mxu0 0.0
  %1436 = vmatpush1.msra.mxu0 0.0
  %1437 = vmatprep.subr.mxu0 0.0
  %1438 = vmatpush1.msra.mxu0 0.0
  %1439 = vmatprep.subr.mxu0 0.0
  %1440 = vmatpush1.msra.mxu0 0.0
  %1441 = vmatprep.subr.mxu0 0.0
  %1442 = vmatpush1.msra.mxu0 0.0
  %1443 = vmatprep.subr.mxu0 0.0
  %1444 = vmatpush1.msra.mxu0 0.0
  %1445 = vmatprep.subr.mxu0 0.0
  %1446 = vmatpush1.msra.mxu0 0.0
  %1447 = vmatprep.subr.mxu0 0.0
  %1448 = vmatpush1.msra.mxu0 0.0
  %1449 = vmatprep.subr.mxu0 0.0
  %1450 = vmatpush1.msra.mxu0 0.0
  %1451 = vmatprep.subr.mxu0 0.0
  %1452 = vmatpush1.msra.mxu0 0.0
  %1453 = vmatprep.subr.mxu0 0.0
  %1454 = vmatpush1.msra.mxu0 0.0
  %1455 = vmatprep.subr.mxu0 0.0
  %1456 = vmatpush1.msra.mxu0 0.0
  %1457 = vmatprep.subr.mxu0 0.0
  %1458 = vmatpush1.msra.mxu0 0.0
  %1459 = vmatprep.subr.mxu0 0.0
  %1460 = vmatpush1.msra.mxu0 0.0
  %1461 = vmatprep.subr.mxu0 0.0
  %1462 = vmatpush1.msra.mxu0 0.0
  %1463 = vmatprep.subr.mxu0 0.0
  %1464 = vmatpush1.msra.mxu0 0.0
  %1465 = vmatprep.subr.mxu0 0.0
  %1466 = vmatpush1.msra.mxu0 0.0
  %1467 = vmatprep.subr.mxu0 0.0
  %1468 = vmatpush1.msra.mxu0 0.0
  %1469 = vmatprep.subr.mxu0 0.0
  %1470 = vmatpush1.msra.mxu0 0.0
  %1471 = vmatprep.subr.mxu0 0.0
  %1472 = vmatpush1.msra.mxu0 0.0
  %1473 = vmatprep.subr.mxu0 0.0
  %1474 = vmatpush1.msra.mxu0 0.0
  %1475 = vmatprep.mubr.f32.mxu0 0.0
  %1476 = vmatmul.mubr.f32.gmra.mrb[0].mxu0 %v1407
  %v1477 = vpop.f32.mrb[0].mxu0
  %v1478 = vadd.f32 %v1395, %v1477
  %v1479 = vpop.f32.mrb[0].mxu0
  %1480 = vmatprep.mubr.f32.mxu0 0.0
  %1481 = vmatmul.mubr.f32.gmra.mrb[0].mxu0 %v1409
  %v1482 = vpop.f32.mrb[0].mxu0
  %v1483 = vadd.f32 %v1400, %v1482
  %v1484 = vpop.f32.mrb[0].mxu0
  %1485 = vdwg.mxu0
  %1488 = vrot.lane.b32.xlu0 %v482, 16
  %v1489 = vpop.permute.xlu0 %1488
  %1490 = vrot.lane.b32.xlu0 %v487, 16
  %v1491 = vpop.permute.xlu0 %1490
  %1496 = vrot.lane.b32.xlu0 %v648, 32
  %v1497 = vpop.permute.xlu0 %1496
  %1498 = vrot.lane.b32.xlu0 %v653, 32
  %v1499 = vpop.permute.xlu0 %1498
  %1504 = vrot.lane.b32.xlu0 %v814, 48
  %v1505 = vpop.permute.xlu0 %1504
  %1506 = vrot.lane.b32.xlu0 %v819, 48
  %v1507 = vpop.permute.xlu0 %1506
  %1512 = vrot.lane.b32.xlu0 %v980, 64
  %v1513 = vpop.permute.xlu0 %1512
  %1514 = vrot.lane.b32.xlu0 %v985, 64
  %v1515 = vpop.permute.xlu0 %1514
  %1520 = vrot.lane.b32.xlu0 %v1146, 80
  %v1521 = vpop.permute.xlu0 %1520
  %1522 = vrot.lane.b32.xlu0 %v1151, 80
  %v1523 = vpop.permute.xlu0 %1522
  %1528 = vrot.lane.b32.xlu0 %v1312, 96
  %v1529 = vpop.permute.xlu0 %1528
  %1530 = vrot.lane.b32.xlu0 %v1317, 96
  %v1531 = vpop.permute.xlu0 %1530
  %1536 = vrot.lane.b32.xlu0 %v1478, 112
  %v1537 = vpop.permute.xlu0 %1536
  %1538 = vrot.lane.b32.xlu0 %v1483, 112
  %v1539 = vpop.permute.xlu0 %1538
  %vm1542 = vcmask 130048
  %v1543 = vsel %vm1542, %v316, %v1489
  %v1544 = vsel %vm1542, %v321, %v1491
  %v1545 = vsel %vm52, %v1543, %v1497
  %v1546 = vsel %vm52, %v1544, %v1499
  %vm1547 = vcmask 392192
  %v1548 = vsel %vm1547, %v1545, %v1505
  %v1549 = vsel %vm1547, %v1546, %v1507
  %vm1550 = vcmask 523264
  %v1551 = vsel %vm1550, %v1548, %v1513
  %v1552 = vsel %vm1550, %v1549, %v1515
  %vm1553 = vcmask 654336
  %v1554 = vsel %vm1553, %v1551, %v1521
  %v1555 = vsel %vm1553, %v1552, %v1523
  %vm1556 = vcmask 785408
  %v1557 = vsel %vm1556, %v1554, %v1529
  %v1558 = vsel %vm1556, %v1555, %v1531
  %vm1559 = vcmask 916480
  %v1560 = vsel %vm1559, %v1557, %v1537
  %v1561 = vsel %vm1559, %v1558, %v1539
  %1562 = vst [vmem:[%s12] sm:$0xff] %v1560
  %1563 = vst [vmem:[%s12 + $0x8] sm:$0xff] %v1561
  %v1564 = vld [vmem:[%s5] sm:$0xff]
  %v1565 = vld [vmem:[%s5 + $0x8] sm:$0xff]
  %v1566 = vld [vmem:[%s4] sm:$0xff]
  %v1567 = vld [vmem:[%s4 + $0x8] sm:$0xff]
  %v1568 = vld [vmem:[%s4 + $0x10] sm:$0xff]
  %v1569 = vld [vmem:[%s4 + $0x18] sm:$0xff]
  %v1571 = vsel %vm1542, %v1564, 0
  %v1574 = vsel %vm1542, %v1565, 0
  %1576 = vmatprep.subr.mxu0 %v1567
  %1577 = vmatpush1.msra.mxu0 %v1566
  %1578 = vmatprep.subr.mxu0 %v1569
  %1579 = vmatpush1.msra.mxu0 %v1568
  %1580 = vmatprep.subr.mxu0 0.0
  %1581 = vmatpush1.msra.mxu0 0.0
  %1582 = vmatprep.subr.mxu0 0.0
  %1583 = vmatpush1.msra.mxu0 0.0
  %1584 = vmatprep.subr.mxu0 0.0
  %1585 = vmatpush1.msra.mxu0 0.0
  %1586 = vmatprep.subr.mxu0 0.0
  %1587 = vmatpush1.msra.mxu0 0.0
  %1588 = vmatprep.subr.mxu0 0.0
  %1589 = vmatpush1.msra.mxu0 0.0
  %1590 = vmatprep.subr.mxu0 0.0
  %1591 = vmatpush1.msra.mxu0 0.0
  %1592 = vmatprep.subr.mxu0 0.0
  %1593 = vmatpush1.msra.mxu0 0.0
  %1594 = vmatprep.subr.mxu0 0.0
  %1595 = vmatpush1.msra.mxu0 0.0
  %1596 = vmatprep.subr.mxu0 0.0
  %1597 = vmatpush1.msra.mxu0 0.0
  %1598 = vmatprep.subr.mxu0 0.0
  %1599 = vmatpush1.msra.mxu0 0.0
  %1600 = vmatprep.subr.mxu0 0.0
  %1601 = vmatpush1.msra.mxu0 0.0
  %1602 = vmatprep.subr.mxu0 0.0
  %1603 = vmatpush1.msra.mxu0 0.0
  %1604 = vmatprep.subr.mxu0 0.0
  %1605 = vmatpush1.msra.mxu0 0.0
  %1606 = vmatprep.subr.mxu0 0.0
  %1607 = vmatpush1.msra.mxu0 0.0
  %1608 = vmatprep.subr.mxu0 0.0
  %1609 = vmatpush1.msra.mxu0 0.0
  %1610 = vmatprep.subr.mxu0 0.0
  %1611 = vmatpush1.msra.mxu0 0.0
  %1612 = vmatprep.subr.mxu0 0.0
  %1613 = vmatpush1.msra.mxu0 0.0
  %1614 = vmatprep.subr.mxu0 0.0
  %1615 = vmatpush1.msra.mxu0 0.0
  %1616 = vmatprep.subr.mxu0 0.0
  %1617 = vmatpush1.msra.mxu0 0.0
  %1618 = vmatprep.subr.mxu0 0.0
  %1619 = vmatpush1.msra.mxu0 0.0
  %1620 = vmatprep.subr.mxu0 0.0
  %1621 = vmatpush1.msra.mxu0 0.0
  %1622 = vmatprep.subr.mxu0 0.0
  %1623 = vmatpush1.msra.mxu0 0.0
  %1624 = vmatprep.subr.mxu0 0.0
  %1625 = vmatpush1.msra.mxu0 0.0
  %1626 = vmatprep.subr.mxu0 0.0
  %1627 = vmatpush1.msra.mxu0 0.0
  %1628 = vmatprep.subr.mxu0 0.0
  %1629 = vmatpush1.msra.mxu0 0.0
  %1630 = vmatprep.subr.mxu0 0.0
  %1631 = vmatpush1.msra.mxu0 0.0
  %1632 = vmatprep.subr.mxu0 0.0
  %1633 = vmatpush1.msra.mxu0 0.0
  %1634 = vmatprep.subr.mxu0 0.0
  %1635 = vmatpush1.msra.mxu0 0.0
  %1636 = vmatprep.subr.mxu0 0.0
  %1637 = vmatpush1.msra.mxu0 0.0
  %1638 = vmatprep.subr.mxu0 0.0
  %1639 = vmatpush1.msra.mxu0 0.0
  %1640 = vmatprep.mubr.f32.mxu0 0.0
  %1641 = vmatmul.mubr.f32.gmra.mrb[0].mxu0 %v1571
  %v1642 = vpop.f32.mrb[0].mxu0
  %v1643 = vadd.f32 0.0, %v1642
  %v1644 = vpop.f32.mrb[0].mxu0
  %v1645 = vadd.f32 0.0, %v1644
  %1646 = vmatprep.mubr.f32.mxu0 0.0
  %1647 = vmatmul.mubr.f32.gmra.mrb[0].mxu0 %v1574
  %v1648 = vpop.f32.mrb[0].mxu0
  %v1649 = vadd.f32 0.0, %v1648
  %v1650 = vpop.f32.mrb[0].mxu0
  %v1651 = vadd.f32 0.0, %v1650
  %1652 = vdwg.mxu0
  %v1653 = vld [vmem:[%s6] sm:$0xff]
  %v1654 = vld [vmem:[%s6 + $0x8] sm:$0x1]
  %v1655 = vld [vmem:[%s7] sm:$0xff]
  %v1656 = vld [vmem:[%s7 + $0x8] sm:$0x1]
  %v1658 = vsel %vm154, %v1649, 0
  %v1661 = vsel %vm161, %v1656, 0
  %1663 = vmatprep.subr.mxu0 0.0
  %1664 = vmatpush1.msra.mxu0 %v1655
  %1665 = vmatprep.subr.mxu0 0.0
  %1666 = vmatpush1.msra.mxu0 %v1661
  %1667 = vmatprep.subr.mxu0 0.0
  %1668 = vmatpush1.msra.mxu0 0.0
  %1669 = vmatprep.subr.mxu0 0.0
  %1670 = vmatpush1.msra.mxu0 0.0
  %1671 = vmatprep.subr.mxu0 0.0
  %1672 = vmatpush1.msra.mxu0 0.0
  %1673 = vmatprep.subr.mxu0 0.0
  %1674 = vmatpush1.msra.mxu0 0.0
  %1675 = vmatprep.subr.mxu0 0.0
  %1676 = vmatpush1.msra.mxu0 0.0
  %1677 = vmatprep.subr.mxu0 0.0
  %1678 = vmatpush1.msra.mxu0 0.0
  %1679 = vmatprep.subr.mxu0 0.0
  %1680 = vmatpush1.msra.mxu0 0.0
  %1681 = vmatprep.subr.mxu0 0.0
  %1682 = vmatpush1.msra.mxu0 0.0
  %1683 = vmatprep.subr.mxu0 0.0
  %1684 = vmatpush1.msra.mxu0 0.0
  %1685 = vmatprep.subr.mxu0 0.0
  %1686 = vmatpush1.msra.mxu0 0.0
  %1687 = vmatprep.subr.mxu0 0.0
  %1688 = vmatpush1.msra.mxu0 0.0
  %1689 = vmatprep.subr.mxu0 0.0
  %1690 = vmatpush1.msra.mxu0 0.0
  %1691 = vmatprep.subr.mxu0 0.0
  %1692 = vmatpush1.msra.mxu0 0.0
  %1693 = vmatprep.subr.mxu0 0.0
  %1694 = vmatpush1.msra.mxu0 0.0
  %1695 = vmatprep.subr.mxu0 0.0
  %1696 = vmatpush1.msra.mxu0 0.0
  %1697 = vmatprep.subr.mxu0 0.0
  %1698 = vmatpush1.msra.mxu0 0.0
  %1699 = vmatprep.subr.mxu0 0.0
  %1700 = vmatpush1.msra.mxu0 0.0
  %1701 = vmatprep.subr.mxu0 0.0
  %1702 = vmatpush1.msra.mxu0 0.0
  %1703 = vmatprep.subr.mxu0 0.0
  %1704 = vmatpush1.msra.mxu0 0.0
  %1705 = vmatprep.subr.mxu0 0.0
  %1706 = vmatpush1.msra.mxu0 0.0
  %1707 = vmatprep.subr.mxu0 0.0
  %1708 = vmatpush1.msra.mxu0 0.0
  %1709 = vmatprep.subr.mxu0 0.0
  %1710 = vmatpush1.msra.mxu0 0.0
  %1711 = vmatprep.subr.mxu0 0.0
  %1712 = vmatpush1.msra.mxu0 0.0
  %1713 = vmatprep.subr.mxu0 0.0
  %1714 = vmatpush1.msra.mxu0 0.0
  %1715 = vmatprep.subr.mxu0 0.0
  %1716 = vmatpush1.msra.mxu0 0.0
  %1717 = vmatprep.subr.mxu0 0.0
  %1718 = vmatpush1.msra.mxu0 0.0
  %1719 = vmatprep.subr.mxu0 0.0
  %1720 = vmatpush1.msra.mxu0 0.0
  %1721 = vmatprep.subr.mxu0 0.0
  %1722 = vmatpush1.msra.mxu0 0.0
  %1723 = vmatprep.subr.mxu0 0.0
  %1724 = vmatpush1.msra.mxu0 0.0
  %1725 = vmatprep.subr.mxu0 0.0
  %1726 = vmatpush1.msra.mxu0 0.0
  %1727 = vmatprep.mubr.f32.mxu0 0.0
  %1728 = vmatmul.mubr.f32.gmra.mrb[0].mxu0 %v1658
  %v1729 = vpop.f32.mrb[0].mxu0
  %v1730 = vadd.f32 0.0, %v1729
  %v1731 = vpop.f32.mrb[0].mxu0
  %1732 = vdwg.mxu0
  %v1734 = vsel %vm154, %v1643, 0
  %v1737 = vsel %vm161, %v1654, 0
  %1739 = vmatprep.subr.mxu0 0.0
  %1740 = vmatpush1.msra.mxu0 %v1653
  %1741 = vmatprep.subr.mxu0 0.0
  %1742 = vmatpush1.msra.mxu0 %v1737
  %1743 = vmatprep.subr.mxu0 0.0
  %1744 = vmatpush1.msra.mxu0 0.0
  %1745 = vmatprep.subr.mxu0 0.0
  %1746 = vmatpush1.msra.mxu0 0.0
  %1747 = vmatprep.subr.mxu0 0.0
  %1748 = vmatpush1.msra.mxu0 0.0
  %1749 = vmatprep.subr.mxu0 0.0
  %1750 = vmatpush1.msra.mxu0 0.0
  %1751 = vmatprep.subr.mxu0 0.0
  %1752 = vmatpush1.msra.mxu0 0.0
  %1753 = vmatprep.subr.mxu0 0.0
  %1754 = vmatpush1.msra.mxu0 0.0
  %1755 = vmatprep.subr.mxu0 0.0
  %1756 = vmatpush1.msra.mxu0 0.0
  %1757 = vmatprep.subr.mxu0 0.0
  %1758 = vmatpush1.msra.mxu0 0.0
  %1759 = vmatprep.subr.mxu0 0.0
  %1760 = vmatpush1.msra.mxu0 0.0
  %1761 = vmatprep.subr.mxu0 0.0
  %1762 = vmatpush1.msra.mxu0 0.0
  %1763 = vmatprep.subr.mxu0 0.0
  %1764 = vmatpush1.msra.mxu0 0.0
  %1765 = vmatprep.subr.mxu0 0.0
  %1766 = vmatpush1.msra.mxu0 0.0
  %1767 = vmatprep.subr.mxu0 0.0
  %1768 = vmatpush1.msra.mxu0 0.0
  %1769 = vmatprep.subr.mxu0 0.0
  %1770 = vmatpush1.msra.mxu0 0.0
  %1771 = vmatprep.subr.mxu0 0.0
  %1772 = vmatpush1.msra.mxu0 0.0
  %1773 = vmatprep.subr.mxu0 0.0
  %1774 = vmatpush1.msra.mxu0 0.0
  %1775 = vmatprep.subr.mxu0 0.0
  %1776 = vmatpush1.msra.mxu0 0.0
  %1777 = vmatprep.subr.mxu0 0.0
  %1778 = vmatpush1.msra.mxu0 0.0
  %1779 = vmatprep.subr.mxu0 0.0
  %1780 = vmatpush1.msra.mxu0 0.0
  %1781 = vmatprep.subr.mxu0 0.0
  %1782 = vmatpush1.msra.mxu0 0.0
  %1783 = vmatprep.subr.mxu0 0.0
  %1784 = vmatpush1.msra.mxu0 0.0
  %1785 = vmatprep.subr.mxu0 0.0
  %1786 = vmatpush1.msra.mxu0 0.0
  %1787 = vmatprep.subr.mxu0 0.0
  %1788 = vmatpush1.msra.mxu0 0.0
  %1789 = vmatprep.subr.mxu0 0.0
  %1790 = vmatpush1.msra.mxu0 0.0
  %1791 = vmatprep.subr.mxu0 0.0
  %1792 = vmatpush1.msra.mxu0 0.0
  %1793 = vmatprep.subr.mxu0 0.0
  %1794 = vmatpush1.msra.mxu0 0.0
  %1795 = vmatprep.subr.mxu0 0.0
  %1796 = vmatpush1.msra.mxu0 0.0
  %1797 = vmatprep.subr.mxu0 0.0
  %1798 = vmatpush1.msra.mxu0 0.0
  %1799 = vmatprep.subr.mxu0 0.0
  %1800 = vmatpush1.msra.mxu0 0.0
  %1801 = vmatprep.subr.mxu0 0.0
  %1802 = vmatpush1.msra.mxu0 0.0
  %1803 = vmatprep.mubr.f32.mxu0 0.0
  %1804 = vmatmul.mubr.f32.gmra.mrb[0].mxu0 %v1734
  %v1805 = vpop.f32.mrb[0].mxu0
  %v1806 = vadd.f32 %v1730, %v1805
  %v1807 = vpop.f32.mrb[0].mxu0
  %1808 = vdwg.mxu0
  %1809 = vrot.lane.b32.xlu0 %v1649, 119
  %v1810 = vpop.permute.xlu0 %1809
  %v1811 = vsel %vm154, %v1810, 0
  %1813 = vmatprep.subr.mxu0 0.0
  %1814 = vmatpush1.msra.mxu0 %v1655
  %1815 = vmatprep.subr.mxu0 0.0
  %1816 = vmatpush1.msra.mxu0 %v1661
  %1817 = vmatprep.subr.mxu0 0.0
  %1818 = vmatpush1.msra.mxu0 0.0
  %1819 = vmatprep.subr.mxu0 0.0
  %1820 = vmatpush1.msra.mxu0 0.0
  %1821 = vmatprep.subr.mxu0 0.0
  %1822 = vmatpush1.msra.mxu0 0.0
  %1823 = vmatprep.subr.mxu0 0.0
  %1824 = vmatpush1.msra.mxu0 0.0
  %1825 = vmatprep.subr.mxu0 0.0
  %1826 = vmatpush1.msra.mxu0 0.0
  %1827 = vmatprep.subr.mxu0 0.0
  %1828 = vmatpush1.msra.mxu0 0.0
  %1829 = vmatprep.subr.mxu0 0.0
  %1830 = vmatpush1.msra.mxu0 0.0
  %1831 = vmatprep.subr.mxu0 0.0
  %1832 = vmatpush1.msra.mxu0 0.0
  %1833 = vmatprep.subr.mxu0 0.0
  %1834 = vmatpush1.msra.mxu0 0.0
  %1835 = vmatprep.subr.mxu0 0.0
  %1836 = vmatpush1.msra.mxu0 0.0
  %1837 = vmatprep.subr.mxu0 0.0
  %1838 = vmatpush1.msra.mxu0 0.0
  %1839 = vmatprep.subr.mxu0 0.0
  %1840 = vmatpush1.msra.mxu0 0.0
  %1841 = vmatprep.subr.mxu0 0.0
  %1842 = vmatpush1.msra.mxu0 0.0
  %1843 = vmatprep.subr.mxu0 0.0
  %1844 = vmatpush1.msra.mxu0 0.0
  %1845 = vmatprep.subr.mxu0 0.0
  %1846 = vmatpush1.msra.mxu0 0.0
  %1847 = vmatprep.subr.mxu0 0.0
  %1848 = vmatpush1.msra.mxu0 0.0
  %1849 = vmatprep.subr.mxu0 0.0
  %1850 = vmatpush1.msra.mxu0 0.0
  %1851 = vmatprep.subr.mxu0 0.0
  %1852 = vmatpush1.msra.mxu0 0.0
  %1853 = vmatprep.subr.mxu0 0.0
  %1854 = vmatpush1.msra.mxu0 0.0
  %1855 = vmatprep.subr.mxu0 0.0
  %1856 = vmatpush1.msra.mxu0 0.0
  %1857 = vmatprep.subr.mxu0 0.0
  %1858 = vmatpush1.msra.mxu0 0.0
  %1859 = vmatprep.subr.mxu0 0.0
  %1860 = vmatpush1.msra.mxu0 0.0
  %1861 = vmatprep.subr.mxu0 0.0
  %1862 = vmatpush1.msra.mxu0 0.0
  %1863 = vmatprep.subr.mxu0 0.0
  %1864 = vmatpush1.msra.mxu0 0.0
  %1865 = vmatprep.subr.mxu0 0.0
  %1866 = vmatpush1.msra.mxu0 0.0
  %1867 = vmatprep.subr.mxu0 0.0
  %1868 = vmatpush1.msra.mxu0 0.0
  %1869 = vmatprep.subr.mxu0 0.0
  %1870 = vmatpush1.msra.mxu0 0.0
  %1871 = vmatprep.subr.mxu0 0.0
  %1872 = vmatpush1.msra.mxu0 0.0
  %1873 = vmatprep.subr.mxu0 0.0
  %1874 = vmatpush1.msra.mxu0 0.0
  %1875 = vmatprep.subr.mxu0 0.0
  %1876 = vmatpush1.msra.mxu0 0.0
  %1877 = vmatprep.mubr.f32.mxu0 0.0
  %1878 = vmatmul.mubr.f32.gmra.mrb[0].mxu0 %v1811
  %v1879 = vpop.f32.mrb[0].mxu0
  %v1880 = vadd.f32 0.0, %v1879
  %v1881 = vpop.f32.mrb[0].mxu0
  %1882 = vdwg.mxu0
  %1883 = vrot.lane.b32.xlu0 %v1643, 119
  %v1884 = vpop.permute.xlu0 %1883
  %v1885 = vsel %vm154, %v1884, 0
  %1887 = vmatprep.subr.mxu0 0.0
  %1888 = vmatpush1.msra.mxu0 %v1653
  %1889 = vmatprep.subr.mxu0 0.0
  %1890 = vmatpush1.msra.mxu0 %v1737
  %1891 = vmatprep.subr.mxu0 0.0
  %1892 = vmatpush1.msra.mxu0 0.0
  %1893 = vmatprep.subr.mxu0 0.0
  %1894 = vmatpush1.msra.mxu0 0.0
  %1895 = vmatprep.subr.mxu0 0.0
  %1896 = vmatpush1.msra.mxu0 0.0
  %1897 = vmatprep.subr.mxu0 0.0
  %1898 = vmatpush1.msra.mxu0 0.0
  %1899 = vmatprep.subr.mxu0 0.0
  %1900 = vmatpush1.msra.mxu0 0.0
  %1901 = vmatprep.subr.mxu0 0.0
  %1902 = vmatpush1.msra.mxu0 0.0
  %1903 = vmatprep.subr.mxu0 0.0
  %1904 = vmatpush1.msra.mxu0 0.0
  %1905 = vmatprep.subr.mxu0 0.0
  %1906 = vmatpush1.msra.mxu0 0.0
  %1907 = vmatprep.subr.mxu0 0.0
  %1908 = vmatpush1.msra.mxu0 0.0
  %1909 = vmatprep.subr.mxu0 0.0
  %1910 = vmatpush1.msra.mxu0 0.0
  %1911 = vmatprep.subr.mxu0 0.0
  %1912 = vmatpush1.msra.mxu0 0.0
  %1913 = vmatprep.subr.mxu0 0.0
  %1914 = vmatpush1.msra.mxu0 0.0
  %1915 = vmatprep.subr.mxu0 0.0
  %1916 = vmatpush1.msra.mxu0 0.0
  %1917 = vmatprep.subr.mxu0 0.0
  %1918 = vmatpush1.msra.mxu0 0.0
  %1919 = vmatprep.subr.mxu0 0.0
  %1920 = vmatpush1.msra.mxu0 0.0
  %1921 = vmatprep.subr.mxu0 0.0
  %1922 = vmatpush1.msra.mxu0 0.0
  %1923 = vmatprep.subr.mxu0 0.0
  %1924 = vmatpush1.msra.mxu0 0.0
  %1925 = vmatprep.subr.mxu0 0.0
  %1926 = vmatpush1.msra.mxu0 0.0
  %1927 = vmatprep.subr.mxu0 0.0
  %1928 = vmatpush1.msra.mxu0 0.0
  %1929 = vmatprep.subr.mxu0 0.0
  %1930 = vmatpush1.msra.mxu0 0.0
  %1931 = vmatprep.subr.mxu0 0.0
  %1932 = vmatpush1.msra.mxu0 0.0
  %1933 = vmatprep.subr.mxu0 0.0
  %1934 = vmatpush1.msra.mxu0 0.0
  %1935 = vmatprep.subr.mxu0 0.0
  %1936 = vmatpush1.msra.mxu0 0.0
  %1937 = vmatprep.subr.mxu0 0.0
  %1938 = vmatpush1.msra.mxu0 0.0
  %1939 = vmatprep.subr.mxu0 0.0
  %1940 = vmatpush1.msra.mxu0 0.0
  %1941 = vmatprep.subr.mxu0 0.0
  %1942 = vmatpush1.msra.mxu0 0.0
  %1943 = vmatprep.subr.mxu0 0.0
  %1944 = vmatpush1.msra.mxu0 0.0
  %1945 = vmatprep.subr.mxu0 0.0
  %1946 = vmatpush1.msra.mxu0 0.0
  %1947 = vmatprep.subr.mxu0 0.0
  %1948 = vmatpush1.msra.mxu0 0.0
  %1949 = vmatprep.subr.mxu0 0.0
  %1950 = vmatpush1.msra.mxu0 0.0
  %1951 = vmatprep.mubr.f32.mxu0 0.0
  %1952 = vmatmul.mubr.f32.gmra.mrb[0].mxu0 %v1885
  %v1953 = vpop.f32.mrb[0].mxu0
  %v1954 = vadd.f32 %v1880, %v1953
  %v1955 = vpop.f32.mrb[0].mxu0
  %1956 = vdwg.mxu0
  %1957 = vrot.lane.b32.xlu0 %v1649, 110
  %v1958 = vpop.permute.xlu0 %1957
  %v1959 = vsel %vm154, %v1958, 0
  %1961 = vmatprep.subr.mxu0 0.0
  %1962 = vmatpush1.msra.mxu0 %v1655
  %1963 = vmatprep.subr.mxu0 0.0
  %1964 = vmatpush1.msra.mxu0 %v1661
  %1965 = vmatprep.subr.mxu0 0.0
  %1966 = vmatpush1.msra.mxu0 0.0
  %1967 = vmatprep.subr.mxu0 0.0
  %1968 = vmatpush1.msra.mxu0 0.0
  %1969 = vmatprep.subr.mxu0 0.0
  %1970 = vmatpush1.msra.mxu0 0.0
  %1971 = vmatprep.subr.mxu0 0.0
  %1972 = vmatpush1.msra.mxu0 0.0
  %1973 = vmatprep.subr.mxu0 0.0
  %1974 = vmatpush1.msra.mxu0 0.0
  %1975 = vmatprep.subr.mxu0 0.0
  %1976 = vmatpush1.msra.mxu0 0.0
  %1977 = vmatprep.subr.mxu0 0.0
  %1978 = vmatpush1.msra.mxu0 0.0
  %1979 = vmatprep.subr.mxu0 0.0
  %1980 = vmatpush1.msra.mxu0 0.0
  %1981 = vmatprep.subr.mxu0 0.0
  %1982 = vmatpush1.msra.mxu0 0.0
  %1983 = vmatprep.subr.mxu0 0.0
  %1984 = vmatpush1.msra.mxu0 0.0
  %1985 = vmatprep.subr.mxu0 0.0
  %1986 = vmatpush1.msra.mxu0 0.0
  %1987 = vmatprep.subr.mxu0 0.0
  %1988 = vmatpush1.msra.mxu0 0.0
  %1989 = vmatprep.subr.mxu0 0.0
  %1990 = vmatpush1.msra.mxu0 0.0
  %1991 = vmatprep.subr.mxu0 0.0
  %1992 = vmatpush1.msra.mxu0 0.0
  %1993 = vmatprep.subr.mxu0 0.0
  %1994 = vmatpush1.msra.mxu0 0.0
  %1995 = vmatprep.subr.mxu0 0.0
  %1996 = vmatpush1.msra.mxu0 0.0
  %1997 = vmatprep.subr.mxu0 0.0
  %1998 = vmatpush1.msra.mxu0 0.0
  %1999 = vmatprep.subr.mxu0 0.0
  %2000 = vmatpush1.msra.mxu0 0.0
  %2001 = vmatprep.subr.mxu0 0.0
  %2002 = vmatpush1.msra.mxu0 0.0
  %2003 = vmatprep.subr.mxu0 0.0
  %2004 = vmatpush1.msra.mxu0 0.0
  %2005 = vmatprep.subr.mxu0 0.0
  %2006 = vmatpush1.msra.mxu0 0.0
  %2007 = vmatprep.subr.mxu0 0.0
  %2008 = vmatpush1.msra.mxu0 0.0
  %2009 = vmatprep.subr.mxu0 0.0
  %2010 = vmatpush1.msra.mxu0 0.0
  %2011 = vmatprep.subr.mxu0 0.0
  %2012 = vmatpush1.msra.mxu0 0.0
  %2013 = vmatprep.subr.mxu0 0.0
  %2014 = vmatpush1.msra.mxu0 0.0
  %2015 = vmatprep.subr.mxu0 0.0
  %2016 = vmatpush1.msra.mxu0 0.0
  %2017 = vmatprep.subr.mxu0 0.0
  %2018 = vmatpush1.msra.mxu0 0.0
  %2019 = vmatprep.subr.mxu0 0.0
  %2020 = vmatpush1.msra.mxu0 0.0
  %2021 = vmatprep.subr.mxu0 0.0
  %2022 = vmatpush1.msra.mxu0 0.0
  %2023 = vmatprep.subr.mxu0 0.0
  %2024 = vmatpush1.msra.mxu0 0.0
  %2025 = vmatprep.mubr.f32.mxu0 0.0
  %2026 = vmatmul.mubr.f32.gmra.mrb[0].mxu0 %v1959
  %v2027 = vpop.f32.mrb[0].mxu0
  %v2028 = vadd.f32 0.0, %v2027
  %v2029 = vpop.f32.mrb[0].mxu0
  %2030 = vdwg.mxu0
  %2031 = vrot.lane.b32.xlu0 %v1643, 110
  %v2032 = vpop.permute.xlu0 %2031
  %v2033 = vsel %vm154, %v2032, 0
  %2035 = vmatprep.subr.mxu0 0.0
  %2036 = vmatpush1.msra.mxu0 %v1653
  %2037 = vmatprep.subr.mxu0 0.0
  %2038 = vmatpush1.msra.mxu0 %v1737
  %2039 = vmatprep.subr.mxu0 0.0
  %2040 = vmatpush1.msra.mxu0 0.0
  %2041 = vmatprep.subr.mxu0 0.0
  %2042 = vmatpush1.msra.mxu0 0.0
  %2043 = vmatprep.subr.mxu0 0.0
  %2044 = vmatpush1.msra.mxu0 0.0
  %2045 = vmatprep.subr.mxu0 0.0
  %2046 = vmatpush1.msra.mxu0 0.0
  %2047 = vmatprep.subr.mxu0 0.0
  %2048 = vmatpush1.msra.mxu0 0.0
  %2049 = vmatprep.subr.mxu0 0.0
  %2050 = vmatpush1.msra.mxu0 0.0
  %2051 = vmatprep.subr.mxu0 0.0
  %2052 = vmatpush1.msra.mxu0 0.0
  %2053 = vmatprep.subr.mxu0 0.0
  %2054 = vmatpush1.msra.mxu0 0.0
  %2055 = vmatprep.subr.mxu0 0.0
  %2056 = vmatpush1.msra.mxu0 0.0
  %2057 = vmatprep.subr.mxu0 0.0
  %2058 = vmatpush1.msra.mxu0 0.0
  %2059 = vmatprep.subr.mxu0 0.0
  %2060 = vmatpush1.msra.mxu0 0.0
  %2061 = vmatprep.subr.mxu0 0.0
  %2062 = vmatpush1.msra.mxu0 0.0
  %2063 = vmatprep.subr.mxu0 0.0
  %2064 = vmatpush1.msra.mxu0 0.0
  %2065 = vmatprep.subr.mxu0 0.0
  %2066 = vmatpush1.msra.mxu0 0.0
  %2067 = vmatprep.subr.mxu0 0.0
  %2068 = vmatpush1.msra.mxu0 0.0
  %2069 = vmatprep.subr.mxu0 0.0
  %2070 = vmatpush1.msra.mxu0 0.0
  %2071 = vmatprep.subr.mxu0 0.0
  %2072 = vmatpush1.msra.mxu0 0.0
  %2073 = vmatprep.subr.mxu0 0.0
  %2074 = vmatpush1.msra.mxu0 0.0
  %2075 = vmatprep.subr.mxu0 0.0
  %2076 = vmatpush1.msra.mxu0 0.0
  %2077 = vmatprep.subr.mxu0 0.0
  %2078 = vmatpush1.msra.mxu0 0.0
  %2079 = vmatprep.subr.mxu0 0.0
  %2080 = vmatpush1.msra.mxu0 0.0
  %2081 = vmatprep.subr.mxu0 0.0
  %2082 = vmatpush1.msra.mxu0 0.0
  %2083 = vmatprep.subr.mxu0 0.0
  %2084 = vmatpush1.msra.mxu0 0.0
  %2085 = vmatprep.subr.mxu0 0.0
  %2086 = vmatpush1.msra.mxu0 0.0
  %2087 = vmatprep.subr.mxu0 0.0
  %2088 = vmatpush1.msra.mxu0 0.0
  %2089 = vmatprep.subr.mxu0 0.0
  %2090 = vmatpush1.msra.mxu0 0.0
  %2091 = vmatprep.subr.mxu0 0.0
  %2092 = vmatpush1.msra.mxu0 0.0
  %2093 = vmatprep.subr.mxu0 0.0
  %2094 = vmatpush1.msra.mxu0 0.0
  %2095 = vmatprep.subr.mxu0 0.0
  %2096 = vmatpush1.msra.mxu0 0.0
  %2097 = vmatprep.subr.mxu0 0.0
  %2098 = vmatpush1.msra.mxu0 0.0
  %2099 = vmatprep.mubr.f32.mxu0 0.0
  %2100 = vmatmul.mubr.f32.gmra.mrb[0].mxu0 %v2033
  %v2101 = vpop.f32.mrb[0].mxu0
  %v2102 = vadd.f32 %v2028, %v2101
  %v2103 = vpop.f32.mrb[0].mxu0
  %2104 = vdwg.mxu0
  %2105 = vrot.lane.b32.xlu0 %v1649, 101
  %v2106 = vpop.permute.xlu0 %2105
  %v2107 = vsel %vm154, %v2106, 0
  %2109 = vmatprep.subr.mxu0 0.0
  %2110 = vmatpush1.msra.mxu0 %v1655
  %2111 = vmatprep.subr.mxu0 0.0
  %2112 = vmatpush1.msra.mxu0 %v1661
  %2113 = vmatprep.subr.mxu0 0.0
  %2114 = vmatpush1.msra.mxu0 0.0
  %2115 = vmatprep.subr.mxu0 0.0
  %2116 = vmatpush1.msra.mxu0 0.0
  %2117 = vmatprep.subr.mxu0 0.0
  %2118 = vmatpush1.msra.mxu0 0.0
  %2119 = vmatprep.subr.mxu0 0.0
  %2120 = vmatpush1.msra.mxu0 0.0
  %2121 = vmatprep.subr.mxu0 0.0
  %2122 = vmatpush1.msra.mxu0 0.0
  %2123 = vmatprep.subr.mxu0 0.0
  %2124 = vmatpush1.msra.mxu0 0.0
  %2125 = vmatprep.subr.mxu0 0.0
  %2126 = vmatpush1.msra.mxu0 0.0
  %2127 = vmatprep.subr.mxu0 0.0
  %2128 = vmatpush1.msra.mxu0 0.0
  %2129 = vmatprep.subr.mxu0 0.0
  %2130 = vmatpush1.msra.mxu0 0.0
  %2131 = vmatprep.subr.mxu0 0.0
  %2132 = vmatpush1.msra.mxu0 0.0
  %2133 = vmatprep.subr.mxu0 0.0
  %2134 = vmatpush1.msra.mxu0 0.0
  %2135 = vmatprep.subr.mxu0 0.0
  %2136 = vmatpush1.msra.mxu0 0.0
  %2137 = vmatprep.subr.mxu0 0.0
  %2138 = vmatpush1.msra.mxu0 0.0
  %2139 = vmatprep.subr.mxu0 0.0
  %2140 = vmatpush1.msra.mxu0 0.0
  %2141 = vmatprep.subr.mxu0 0.0
  %2142 = vmatpush1.msra.mxu0 0.0
  %2143 = vmatprep.subr.mxu0 0.0
  %2144 = vmatpush1.msra.mxu0 0.0
  %2145 = vmatprep.subr.mxu0 0.0
  %2146 = vmatpush1.msra.mxu0 0.0
  %2147 = vmatprep.subr.mxu0 0.0
  %2148 = vmatpush1.msra.mxu0 0.0
  %2149 = vmatprep.subr.mxu0 0.0
  %2150 = vmatpush1.msra.mxu0 0.0
  %2151 = vmatprep.subr.mxu0 0.0
  %2152 = vmatpush1.msra.mxu0 0.0
  %2153 = vmatprep.subr.mxu0 0.0
  %2154 = vmatpush1.msra.mxu0 0.0
  %2155 = vmatprep.subr.mxu0 0.0
  %2156 = vmatpush1.msra.mxu0 0.0
  %2157 = vmatprep.subr.mxu0 0.0
  %2158 = vmatpush1.msra.mxu0 0.0
  %2159 = vmatprep.subr.mxu0 0.0
  %2160 = vmatpush1.msra.mxu0 0.0
  %2161 = vmatprep.subr.mxu0 0.0
  %2162 = vmatpush1.msra.mxu0 0.0
  %2163 = vmatprep.subr.mxu0 0.0
  %2164 = vmatpush1.msra.mxu0 0.0
  %2165 = vmatprep.subr.mxu0 0.0
  %2166 = vmatpush1.msra.mxu0 0.0
  %2167 = vmatprep.subr.mxu0 0.0
  %2168 = vmatpush1.msra.mxu0 0.0
  %2169 = vmatprep.subr.mxu0 0.0
  %2170 = vmatpush1.msra.mxu0 0.0
  %2171 = vmatprep.subr.mxu0 0.0
  %2172 = vmatpush1.msra.mxu0 0.0
  %2173 = vmatprep.mubr.f32.mxu0 0.0
  %2174 = vmatmul.mubr.f32.gmra.mrb[0].mxu0 %v2107
  %v2175 = vpop.f32.mrb[0].mxu0
  %v2176 = vadd.f32 0.0, %v2175
  %v2177 = vpop.f32.mrb[0].mxu0
  %2178 = vdwg.mxu0
  %2179 = vrot.lane.b32.xlu0 %v1643, 101
  %v2180 = vpop.permute.xlu0 %2179
  %v2181 = vsel %vm154, %v2180, 0
  %2183 = vmatprep.subr.mxu0 0.0
  %2184 = vmatpush1.msra.mxu0 %v1653
  %2185 = vmatprep.subr.mxu0 0.0
  %2186 = vmatpush1.msra.mxu0 %v1737
  %2187 = vmatprep.subr.mxu0 0.0
  %2188 = vmatpush1.msra.mxu0 0.0
  %2189 = vmatprep.subr.mxu0 0.0
  %2190 = vmatpush1.msra.mxu0 0.0
  %2191 = vmatprep.subr.mxu0 0.0
  %2192 = vmatpush1.msra.mxu0 0.0
  %2193 = vmatprep.subr.mxu0 0.0
  %2194 = vmatpush1.msra.mxu0 0.0
  %2195 = vmatprep.subr.mxu0 0.0
  %2196 = vmatpush1.msra.mxu0 0.0
  %2197 = vmatprep.subr.mxu0 0.0
  %2198 = vmatpush1.msra.mxu0 0.0
  %2199 = vmatprep.subr.mxu0 0.0
  %2200 = vmatpush1.msra.mxu0 0.0
  %2201 = vmatprep.subr.mxu0 0.0
  %2202 = vmatpush1.msra.mxu0 0.0
  %2203 = vmatprep.subr.mxu0 0.0
  %2204 = vmatpush1.msra.mxu0 0.0
  %2205 = vmatprep.subr.mxu0 0.0
  %2206 = vmatpush1.msra.mxu0 0.0
  %2207 = vmatprep.subr.mxu0 0.0
  %2208 = vmatpush1.msra.mxu0 0.0
  %2209 = vmatprep.subr.mxu0 0.0
  %2210 = vmatpush1.msra.mxu0 0.0
  %2211 = vmatprep.subr.mxu0 0.0
  %2212 = vmatpush1.msra.mxu0 0.0
  %2213 = vmatprep.subr.mxu0 0.0
  %2214 = vmatpush1.msra.mxu0 0.0
  %2215 = vmatprep.subr.mxu0 0.0
  %2216 = vmatpush1.msra.mxu0 0.0
  %2217 = vmatprep.subr.mxu0 0.0
  %2218 = vmatpush1.msra.mxu0 0.0
  %2219 = vmatprep.subr.mxu0 0.0
  %2220 = vmatpush1.msra.mxu0 0.0
  %2221 = vmatprep.subr.mxu0 0.0
  %2222 = vmatpush1.msra.mxu0 0.0
  %2223 = vmatprep.subr.mxu0 0.0
  %2224 = vmatpush1.msra.mxu0 0.0
  %2225 = vmatprep.subr.mxu0 0.0
  %2226 = vmatpush1.msra.mxu0 0.0
  %2227 = vmatprep.subr.mxu0 0.0
  %2228 = vmatpush1.msra.mxu0 0.0
  %2229 = vmatprep.subr.mxu0 0.0
  %2230 = vmatpush1.msra.mxu0 0.0
  %2231 = vmatprep.subr.mxu0 0.0
  %2232 = vmatpush1.msra.mxu0 0.0
  %2233 = vmatprep.subr.mxu0 0.0
  %2234 = vmatpush1.msra.mxu0 0.0
  %2235 = vmatprep.subr.mxu0 0.0
  %2236 = vmatpush1.msra.mxu0 0.0
  %2237 = vmatprep.subr.mxu0 0.0
  %2238 = vmatpush1.msra.mxu0 0.0
  %2239 = vmatprep.subr.mxu0 0.0
  %2240 = vmatpush1.msra.mxu0 0.0
  %2241 = vmatprep.subr.mxu0 0.0
  %2242 = vmatpush1.msra.mxu0 0.0
  %2243 = vmatprep.subr.mxu0 0.0
  %2244 = vmatpush1.msra.mxu0 0.0
  %2245 = vmatprep.subr.mxu0 0.0
  %2246 = vmatpush1.msra.mxu0 0.0
  %2247 = vmatprep.mubr.f32.mxu0 0.0
  %2248 = vmatmul.mubr.f32.gmra.mrb[0].mxu0 %v2181
  %v2249 = vpop.f32.mrb[0].mxu0
  %v2250 = vadd.f32 %v2176, %v2249
  %v2251 = vpop.f32.mrb[0].mxu0
  %2252 = vdwg.mxu0
  %2253 = vrot.lane.b32.xlu0 %v1649, 92
  %v2254 = vpop.permute.xlu0 %2253
  %v2255 = vsel %vm154, %v2254, 0
  %2257 = vmatprep.subr.mxu0 0.0
  %2258 = vmatpush1.msra.mxu0 %v1655
  %2259 = vmatprep.subr.mxu0 0.0
  %2260 = vmatpush1.msra.mxu0 %v1661
  %2261 = vmatprep.subr.mxu0 0.0
  %2262 = vmatpush1.msra.mxu0 0.0
  %2263 = vmatprep.subr.mxu0 0.0
  %2264 = vmatpush1.msra.mxu0 0.0
  %2265 = vmatprep.subr.mxu0 0.0
  %2266 = vmatpush1.msra.mxu0 0.0
  %2267 = vmatprep.subr.mxu0 0.0
  %2268 = vmatpush1.msra.mxu0 0.0
  %2269 = vmatprep.subr.mxu0 0.0
  %2270 = vmatpush1.msra.mxu0 0.0
  %2271 = vmatprep.subr.mxu0 0.0
  %2272 = vmatpush1.msra.mxu0 0.0
  %2273 = vmatprep.subr.mxu0 0.0
  %2274 = vmatpush1.msra.mxu0 0.0
  %2275 = vmatprep.subr.mxu0 0.0
  %2276 = vmatpush1.msra.mxu0 0.0
  %2277 = vmatprep.subr.mxu0 0.0
  %2278 = vmatpush1.msra.mxu0 0.0
  %2279 = vmatprep.subr.mxu0 0.0
  %2280 = vmatpush1.msra.mxu0 0.0
  %2281 = vmatprep.subr.mxu0 0.0
  %2282 = vmatpush1.msra.mxu0 0.0
  %2283 = vmatprep.subr.mxu0 0.0
  %2284 = vmatpush1.msra.mxu0 0.0
  %2285 = vmatprep.subr.mxu0 0.0
  %2286 = vmatpush1.msra.mxu0 0.0
  %2287 = vmatprep.subr.mxu0 0.0
  %2288 = vmatpush1.msra.mxu0 0.0
  %2289 = vmatprep.subr.mxu0 0.0
  %2290 = vmatpush1.msra.mxu0 0.0
  %2291 = vmatprep.subr.mxu0 0.0
  %2292 = vmatpush1.msra.mxu0 0.0
  %2293 = vmatprep.subr.mxu0 0.0
  %2294 = vmatpush1.msra.mxu0 0.0
  %2295 = vmatprep.subr.mxu0 0.0
  %2296 = vmatpush1.msra.mxu0 0.0
  %2297 = vmatprep.subr.mxu0 0.0
  %2298 = vmatpush1.msra.mxu0 0.0
  %2299 = vmatprep.subr.mxu0 0.0
  %2300 = vmatpush1.msra.mxu0 0.0
  %2301 = vmatprep.subr.mxu0 0.0
  %2302 = vmatpush1.msra.mxu0 0.0
  %2303 = vmatprep.subr.mxu0 0.0
  %2304 = vmatpush1.msra.mxu0 0.0
  %2305 = vmatprep.subr.mxu0 0.0
  %2306 = vmatpush1.msra.mxu0 0.0
  %2307 = vmatprep.subr.mxu0 0.0
  %2308 = vmatpush1.msra.mxu0 0.0
  %2309 = vmatprep.subr.mxu0 0.0
  %2310 = vmatpush1.msra.mxu0 0.0
  %2311 = vmatprep.subr.mxu0 0.0
  %2312 = vmatpush1.msra.mxu0 0.0
  %2313 = vmatprep.subr.mxu0 0.0
  %2314 = vmatpush1.msra.mxu0 0.0
  %2315 = vmatprep.subr.mxu0 0.0
  %2316 = vmatpush1.msra.mxu0 0.0
  %2317 = vmatprep.subr.mxu0 0.0
  %2318 = vmatpush1.msra.mxu0 0.0
  %2319 = vmatprep.subr.mxu0 0.0
  %2320 = vmatpush1.msra.mxu0 0.0
  %2321 = vmatprep.mubr.f32.mxu0 0.0
  %2322 = vmatmul.mubr.f32.gmra.mrb[0].mxu0 %v2255
  %v2323 = vpop.f32.mrb[0].mxu0
  %v2324 = vadd.f32 0.0, %v2323
  %v2325 = vpop.f32.mrb[0].mxu0
  %2326 = vdwg.mxu0
  %2327 = vrot.lane.b32.xlu0 %v1643, 92
  %v2328 = vpop.permute.xlu0 %2327
  %v2329 = vsel %vm154, %v2328, 0
  %2331 = vmatprep.subr.mxu0 0.0
  %2332 = vmatpush1.msra.mxu0 %v1653
  %2333 = vmatprep.subr.mxu0 0.0
  %2334 = vmatpush1.msra.mxu0 %v1737
  %2335 = vmatprep.subr.mxu0 0.0
  %2336 = vmatpush1.msra.mxu0 0.0
  %2337 = vmatprep.subr.mxu0 0.0
  %2338 = vmatpush1.msra.mxu0 0.0
  %2339 = vmatprep.subr.mxu0 0.0
  %2340 = vmatpush1.msra.mxu0 0.0
  %2341 = vmatprep.subr.mxu0 0.0
  %2342 = vmatpush1.msra.mxu0 0.0
  %2343 = vmatprep.subr.mxu0 0.0
  %2344 = vmatpush1.msra.mxu0 0.0
  %2345 = vmatprep.subr.mxu0 0.0
  %2346 = vmatpush1.msra.mxu0 0.0
  %2347 = vmatprep.subr.mxu0 0.0
  %2348 = vmatpush1.msra.mxu0 0.0
  %2349 = vmatprep.subr.mxu0 0.0
  %2350 = vmatpush1.msra.mxu0 0.0
  %2351 = vmatprep.subr.mxu0 0.0
  %2352 = vmatpush1.msra.mxu0 0.0
  %2353 = vmatprep.subr.mxu0 0.0
  %2354 = vmatpush1.msra.mxu0 0.0
  %2355 = vmatprep.subr.mxu0 0.0
  %2356 = vmatpush1.msra.mxu0 0.0
  %2357 = vmatprep.subr.mxu0 0.0
  %2358 = vmatpush1.msra.mxu0 0.0
  %2359 = vmatprep.subr.mxu0 0.0
  %2360 = vmatpush1.msra.mxu0 0.0
  %2361 = vmatprep.subr.mxu0 0.0
  %2362 = vmatpush1.msra.mxu0 0.0
  %2363 = vmatprep.subr.mxu0 0.0
  %2364 = vmatpush1.msra.mxu0 0.0
  %2365 = vmatprep.subr.mxu0 0.0
  %2366 = vmatpush1.msra.mxu0 0.0
  %2367 = vmatprep.subr.mxu0 0.0
  %2368 = vmatpush1.msra.mxu0 0.0
  %2369 = vmatprep.subr.mxu0 0.0
  %2370 = vmatpush1.msra.mxu0 0.0
  %2371 = vmatprep.subr.mxu0 0.0
  %2372 = vmatpush1.msra.mxu0 0.0
  %2373 = vmatprep.subr.mxu0 0.0
  %2374 = vmatpush1.msra.mxu0 0.0
  %2375 = vmatprep.subr.mxu0 0.0
  %2376 = vmatpush1.msra.mxu0 0.0
  %2377 = vmatprep.subr.mxu0 0.0
  %2378 = vmatpush1.msra.mxu0 0.0
  %2379 = vmatprep.subr.mxu0 0.0
  %2380 = vmatpush1.msra.mxu0 0.0
  %2381 = vmatprep.subr.mxu0 0.0
  %2382 = vmatpush1.msra.mxu0 0.0
  %2383 = vmatprep.subr.mxu0 0.0
  %2384 = vmatpush1.msra.mxu0 0.0
  %2385 = vmatprep.subr.mxu0 0.0
  %2386 = vmatpush1.msra.mxu0 0.0
  %2387 = vmatprep.subr.mxu0 0.0
  %2388 = vmatpush1.msra.mxu0 0.0
  %2389 = vmatprep.subr.mxu0 0.0
  %2390 = vmatpush1.msra.mxu0 0.0
  %2391 = vmatprep.subr.mxu0 0.0
  %2392 = vmatpush1.msra.mxu0 0.0
  %2393 = vmatprep.subr.mxu0 0.0
  %2394 = vmatpush1.msra.mxu0 0.0
  %2395 = vmatprep.mubr.f32.mxu0 0.0
  %2396 = vmatmul.mubr.f32.gmra.mrb[0].mxu0 %v2329
  %v2397 = vpop.f32.mrb[0].mxu0
  %v2398 = vadd.f32 %v2324, %v2397
  %v2399 = vpop.f32.mrb[0].mxu0
  %2400 = vdwg.mxu0
  %2401 = vrot.lane.b32.xlu0 %v1649, 83
  %v2402 = vpop.permute.xlu0 %2401
  %v2403 = vsel %vm154, %v2402, 0
  %2405 = vmatprep.subr.mxu0 0.0
  %2406 = vmatpush1.msra.mxu0 %v1655
  %2407 = vmatprep.subr.mxu0 0.0
  %2408 = vmatpush1.msra.mxu0 %v1661
  %2409 = vmatprep.subr.mxu0 0.0
  %2410 = vmatpush1.msra.mxu0 0.0
  %2411 = vmatprep.subr.mxu0 0.0
  %2412 = vmatpush1.msra.mxu0 0.0
  %2413 = vmatprep.subr.mxu0 0.0
  %2414 = vmatpush1.msra.mxu0 0.0
  %2415 = vmatprep.subr.mxu0 0.0
  %2416 = vmatpush1.msra.mxu0 0.0
  %2417 = vmatprep.subr.mxu0 0.0
  %2418 = vmatpush1.msra.mxu0 0.0
  %2419 = vmatprep.subr.mxu0 0.0
  %2420 = vmatpush1.msra.mxu0 0.0
  %2421 = vmatprep.subr.mxu0 0.0
  %2422 = vmatpush1.msra.mxu0 0.0
  %2423 = vmatprep.subr.mxu0 0.0
  %2424 = vmatpush1.msra.mxu0 0.0
  %2425 = vmatprep.subr.mxu0 0.0
  %2426 = vmatpush1.msra.mxu0 0.0
  %2427 = vmatprep.subr.mxu0 0.0
  %2428 = vmatpush1.msra.mxu0 0.0
  %2429 = vmatprep.subr.mxu0 0.0
  %2430 = vmatpush1.msra.mxu0 0.0
  %2431 = vmatprep.subr.mxu0 0.0
  %2432 = vmatpush1.msra.mxu0 0.0
  %2433 = vmatprep.subr.mxu0 0.0
  %2434 = vmatpush1.msra.mxu0 0.0
  %2435 = vmatprep.subr.mxu0 0.0
  %2436 = vmatpush1.msra.mxu0 0.0
  %2437 = vmatprep.subr.mxu0 0.0
  %2438 = vmatpush1.msra.mxu0 0.0
  %2439 = vmatprep.subr.mxu0 0.0
  %2440 = vmatpush1.msra.mxu0 0.0
  %2441 = vmatprep.subr.mxu0 0.0
  %2442 = vmatpush1.msra.mxu0 0.0
  %2443 = vmatprep.subr.mxu0 0.0
  %2444 = vmatpush1.msra.mxu0 0.0
  %2445 = vmatprep.subr.mxu0 0.0
  %2446 = vmatpush1.msra.mxu0 0.0
  %2447 = vmatprep.subr.mxu0 0.0
  %2448 = vmatpush1.msra.mxu0 0.0
  %2449 = vmatprep.subr.mxu0 0.0
  %2450 = vmatpush1.msra.mxu0 0.0
  %2451 = vmatprep.subr.mxu0 0.0
  %2452 = vmatpush1.msra.mxu0 0.0
  %2453 = vmatprep.subr.mxu0 0.0
  %2454 = vmatpush1.msra.mxu0 0.0
  %2455 = vmatprep.subr.mxu0 0.0
  %2456 = vmatpush1.msra.mxu0 0.0
  %2457 = vmatprep.subr.mxu0 0.0
  %2458 = vmatpush1.msra.mxu0 0.0
  %2459 = vmatprep.subr.mxu0 0.0
  %2460 = vmatpush1.msra.mxu0 0.0
  %2461 = vmatprep.subr.mxu0 0.0
  %2462 = vmatpush1.msra.mxu0 0.0
  %2463 = vmatprep.subr.mxu0 0.0
  %2464 = vmatpush1.msra.mxu0 0.0
  %2465 = vmatprep.subr.mxu0 0.0
  %2466 = vmatpush1.msra.mxu0 0.0
  %2467 = vmatprep.subr.mxu0 0.0
  %2468 = vmatpush1.msra.mxu0 0.0
  %2469 = vmatprep.mubr.f32.mxu0 0.0
  %2470 = vmatmul.mubr.f32.gmra.mrb[0].mxu0 %v2403
  %v2471 = vpop.f32.mrb[0].mxu0
  %v2472 = vadd.f32 0.0, %v2471
  %v2473 = vpop.f32.mrb[0].mxu0
  %2474 = vdwg.mxu0
  %2475 = vrot.lane.b32.xlu0 %v1643, 83
  %v2476 = vpop.permute.xlu0 %2475
  %v2477 = vsel %vm154, %v2476, 0
  %2479 = vmatprep.subr.mxu0 0.0
  %2480 = vmatpush1.msra.mxu0 %v1653
  %2481 = vmatprep.subr.mxu0 0.0
  %2482 = vmatpush1.msra.mxu0 %v1737
  %2483 = vmatprep.subr.mxu0 0.0
  %2484 = vmatpush1.msra.mxu0 0.0
  %2485 = vmatprep.subr.mxu0 0.0
  %2486 = vmatpush1.msra.mxu0 0.0
  %2487 = vmatprep.subr.mxu0 0.0
  %2488 = vmatpush1.msra.mxu0 0.0
  %2489 = vmatprep.subr.mxu0 0.0
  %2490 = vmatpush1.msra.mxu0 0.0
  %2491 = vmatprep.subr.mxu0 0.0
  %2492 = vmatpush1.msra.mxu0 0.0
  %2493 = vmatprep.subr.mxu0 0.0
  %2494 = vmatpush1.msra.mxu0 0.0
  %2495 = vmatprep.subr.mxu0 0.0
  %2496 = vmatpush1.msra.mxu0 0.0
  %2497 = vmatprep.subr.mxu0 0.0
  %2498 = vmatpush1.msra.mxu0 0.0
  %2499 = vmatprep.subr.mxu0 0.0
  %2500 = vmatpush1.msra.mxu0 0.0
  %2501 = vmatprep.subr.mxu0 0.0
  %2502 = vmatpush1.msra.mxu0 0.0
  %2503 = vmatprep.subr.mxu0 0.0
  %2504 = vmatpush1.msra.mxu0 0.0
  %2505 = vmatprep.subr.mxu0 0.0
  %2506 = vmatpush1.msra.mxu0 0.0
  %2507 = vmatprep.subr.mxu0 0.0
  %2508 = vmatpush1.msra.mxu0 0.0
  %2509 = vmatprep.subr.mxu0 0.0
  %2510 = vmatpush1.msra.mxu0 0.0
  %2511 = vmatprep.subr.mxu0 0.0
  %2512 = vmatpush1.msra.mxu0 0.0
  %2513 = vmatprep.subr.mxu0 0.0
  %2514 = vmatpush1.msra.mxu0 0.0
  %2515 = vmatprep.subr.mxu0 0.0
  %2516 = vmatpush1.msra.mxu0 0.0
  %2517 = vmatprep.subr.mxu0 0.0
  %2518 = vmatpush1.msra.mxu0 0.0
  %2519 = vmatprep.subr.mxu0 0.0
  %2520 = vmatpush1.msra.mxu0 0.0
  %2521 = vmatprep.subr.mxu0 0.0
  %2522 = vmatpush1.msra.mxu0 0.0
  %2523 = vmatprep.subr.mxu0 0.0
  %2524 = vmatpush1.msra.mxu0 0.0
  %2525 = vmatprep.subr.mxu0 0.0
  %2526 = vmatpush1.msra.mxu0 0.0
  %2527 = vmatprep.subr.mxu0 0.0
  %2528 = vmatpush1.msra.mxu0 0.0
  %2529 = vmatprep.subr.mxu0 0.0
  %2530 = vmatpush1.msra.mxu0 0.0
  %2531 = vmatprep.subr.mxu0 0.0
  %2532 = vmatpush1.msra.mxu0 0.0
  %2533 = vmatprep.subr.mxu0 0.0
  %2534 = vmatpush1.msra.mxu0 0.0
  %2535 = vmatprep.subr.mxu0 0.0
  %2536 = vmatpush1.msra.mxu0 0.0
  %2537 = vmatprep.subr.mxu0 0.0
  %2538 = vmatpush1.msra.mxu0 0.0
  %2539 = vmatprep.subr.mxu0 0.0
  %2540 = vmatpush1.msra.mxu0 0.0
  %2541 = vmatprep.subr.mxu0 0.0
  %2542 = vmatpush1.msra.mxu0 0.0
  %2543 = vmatprep.mubr.f32.mxu0 0.0
  %2544 = vmatmul.mubr.f32.gmra.mrb[0].mxu0 %v2477
  %v2545 = vpop.f32.mrb[0].mxu0
  %v2546 = vadd.f32 %v2472, %v2545
  %v2547 = vpop.f32.mrb[0].mxu0
  %2548 = vdwg.mxu0
  %2549 = vrot.lane.b32.xlu0 %v1649, 74
  %v2550 = vpop.permute.xlu0 %2549
  %v2551 = vsel %vm154, %v2550, 0
  %2553 = vmatprep.subr.mxu0 0.0
  %2554 = vmatpush1.msra.mxu0 %v1655
  %2555 = vmatprep.subr.mxu0 0.0
  %2556 = vmatpush1.msra.mxu0 %v1661
  %2557 = vmatprep.subr.mxu0 0.0
  %2558 = vmatpush1.msra.mxu0 0.0
  %2559 = vmatprep.subr.mxu0 0.0
  %2560 = vmatpush1.msra.mxu0 0.0
  %2561 = vmatprep.subr.mxu0 0.0
  %2562 = vmatpush1.msra.mxu0 0.0
  %2563 = vmatprep.subr.mxu0 0.0
  %2564 = vmatpush1.msra.mxu0 0.0
  %2565 = vmatprep.subr.mxu0 0.0
  %2566 = vmatpush1.msra.mxu0 0.0
  %2567 = vmatprep.subr.mxu0 0.0
  %2568 = vmatpush1.msra.mxu0 0.0
  %2569 = vmatprep.subr.mxu0 0.0
  %2570 = vmatpush1.msra.mxu0 0.0
  %2571 = vmatprep.subr.mxu0 0.0
  %2572 = vmatpush1.msra.mxu0 0.0
  %2573 = vmatprep.subr.mxu0 0.0
  %2574 = vmatpush1.msra.mxu0 0.0
  %2575 = vmatprep.subr.mxu0 0.0
  %2576 = vmatpush1.msra.mxu0 0.0
  %2577 = vmatprep.subr.mxu0 0.0
  %2578 = vmatpush1.msra.mxu0 0.0
  %2579 = vmatprep.subr.mxu0 0.0
  %2580 = vmatpush1.msra.mxu0 0.0
  %2581 = vmatprep.subr.mxu0 0.0
  %2582 = vmatpush1.msra.mxu0 0.0
  %2583 = vmatprep.subr.mxu0 0.0
  %2584 = vmatpush1.msra.mxu0 0.0
  %2585 = vmatprep.subr.mxu0 0.0
  %2586 = vmatpush1.msra.mxu0 0.0
  %2587 = vmatprep.subr.mxu0 0.0
  %2588 = vmatpush1.msra.mxu0 0.0
  %2589 = vmatprep.subr.mxu0 0.0
  %2590 = vmatpush1.msra.mxu0 0.0
  %2591 = vmatprep.subr.mxu0 0.0
  %2592 = vmatpush1.msra.mxu0 0.0
  %2593 = vmatprep.subr.mxu0 0.0
  %2594 = vmatpush1.msra.mxu0 0.0
  %2595 = vmatprep.subr.mxu0 0.0
  %2596 = vmatpush1.msra.mxu0 0.0
  %2597 = vmatprep.subr.mxu0 0.0
  %2598 = vmatpush1.msra.mxu0 0.0
  %2599 = vmatprep.subr.mxu0 0.0
  %2600 = vmatpush1.msra.mxu0 0.0
  %2601 = vmatprep.subr.mxu0 0.0
  %2602 = vmatpush1.msra.mxu0 0.0
  %2603 = vmatprep.subr.mxu0 0.0
  %2604 = vmatpush1.msra.mxu0 0.0
  %2605 = vmatprep.subr.mxu0 0.0
  %2606 = vmatpush1.msra.mxu0 0.0
  %2607 = vmatprep.subr.mxu0 0.0
  %2608 = vmatpush1.msra.mxu0 0.0
  %2609 = vmatprep.subr.mxu0 0.0
  %2610 = vmatpush1.msra.mxu0 0.0
  %2611 = vmatprep.subr.mxu0 0.0
  %2612 = vmatpush1.msra.mxu0 0.0
  %2613 = vmatprep.subr.mxu0 0.0
  %2614 = vmatpush1.msra.mxu0 0.0
  %2615 = vmatprep.subr.mxu0 0.0
  %2616 = vmatpush1.msra.mxu0 0.0
  %2617 = vmatprep.mubr.f32.mxu0 0.0
  %2618 = vmatmul.mubr.f32.gmra.mrb[0].mxu0 %v2551
  %v2619 = vpop.f32.mrb[0].mxu0
  %v2620 = vadd.f32 0.0, %v2619
  %v2621 = vpop.f32.mrb[0].mxu0
  %2622 = vdwg.mxu0
  %2623 = vrot.lane.b32.xlu0 %v1643, 74
  %v2624 = vpop.permute.xlu0 %2623
  %v2625 = vsel %vm154, %v2624, 0
  %2627 = vmatprep.subr.mxu0 0.0
  %2628 = vmatpush1.msra.mxu0 %v1653
  %2629 = vmatprep.subr.mxu0 0.0
  %2630 = vmatpush1.msra.mxu0 %v1737
  %2631 = vmatprep.subr.mxu0 0.0
  %2632 = vmatpush1.msra.mxu0 0.0
  %2633 = vmatprep.subr.mxu0 0.0
  %2634 = vmatpush1.msra.mxu0 0.0
  %2635 = vmatprep.subr.mxu0 0.0
  %2636 = vmatpush1.msra.mxu0 0.0
  %2637 = vmatprep.subr.mxu0 0.0
  %2638 = vmatpush1.msra.mxu0 0.0
  %2639 = vmatprep.subr.mxu0 0.0
  %2640 = vmatpush1.msra.mxu0 0.0
  %2641 = vmatprep.subr.mxu0 0.0
  %2642 = vmatpush1.msra.mxu0 0.0
  %2643 = vmatprep.subr.mxu0 0.0
  %2644 = vmatpush1.msra.mxu0 0.0
  %2645 = vmatprep.subr.mxu0 0.0
  %2646 = vmatpush1.msra.mxu0 0.0
  %2647 = vmatprep.subr.mxu0 0.0
  %2648 = vmatpush1.msra.mxu0 0.0
  %2649 = vmatprep.subr.mxu0 0.0
  %2650 = vmatpush1.msra.mxu0 0.0
  %2651 = vmatprep.subr.mxu0 0.0
  %2652 = vmatpush1.msra.mxu0 0.0
  %2653 = vmatprep.subr.mxu0 0.0
  %2654 = vmatpush1.msra.mxu0 0.0
  %2655 = vmatprep.subr.mxu0 0.0
  %2656 = vmatpush1.msra.mxu0 0.0
  %2657 = vmatprep.subr.mxu0 0.0
  %2658 = vmatpush1.msra.mxu0 0.0
  %2659 = vmatprep.subr.mxu0 0.0
  %2660 = vmatpush1.msra.mxu0 0.0
  %2661 = vmatprep.subr.mxu0 0.0
  %2662 = vmatpush1.msra.mxu0 0.0
  %2663 = vmatprep.subr.mxu0 0.0
  %2664 = vmatpush1.msra.mxu0 0.0
  %2665 = vmatprep.subr.mxu0 0.0
  %2666 = vmatpush1.msra.mxu0 0.0
  %2667 = vmatprep.subr.mxu0 0.0
  %2668 = vmatpush1.msra.mxu0 0.0
  %2669 = vmatprep.subr.mxu0 0.0
  %2670 = vmatpush1.msra.mxu0 0.0
  %2671 = vmatprep.subr.mxu0 0.0
  %2672 = vmatpush1.msra.mxu0 0.0
  %2673 = vmatprep.subr.mxu0 0.0
  %2674 = vmatpush1.msra.mxu0 0.0
  %2675 = vmatprep.subr.mxu0 0.0
  %2676 = vmatpush1.msra.mxu0 0.0
  %2677 = vmatprep.subr.mxu0 0.0
  %2678 = vmatpush1.msra.mxu0 0.0
  %2679 = vmatprep.subr.mxu0 0.0
  %2680 = vmatpush1.msra.mxu0 0.0
  %2681 = vmatprep.subr.mxu0 0.0
  %2682 = vmatpush1.msra.mxu0 0.0
  %2683 = vmatprep.subr.mxu0 0.0
  %2684 = vmatpush1.msra.mxu0 0.0
  %2685 = vmatprep.subr.mxu0 0.0
  %2686 = vmatpush1.msra.mxu0 0.0
  %2687 = vmatprep.subr.mxu0 0.0
  %2688 = vmatpush1.msra.mxu0 0.0
  %2689 = vmatprep.subr.mxu0 0.0
  %2690 = vmatpush1.msra.mxu0 0.0
  %2691 = vmatprep.mubr.f32.mxu0 0.0
  %2692 = vmatmul.mubr.f32.gmra.mrb[0].mxu0 %v2625
  %v2693 = vpop.f32.mrb[0].mxu0
  %v2694 = vadd.f32 %v2620, %v2693
  %v2695 = vpop.f32.mrb[0].mxu0
  %2696 = vdwg.mxu0
  %2697 = vrot.lane.b32.xlu0 %v1649, 65
  %v2698 = vpop.permute.xlu0 %2697
  %v2699 = vsel %vm154, %v2698, 0
  %2701 = vmatprep.subr.mxu0 0.0
  %2702 = vmatpush1.msra.mxu0 %v1655
  %2703 = vmatprep.subr.mxu0 0.0
  %2704 = vmatpush1.msra.mxu0 %v1661
  %2705 = vmatprep.subr.mxu0 0.0
  %2706 = vmatpush1.msra.mxu0 0.0
  %2707 = vmatprep.subr.mxu0 0.0
  %2708 = vmatpush1.msra.mxu0 0.0
  %2709 = vmatprep.subr.mxu0 0.0
  %2710 = vmatpush1.msra.mxu0 0.0
  %2711 = vmatprep.subr.mxu0 0.0
  %2712 = vmatpush1.msra.mxu0 0.0
  %2713 = vmatprep.subr.mxu0 0.0
  %2714 = vmatpush1.msra.mxu0 0.0
  %2715 = vmatprep.subr.mxu0 0.0
  %2716 = vmatpush1.msra.mxu0 0.0
  %2717 = vmatprep.subr.mxu0 0.0
  %2718 = vmatpush1.msra.mxu0 0.0
  %2719 = vmatprep.subr.mxu0 0.0
  %2720 = vmatpush1.msra.mxu0 0.0
  %2721 = vmatprep.subr.mxu0 0.0
  %2722 = vmatpush1.msra.mxu0 0.0
  %2723 = vmatprep.subr.mxu0 0.0
  %2724 = vmatpush1.msra.mxu0 0.0
  %2725 = vmatprep.subr.mxu0 0.0
  %2726 = vmatpush1.msra.mxu0 0.0
  %2727 = vmatprep.subr.mxu0 0.0
  %2728 = vmatpush1.msra.mxu0 0.0
  %2729 = vmatprep.subr.mxu0 0.0
  %2730 = vmatpush1.msra.mxu0 0.0
  %2731 = vmatprep.subr.mxu0 0.0
  %2732 = vmatpush1.msra.mxu0 0.0
  %2733 = vmatprep.subr.mxu0 0.0
  %2734 = vmatpush1.msra.mxu0 0.0
  %2735 = vmatprep.subr.mxu0 0.0
  %2736 = vmatpush1.msra.mxu0 0.0
  %2737 = vmatprep.subr.mxu0 0.0
  %2738 = vmatpush1.msra.mxu0 0.0
  %2739 = vmatprep.subr.mxu0 0.0
  %2740 = vmatpush1.msra.mxu0 0.0
  %2741 = vmatprep.subr.mxu0 0.0
  %2742 = vmatpush1.msra.mxu0 0.0
  %2743 = vmatprep.subr.mxu0 0.0
  %2744 = vmatpush1.msra.mxu0 0.0
  %2745 = vmatprep.subr.mxu0 0.0
  %2746 = vmatpush1.msra.mxu0 0.0
  %2747 = vmatprep.subr.mxu0 0.0
  %2748 = vmatpush1.msra.mxu0 0.0
  %2749 = vmatprep.subr.mxu0 0.0
  %2750 = vmatpush1.msra.mxu0 0.0
  %2751 = vmatprep.subr.mxu0 0.0
  %2752 = vmatpush1.msra.mxu0 0.0
  %2753 = vmatprep.subr.mxu0 0.0
  %2754 = vmatpush1.msra.mxu0 0.0
  %2755 = vmatprep.subr.mxu0 0.0
  %2756 = vmatpush1.msra.mxu0 0.0
  %2757 = vmatprep.subr.mxu0 0.0
  %2758 = vmatpush1.msra.mxu0 0.0
  %2759 = vmatprep.subr.mxu0 0.0
  %2760 = vmatpush1.msra.mxu0 0.0
  %2761 = vmatprep.subr.mxu0 0.0
  %2762 = vmatpush1.msra.mxu0 0.0
  %2763 = vmatprep.subr.mxu0 0.0
  %2764 = vmatpush1.msra.mxu0 0.0
  %2765 = vmatprep.mubr.f32.mxu0 0.0
  %2766 = vmatmul.mubr.f32.gmra.mrb[0].mxu0 %v2699
  %v2767 = vpop.f32.mrb[0].mxu0
  %v2768 = vadd.f32 0.0, %v2767
  %v2769 = vpop.f32.mrb[0].mxu0
  %2770 = vdwg.mxu0
  %2771 = vrot.lane.b32.xlu0 %v1643, 65
  %v2772 = vpop.permute.xlu0 %2771
  %v2773 = vsel %vm154, %v2772, 0
  %2775 = vmatprep.subr.mxu0 0.0
  %2776 = vmatpush1.msra.mxu0 %v1653
  %2777 = vmatprep.subr.mxu0 0.0
  %2778 = vmatpush1.msra.mxu0 %v1737
  %2779 = vmatprep.subr.mxu0 0.0
  %2780 = vmatpush1.msra.mxu0 0.0
  %2781 = vmatprep.subr.mxu0 0.0
  %2782 = vmatpush1.msra.mxu0 0.0
  %2783 = vmatprep.subr.mxu0 0.0
  %2784 = vmatpush1.msra.mxu0 0.0
  %2785 = vmatprep.subr.mxu0 0.0
  %2786 = vmatpush1.msra.mxu0 0.0
  %2787 = vmatprep.subr.mxu0 0.0
  %2788 = vmatpush1.msra.mxu0 0.0
  %2789 = vmatprep.subr.mxu0 0.0
  %2790 = vmatpush1.msra.mxu0 0.0
  %2791 = vmatprep.subr.mxu0 0.0
  %2792 = vmatpush1.msra.mxu0 0.0
  %2793 = vmatprep.subr.mxu0 0.0
  %2794 = vmatpush1.msra.mxu0 0.0
  %2795 = vmatprep.subr.mxu0 0.0
  %2796 = vmatpush1.msra.mxu0 0.0
  %2797 = vmatprep.subr.mxu0 0.0
  %2798 = vmatpush1.msra.mxu0 0.0
  %2799 = vmatprep.subr.mxu0 0.0
  %2800 = vmatpush1.msra.mxu0 0.0
  %2801 = vmatprep.subr.mxu0 0.0
  %2802 = vmatpush1.msra.mxu0 0.0
  %2803 = vmatprep.subr.mxu0 0.0
  %2804 = vmatpush1.msra.mxu0 0.0
  %2805 = vmatprep.subr.mxu0 0.0
  %2806 = vmatpush1.msra.mxu0 0.0
  %2807 = vmatprep.subr.mxu0 0.0
  %2808 = vmatpush1.msra.mxu0 0.0
  %2809 = vmatprep.subr.mxu0 0.0
  %2810 = vmatpush1.msra.mxu0 0.0
  %2811 = vmatprep.subr.mxu0 0.0
  %2812 = vmatpush1.msra.mxu0 0.0
  %2813 = vmatprep.subr.mxu0 0.0
  %2814 = vmatpush1.msra.mxu0 0.0
  %2815 = vmatprep.subr.mxu0 0.0
  %2816 = vmatpush1.msra.mxu0 0.0
  %2817 = vmatprep.subr.mxu0 0.0
  %2818 = vmatpush1.msra.mxu0 0.0
  %2819 = vmatprep.subr.mxu0 0.0
  %2820 = vmatpush1.msra.mxu0 0.0
  %2821 = vmatprep.subr.mxu0 0.0
  %2822 = vmatpush1.msra.mxu0 0.0
  %2823 = vmatprep.subr.mxu0 0.0
  %2824 = vmatpush1.msra.mxu0 0.0
  %2825 = vmatprep.subr.mxu0 0.0
  %2826 = vmatpush1.msra.mxu0 0.0
  %2827 = vmatprep.subr.mxu0 0.0
  %2828 = vmatpush1.msra.mxu0 0.0
  %2829 = vmatprep.subr.mxu0 0.0
  %2830 = vmatpush1.msra.mxu0 0.0
  %2831 = vmatprep.subr.mxu0 0.0
  %2832 = vmatpush1.msra.mxu0 0.0
  %2833 = vmatprep.subr.mxu0 0.0
  %2834 = vmatpush1.msra.mxu0 0.0
  %2835 = vmatprep.subr.mxu0 0.0
  %2836 = vmatpush1.msra.mxu0 0.0
  %2837 = vmatprep.subr.mxu0 0.0
  %2838 = vmatpush1.msra.mxu0 0.0
  %2839 = vmatprep.mubr.f32.mxu0 0.0
  %2840 = vmatmul.mubr.f32.gmra.mrb[0].mxu0 %v2773
  %v2841 = vpop.f32.mrb[0].mxu0
  %v2842 = vadd.f32 %v2768, %v2841
  %v2843 = vpop.f32.mrb[0].mxu0
  %2844 = vdwg.mxu0
  %2845 = vrot.lane.b32.xlu0 %v1649, 56
  %v2846 = vpop.permute.xlu0 %2845
  %v2847 = vsel %vm154, %v2846, 0
  %2849 = vmatprep.subr.mxu0 0.0
  %2850 = vmatpush1.msra.mxu0 %v1655
  %2851 = vmatprep.subr.mxu0 0.0
  %2852 = vmatpush1.msra.mxu0 %v1661
  %2853 = vmatprep.subr.mxu0 0.0
  %2854 = vmatpush1.msra.mxu0 0.0
  %2855 = vmatprep.subr.mxu0 0.0
  %2856 = vmatpush1.msra.mxu0 0.0
  %2857 = vmatprep.subr.mxu0 0.0
  %2858 = vmatpush1.msra.mxu0 0.0
  %2859 = vmatprep.subr.mxu0 0.0
  %2860 = vmatpush1.msra.mxu0 0.0
  %2861 = vmatprep.subr.mxu0 0.0
  %2862 = vmatpush1.msra.mxu0 0.0
  %2863 = vmatprep.subr.mxu0 0.0
  %2864 = vmatpush1.msra.mxu0 0.0
  %2865 = vmatprep.subr.mxu0 0.0
  %2866 = vmatpush1.msra.mxu0 0.0
  %2867 = vmatprep.subr.mxu0 0.0
  %2868 = vmatpush1.msra.mxu0 0.0
  %2869 = vmatprep.subr.mxu0 0.0
  %2870 = vmatpush1.msra.mxu0 0.0
  %2871 = vmatprep.subr.mxu0 0.0
  %2872 = vmatpush1.msra.mxu0 0.0
  %2873 = vmatprep.subr.mxu0 0.0
  %2874 = vmatpush1.msra.mxu0 0.0
  %2875 = vmatprep.subr.mxu0 0.0
  %2876 = vmatpush1.msra.mxu0 0.0
  %2877 = vmatprep.subr.mxu0 0.0
  %2878 = vmatpush1.msra.mxu0 0.0
  %2879 = vmatprep.subr.mxu0 0.0
  %2880 = vmatpush1.msra.mxu0 0.0
  %2881 = vmatprep.subr.mxu0 0.0
  %2882 = vmatpush1.msra.mxu0 0.0
  %2883 = vmatprep.subr.mxu0 0.0
  %2884 = vmatpush1.msra.mxu0 0.0
  %2885 = vmatprep.subr.mxu0 0.0
  %2886 = vmatpush1.msra.mxu0 0.0
  %2887 = vmatprep.subr.mxu0 0.0
  %2888 = vmatpush1.msra.mxu0 0.0
  %2889 = vmatprep.subr.mxu0 0.0
  %2890 = vmatpush1.msra.mxu0 0.0
  %2891 = vmatprep.subr.mxu0 0.0
  %2892 = vmatpush1.msra.mxu0 0.0
  %2893 = vmatprep.subr.mxu0 0.0
  %2894 = vmatpush1.msra.mxu0 0.0
  %2895 = vmatprep.subr.mxu0 0.0
  %2896 = vmatpush1.msra.mxu0 0.0
  %2897 = vmatprep.subr.mxu0 0.0
  %2898 = vmatpush1.msra.mxu0 0.0
  %2899 = vmatprep.subr.mxu0 0.0
  %2900 = vmatpush1.msra.mxu0 0.0
  %2901 = vmatprep.subr.mxu0 0.0
  %2902 = vmatpush1.msra.mxu0 0.0
  %2903 = vmatprep.subr.mxu0 0.0
  %2904 = vmatpush1.msra.mxu0 0.0
  %2905 = vmatprep.subr.mxu0 0.0
  %2906 = vmatpush1.msra.mxu0 0.0
  %2907 = vmatprep.subr.mxu0 0.0
  %2908 = vmatpush1.msra.mxu0 0.0
  %2909 = vmatprep.subr.mxu0 0.0
  %2910 = vmatpush1.msra.mxu0 0.0
  %2911 = vmatprep.subr.mxu0 0.0
  %2912 = vmatpush1.msra.mxu0 0.0
  %2913 = vmatprep.mubr.f32.mxu0 0.0
  %2914 = vmatmul.mubr.f32.gmra.mrb[0].mxu0 %v2847
  %v2915 = vpop.f32.mrb[0].mxu0
  %v2916 = vadd.f32 0.0, %v2915
  %v2917 = vpop.f32.mrb[0].mxu0
  %2918 = vdwg.mxu0
  %2919 = vrot.lane.b32.xlu0 %v1643, 56
  %v2920 = vpop.permute.xlu0 %2919
  %v2921 = vsel %vm154, %v2920, 0
  %2923 = vmatprep.subr.mxu0 0.0
  %2924 = vmatpush1.msra.mxu0 %v1653
  %2925 = vmatprep.subr.mxu0 0.0
  %2926 = vmatpush1.msra.mxu0 %v1737
  %2927 = vmatprep.subr.mxu0 0.0
  %2928 = vmatpush1.msra.mxu0 0.0
  %2929 = vmatprep.subr.mxu0 0.0
  %2930 = vmatpush1.msra.mxu0 0.0
  %2931 = vmatprep.subr.mxu0 0.0
  %2932 = vmatpush1.msra.mxu0 0.0
  %2933 = vmatprep.subr.mxu0 0.0
  %2934 = vmatpush1.msra.mxu0 0.0
  %2935 = vmatprep.subr.mxu0 0.0
  %2936 = vmatpush1.msra.mxu0 0.0
  %2937 = vmatprep.subr.mxu0 0.0
  %2938 = vmatpush1.msra.mxu0 0.0
  %2939 = vmatprep.subr.mxu0 0.0
  %2940 = vmatpush1.msra.mxu0 0.0
  %2941 = vmatprep.subr.mxu0 0.0
  %2942 = vmatpush1.msra.mxu0 0.0
  %2943 = vmatprep.subr.mxu0 0.0
  %2944 = vmatpush1.msra.mxu0 0.0
  %2945 = vmatprep.subr.mxu0 0.0
  %2946 = vmatpush1.msra.mxu0 0.0
  %2947 = vmatprep.subr.mxu0 0.0
  %2948 = vmatpush1.msra.mxu0 0.0
  %2949 = vmatprep.subr.mxu0 0.0
  %2950 = vmatpush1.msra.mxu0 0.0
  %2951 = vmatprep.subr.mxu0 0.0
  %2952 = vmatpush1.msra.mxu0 0.0
  %2953 = vmatprep.subr.mxu0 0.0
  %2954 = vmatpush1.msra.mxu0 0.0
  %2955 = vmatprep.subr.mxu0 0.0
  %2956 = vmatpush1.msra.mxu0 0.0
  %2957 = vmatprep.subr.mxu0 0.0
  %2958 = vmatpush1.msra.mxu0 0.0
  %2959 = vmatprep.subr.mxu0 0.0
  %2960 = vmatpush1.msra.mxu0 0.0
  %2961 = vmatprep.subr.mxu0 0.0
  %2962 = vmatpush1.msra.mxu0 0.0
  %2963 = vmatprep.subr.mxu0 0.0
  %2964 = vmatpush1.msra.mxu0 0.0
  %2965 = vmatprep.subr.mxu0 0.0
  %2966 = vmatpush1.msra.mxu0 0.0
  %2967 = vmatprep.subr.mxu0 0.0
  %2968 = vmatpush1.msra.mxu0 0.0
  %2969 = vmatprep.subr.mxu0 0.0
  %2970 = vmatpush1.msra.mxu0 0.0
  %2971 = vmatprep.subr.mxu0 0.0
  %2972 = vmatpush1.msra.mxu0 0.0
  %2973 = vmatprep.subr.mxu0 0.0
  %2974 = vmatpush1.msra.mxu0 0.0
  %2975 = vmatprep.subr.mxu0 0.0
  %2976 = vmatpush1.msra.mxu0 0.0
  %2977 = vmatprep.subr.mxu0 0.0
  %2978 = vmatpush1.msra.mxu0 0.0
  %2979 = vmatprep.subr.mxu0 0.0
  %2980 = vmatpush1.msra.mxu0 0.0
  %2981 = vmatprep.subr.mxu0 0.0
  %2982 = vmatpush1.msra.mxu0 0.0
  %2983 = vmatprep.subr.mxu0 0.0
  %2984 = vmatpush1.msra.mxu0 0.0
  %2985 = vmatprep.subr.mxu0 0.0
  %2986 = vmatpush1.msra.mxu0 0.0
  %2987 = vmatprep.mubr.f32.mxu0 0.0
  %2988 = vmatmul.mubr.f32.gmra.mrb[0].mxu0 %v2921
  %v2989 = vpop.f32.mrb[0].mxu0
  %v2990 = vadd.f32 %v2916, %v2989
  %v2991 = vpop.f32.mrb[0].mxu0
  %2992 = vdwg.mxu0
  %2993 = vrot.lane.b32.xlu0 %v1649, 47
  %v2994 = vpop.permute.xlu0 %2993
  %v2995 = vsel %vm154, %v2994, 0
  %2997 = vmatprep.subr.mxu0 0.0
  %2998 = vmatpush1.msra.mxu0 %v1655
  %2999 = vmatprep.subr.mxu0 0.0
  %3000 = vmatpush1.msra.mxu0 %v1661
  %3001 = vmatprep.subr.mxu0 0.0
  %3002 = vmatpush1.msra.mxu0 0.0
  %3003 = vmatprep.subr.mxu0 0.0
  %3004 = vmatpush1.msra.mxu0 0.0
  %3005 = vmatprep.subr.mxu0 0.0
  %3006 = vmatpush1.msra.mxu0 0.0
  %3007 = vmatprep.subr.mxu0 0.0
  %3008 = vmatpush1.msra.mxu0 0.0
  %3009 = vmatprep.subr.mxu0 0.0
  %3010 = vmatpush1.msra.mxu0 0.0
  %3011 = vmatprep.subr.mxu0 0.0
  %3012 = vmatpush1.msra.mxu0 0.0
  %3013 = vmatprep.subr.mxu0 0.0
  %3014 = vmatpush1.msra.mxu0 0.0
  %3015 = vmatprep.subr.mxu0 0.0
  %3016 = vmatpush1.msra.mxu0 0.0
  %3017 = vmatprep.subr.mxu0 0.0
  %3018 = vmatpush1.msra.mxu0 0.0
  %3019 = vmatprep.subr.mxu0 0.0
  %3020 = vmatpush1.msra.mxu0 0.0
  %3021 = vmatprep.subr.mxu0 0.0
  %3022 = vmatpush1.msra.mxu0 0.0
  %3023 = vmatprep.subr.mxu0 0.0
  %3024 = vmatpush1.msra.mxu0 0.0
  %3025 = vmatprep.subr.mxu0 0.0
  %3026 = vmatpush1.msra.mxu0 0.0
  %3027 = vmatprep.subr.mxu0 0.0
  %3028 = vmatpush1.msra.mxu0 0.0
  %3029 = vmatprep.subr.mxu0 0.0
  %3030 = vmatpush1.msra.mxu0 0.0
  %3031 = vmatprep.subr.mxu0 0.0
  %3032 = vmatpush1.msra.mxu0 0.0
  %3033 = vmatprep.subr.mxu0 0.0
  %3034 = vmatpush1.msra.mxu0 0.0
  %3035 = vmatprep.subr.mxu0 0.0
  %3036 = vmatpush1.msra.mxu0 0.0
  %3037 = vmatprep.subr.mxu0 0.0
  %3038 = vmatpush1.msra.mxu0 0.0
  %3039 = vmatprep.subr.mxu0 0.0
  %3040 = vmatpush1.msra.mxu0 0.0
  %3041 = vmatprep.subr.mxu0 0.0
  %3042 = vmatpush1.msra.mxu0 0.0
  %3043 = vmatprep.subr.mxu0 0.0
  %3044 = vmatpush1.msra.mxu0 0.0
  %3045 = vmatprep.subr.mxu0 0.0
  %3046 = vmatpush1.msra.mxu0 0.0
  %3047 = vmatprep.subr.mxu0 0.0
  %3048 = vmatpush1.msra.mxu0 0.0
  %3049 = vmatprep.subr.mxu0 0.0
  %3050 = vmatpush1.msra.mxu0 0.0
  %3051 = vmatprep.subr.mxu0 0.0
  %3052 = vmatpush1.msra.mxu0 0.0
  %3053 = vmatprep.subr.mxu0 0.0
  %3054 = vmatpush1.msra.mxu0 0.0
  %3055 = vmatprep.subr.mxu0 0.0
  %3056 = vmatpush1.msra.mxu0 0.0
  %3057 = vmatprep.subr.mxu0 0.0
  %3058 = vmatpush1.msra.mxu0 0.0
  %3059 = vmatprep.subr.mxu0 0.0
  %3060 = vmatpush1.msra.mxu0 0.0
  %3061 = vmatprep.mubr.f32.mxu0 0.0
  %3062 = vmatmul.mubr.f32.gmra.mrb[0].mxu0 %v2995
  %v3063 = vpop.f32.mrb[0].mxu0
  %v3064 = vadd.f32 0.0, %v3063
  %v3065 = vpop.f32.mrb[0].mxu0
  %3066 = vdwg.mxu0
  %3067 = vrot.lane.b32.xlu0 %v1643, 47
  %v3068 = vpop.permute.xlu0 %3067
  %v3069 = vsel %vm154, %v3068, 0
  %3071 = vmatprep.subr.mxu0 0.0
  %3072 = vmatpush1.msra.mxu0 %v1653
  %3073 = vmatprep.subr.mxu0 0.0
  %3074 = vmatpush1.msra.mxu0 %v1737
  %3075 = vmatprep.subr.mxu0 0.0
  %3076 = vmatpush1.msra.mxu0 0.0
  %3077 = vmatprep.subr.mxu0 0.0
  %3078 = vmatpush1.msra.mxu0 0.0
  %3079 = vmatprep.subr.mxu0 0.0
  %3080 = vmatpush1.msra.mxu0 0.0
  %3081 = vmatprep.subr.mxu0 0.0
  %3082 = vmatpush1.msra.mxu0 0.0
  %3083 = vmatprep.subr.mxu0 0.0
  %3084 = vmatpush1.msra.mxu0 0.0
  %3085 = vmatprep.subr.mxu0 0.0
  %3086 = vmatpush1.msra.mxu0 0.0
  %3087 = vmatprep.subr.mxu0 0.0
  %3088 = vmatpush1.msra.mxu0 0.0
  %3089 = vmatprep.subr.mxu0 0.0
  %3090 = vmatpush1.msra.mxu0 0.0
  %3091 = vmatprep.subr.mxu0 0.0
  %3092 = vmatpush1.msra.mxu0 0.0
  %3093 = vmatprep.subr.mxu0 0.0
  %3094 = vmatpush1.msra.mxu0 0.0
  %3095 = vmatprep.subr.mxu0 0.0
  %3096 = vmatpush1.msra.mxu0 0.0
  %3097 = vmatprep.subr.mxu0 0.0
  %3098 = vmatpush1.msra.mxu0 0.0
  %3099 = vmatprep.subr.mxu0 0.0
  %3100 = vmatpush1.msra.mxu0 0.0
  %3101 = vmatprep.subr.mxu0 0.0
  %3102 = vmatpush1.msra.mxu0 0.0
  %3103 = vmatprep.subr.mxu0 0.0
  %3104 = vmatpush1.msra.mxu0 0.0
  %3105 = vmatprep.subr.mxu0 0.0
  %3106 = vmatpush1.msra.mxu0 0.0
  %3107 = vmatprep.subr.mxu0 0.0
  %3108 = vmatpush1.msra.mxu0 0.0
  %3109 = vmatprep.subr.mxu0 0.0
  %3110 = vmatpush1.msra.mxu0 0.0
  %3111 = vmatprep.subr.mxu0 0.0
  %3112 = vmatpush1.msra.mxu0 0.0
  %3113 = vmatprep.subr.mxu0 0.0
  %3114 = vmatpush1.msra.mxu0 0.0
  %3115 = vmatprep.subr.mxu0 0.0
  %3116 = vmatpush1.msra.mxu0 0.0
  %3117 = vmatprep.subr.mxu0 0.0
  %3118 = vmatpush1.msra.mxu0 0.0
  %3119 = vmatprep.subr.mxu0 0.0
  %3120 = vmatpush1.msra.mxu0 0.0
  %3121 = vmatprep.subr.mxu0 0.0
  %3122 = vmatpush1.msra.mxu0 0.0
  %3123 = vmatprep.subr.mxu0 0.0
  %3124 = vmatpush1.msra.mxu0 0.0
  %3125 = vmatprep.subr.mxu0 0.0
  %3126 = vmatpush1.msra.mxu0 0.0
  %3127 = vmatprep.subr.mxu0 0.0
  %3128 = vmatpush1.msra.mxu0 0.0
  %3129 = vmatprep.subr.mxu0 0.0
  %3130 = vmatpush1.msra.mxu0 0.0
  %3131 = vmatprep.subr.mxu0 0.0
  %3132 = vmatpush1.msra.mxu0 0.0
  %3133 = vmatprep.subr.mxu0 0.0
  %3134 = vmatpush1.msra.mxu0 0.0
  %3135 = vmatprep.mubr.f32.mxu0 0.0
  %3136 = vmatmul.mubr.f32.gmra.mrb[0].mxu0 %v3069
  %v3137 = vpop.f32.mrb[0].mxu0
  %v3138 = vadd.f32 %v3064, %v3137
  %v3139 = vpop.f32.mrb[0].mxu0
  %3140 = vdwg.mxu0
  %3141 = vrot.lane.b32.xlu0 %v1649, 38
  %v3142 = vpop.permute.xlu0 %3141
  %v3143 = vsel %vm154, %v3142, 0
  %3145 = vmatprep.subr.mxu0 0.0
  %3146 = vmatpush1.msra.mxu0 %v1655
  %3147 = vmatprep.subr.mxu0 0.0
  %3148 = vmatpush1.msra.mxu0 %v1661
  %3149 = vmatprep.subr.mxu0 0.0
  %3150 = vmatpush1.msra.mxu0 0.0
  %3151 = vmatprep.subr.mxu0 0.0
  %3152 = vmatpush1.msra.mxu0 0.0
  %3153 = vmatprep.subr.mxu0 0.0
  %3154 = vmatpush1.msra.mxu0 0.0
  %3155 = vmatprep.subr.mxu0 0.0
  %3156 = vmatpush1.msra.mxu0 0.0
  %3157 = vmatprep.subr.mxu0 0.0
  %3158 = vmatpush1.msra.mxu0 0.0
  %3159 = vmatprep.subr.mxu0 0.0
  %3160 = vmatpush1.msra.mxu0 0.0
  %3161 = vmatprep.subr.mxu0 0.0
  %3162 = vmatpush1.msra.mxu0 0.0
  %3163 = vmatprep.subr.mxu0 0.0
  %3164 = vmatpush1.msra.mxu0 0.0
  %3165 = vmatprep.subr.mxu0 0.0
  %3166 = vmatpush1.msra.mxu0 0.0
  %3167 = vmatprep.subr.mxu0 0.0
  %3168 = vmatpush1.msra.mxu0 0.0
  %3169 = vmatprep.subr.mxu0 0.0
  %3170 = vmatpush1.msra.mxu0 0.0
  %3171 = vmatprep.subr.mxu0 0.0
  %3172 = vmatpush1.msra.mxu0 0.0
  %3173 = vmatprep.subr.mxu0 0.0
  %3174 = vmatpush1.msra.mxu0 0.0
  %3175 = vmatprep.subr.mxu0 0.0
  %3176 = vmatpush1.msra.mxu0 0.0
  %3177 = vmatprep.subr.mxu0 0.0
  %3178 = vmatpush1.msra.mxu0 0.0
  %3179 = vmatprep.subr.mxu0 0.0
  %3180 = vmatpush1.msra.mxu0 0.0
  %3181 = vmatprep.subr.mxu0 0.0
  %3182 = vmatpush1.msra.mxu0 0.0
  %3183 = vmatprep.subr.mxu0 0.0
  %3184 = vmatpush1.msra.mxu0 0.0
  %3185 = vmatprep.subr.mxu0 0.0
  %3186 = vmatpush1.msra.mxu0 0.0
  %3187 = vmatprep.subr.mxu0 0.0
  %3188 = vmatpush1.msra.mxu0 0.0
  %3189 = vmatprep.subr.mxu0 0.0
  %3190 = vmatpush1.msra.mxu0 0.0
  %3191 = vmatprep.subr.mxu0 0.0
  %3192 = vmatpush1.msra.mxu0 0.0
  %3193 = vmatprep.subr.mxu0 0.0
  %3194 = vmatpush1.msra.mxu0 0.0
  %3195 = vmatprep.subr.mxu0 0.0
  %3196 = vmatpush1.msra.mxu0 0.0
  %3197 = vmatprep.subr.mxu0 0.0
  %3198 = vmatpush1.msra.mxu0 0.0
  %3199 = vmatprep.subr.mxu0 0.0
  %3200 = vmatpush1.msra.mxu0 0.0
  %3201 = vmatprep.subr.mxu0 0.0
  %3202 = vmatpush1.msra.mxu0 0.0
  %3203 = vmatprep.subr.mxu0 0.0
  %3204 = vmatpush1.msra.mxu0 0.0
  %3205 = vmatprep.subr.mxu0 0.0
  %3206 = vmatpush1.msra.mxu0 0.0
  %3207 = vmatprep.subr.mxu0 0.0
  %3208 = vmatpush1.msra.mxu0 0.0
  %3209 = vmatprep.mubr.f32.mxu0 0.0
  %3210 = vmatmul.mubr.f32.gmra.mrb[0].mxu0 %v3143
  %v3211 = vpop.f32.mrb[0].mxu0
  %v3212 = vadd.f32 0.0, %v3211
  %v3213 = vpop.f32.mrb[0].mxu0
  %3214 = vdwg.mxu0
  %3215 = vrot.lane.b32.xlu0 %v1643, 38
  %v3216 = vpop.permute.xlu0 %3215
  %v3217 = vsel %vm154, %v3216, 0
  %3219 = vmatprep.subr.mxu0 0.0
  %3220 = vmatpush1.msra.mxu0 %v1653
  %3221 = vmatprep.subr.mxu0 0.0
  %3222 = vmatpush1.msra.mxu0 %v1737
  %3223 = vmatprep.subr.mxu0 0.0
  %3224 = vmatpush1.msra.mxu0 0.0
  %3225 = vmatprep.subr.mxu0 0.0
  %3226 = vmatpush1.msra.mxu0 0.0
  %3227 = vmatprep.subr.mxu0 0.0
  %3228 = vmatpush1.msra.mxu0 0.0
  %3229 = vmatprep.subr.mxu0 0.0
  %3230 = vmatpush1.msra.mxu0 0.0
  %3231 = vmatprep.subr.mxu0 0.0
  %3232 = vmatpush1.msra.mxu0 0.0
  %3233 = vmatprep.subr.mxu0 0.0
  %3234 = vmatpush1.msra.mxu0 0.0
  %3235 = vmatprep.subr.mxu0 0.0
  %3236 = vmatpush1.msra.mxu0 0.0
  %3237 = vmatprep.subr.mxu0 0.0
  %3238 = vmatpush1.msra.mxu0 0.0
  %3239 = vmatprep.subr.mxu0 0.0
  %3240 = vmatpush1.msra.mxu0 0.0
  %3241 = vmatprep.subr.mxu0 0.0
  %3242 = vmatpush1.msra.mxu0 0.0
  %3243 = vmatprep.subr.mxu0 0.0
  %3244 = vmatpush1.msra.mxu0 0.0
  %3245 = vmatprep.subr.mxu0 0.0
  %3246 = vmatpush1.msra.mxu0 0.0
  %3247 = vmatprep.subr.mxu0 0.0
  %3248 = vmatpush1.msra.mxu0 0.0
  %3249 = vmatprep.subr.mxu0 0.0
  %3250 = vmatpush1.msra.mxu0 0.0
  %3251 = vmatprep.subr.mxu0 0.0
  %3252 = vmatpush1.msra.mxu0 0.0
  %3253 = vmatprep.subr.mxu0 0.0
  %3254 = vmatpush1.msra.mxu0 0.0
  %3255 = vmatprep.subr.mxu0 0.0
  %3256 = vmatpush1.msra.mxu0 0.0
  %3257 = vmatprep.subr.mxu0 0.0
  %3258 = vmatpush1.msra.mxu0 0.0
  %3259 = vmatprep.subr.mxu0 0.0
  %3260 = vmatpush1.msra.mxu0 0.0
  %3261 = vmatprep.subr.mxu0 0.0
  %3262 = vmatpush1.msra.mxu0 0.0
  %3263 = vmatprep.subr.mxu0 0.0
  %3264 = vmatpush1.msra.mxu0 0.0
  %3265 = vmatprep.subr.mxu0 0.0
  %3266 = vmatpush1.msra.mxu0 0.0
  %3267 = vmatprep.subr.mxu0 0.0
  %3268 = vmatpush1.msra.mxu0 0.0
  %3269 = vmatprep.subr.mxu0 0.0
  %3270 = vmatpush1.msra.mxu0 0.0
  %3271 = vmatprep.subr.mxu0 0.0
  %3272 = vmatpush1.msra.mxu0 0.0
  %3273 = vmatprep.subr.mxu0 0.0
  %3274 = vmatpush1.msra.mxu0 0.0
  %3275 = vmatprep.subr.mxu0 0.0
  %3276 = vmatpush1.msra.mxu0 0.0
  %3277 = vmatprep.subr.mxu0 0.0
  %3278 = vmatpush1.msra.mxu0 0.0
  %3279 = vmatprep.subr.mxu0 0.0
  %3280 = vmatpush1.msra.mxu0 0.0
  %3281 = vmatprep.subr.mxu0 0.0
  %3282 = vmatpush1.msra.mxu0 0.0
  %3283 = vmatprep.mubr.f32.mxu0 0.0
  %3284 = vmatmul.mubr.f32.gmra.mrb[0].mxu0 %v3217
  %v3285 = vpop.f32.mrb[0].mxu0
  %v3286 = vadd.f32 %v3212, %v3285
  %v3287 = vpop.f32.mrb[0].mxu0
  %3288 = vdwg.mxu0
  %3289 = vrot.lane.b32.xlu0 %v1649, 29
  %v3290 = vpop.permute.xlu0 %3289
  %v3291 = vsel %vm154, %v3290, 0
  %3293 = vmatprep.subr.mxu0 0.0
  %3294 = vmatpush1.msra.mxu0 %v1655
  %3295 = vmatprep.subr.mxu0 0.0
  %3296 = vmatpush1.msra.mxu0 %v1661
  %3297 = vmatprep.subr.mxu0 0.0
  %3298 = vmatpush1.msra.mxu0 0.0
  %3299 = vmatprep.subr.mxu0 0.0
  %3300 = vmatpush1.msra.mxu0 0.0
  %3301 = vmatprep.subr.mxu0 0.0
  %3302 = vmatpush1.msra.mxu0 0.0
  %3303 = vmatprep.subr.mxu0 0.0
  %3304 = vmatpush1.msra.mxu0 0.0
  %3305 = vmatprep.subr.mxu0 0.0
  %3306 = vmatpush1.msra.mxu0 0.0
  %3307 = vmatprep.subr.mxu0 0.0
  %3308 = vmatpush1.msra.mxu0 0.0
  %3309 = vmatprep.subr.mxu0 0.0
  %3310 = vmatpush1.msra.mxu0 0.0
  %3311 = vmatprep.subr.mxu0 0.0
  %3312 = vmatpush1.msra.mxu0 0.0
  %3313 = vmatprep.subr.mxu0 0.0
  %3314 = vmatpush1.msra.mxu0 0.0
  %3315 = vmatprep.subr.mxu0 0.0
  %3316 = vmatpush1.msra.mxu0 0.0
  %3317 = vmatprep.subr.mxu0 0.0
  %3318 = vmatpush1.msra.mxu0 0.0
  %3319 = vmatprep.subr.mxu0 0.0
  %3320 = vmatpush1.msra.mxu0 0.0
  %3321 = vmatprep.subr.mxu0 0.0
  %3322 = vmatpush1.msra.mxu0 0.0
  %3323 = vmatprep.subr.mxu0 0.0
  %3324 = vmatpush1.msra.mxu0 0.0
  %3325 = vmatprep.subr.mxu0 0.0
  %3326 = vmatpush1.msra.mxu0 0.0
  %3327 = vmatprep.subr.mxu0 0.0
  %3328 = vmatpush1.msra.mxu0 0.0
  %3329 = vmatprep.subr.mxu0 0.0
  %3330 = vmatpush1.msra.mxu0 0.0
  %3331 = vmatprep.subr.mxu0 0.0
  %3332 = vmatpush1.msra.mxu0 0.0
  %3333 = vmatprep.subr.mxu0 0.0
  %3334 = vmatpush1.msra.mxu0 0.0
  %3335 = vmatprep.subr.mxu0 0.0
  %3336 = vmatpush1.msra.mxu0 0.0
  %3337 = vmatprep.subr.mxu0 0.0
  %3338 = vmatpush1.msra.mxu0 0.0
  %3339 = vmatprep.subr.mxu0 0.0
  %3340 = vmatpush1.msra.mxu0 0.0
  %3341 = vmatprep.subr.mxu0 0.0
  %3342 = vmatpush1.msra.mxu0 0.0
  %3343 = vmatprep.subr.mxu0 0.0
  %3344 = vmatpush1.msra.mxu0 0.0
  %3345 = vmatprep.subr.mxu0 0.0
  %3346 = vmatpush1.msra.mxu0 0.0
  %3347 = vmatprep.subr.mxu0 0.0
  %3348 = vmatpush1.msra.mxu0 0.0
  %3349 = vmatprep.subr.mxu0 0.0
  %3350 = vmatpush1.msra.mxu0 0.0
  %3351 = vmatprep.subr.mxu0 0.0
  %3352 = vmatpush1.msra.mxu0 0.0
  %3353 = vmatprep.subr.mxu0 0.0
  %3354 = vmatpush1.msra.mxu0 0.0
  %3355 = vmatprep.subr.mxu0 0.0
  %3356 = vmatpush1.msra.mxu0 0.0
  %3357 = vmatprep.mubr.f32.mxu0 0.0
  %3358 = vmatmul.mubr.f32.gmra.mrb[0].mxu0 %v3291
  %v3359 = vpop.f32.mrb[0].mxu0
  %v3360 = vadd.f32 0.0, %v3359
  %v3361 = vpop.f32.mrb[0].mxu0
  %3362 = vdwg.mxu0
  %3363 = vrot.lane.b32.xlu0 %v1643, 29
  %v3364 = vpop.permute.xlu0 %3363
  %v3365 = vsel %vm154, %v3364, 0
  %3367 = vmatprep.subr.mxu0 0.0
  %3368 = vmatpush1.msra.mxu0 %v1653
  %3369 = vmatprep.subr.mxu0 0.0
  %3370 = vmatpush1.msra.mxu0 %v1737
  %3371 = vmatprep.subr.mxu0 0.0
  %3372 = vmatpush1.msra.mxu0 0.0
  %3373 = vmatprep.subr.mxu0 0.0
  %3374 = vmatpush1.msra.mxu0 0.0
  %3375 = vmatprep.subr.mxu0 0.0
  %3376 = vmatpush1.msra.mxu0 0.0
  %3377 = vmatprep.subr.mxu0 0.0
  %3378 = vmatpush1.msra.mxu0 0.0
  %3379 = vmatprep.subr.mxu0 0.0
  %3380 = vmatpush1.msra.mxu0 0.0
  %3381 = vmatprep.subr.mxu0 0.0
  %3382 = vmatpush1.msra.mxu0 0.0
  %3383 = vmatprep.subr.mxu0 0.0
  %3384 = vmatpush1.msra.mxu0 0.0
  %3385 = vmatprep.subr.mxu0 0.0
  %3386 = vmatpush1.msra.mxu0 0.0
  %3387 = vmatprep.subr.mxu0 0.0
  %3388 = vmatpush1.msra.mxu0 0.0
  %3389 = vmatprep.subr.mxu0 0.0
  %3390 = vmatpush1.msra.mxu0 0.0
  %3391 = vmatprep.subr.mxu0 0.0
  %3392 = vmatpush1.msra.mxu0 0.0
  %3393 = vmatprep.subr.mxu0 0.0
  %3394 = vmatpush1.msra.mxu0 0.0
  %3395 = vmatprep.subr.mxu0 0.0
  %3396 = vmatpush1.msra.mxu0 0.0
  %3397 = vmatprep.subr.mxu0 0.0
  %3398 = vmatpush1.msra.mxu0 0.0
  %3399 = vmatprep.subr.mxu0 0.0
  %3400 = vmatpush1.msra.mxu0 0.0
  %3401 = vmatprep.subr.mxu0 0.0
  %3402 = vmatpush1.msra.mxu0 0.0
  %3403 = vmatprep.subr.mxu0 0.0
  %3404 = vmatpush1.msra.mxu0 0.0
  %3405 = vmatprep.subr.mxu0 0.0
  %3406 = vmatpush1.msra.mxu0 0.0
  %3407 = vmatprep.subr.mxu0 0.0
  %3408 = vmatpush1.msra.mxu0 0.0
  %3409 = vmatprep.subr.mxu0 0.0
  %3410 = vmatpush1.msra.mxu0 0.0
  %3411 = vmatprep.subr.mxu0 0.0
  %3412 = vmatpush1.msra.mxu0 0.0
  %3413 = vmatprep.subr.mxu0 0.0
  %3414 = vmatpush1.msra.mxu0 0.0
  %3415 = vmatprep.subr.mxu0 0.0
  %3416 = vmatpush1.msra.mxu0 0.0
  %3417 = vmatprep.subr.mxu0 0.0
  %3418 = vmatpush1.msra.mxu0 0.0
  %3419 = vmatprep.subr.mxu0 0.0
  %3420 = vmatpush1.msra.mxu0 0.0
  %3421 = vmatprep.subr.mxu0 0.0
  %3422 = vmatpush1.msra.mxu0 0.0
  %3423 = vmatprep.subr.mxu0 0.0
  %3424 = vmatpush1.msra.mxu0 0.0
  %3425 = vmatprep.subr.mxu0 0.0
  %3426 = vmatpush1.msra.mxu0 0.0
  %3427 = vmatprep.subr.mxu0 0.0
  %3428 = vmatpush1.msra.mxu0 0.0
  %3429 = vmatprep.subr.mxu0 0.0
  %3430 = vmatpush1.msra.mxu0 0.0
  %3431 = vmatprep.mubr.f32.mxu0 0.0
  %3432 = vmatmul.mubr.f32.gmra.mrb[0].mxu0 %v3365
  %v3433 = vpop.f32.mrb[0].mxu0
  %v3434 = vadd.f32 %v3360, %v3433
  %v3435 = vpop.f32.mrb[0].mxu0
  %3436 = vdwg.mxu0
  %3437 = vrot.lane.b32.xlu0 %v1649, 20
  %v3438 = vpop.permute.xlu0 %3437
  %v3439 = vsel %vm154, %v3438, 0
  %3441 = vmatprep.subr.mxu0 0.0
  %3442 = vmatpush1.msra.mxu0 %v1655
  %3443 = vmatprep.subr.mxu0 0.0
  %3444 = vmatpush1.msra.mxu0 %v1661
  %3445 = vmatprep.subr.mxu0 0.0
  %3446 = vmatpush1.msra.mxu0 0.0
  %3447 = vmatprep.subr.mxu0 0.0
  %3448 = vmatpush1.msra.mxu0 0.0
  %3449 = vmatprep.subr.mxu0 0.0
  %3450 = vmatpush1.msra.mxu0 0.0
  %3451 = vmatprep.subr.mxu0 0.0
  %3452 = vmatpush1.msra.mxu0 0.0
  %3453 = vmatprep.subr.mxu0 0.0
  %3454 = vmatpush1.msra.mxu0 0.0
  %3455 = vmatprep.subr.mxu0 0.0
  %3456 = vmatpush1.msra.mxu0 0.0
  %3457 = vmatprep.subr.mxu0 0.0
  %3458 = vmatpush1.msra.mxu0 0.0
  %3459 = vmatprep.subr.mxu0 0.0
  %3460 = vmatpush1.msra.mxu0 0.0
  %3461 = vmatprep.subr.mxu0 0.0
  %3462 = vmatpush1.msra.mxu0 0.0
  %3463 = vmatprep.subr.mxu0 0.0
  %3464 = vmatpush1.msra.mxu0 0.0
  %3465 = vmatprep.subr.mxu0 0.0
  %3466 = vmatpush1.msra.mxu0 0.0
  %3467 = vmatprep.subr.mxu0 0.0
  %3468 = vmatpush1.msra.mxu0 0.0
  %3469 = vmatprep.subr.mxu0 0.0
  %3470 = vmatpush1.msra.mxu0 0.0
  %3471 = vmatprep.subr.mxu0 0.0
  %3472 = vmatpush1.msra.mxu0 0.0
  %3473 = vmatprep.subr.mxu0 0.0
  %3474 = vmatpush1.msra.mxu0 0.0
  %3475 = vmatprep.subr.mxu0 0.0
  %3476 = vmatpush1.msra.mxu0 0.0
  %3477 = vmatprep.subr.mxu0 0.0
  %3478 = vmatpush1.msra.mxu0 0.0
  %3479 = vmatprep.subr.mxu0 0.0
  %3480 = vmatpush1.msra.mxu0 0.0
  %3481 = vmatprep.subr.mxu0 0.0
  %3482 = vmatpush1.msra.mxu0 0.0
  %3483 = vmatprep.subr.mxu0 0.0
  %3484 = vmatpush1.msra.mxu0 0.0
  %3485 = vmatprep.subr.mxu0 0.0
  %3486 = vmatpush1.msra.mxu0 0.0
  %3487 = vmatprep.subr.mxu0 0.0
  %3488 = vmatpush1.msra.mxu0 0.0
  %3489 = vmatprep.subr.mxu0 0.0
  %3490 = vmatpush1.msra.mxu0 0.0
  %3491 = vmatprep.subr.mxu0 0.0
  %3492 = vmatpush1.msra.mxu0 0.0
  %3493 = vmatprep.subr.mxu0 0.0
  %3494 = vmatpush1.msra.mxu0 0.0
  %3495 = vmatprep.subr.mxu0 0.0
  %3496 = vmatpush1.msra.mxu0 0.0
  %3497 = vmatprep.subr.mxu0 0.0
  %3498 = vmatpush1.msra.mxu0 0.0
  %3499 = vmatprep.subr.mxu0 0.0
  %3500 = vmatpush1.msra.mxu0 0.0
  %3501 = vmatprep.subr.mxu0 0.0
  %3502 = vmatpush1.msra.mxu0 0.0
  %3503 = vmatprep.subr.mxu0 0.0
  %3504 = vmatpush1.msra.mxu0 0.0
  %3505 = vmatprep.mubr.f32.mxu0 0.0
  %3506 = vmatmul.mubr.f32.gmra.mrb[0].mxu0 %v3439
  %v3507 = vpop.f32.mrb[0].mxu0
  %v3508 = vadd.f32 0.0, %v3507
  %v3509 = vpop.f32.mrb[0].mxu0
  %3510 = vdwg.mxu0
  %3511 = vrot.lane.b32.xlu0 %v1643, 20
  %v3512 = vpop.permute.xlu0 %3511
  %v3513 = vsel %vm154, %v3512, 0
  %3515 = vmatprep.subr.mxu0 0.0
  %3516 = vmatpush1.msra.mxu0 %v1653
  %3517 = vmatprep.subr.mxu0 0.0
  %3518 = vmatpush1.msra.mxu0 %v1737
  %3519 = vmatprep.subr.mxu0 0.0
  %3520 = vmatpush1.msra.mxu0 0.0
  %3521 = vmatprep.subr.mxu0 0.0
  %3522 = vmatpush1.msra.mxu0 0.0
  %3523 = vmatprep.subr.mxu0 0.0
  %3524 = vmatpush1.msra.mxu0 0.0
  %3525 = vmatprep.subr.mxu0 0.0
  %3526 = vmatpush1.msra.mxu0 0.0
  %3527 = vmatprep.subr.mxu0 0.0
  %3528 = vmatpush1.msra.mxu0 0.0
  %3529 = vmatprep.subr.mxu0 0.0
  %3530 = vmatpush1.msra.mxu0 0.0
  %3531 = vmatprep.subr.mxu0 0.0
  %3532 = vmatpush1.msra.mxu0 0.0
  %3533 = vmatprep.subr.mxu0 0.0
  %3534 = vmatpush1.msra.mxu0 0.0
  %3535 = vmatprep.subr.mxu0 0.0
  %3536 = vmatpush1.msra.mxu0 0.0
  %3537 = vmatprep.subr.mxu0 0.0
  %3538 = vmatpush1.msra.mxu0 0.0
  %3539 = vmatprep.subr.mxu0 0.0
  %3540 = vmatpush1.msra.mxu0 0.0
  %3541 = vmatprep.subr.mxu0 0.0
  %3542 = vmatpush1.msra.mxu0 0.0
  %3543 = vmatprep.subr.mxu0 0.0
  %3544 = vmatpush1.msra.mxu0 0.0
  %3545 = vmatprep.subr.mxu0 0.0
  %3546 = vmatpush1.msra.mxu0 0.0
  %3547 = vmatprep.subr.mxu0 0.0
  %3548 = vmatpush1.msra.mxu0 0.0
  %3549 = vmatprep.subr.mxu0 0.0
  %3550 = vmatpush1.msra.mxu0 0.0
  %3551 = vmatprep.subr.mxu0 0.0
  %3552 = vmatpush1.msra.mxu0 0.0
  %3553 = vmatprep.subr.mxu0 0.0
  %3554 = vmatpush1.msra.mxu0 0.0
  %3555 = vmatprep.subr.mxu0 0.0
  %3556 = vmatpush1.msra.mxu0 0.0
  %3557 = vmatprep.subr.mxu0 0.0
  %3558 = vmatpush1.msra.mxu0 0.0
  %3559 = vmatprep.subr.mxu0 0.0
  %3560 = vmatpush1.msra.mxu0 0.0
  %3561 = vmatprep.subr.mxu0 0.0
  %3562 = vmatpush1.msra.mxu0 0.0
  %3563 = vmatprep.subr.mxu0 0.0
  %3564 = vmatpush1.msra.mxu0 0.0
  %3565 = vmatprep.subr.mxu0 0.0
  %3566 = vmatpush1.msra.mxu0 0.0
  %3567 = vmatprep.subr.mxu0 0.0
  %3568 = vmatpush1.msra.mxu0 0.0
  %3569 = vmatprep.subr.mxu0 0.0
  %3570 = vmatpush1.msra.mxu0 0.0
  %3571 = vmatprep.subr.mxu0 0.0
  %3572 = vmatpush1.msra.mxu0 0.0
  %3573 = vmatprep.subr.mxu0 0.0
  %3574 = vmatpush1.msra.mxu0 0.0
  %3575 = vmatprep.subr.mxu0 0.0
  %3576 = vmatpush1.msra.mxu0 0.0
  %3577 = vmatprep.subr.mxu0 0.0
  %3578 = vmatpush1.msra.mxu0 0.0
  %3579 = vmatprep.mubr.f32.mxu0 0.0
  %3580 = vmatmul.mubr.f32.gmra.mrb[0].mxu0 %v3513
  %v3581 = vpop.f32.mrb[0].mxu0
  %v3582 = vadd.f32 %v3508, %v3581
  %v3583 = vpop.f32.mrb[0].mxu0
  %3584 = vdwg.mxu0
  %3585 = vrot.lane.b32.xlu0 %v1649, 11
  %v3586 = vpop.permute.xlu0 %3585
  %v3587 = vsel %vm154, %v3586, 0
  %3589 = vmatprep.subr.mxu0 0.0
  %3590 = vmatpush1.msra.mxu0 %v1655
  %3591 = vmatprep.subr.mxu0 0.0
  %3592 = vmatpush1.msra.mxu0 %v1661
  %3593 = vmatprep.subr.mxu0 0.0
  %3594 = vmatpush1.msra.mxu0 0.0
  %3595 = vmatprep.subr.mxu0 0.0
  %3596 = vmatpush1.msra.mxu0 0.0
  %3597 = vmatprep.subr.mxu0 0.0
  %3598 = vmatpush1.msra.mxu0 0.0
  %3599 = vmatprep.subr.mxu0 0.0
  %3600 = vmatpush1.msra.mxu0 0.0
  %3601 = vmatprep.subr.mxu0 0.0
  %3602 = vmatpush1.msra.mxu0 0.0
  %3603 = vmatprep.subr.mxu0 0.0
  %3604 = vmatpush1.msra.mxu0 0.0
  %3605 = vmatprep.subr.mxu0 0.0
  %3606 = vmatpush1.msra.mxu0 0.0
  %3607 = vmatprep.subr.mxu0 0.0
  %3608 = vmatpush1.msra.mxu0 0.0
  %3609 = vmatprep.subr.mxu0 0.0
  %3610 = vmatpush1.msra.mxu0 0.0
  %3611 = vmatprep.subr.mxu0 0.0
  %3612 = vmatpush1.msra.mxu0 0.0
  %3613 = vmatprep.subr.mxu0 0.0
  %3614 = vmatpush1.msra.mxu0 0.0
  %3615 = vmatprep.subr.mxu0 0.0
  %3616 = vmatpush1.msra.mxu0 0.0
  %3617 = vmatprep.subr.mxu0 0.0
  %3618 = vmatpush1.msra.mxu0 0.0
  %3619 = vmatprep.subr.mxu0 0.0
  %3620 = vmatpush1.msra.mxu0 0.0
  %3621 = vmatprep.subr.mxu0 0.0
  %3622 = vmatpush1.msra.mxu0 0.0
  %3623 = vmatprep.subr.mxu0 0.0
  %3624 = vmatpush1.msra.mxu0 0.0
  %3625 = vmatprep.subr.mxu0 0.0
  %3626 = vmatpush1.msra.mxu0 0.0
  %3627 = vmatprep.subr.mxu0 0.0
  %3628 = vmatpush1.msra.mxu0 0.0
  %3629 = vmatprep.subr.mxu0 0.0
  %3630 = vmatpush1.msra.mxu0 0.0
  %3631 = vmatprep.subr.mxu0 0.0
  %3632 = vmatpush1.msra.mxu0 0.0
  %3633 = vmatprep.subr.mxu0 0.0
  %3634 = vmatpush1.msra.mxu0 0.0
  %3635 = vmatprep.subr.mxu0 0.0
  %3636 = vmatpush1.msra.mxu0 0.0
  %3637 = vmatprep.subr.mxu0 0.0
  %3638 = vmatpush1.msra.mxu0 0.0
  %3639 = vmatprep.subr.mxu0 0.0
  %3640 = vmatpush1.msra.mxu0 0.0
  %3641 = vmatprep.subr.mxu0 0.0
  %3642 = vmatpush1.msra.mxu0 0.0
  %3643 = vmatprep.subr.mxu0 0.0
  %3644 = vmatpush1.msra.mxu0 0.0
  %3645 = vmatprep.subr.mxu0 0.0
  %3646 = vmatpush1.msra.mxu0 0.0
  %3647 = vmatprep.subr.mxu0 0.0
  %3648 = vmatpush1.msra.mxu0 0.0
  %3649 = vmatprep.subr.mxu0 0.0
  %3650 = vmatpush1.msra.mxu0 0.0
  %3651 = vmatprep.subr.mxu0 0.0
  %3652 = vmatpush1.msra.mxu0 0.0
  %3653 = vmatprep.mubr.f32.mxu0 0.0
  %3654 = vmatmul.mubr.f32.gmra.mrb[0].mxu0 %v3587
  %v3655 = vpop.f32.mrb[0].mxu0
  %v3656 = vadd.f32 0.0, %v3655
  %v3657 = vpop.f32.mrb[0].mxu0
  %3658 = vdwg.mxu0
  %3659 = vrot.lane.b32.xlu0 %v1643, 11
  %v3660 = vpop.permute.xlu0 %3659
  %v3661 = vsel %vm154, %v3660, 0
  %3663 = vmatprep.subr.mxu0 0.0
  %3664 = vmatpush1.msra.mxu0 %v1653
  %3665 = vmatprep.subr.mxu0 0.0
  %3666 = vmatpush1.msra.mxu0 %v1737
  %3667 = vmatprep.subr.mxu0 0.0
  %3668 = vmatpush1.msra.mxu0 0.0
  %3669 = vmatprep.subr.mxu0 0.0
  %3670 = vmatpush1.msra.mxu0 0.0
  %3671 = vmatprep.subr.mxu0 0.0
  %3672 = vmatpush1.msra.mxu0 0.0
  %3673 = vmatprep.subr.mxu0 0.0
  %3674 = vmatpush1.msra.mxu0 0.0
  %3675 = vmatprep.subr.mxu0 0.0
  %3676 = vmatpush1.msra.mxu0 0.0
  %3677 = vmatprep.subr.mxu0 0.0
  %3678 = vmatpush1.msra.mxu0 0.0
  %3679 = vmatprep.subr.mxu0 0.0
  %3680 = vmatpush1.msra.mxu0 0.0
  %3681 = vmatprep.subr.mxu0 0.0
  %3682 = vmatpush1.msra.mxu0 0.0
  %3683 = vmatprep.subr.mxu0 0.0
  %3684 = vmatpush1.msra.mxu0 0.0
  %3685 = vmatprep.subr.mxu0 0.0
  %3686 = vmatpush1.msra.mxu0 0.0
  %3687 = vmatprep.subr.mxu0 0.0
  %3688 = vmatpush1.msra.mxu0 0.0
  %3689 = vmatprep.subr.mxu0 0.0
  %3690 = vmatpush1.msra.mxu0 0.0
  %3691 = vmatprep.subr.mxu0 0.0
  %3692 = vmatpush1.msra.mxu0 0.0
  %3693 = vmatprep.subr.mxu0 0.0
  %3694 = vmatpush1.msra.mxu0 0.0
  %3695 = vmatprep.subr.mxu0 0.0
  %3696 = vmatpush1.msra.mxu0 0.0
  %3697 = vmatprep.subr.mxu0 0.0
  %3698 = vmatpush1.msra.mxu0 0.0
  %3699 = vmatprep.subr.mxu0 0.0
  %3700 = vmatpush1.msra.mxu0 0.0
  %3701 = vmatprep.subr.mxu0 0.0
  %3702 = vmatpush1.msra.mxu0 0.0
  %3703 = vmatprep.subr.mxu0 0.0
  %3704 = vmatpush1.msra.mxu0 0.0
  %3705 = vmatprep.subr.mxu0 0.0
  %3706 = vmatpush1.msra.mxu0 0.0
  %3707 = vmatprep.subr.mxu0 0.0
  %3708 = vmatpush1.msra.mxu0 0.0
  %3709 = vmatprep.subr.mxu0 0.0
  %3710 = vmatpush1.msra.mxu0 0.0
  %3711 = vmatprep.subr.mxu0 0.0
  %3712 = vmatpush1.msra.mxu0 0.0
  %3713 = vmatprep.subr.mxu0 0.0
  %3714 = vmatpush1.msra.mxu0 0.0
  %3715 = vmatprep.subr.mxu0 0.0
  %3716 = vmatpush1.msra.mxu0 0.0
  %3717 = vmatprep.subr.mxu0 0.0
  %3718 = vmatpush1.msra.mxu0 0.0
  %3719 = vmatprep.subr.mxu0 0.0
  %3720 = vmatpush1.msra.mxu0 0.0
  %3721 = vmatprep.subr.mxu0 0.0
  %3722 = vmatpush1.msra.mxu0 0.0
  %3723 = vmatprep.subr.mxu0 0.0
  %3724 = vmatpush1.msra.mxu0 0.0
  %3725 = vmatprep.subr.mxu0 0.0
  %3726 = vmatpush1.msra.mxu0 0.0
  %3727 = vmatprep.mubr.f32.mxu0 0.0
  %3728 = vmatmul.mubr.f32.gmra.mrb[0].mxu0 %v3661
  %v3729 = vpop.f32.mrb[0].mxu0
  %v3730 = vadd.f32 %v3656, %v3729
  %v3731 = vpop.f32.mrb[0].mxu0
  %3732 = vdwg.mxu0
  %3734 = vrot.lane.b32.xlu0 %v1649, 2
  %v3735 = vpop.permute.xlu0 %3734
  %3736 = vrot.lane.b32.xlu0 %v1651, 2
  %v3737 = vpop.permute.xlu0 %3736
  %vm3738 = vcmask 15360
  %v3739 = vsel %vm3738, %v3735, %v3737
  %v3740 = vsel %vm154, %v3739, 0
  %3742 = vmatprep.subr.mxu0 0.0
  %3743 = vmatpush1.msra.mxu0 %v1655
  %3744 = vmatprep.subr.mxu0 0.0
  %3745 = vmatpush1.msra.mxu0 %v1661
  %3746 = vmatprep.subr.mxu0 0.0
  %3747 = vmatpush1.msra.mxu0 0.0
  %3748 = vmatprep.subr.mxu0 0.0
  %3749 = vmatpush1.msra.mxu0 0.0
  %3750 = vmatprep.subr.mxu0 0.0
  %3751 = vmatpush1.msra.mxu0 0.0
  %3752 = vmatprep.subr.mxu0 0.0
  %3753 = vmatpush1.msra.mxu0 0.0
  %3754 = vmatprep.subr.mxu0 0.0
  %3755 = vmatpush1.msra.mxu0 0.0
  %3756 = vmatprep.subr.mxu0 0.0
  %3757 = vmatpush1.msra.mxu0 0.0
  %3758 = vmatprep.subr.mxu0 0.0
  %3759 = vmatpush1.msra.mxu0 0.0
  %3760 = vmatprep.subr.mxu0 0.0
  %3761 = vmatpush1.msra.mxu0 0.0
  %3762 = vmatprep.subr.mxu0 0.0
  %3763 = vmatpush1.msra.mxu0 0.0
  %3764 = vmatprep.subr.mxu0 0.0
  %3765 = vmatpush1.msra.mxu0 0.0
  %3766 = vmatprep.subr.mxu0 0.0
  %3767 = vmatpush1.msra.mxu0 0.0
  %3768 = vmatprep.subr.mxu0 0.0
  %3769 = vmatpush1.msra.mxu0 0.0
  %3770 = vmatprep.subr.mxu0 0.0
  %3771 = vmatpush1.msra.mxu0 0.0
  %3772 = vmatprep.subr.mxu0 0.0
  %3773 = vmatpush1.msra.mxu0 0.0
  %3774 = vmatprep.subr.mxu0 0.0
  %3775 = vmatpush1.msra.mxu0 0.0
  %3776 = vmatprep.subr.mxu0 0.0
  %3777 = vmatpush1.msra.mxu0 0.0
  %3778 = vmatprep.subr.mxu0 0.0
  %3779 = vmatpush1.msra.mxu0 0.0
  %3780 = vmatprep.subr.mxu0 0.0
  %3781 = vmatpush1.msra.mxu0 0.0
  %3782 = vmatprep.subr.mxu0 0.0
  %3783 = vmatpush1.msra.mxu0 0.0
  %3784 = vmatprep.subr.mxu0 0.0
  %3785 = vmatpush1.msra.mxu0 0.0
  %3786 = vmatprep.subr.mxu0 0.0
  %3787 = vmatpush1.msra.mxu0 0.0
  %3788 = vmatprep.subr.mxu0 0.0
  %3789 = vmatpush1.msra.mxu0 0.0
  %3790 = vmatprep.subr.mxu0 0.0
  %3791 = vmatpush1.msra.mxu0 0.0
  %3792 = vmatprep.subr.mxu0 0.0
  %3793 = vmatpush1.msra.mxu0 0.0
  %3794 = vmatprep.subr.mxu0 0.0
  %3795 = vmatpush1.msra.mxu0 0.0
  %3796 = vmatprep.subr.mxu0 0.0
  %3797 = vmatpush1.msra.mxu0 0.0
  %3798 = vmatprep.subr.mxu0 0.0
  %3799 = vmatpush1.msra.mxu0 0.0
  %3800 = vmatprep.subr.mxu0 0.0
  %3801 = vmatpush1.msra.mxu0 0.0
  %3802 = vmatprep.subr.mxu0 0.0
  %3803 = vmatpush1.msra.mxu0 0.0
  %3804 = vmatprep.subr.mxu0 0.0
  %3805 = vmatpush1.msra.mxu0 0.0
  %3806 = vmatprep.mubr.f32.mxu0 0.0
  %3807 = vmatmul.mubr.f32.gmra.mrb[0].mxu0 %v3740
  %v3808 = vpop.f32.mrb[0].mxu0
  %v3809 = vadd.f32 0.0, %v3808
  %v3810 = vpop.f32.mrb[0].mxu0
  %3811 = vdwg.mxu0
  %3813 = vrot.lane.b32.xlu0 %v1643, 2
  %v3814 = vpop.permute.xlu0 %3813
  %3815 = vrot.lane.b32.xlu0 %v1645, 2
  %v3816 = vpop.permute.xlu0 %3815
  %v3817 = vsel %vm3738, %v3814, %v3816
  %v3818 = vsel %vm154, %v3817, 0
  %3820 = vmatprep.subr.mxu0 0.0
  %3821 = vmatpush1.msra.mxu0 %v1653
  %3822 = vmatprep.subr.mxu0 0.0
  %3823 = vmatpush1.msra.mxu0 %v1737
  %3824 = vmatprep.subr.mxu0 0.0
  %3825 = vmatpush1.msra.mxu0 0.0
  %3826 = vmatprep.subr.mxu0 0.0
  %3827 = vmatpush1.msra.mxu0 0.0
  %3828 = vmatprep.subr.mxu0 0.0
  %3829 = vmatpush1.msra.mxu0 0.0
  %3830 = vmatprep.subr.mxu0 0.0
  %3831 = vmatpush1.msra.mxu0 0.0
  %3832 = vmatprep.subr.mxu0 0.0
  %3833 = vmatpush1.msra.mxu0 0.0
  %3834 = vmatprep.subr.mxu0 0.0
  %3835 = vmatpush1.msra.mxu0 0.0
  %3836 = vmatprep.subr.mxu0 0.0
  %3837 = vmatpush1.msra.mxu0 0.0
  %3838 = vmatprep.subr.mxu0 0.0
  %3839 = vmatpush1.msra.mxu0 0.0
  %3840 = vmatprep.subr.mxu0 0.0
  %3841 = vmatpush1.msra.mxu0 0.0
  %3842 = vmatprep.subr.mxu0 0.0
  %3843 = vmatpush1.msra.mxu0 0.0
  %3844 = vmatprep.subr.mxu0 0.0
  %3845 = vmatpush1.msra.mxu0 0.0
  %3846 = vmatprep.subr.mxu0 0.0
  %3847 = vmatpush1.msra.mxu0 0.0
  %3848 = vmatprep.subr.mxu0 0.0
  %3849 = vmatpush1.msra.mxu0 0.0
  %3850 = vmatprep.subr.mxu0 0.0
  %3851 = vmatpush1.msra.mxu0 0.0
  %3852 = vmatprep.subr.mxu0 0.0
  %3853 = vmatpush1.msra.mxu0 0.0
  %3854 = vmatprep.subr.mxu0 0.0
  %3855 = vmatpush1.msra.mxu0 0.0
  %3856 = vmatprep.subr.mxu0 0.0
  %3857 = vmatpush1.msra.mxu0 0.0
  %3858 = vmatprep.subr.mxu0 0.0
  %3859 = vmatpush1.msra.mxu0 0.0
  %3860 = vmatprep.subr.mxu0 0.0
  %3861 = vmatpush1.msra.mxu0 0.0
  %3862 = vmatprep.subr.mxu0 0.0
  %3863 = vmatpush1.msra.mxu0 0.0
  %3864 = vmatprep.subr.mxu0 0.0
  %3865 = vmatpush1.msra.mxu0 0.0
  %3866 = vmatprep.subr.mxu0 0.0
  %3867 = vmatpush1.msra.mxu0 0.0
  %3868 = vmatprep.subr.mxu0 0.0
  %3869 = vmatpush1.msra.mxu0 0.0
  %3870 = vmatprep.subr.mxu0 0.0
  %3871 = vmatpush1.msra.mxu0 0.0
  %3872 = vmatprep.subr.mxu0 0.0
  %3873 = vmatpush1.msra.mxu0 0.0
  %3874 = vmatprep.subr.mxu0 0.0
  %3875 = vmatpush1.msra.mxu0 0.0
  %3876 = vmatprep.subr.mxu0 0.0
  %3877 = vmatpush1.msra.mxu0 0.0
  %3878 = vmatprep.subr.mxu0 0.0
  %3879 = vmatpush1.msra.mxu0 0.0
  %3880 = vmatprep.subr.mxu0 0.0
  %3881 = vmatpush1.msra.mxu0 0.0
  %3882 = vmatprep.subr.mxu0 0.0
  %3883 = vmatpush1.msra.mxu0 0.0
  %3884 = vmatprep.mubr.f32.mxu0 0.0
  %3885 = vmatmul.mubr.f32.gmra.mrb[0].mxu0 %v3818
  %v3886 = vpop.f32.mrb[0].mxu0
  %v3887 = vadd.f32 %v3809, %v3886
  %v3888 = vpop.f32.mrb[0].mxu0
  %3889 = vdwg.mxu0
  %3890 = vrot.lane.b32.xlu0 %v1651, 121
  %v3891 = vpop.permute.xlu0 %3890
  %v3892 = vsel %vm154, %v3891, 0
  %3894 = vmatprep.subr.mxu0 0.0
  %3895 = vmatpush1.msra.mxu0 %v1655
  %3896 = vmatprep.subr.mxu0 0.0
  %3897 = vmatpush1.msra.mxu0 %v1661
  %3898 = vmatprep.subr.mxu0 0.0
  %3899 = vmatpush1.msra.mxu0 0.0
  %3900 = vmatprep.subr.mxu0 0.0
  %3901 = vmatpush1.msra.mxu0 0.0
  %3902 = vmatprep.subr.mxu0 0.0
  %3903 = vmatpush1.msra.mxu0 0.0
  %3904 = vmatprep.subr.mxu0 0.0
  %3905 = vmatpush1.msra.mxu0 0.0
  %3906 = vmatprep.subr.mxu0 0.0
  %3907 = vmatpush1.msra.mxu0 0.0
  %3908 = vmatprep.subr.mxu0 0.0
  %3909 = vmatpush1.msra.mxu0 0.0
  %3910 = vmatprep.subr.mxu0 0.0
  %3911 = vmatpush1.msra.mxu0 0.0
  %3912 = vmatprep.subr.mxu0 0.0
  %3913 = vmatpush1.msra.mxu0 0.0
  %3914 = vmatprep.subr.mxu0 0.0
  %3915 = vmatpush1.msra.mxu0 0.0
  %3916 = vmatprep.subr.mxu0 0.0
  %3917 = vmatpush1.msra.mxu0 0.0
  %3918 = vmatprep.subr.mxu0 0.0
  %3919 = vmatpush1.msra.mxu0 0.0
  %3920 = vmatprep.subr.mxu0 0.0
  %3921 = vmatpush1.msra.mxu0 0.0
  %3922 = vmatprep.subr.mxu0 0.0
  %3923 = vmatpush1.msra.mxu0 0.0
  %3924 = vmatprep.subr.mxu0 0.0
  %3925 = vmatpush1.msra.mxu0 0.0
  %3926 = vmatprep.subr.mxu0 0.0
  %3927 = vmatpush1.msra.mxu0 0.0
  %3928 = vmatprep.subr.mxu0 0.0
  %3929 = vmatpush1.msra.mxu0 0.0
  %3930 = vmatprep.subr.mxu0 0.0
  %3931 = vmatpush1.msra.mxu0 0.0
  %3932 = vmatprep.subr.mxu0 0.0
  %3933 = vmatpush1.msra.mxu0 0.0
  %3934 = vmatprep.subr.mxu0 0.0
  %3935 = vmatpush1.msra.mxu0 0.0
  %3936 = vmatprep.subr.mxu0 0.0
  %3937 = vmatpush1.msra.mxu0 0.0
  %3938 = vmatprep.subr.mxu0 0.0
  %3939 = vmatpush1.msra.mxu0 0.0
  %3940 = vmatprep.subr.mxu0 0.0
  %3941 = vmatpush1.msra.mxu0 0.0
  %3942 = vmatprep.subr.mxu0 0.0
  %3943 = vmatpush1.msra.mxu0 0.0
  %3944 = vmatprep.subr.mxu0 0.0
  %3945 = vmatpush1.msra.mxu0 0.0
  %3946 = vmatprep.subr.mxu0 0.0
  %3947 = vmatpush1.msra.mxu0 0.0
  %3948 = vmatprep.subr.mxu0 0.0
  %3949 = vmatpush1.msra.mxu0 0.0
  %3950 = vmatprep.subr.mxu0 0.0
  %3951 = vmatpush1.msra.mxu0 0.0
  %3952 = vmatprep.subr.mxu0 0.0
  %3953 = vmatpush1.msra.mxu0 0.0
  %3954 = vmatprep.subr.mxu0 0.0
  %3955 = vmatpush1.msra.mxu0 0.0
  %3956 = vmatprep.subr.mxu0 0.0
  %3957 = vmatpush1.msra.mxu0 0.0
  %3958 = vmatprep.mubr.f32.mxu0 0.0
  %3959 = vmatmul.mubr.f32.gmra.mrb[0].mxu0 %v3892
  %v3960 = vpop.f32.mrb[0].mxu0
  %v3961 = vadd.f32 0.0, %v3960
  %v3962 = vpop.f32.mrb[0].mxu0
  %3963 = vdwg.mxu0
  %3964 = vrot.lane.b32.xlu0 %v1645, 121
  %v3965 = vpop.permute.xlu0 %3964
  %v3966 = vsel %vm154, %v3965, 0
  %3968 = vmatprep.subr.mxu0 0.0
  %3969 = vmatpush1.msra.mxu0 %v1653
  %3970 = vmatprep.subr.mxu0 0.0
  %3971 = vmatpush1.msra.mxu0 %v1737
  %3972 = vmatprep.subr.mxu0 0.0
  %3973 = vmatpush1.msra.mxu0 0.0
  %3974 = vmatprep.subr.mxu0 0.0
  %3975 = vmatpush1.msra.mxu0 0.0
  %3976 = vmatprep.subr.mxu0 0.0
  %3977 = vmatpush1.msra.mxu0 0.0
  %3978 = vmatprep.subr.mxu0 0.0
  %3979 = vmatpush1.msra.mxu0 0.0
  %3980 = vmatprep.subr.mxu0 0.0
  %3981 = vmatpush1.msra.mxu0 0.0
  %3982 = vmatprep.subr.mxu0 0.0
  %3983 = vmatpush1.msra.mxu0 0.0
  %3984 = vmatprep.subr.mxu0 0.0
  %3985 = vmatpush1.msra.mxu0 0.0
  %3986 = vmatprep.subr.mxu0 0.0
  %3987 = vmatpush1.msra.mxu0 0.0
  %3988 = vmatprep.subr.mxu0 0.0
  %3989 = vmatpush1.msra.mxu0 0.0
  %3990 = vmatprep.subr.mxu0 0.0
  %3991 = vmatpush1.msra.mxu0 0.0
  %3992 = vmatprep.subr.mxu0 0.0
  %3993 = vmatpush1.msra.mxu0 0.0
  %3994 = vmatprep.subr.mxu0 0.0
  %3995 = vmatpush1.msra.mxu0 0.0
  %3996 = vmatprep.subr.mxu0 0.0
  %3997 = vmatpush1.msra.mxu0 0.0
  %3998 = vmatprep.subr.mxu0 0.0
  %3999 = vmatpush1.msra.mxu0 0.0
  %4000 = vmatprep.subr.mxu0 0.0
  %4001 = vmatpush1.msra.mxu0 0.0
  %4002 = vmatprep.subr.mxu0 0.0
  %4003 = vmatpush1.msra.mxu0 0.0
  %4004 = vmatprep.subr.mxu0 0.0
  %4005 = vmatpush1.msra.mxu0 0.0
  %4006 = vmatprep.subr.mxu0 0.0
  %4007 = vmatpush1.msra.mxu0 0.0
  %4008 = vmatprep.subr.mxu0 0.0
  %4009 = vmatpush1.msra.mxu0 0.0
  %4010 = vmatprep.subr.mxu0 0.0
  %4011 = vmatpush1.msra.mxu0 0.0
  %4012 = vmatprep.subr.mxu0 0.0
  %4013 = vmatpush1.msra.mxu0 0.0
  %4014 = vmatprep.subr.mxu0 0.0
  %4015 = vmatpush1.msra.mxu0 0.0
  %4016 = vmatprep.subr.mxu0 0.0
  %4017 = vmatpush1.msra.mxu0 0.0
  %4018 = vmatprep.subr.mxu0 0.0
  %4019 = vmatpush1.msra.mxu0 0.0
  %4020 = vmatprep.subr.mxu0 0.0
  %4021 = vmatpush1.msra.mxu0 0.0
  %4022 = vmatprep.subr.mxu0 0.0
  %4023 = vmatpush1.msra.mxu0 0.0
  %4024 = vmatprep.subr.mxu0 0.0
  %4025 = vmatpush1.msra.mxu0 0.0
  %4026 = vmatprep.subr.mxu0 0.0
  %4027 = vmatpush1.msra.mxu0 0.0
  %4028 = vmatprep.subr.mxu0 0.0
  %4029 = vmatpush1.msra.mxu0 0.0
  %4030 = vmatprep.subr.mxu0 0.0
  %4031 = vmatpush1.msra.mxu0 0.0
  %4032 = vmatprep.mubr.f32.mxu0 0.0
  %4033 = vmatmul.mubr.f32.gmra.mrb[0].mxu0 %v3966
  %v4034 = vpop.f32.mrb[0].mxu0
  %v4035 = vadd.f32 %v3961, %v4034
  %v4036 = vpop.f32.mrb[0].mxu0
  %4037 = vdwg.mxu0
  %4039 = vrot.lane.b32.xlu0 %v1954, 16
  %v4040 = vpop.permute.xlu0 %4039
  %4043 = vrot.lane.b32.xlu0 %v2102, 32
  %v4044 = vpop.permute.xlu0 %4043
  %4047 = vrot.lane.b32.xlu0 %v2250, 48
  %v4048 = vpop.permute.xlu0 %4047
  %4051 = vrot.lane.b32.xlu0 %v2398, 64
  %v4052 = vpop.permute.xlu0 %4051
  %4055 = vrot.lane.b32.xlu0 %v2546, 80
  %v4056 = vpop.permute.xlu0 %4055
  %4059 = vrot.lane.b32.xlu0 %v2694, 96
  %v4060 = vpop.permute.xlu0 %4059
  %4063 = vrot.lane.b32.xlu0 %v2842, 112
  %v4064 = vpop.permute.xlu0 %4063
  %4067 = vrot.lane.b32.xlu0 %v3138, 16
  %v4068 = vpop.permute.xlu0 %4067
  %4071 = vrot.lane.b32.xlu0 %v3286, 32
  %v4072 = vpop.permute.xlu0 %4071
  %4075 = vrot.lane.b32.xlu0 %v3434, 48
  %v4076 = vpop.permute.xlu0 %4075
  %4079 = vrot.lane.b32.xlu0 %v3582, 64
  %v4080 = vpop.permute.xlu0 %4079
  %4083 = vrot.lane.b32.xlu0 %v3730, 80
  %v4084 = vpop.permute.xlu0 %4083
  %4087 = vrot.lane.b32.xlu0 %v3887, 96
  %v4088 = vpop.permute.xlu0 %4087
  %4091 = vrot.lane.b32.xlu0 %v4035, 112
  %v4092 = vpop.permute.xlu0 %4091
  %v4094 = vsel %vm1542, %v1806, %v4040
  %v4095 = vsel %vm52, %v4094, %v4044
  %v4096 = vsel %vm1547, %v4095, %v4048
  %v4097 = vsel %vm1550, %v4096, %v4052
  %v4098 = vsel %vm1553, %v4097, %v4056
  %v4099 = vsel %vm1556, %v4098, %v4060
  %v4100 = vsel %vm1559, %v4099, %v4064
  %v4101 = vsel %vm1542, %v2990, %v4068
  %v4102 = vsel %vm52, %v4101, %v4072
  %v4103 = vsel %vm1547, %v4102, %v4076
  %v4104 = vsel %vm1550, %v4103, %v4080
  %v4105 = vsel %vm1553, %v4104, %v4084
  %v4106 = vsel %vm1556, %v4105, %v4088
  %v4107 = vsel %vm1559, %v4106, %v4092
  %4108 = vst [vmem:[%s13] sm:$0xff] %v4100
  %4109 = vst [vmem:[%s13 + $0x8] sm:$0xff] %v4107
  %v4110 = vld [vmem:[%s9] sm:$0xff]
  %v4111 = vld [vmem:[%s9 + $0x8] sm:$0xff]
  %v4112 = vld [vmem:[%s8] sm:$0xff]
  %v4113 = vld [vmem:[%s8 + $0x8] sm:$0xff]
  %v4115 = vsel %vm1542, %v4110, 0
  %v4118 = vsel %vm1542, %v4111, 0
  %4120 = vmatprep.subr.mxu0 0.0
  %4121 = vmatpush1.msra.mxu0 %v4112
  %4122 = vmatprep.subr.mxu0 0.0
  %4123 = vmatpush1.msra.mxu0 %v4113
  %4124 = vmatprep.subr.mxu0 0.0
  %4125 = vmatpush1.msra.mxu0 0.0
  %4126 = vmatprep.subr.mxu0 0.0
  %4127 = vmatpush1.msra.mxu0 0.0
  %4128 = vmatprep.subr.mxu0 0.0
  %4129 = vmatpush1.msra.mxu0 0.0
  %4130 = vmatprep.subr.mxu0 0.0
  %4131 = vmatpush1.msra.mxu0 0.0
  %4132 = vmatprep.subr.mxu0 0.0
  %4133 = vmatpush1.msra.mxu0 0.0
  %4134 = vmatprep.subr.mxu0 0.0
  %4135 = vmatpush1.msra.mxu0 0.0
  %4136 = vmatprep.subr.mxu0 0.0
  %4137 = vmatpush1.msra.mxu0 0.0
  %4138 = vmatprep.subr.mxu0 0.0
  %4139 = vmatpush1.msra.mxu0 0.0
  %4140 = vmatprep.subr.mxu0 0.0
  %4141 = vmatpush1.msra.mxu0 0.0
  %4142 = vmatprep.subr.mxu0 0.0
  %4143 = vmatpush1.msra.mxu0 0.0
  %4144 = vmatprep.subr.mxu0 0.0
  %4145 = vmatpush1.msra.mxu0 0.0
  %4146 = vmatprep.subr.mxu0 0.0
  %4147 = vmatpush1.msra.mxu0 0.0
  %4148 = vmatprep.subr.mxu0 0.0
  %4149 = vmatpush1.msra.mxu0 0.0
  %4150 = vmatprep.subr.mxu0 0.0
  %4151 = vmatpush1.msra.mxu0 0.0
  %4152 = vmatprep.subr.mxu0 0.0
  %4153 = vmatpush1.msra.mxu0 0.0
  %4154 = vmatprep.subr.mxu0 0.0
  %4155 = vmatpush1.msra.mxu0 0.0
  %4156 = vmatprep.subr.mxu0 0.0
  %4157 = vmatpush1.msra.mxu0 0.0
  %4158 = vmatprep.subr.mxu0 0.0
  %4159 = vmatpush1.msra.mxu0 0.0
  %4160 = vmatprep.subr.mxu0 0.0
  %4161 = vmatpush1.msra.mxu0 0.0
  %4162 = vmatprep.subr.mxu0 0.0
  %4163 = vmatpush1.msra.mxu0 0.0
  %4164 = vmatprep.subr.mxu0 0.0
  %4165 = vmatpush1.msra.mxu0 0.0
  %4166 = vmatprep.subr.mxu0 0.0
  %4167 = vmatpush1.msra.mxu0 0.0
  %4168 = vmatprep.subr.mxu0 0.0
  %4169 = vmatpush1.msra.mxu0 0.0
  %4170 = vmatprep.subr.mxu0 0.0
  %4171 = vmatpush1.msra.mxu0 0.0
  %4172 = vmatprep.subr.mxu0 0.0
  %4173 = vmatpush1.msra.mxu0 0.0
  %4174 = vmatprep.subr.mxu0 0.0
  %4175 = vmatpush1.msra.mxu0 0.0
  %4176 = vmatprep.subr.mxu0 0.0
  %4177 = vmatpush1.msra.mxu0 0.0
  %4178 = vmatprep.subr.mxu0 0.0
  %4179 = vmatpush1.msra.mxu0 0.0
  %4180 = vmatprep.subr.mxu0 0.0
  %4181 = vmatpush1.msra.mxu0 0.0
  %4182 = vmatprep.subr.mxu0 0.0
  %4183 = vmatpush1.msra.mxu0 0.0
  %4184 = vmatprep.mubr.f32.mxu0 0.0
  %4185 = vmatmul.mubr.f32.gmra.mrb[0].mxu0 %v4115
  %v4186 = vpop.f32.mrb[0].mxu0
  %v4187 = vadd.f32 0.0, %v4186
  %v4188 = vpop.f32.mrb[0].mxu0
  %4189 = vmatprep.mubr.f32.mxu0 0.0
  %4190 = vmatmul.mubr.f32.gmra.mrb[0].mxu0 %v4118
  %v4191 = vpop.f32.mrb[0].mxu0
  %v4192 = vadd.f32 0.0, %v4191
  %v4193 = vpop.f32.mrb[0].mxu0
  %4194 = vdwg.mxu0
  %v4195 = vld [vmem:[%s10] sm:$0x1f]
  %v4196 = vld [vmem:[%s11] sm:$0x1f]
  %vm4197 = vcmask 39936
  %v4199 = vsel %vm4197, %v4192, 0
  %vm4201 = vcmask 1044480
  %v4203 = vsel %vm4201, %v4196, 0
  %4205 = vmatprep.subr.mxu0 0.0
  %4206 = vmatpush1.msra.mxu0 %v4203
  %4207 = vmatprep.subr.mxu0 0.0
  %4208 = vmatpush1.msra.mxu0 0.0
  %4209 = vmatprep.subr.mxu0 0.0
  %4210 = vmatpush1.msra.mxu0 0.0
  %4211 = vmatprep.subr.mxu0 0.0
  %4212 = vmatpush1.msra.mxu0 0.0
  %4213 = vmatprep.subr.mxu0 0.0
  %4214 = vmatpush1.msra.mxu0 0.0
  %4215 = vmatprep.subr.mxu0 0.0
  %4216 = vmatpush1.msra.mxu0 0.0
  %4217 = vmatprep.subr.mxu0 0.0
  %4218 = vmatpush1.msra.mxu0 0.0
  %4219 = vmatprep.subr.mxu0 0.0
  %4220 = vmatpush1.msra.mxu0 0.0
  %4221 = vmatprep.subr.mxu0 0.0
  %4222 = vmatpush1.msra.mxu0 0.0
  %4223 = vmatprep.subr.mxu0 0.0
  %4224 = vmatpush1.msra.mxu0 0.0
  %4225 = vmatprep.subr.mxu0 0.0
  %4226 = vmatpush1.msra.mxu0 0.0
  %4227 = vmatprep.subr.mxu0 0.0
  %4228 = vmatpush1.msra.mxu0 0.0
  %4229 = vmatprep.subr.mxu0 0.0
  %4230 = vmatpush1.msra.mxu0 0.0
  %4231 = vmatprep.subr.mxu0 0.0
  %4232 = vmatpush1.msra.mxu0 0.0
  %4233 = vmatprep.subr.mxu0 0.0
  %4234 = vmatpush1.msra.mxu0 0.0
  %4235 = vmatprep.subr.mxu0 0.0
  %4236 = vmatpush1.msra.mxu0 0.0
  %4237 = vmatprep.subr.mxu0 0.0
  %4238 = vmatpush1.msra.mxu0 0.0
  %4239 = vmatprep.subr.mxu0 0.0
  %4240 = vmatpush1.msra.mxu0 0.0
  %4241 = vmatprep.subr.mxu0 0.0
  %4242 = vmatpush1.msra.mxu0 0.0
  %4243 = vmatprep.subr.mxu0 0.0
  %4244 = vmatpush1.msra.mxu0 0.0
  %4245 = vmatprep.subr.mxu0 0.0
  %4246 = vmatpush1.msra.mxu0 0.0
  %4247 = vmatprep.subr.mxu0 0.0
  %4248 = vmatpush1.msra.mxu0 0.0
  %4249 = vmatprep.subr.mxu0 0.0
  %4250 = vmatpush1.msra.mxu0 0.0
  %4251 = vmatprep.subr.mxu0 0.0
  %4252 = vmatpush1.msra.mxu0 0.0
  %4253 = vmatprep.subr.mxu0 0.0
  %4254 = vmatpush1.msra.mxu0 0.0
  %4255 = vmatprep.subr.mxu0 0.0
  %4256 = vmatpush1.msra.mxu0 0.0
  %4257 = vmatprep.subr.mxu0 0.0
  %4258 = vmatpush1.msra.mxu0 0.0
  %4259 = vmatprep.subr.mxu0 0.0
  %4260 = vmatpush1.msra.mxu0 0.0
  %4261 = vmatprep.subr.mxu0 0.0
  %4262 = vmatpush1.msra.mxu0 0.0
  %4263 = vmatprep.subr.mxu0 0.0
  %4264 = vmatpush1.msra.mxu0 0.0
  %4265 = vmatprep.subr.mxu0 0.0
  %4266 = vmatpush1.msra.mxu0 0.0
  %4267 = vmatprep.subr.mxu0 0.0
  %4268 = vmatpush1.msra.mxu0 0.0
  %4269 = vmatprep.mubr.f32.mxu0 0.0
  %4270 = vmatmul.mubr.f32.gmra.mrb[0].mxu0 %v4199
  %v4271 = vpop.f32.mrb[0].mxu0
  %v4272 = vadd.f32 0.0, %v4271
  %v4273 = vpop.f32.mrb[0].mxu0
  %4274 = vdwg.mxu0
  %v4276 = vsel %vm4197, %v4187, 0
  %v4279 = vsel %vm4201, %v4195, 0
  %4281 = vmatprep.subr.mxu0 0.0
  %4282 = vmatpush1.msra.mxu0 %v4279
  %4283 = vmatprep.subr.mxu0 0.0
  %4284 = vmatpush1.msra.mxu0 0.0
  %4285 = vmatprep.subr.mxu0 0.0
  %4286 = vmatpush1.msra.mxu0 0.0
  %4287 = vmatprep.subr.mxu0 0.0
  %4288 = vmatpush1.msra.mxu0 0.0
  %4289 = vmatprep.subr.mxu0 0.0
  %4290 = vmatpush1.msra.mxu0 0.0
  %4291 = vmatprep.subr.mxu0 0.0
  %4292 = vmatpush1.msra.mxu0 0.0
  %4293 = vmatprep.subr.mxu0 0.0
  %4294 = vmatpush1.msra.mxu0 0.0
  %4295 = vmatprep.subr.mxu0 0.0
  %4296 = vmatpush1.msra.mxu0 0.0
  %4297 = vmatprep.subr.mxu0 0.0
  %4298 = vmatpush1.msra.mxu0 0.0
  %4299 = vmatprep.subr.mxu0 0.0
  %4300 = vmatpush1.msra.mxu0 0.0
  %4301 = vmatprep.subr.mxu0 0.0
  %4302 = vmatpush1.msra.mxu0 0.0
  %4303 = vmatprep.subr.mxu0 0.0
  %4304 = vmatpush1.msra.mxu0 0.0
  %4305 = vmatprep.subr.mxu0 0.0
  %4306 = vmatpush1.msra.mxu0 0.0
  %4307 = vmatprep.subr.mxu0 0.0
  %4308 = vmatpush1.msra.mxu0 0.0
  %4309 = vmatprep.subr.mxu0 0.0
  %4310 = vmatpush1.msra.mxu0 0.0
  %4311 = vmatprep.subr.mxu0 0.0
  %4312 = vmatpush1.msra.mxu0 0.0
  %4313 = vmatprep.subr.mxu0 0.0
  %4314 = vmatpush1.msra.mxu0 0.0
  %4315 = vmatprep.subr.mxu0 0.0
  %4316 = vmatpush1.msra.mxu0 0.0
  %4317 = vmatprep.subr.mxu0 0.0
  %4318 = vmatpush1.msra.mxu0 0.0
  %4319 = vmatprep.subr.mxu0 0.0
  %4320 = vmatpush1.msra.mxu0 0.0
  %4321 = vmatprep.subr.mxu0 0.0
  %4322 = vmatpush1.msra.mxu0 0.0
  %4323 = vmatprep.subr.mxu0 0.0
  %4324 = vmatpush1.msra.mxu0 0.0
  %4325 = vmatprep.subr.mxu0 0.0
  %4326 = vmatpush1.msra.mxu0 0.0
  %4327 = vmatprep.subr.mxu0 0.0
  %4328 = vmatpush1.msra.mxu0 0.0
  %4329 = vmatprep.subr.mxu0 0.0
  %4330 = vmatpush1.msra.mxu0 0.0
  %4331 = vmatprep.subr.mxu0 0.0
  %4332 = vmatpush1.msra.mxu0 0.0
  %4333 = vmatprep.subr.mxu0 0.0
  %4334 = vmatpush1.msra.mxu0 0.0
  %4335 = vmatprep.subr.mxu0 0.0
  %4336 = vmatpush1.msra.mxu0 0.0
  %4337 = vmatprep.subr.mxu0 0.0
  %4338 = vmatpush1.msra.mxu0 0.0
  %4339 = vmatprep.subr.mxu0 0.0
  %4340 = vmatpush1.msra.mxu0 0.0
  %4341 = vmatprep.subr.mxu0 0.0
  %4342 = vmatpush1.msra.mxu0 0.0
  %4343 = vmatprep.subr.mxu0 0.0
  %4344 = vmatpush1.msra.mxu0 0.0
  %4345 = vmatprep.mubr.f32.mxu0 0.0
  %4346 = vmatmul.mubr.f32.gmra.mrb[0].mxu0 %v4276
  %v4347 = vpop.f32.mrb[0].mxu0
  %v4348 = vadd.f32 %v4272, %v4347
  %v4349 = vpop.f32.mrb[0].mxu0
  %4350 = vdwg.mxu0
  %4351 = vrot.lane.b32.xlu0 %v4192, 123
  %v4352 = vpop.permute.xlu0 %4351
  %v4353 = vsel %vm4197, %v4352, 0
  %4355 = vmatprep.subr.mxu0 0.0
  %4356 = vmatpush1.msra.mxu0 %v4203
  %4357 = vmatprep.subr.mxu0 0.0
  %4358 = vmatpush1.msra.mxu0 0.0
  %4359 = vmatprep.subr.mxu0 0.0
  %4360 = vmatpush1.msra.mxu0 0.0
  %4361 = vmatprep.subr.mxu0 0.0
  %4362 = vmatpush1.msra.mxu0 0.0
  %4363 = vmatprep.subr.mxu0 0.0
  %4364 = vmatpush1.msra.mxu0 0.0
  %4365 = vmatprep.subr.mxu0 0.0
  %4366 = vmatpush1.msra.mxu0 0.0
  %4367 = vmatprep.subr.mxu0 0.0
  %4368 = vmatpush1.msra.mxu0 0.0
  %4369 = vmatprep.subr.mxu0 0.0
  %4370 = vmatpush1.msra.mxu0 0.0
  %4371 = vmatprep.subr.mxu0 0.0
  %4372 = vmatpush1.msra.mxu0 0.0
  %4373 = vmatprep.subr.mxu0 0.0
  %4374 = vmatpush1.msra.mxu0 0.0
  %4375 = vmatprep.subr.mxu0 0.0
  %4376 = vmatpush1.msra.mxu0 0.0
  %4377 = vmatprep.subr.mxu0 0.0
  %4378 = vmatpush1.msra.mxu0 0.0
  %4379 = vmatprep.subr.mxu0 0.0
  %4380 = vmatpush1.msra.mxu0 0.0
  %4381 = vmatprep.subr.mxu0 0.0
  %4382 = vmatpush1.msra.mxu0 0.0
  %4383 = vmatprep.subr.mxu0 0.0
  %4384 = vmatpush1.msra.mxu0 0.0
  %4385 = vmatprep.subr.mxu0 0.0
  %4386 = vmatpush1.msra.mxu0 0.0
  %4387 = vmatprep.subr.mxu0 0.0
  %4388 = vmatpush1.msra.mxu0 0.0
  %4389 = vmatprep.subr.mxu0 0.0
  %4390 = vmatpush1.msra.mxu0 0.0
  %4391 = vmatprep.subr.mxu0 0.0
  %4392 = vmatpush1.msra.mxu0 0.0
  %4393 = vmatprep.subr.mxu0 0.0
  %4394 = vmatpush1.msra.mxu0 0.0
  %4395 = vmatprep.subr.mxu0 0.0
  %4396 = vmatpush1.msra.mxu0 0.0
  %4397 = vmatprep.subr.mxu0 0.0
  %4398 = vmatpush1.msra.mxu0 0.0
  %4399 = vmatprep.subr.mxu0 0.0
  %4400 = vmatpush1.msra.mxu0 0.0
  %4401 = vmatprep.subr.mxu0 0.0
  %4402 = vmatpush1.msra.mxu0 0.0
  %4403 = vmatprep.subr.mxu0 0.0
  %4404 = vmatpush1.msra.mxu0 0.0
  %4405 = vmatprep.subr.mxu0 0.0
  %4406 = vmatpush1.msra.mxu0 0.0
  %4407 = vmatprep.subr.mxu0 0.0
  %4408 = vmatpush1.msra.mxu0 0.0
  %4409 = vmatprep.subr.mxu0 0.0
  %4410 = vmatpush1.msra.mxu0 0.0
  %4411 = vmatprep.subr.mxu0 0.0
  %4412 = vmatpush1.msra.mxu0 0.0
  %4413 = vmatprep.subr.mxu0 0.0
  %4414 = vmatpush1.msra.mxu0 0.0
  %4415 = vmatprep.subr.mxu0 0.0
  %4416 = vmatpush1.msra.mxu0 0.0
  %4417 = vmatprep.subr.mxu0 0.0
  %4418 = vmatpush1.msra.mxu0 0.0
  %4419 = vmatprep.mubr.f32.mxu0 0.0
  %4420 = vmatmul.mubr.f32.gmra.mrb[0].mxu0 %v4353
  %v4421 = vpop.f32.mrb[0].mxu0
  %v4422 = vadd.f32 0.0, %v4421
  %v4423 = vpop.f32.mrb[0].mxu0
  %4424 = vdwg.mxu0
  %4425 = vrot.lane.b32.xlu0 %v4187, 123
  %v4426 = vpop.permute.xlu0 %4425
  %v4427 = vsel %vm4197, %v4426, 0
  %4429 = vmatprep.subr.mxu0 0.0
  %4430 = vmatpush1.msra.mxu0 %v4279
  %4431 = vmatprep.subr.mxu0 0.0
  %4432 = vmatpush1.msra.mxu0 0.0
  %4433 = vmatprep.subr.mxu0 0.0
  %4434 = vmatpush1.msra.mxu0 0.0
  %4435 = vmatprep.subr.mxu0 0.0
  %4436 = vmatpush1.msra.mxu0 0.0
  %4437 = vmatprep.subr.mxu0 0.0
  %4438 = vmatpush1.msra.mxu0 0.0
  %4439 = vmatprep.subr.mxu0 0.0
  %4440 = vmatpush1.msra.mxu0 0.0
  %4441 = vmatprep.subr.mxu0 0.0
  %4442 = vmatpush1.msra.mxu0 0.0
  %4443 = vmatprep.subr.mxu0 0.0
  %4444 = vmatpush1.msra.mxu0 0.0
  %4445 = vmatprep.subr.mxu0 0.0
  %4446 = vmatpush1.msra.mxu0 0.0
  %4447 = vmatprep.subr.mxu0 0.0
  %4448 = vmatpush1.msra.mxu0 0.0
  %4449 = vmatprep.subr.mxu0 0.0
  %4450 = vmatpush1.msra.mxu0 0.0
  %4451 = vmatprep.subr.mxu0 0.0
  %4452 = vmatpush1.msra.mxu0 0.0
  %4453 = vmatprep.subr.mxu0 0.0
  %4454 = vmatpush1.msra.mxu0 0.0
  %4455 = vmatprep.subr.mxu0 0.0
  %4456 = vmatpush1.msra.mxu0 0.0
  %4457 = vmatprep.subr.mxu0 0.0
  %4458 = vmatpush1.msra.mxu0 0.0
  %4459 = vmatprep.subr.mxu0 0.0
  %4460 = vmatpush1.msra.mxu0 0.0
  %4461 = vmatprep.subr.mxu0 0.0
  %4462 = vmatpush1.msra.mxu0 0.0
  %4463 = vmatprep.subr.mxu0 0.0
  %4464 = vmatpush1.msra.mxu0 0.0
  %4465 = vmatprep.subr.mxu0 0.0
  %4466 = vmatpush1.msra.mxu0 0.0
  %4467 = vmatprep.subr.mxu0 0.0
  %4468 = vmatpush1.msra.mxu0 0.0
  %4469 = vmatprep.subr.mxu0 0.0
  %4470 = vmatpush1.msra.mxu0 0.0
  %4471 = vmatprep.subr.mxu0 0.0
  %4472 = vmatpush1.msra.mxu0 0.0
  %4473 = vmatprep.subr.mxu0 0.0
  %4474 = vmatpush1.msra.mxu0 0.0
  %4475 = vmatprep.subr.mxu0 0.0
  %4476 = vmatpush1.msra.mxu0 0.0
  %4477 = vmatprep.subr.mxu0 0.0
  %4478 = vmatpush1.msra.mxu0 0.0
  %4479 = vmatprep.subr.mxu0 0.0
  %4480 = vmatpush1.msra.mxu0 0.0
  %4481 = vmatprep.subr.mxu0 0.0
  %4482 = vmatpush1.msra.mxu0 0.0
  %4483 = vmatprep.subr.mxu0 0.0
  %4484 = vmatpush1.msra.mxu0 0.0
  %4485 = vmatprep.subr.mxu0 0.0
  %4486 = vmatpush1.msra.mxu0 0.0
  %4487 = vmatprep.subr.mxu0 0.0
  %4488 = vmatpush1.msra.mxu0 0.0
  %4489 = vmatprep.subr.mxu0 0.0
  %4490 = vmatpush1.msra.mxu0 0.0
  %4491 = vmatprep.subr.mxu0 0.0
  %4492 = vmatpush1.msra.mxu0 0.0
  %4493 = vmatprep.mubr.f32.mxu0 0.0
  %4494 = vmatmul.mubr.f32.gmra.mrb[0].mxu0 %v4427
  %v4495 = vpop.f32.mrb[0].mxu0
  %v4496 = vadd.f32 %v4422, %v4495
  %v4497 = vpop.f32.mrb[0].mxu0
  %4498 = vdwg.mxu0
  %4499 = vrot.lane.b32.xlu0 %v4192, 118
  %v4500 = vpop.permute.xlu0 %4499
  %v4501 = vsel %vm4197, %v4500, 0
  %4503 = vmatprep.subr.mxu0 0.0
  %4504 = vmatpush1.msra.mxu0 %v4203
  %4505 = vmatprep.subr.mxu0 0.0
  %4506 = vmatpush1.msra.mxu0 0.0
  %4507 = vmatprep.subr.mxu0 0.0
  %4508 = vmatpush1.msra.mxu0 0.0
  %4509 = vmatprep.subr.mxu0 0.0
  %4510 = vmatpush1.msra.mxu0 0.0
  %4511 = vmatprep.subr.mxu0 0.0
  %4512 = vmatpush1.msra.mxu0 0.0
  %4513 = vmatprep.subr.mxu0 0.0
  %4514 = vmatpush1.msra.mxu0 0.0
  %4515 = vmatprep.subr.mxu0 0.0
  %4516 = vmatpush1.msra.mxu0 0.0
  %4517 = vmatprep.subr.mxu0 0.0
  %4518 = vmatpush1.msra.mxu0 0.0
  %4519 = vmatprep.subr.mxu0 0.0
  %4520 = vmatpush1.msra.mxu0 0.0
  %4521 = vmatprep.subr.mxu0 0.0
  %4522 = vmatpush1.msra.mxu0 0.0
  %4523 = vmatprep.subr.mxu0 0.0
  %4524 = vmatpush1.msra.mxu0 0.0
  %4525 = vmatprep.subr.mxu0 0.0
  %4526 = vmatpush1.msra.mxu0 0.0
  %4527 = vmatprep.subr.mxu0 0.0
  %4528 = vmatpush1.msra.mxu0 0.0
  %4529 = vmatprep.subr.mxu0 0.0
  %4530 = vmatpush1.msra.mxu0 0.0
  %4531 = vmatprep.subr.mxu0 0.0
  %4532 = vmatpush1.msra.mxu0 0.0
  %4533 = vmatprep.subr.mxu0 0.0
  %4534 = vmatpush1.msra.mxu0 0.0
  %4535 = vmatprep.subr.mxu0 0.0
  %4536 = vmatpush1.msra.mxu0 0.0
  %4537 = vmatprep.subr.mxu0 0.0
  %4538 = vmatpush1.msra.mxu0 0.0
  %4539 = vmatprep.subr.mxu0 0.0
  %4540 = vmatpush1.msra.mxu0 0.0
  %4541 = vmatprep.subr.mxu0 0.0
  %4542 = vmatpush1.msra.mxu0 0.0
  %4543 = vmatprep.subr.mxu0 0.0
  %4544 = vmatpush1.msra.mxu0 0.0
  %4545 = vmatprep.subr.mxu0 0.0
  %4546 = vmatpush1.msra.mxu0 0.0
  %4547 = vmatprep.subr.mxu0 0.0
  %4548 = vmatpush1.msra.mxu0 0.0
  %4549 = vmatprep.subr.mxu0 0.0
  %4550 = vmatpush1.msra.mxu0 0.0
  %4551 = vmatprep.subr.mxu0 0.0
  %4552 = vmatpush1.msra.mxu0 0.0
  %4553 = vmatprep.subr.mxu0 0.0
  %4554 = vmatpush1.msra.mxu0 0.0
  %4555 = vmatprep.subr.mxu0 0.0
  %4556 = vmatpush1.msra.mxu0 0.0
  %4557 = vmatprep.subr.mxu0 0.0
  %4558 = vmatpush1.msra.mxu0 0.0
  %4559 = vmatprep.subr.mxu0 0.0
  %4560 = vmatpush1.msra.mxu0 0.0
  %4561 = vmatprep.subr.mxu0 0.0
  %4562 = vmatpush1.msra.mxu0 0.0
  %4563 = vmatprep.subr.mxu0 0.0
  %4564 = vmatpush1.msra.mxu0 0.0
  %4565 = vmatprep.subr.mxu0 0.0
  %4566 = vmatpush1.msra.mxu0 0.0
  %4567 = vmatprep.mubr.f32.mxu0 0.0
  %4568 = vmatmul.mubr.f32.gmra.mrb[0].mxu0 %v4501
  %v4569 = vpop.f32.mrb[0].mxu0
  %v4570 = vadd.f32 0.0, %v4569
  %v4571 = vpop.f32.mrb[0].mxu0
  %4572 = vdwg.mxu0
  %4573 = vrot.lane.b32.xlu0 %v4187, 118
  %v4574 = vpop.permute.xlu0 %4573
  %v4575 = vsel %vm4197, %v4574, 0
  %4577 = vmatprep.subr.mxu0 0.0
  %4578 = vmatpush1.msra.mxu0 %v4279
  %4579 = vmatprep.subr.mxu0 0.0
  %4580 = vmatpush1.msra.mxu0 0.0
  %4581 = vmatprep.subr.mxu0 0.0
  %4582 = vmatpush1.msra.mxu0 0.0
  %4583 = vmatprep.subr.mxu0 0.0
  %4584 = vmatpush1.msra.mxu0 0.0
  %4585 = vmatprep.subr.mxu0 0.0
  %4586 = vmatpush1.msra.mxu0 0.0
  %4587 = vmatprep.subr.mxu0 0.0
  %4588 = vmatpush1.msra.mxu0 0.0
  %4589 = vmatprep.subr.mxu0 0.0
  %4590 = vmatpush1.msra.mxu0 0.0
  %4591 = vmatprep.subr.mxu0 0.0
  %4592 = vmatpush1.msra.mxu0 0.0
  %4593 = vmatprep.subr.mxu0 0.0
  %4594 = vmatpush1.msra.mxu0 0.0
  %4595 = vmatprep.subr.mxu0 0.0
  %4596 = vmatpush1.msra.mxu0 0.0
  %4597 = vmatprep.subr.mxu0 0.0
  %4598 = vmatpush1.msra.mxu0 0.0
  %4599 = vmatprep.subr.mxu0 0.0
  %4600 = vmatpush1.msra.mxu0 0.0
  %4601 = vmatprep.subr.mxu0 0.0
  %4602 = vmatpush1.msra.mxu0 0.0
  %4603 = vmatprep.subr.mxu0 0.0
  %4604 = vmatpush1.msra.mxu0 0.0
  %4605 = vmatprep.subr.mxu0 0.0
  %4606 = vmatpush1.msra.mxu0 0.0
  %4607 = vmatprep.subr.mxu0 0.0
  %4608 = vmatpush1.msra.mxu0 0.0
  %4609 = vmatprep.subr.mxu0 0.0
  %4610 = vmatpush1.msra.mxu0 0.0
  %4611 = vmatprep.subr.mxu0 0.0
  %4612 = vmatpush1.msra.mxu0 0.0
  %4613 = vmatprep.subr.mxu0 0.0
  %4614 = vmatpush1.msra.mxu0 0.0
  %4615 = vmatprep.subr.mxu0 0.0
  %4616 = vmatpush1.msra.mxu0 0.0
  %4617 = vmatprep.subr.mxu0 0.0
  %4618 = vmatpush1.msra.mxu0 0.0
  %4619 = vmatprep.subr.mxu0 0.0
  %4620 = vmatpush1.msra.mxu0 0.0
  %4621 = vmatprep.subr.mxu0 0.0
  %4622 = vmatpush1.msra.mxu0 0.0
  %4623 = vmatprep.subr.mxu0 0.0
  %4624 = vmatpush1.msra.mxu0 0.0
  %4625 = vmatprep.subr.mxu0 0.0
  %4626 = vmatpush1.msra.mxu0 0.0
  %4627 = vmatprep.subr.mxu0 0.0
  %4628 = vmatpush1.msra.mxu0 0.0
  %4629 = vmatprep.subr.mxu0 0.0
  %4630 = vmatpush1.msra.mxu0 0.0
  %4631 = vmatprep.subr.mxu0 0.0
  %4632 = vmatpush1.msra.mxu0 0.0
  %4633 = vmatprep.subr.mxu0 0.0
  %4634 = vmatpush1.msra.mxu0 0.0
  %4635 = vmatprep.subr.mxu0 0.0
  %4636 = vmatpush1.msra.mxu0 0.0
  %4637 = vmatprep.subr.mxu0 0.0
  %4638 = vmatpush1.msra.mxu0 0.0
  %4639 = vmatprep.subr.mxu0 0.0
  %4640 = vmatpush1.msra.mxu0 0.0
  %4641 = vmatprep.mubr.f32.mxu0 0.0
  %4642 = vmatmul.mubr.f32.gmra.mrb[0].mxu0 %v4575
  %v4643 = vpop.f32.mrb[0].mxu0
  %v4644 = vadd.f32 %v4570, %v4643
  %v4645 = vpop.f32.mrb[0].mxu0
  %4646 = vdwg.mxu0
  %4647 = vrot.lane.b32.xlu0 %v4192, 113
  %v4648 = vpop.permute.xlu0 %4647
  %v4649 = vsel %vm4197, %v4648, 0
  %4651 = vmatprep.subr.mxu0 0.0
  %4652 = vmatpush1.msra.mxu0 %v4203
  %4653 = vmatprep.subr.mxu0 0.0
  %4654 = vmatpush1.msra.mxu0 0.0
  %4655 = vmatprep.subr.mxu0 0.0
  %4656 = vmatpush1.msra.mxu0 0.0
  %4657 = vmatprep.subr.mxu0 0.0
  %4658 = vmatpush1.msra.mxu0 0.0
  %4659 = vmatprep.subr.mxu0 0.0
  %4660 = vmatpush1.msra.mxu0 0.0
  %4661 = vmatprep.subr.mxu0 0.0
  %4662 = vmatpush1.msra.mxu0 0.0
  %4663 = vmatprep.subr.mxu0 0.0
  %4664 = vmatpush1.msra.mxu0 0.0
  %4665 = vmatprep.subr.mxu0 0.0
  %4666 = vmatpush1.msra.mxu0 0.0
  %4667 = vmatprep.subr.mxu0 0.0
  %4668 = vmatpush1.msra.mxu0 0.0
  %4669 = vmatprep.subr.mxu0 0.0
  %4670 = vmatpush1.msra.mxu0 0.0
  %4671 = vmatprep.subr.mxu0 0.0
  %4672 = vmatpush1.msra.mxu0 0.0
  %4673 = vmatprep.subr.mxu0 0.0
  %4674 = vmatpush1.msra.mxu0 0.0
  %4675 = vmatprep.subr.mxu0 0.0
  %4676 = vmatpush1.msra.mxu0 0.0
  %4677 = vmatprep.subr.mxu0 0.0
  %4678 = vmatpush1.msra.mxu0 0.0
  %4679 = vmatprep.subr.mxu0 0.0
  %4680 = vmatpush1.msra.mxu0 0.0
  %4681 = vmatprep.subr.mxu0 0.0
  %4682 = vmatpush1.msra.mxu0 0.0
  %4683 = vmatprep.subr.mxu0 0.0
  %4684 = vmatpush1.msra.mxu0 0.0
  %4685 = vmatprep.subr.mxu0 0.0
  %4686 = vmatpush1.msra.mxu0 0.0
  %4687 = vmatprep.subr.mxu0 0.0
  %4688 = vmatpush1.msra.mxu0 0.0
  %4689 = vmatprep.subr.mxu0 0.0
  %4690 = vmatpush1.msra.mxu0 0.0
  %4691 = vmatprep.subr.mxu0 0.0
  %4692 = vmatpush1.msra.mxu0 0.0
  %4693 = vmatprep.subr.mxu0 0.0
  %4694 = vmatpush1.msra.mxu0 0.0
  %4695 = vmatprep.subr.mxu0 0.0
  %4696 = vmatpush1.msra.mxu0 0.0
  %4697 = vmatprep.subr.mxu0 0.0
  %4698 = vmatpush1.msra.mxu0 0.0
  %4699 = vmatprep.subr.mxu0 0.0
  %4700 = vmatpush1.msra.mxu0 0.0
  %4701 = vmatprep.subr.mxu0 0.0
  %4702 = vmatpush1.msra.mxu0 0.0
  %4703 = vmatprep.subr.mxu0 0.0
  %4704 = vmatpush1.msra.mxu0 0.0
  %4705 = vmatprep.subr.mxu0 0.0
  %4706 = vmatpush1.msra.mxu0 0.0
  %4707 = vmatprep.subr.mxu0 0.0
  %4708 = vmatpush1.msra.mxu0 0.0
  %4709 = vmatprep.subr.mxu0 0.0
  %4710 = vmatpush1.msra.mxu0 0.0
  %4711 = vmatprep.subr.mxu0 0.0
  %4712 = vmatpush1.msra.mxu0 0.0
  %4713 = vmatprep.subr.mxu0 0.0
  %4714 = vmatpush1.msra.mxu0 0.0
  %4715 = vmatprep.mubr.f32.mxu0 0.0
  %4716 = vmatmul.mubr.f32.gmra.mrb[0].mxu0 %v4649
  %v4717 = vpop.f32.mrb[0].mxu0
  %v4718 = vadd.f32 0.0, %v4717
  %v4719 = vpop.f32.mrb[0].mxu0
  %4720 = vdwg.mxu0
  %4721 = vrot.lane.b32.xlu0 %v4187, 113
  %v4722 = vpop.permute.xlu0 %4721
  %v4723 = vsel %vm4197, %v4722, 0
  %4725 = vmatprep.subr.mxu0 0.0
  %4726 = vmatpush1.msra.mxu0 %v4279
  %4727 = vmatprep.subr.mxu0 0.0
  %4728 = vmatpush1.msra.mxu0 0.0
  %4729 = vmatprep.subr.mxu0 0.0
  %4730 = vmatpush1.msra.mxu0 0.0
  %4731 = vmatprep.subr.mxu0 0.0
  %4732 = vmatpush1.msra.mxu0 0.0
  %4733 = vmatprep.subr.mxu0 0.0
  %4734 = vmatpush1.msra.mxu0 0.0
  %4735 = vmatprep.subr.mxu0 0.0
  %4736 = vmatpush1.msra.mxu0 0.0
  %4737 = vmatprep.subr.mxu0 0.0
  %4738 = vmatpush1.msra.mxu0 0.0
  %4739 = vmatprep.subr.mxu0 0.0
  %4740 = vmatpush1.msra.mxu0 0.0
  %4741 = vmatprep.subr.mxu0 0.0
  %4742 = vmatpush1.msra.mxu0 0.0
  %4743 = vmatprep.subr.mxu0 0.0
  %4744 = vmatpush1.msra.mxu0 0.0
  %4745 = vmatprep.subr.mxu0 0.0
  %4746 = vmatpush1.msra.mxu0 0.0
  %4747 = vmatprep.subr.mxu0 0.0
  %4748 = vmatpush1.msra.mxu0 0.0
  %4749 = vmatprep.subr.mxu0 0.0
  %4750 = vmatpush1.msra.mxu0 0.0
  %4751 = vmatprep.subr.mxu0 0.0
  %4752 = vmatpush1.msra.mxu0 0.0
  %4753 = vmatprep.subr.mxu0 0.0
  %4754 = vmatpush1.msra.mxu0 0.0
  %4755 = vmatprep.subr.mxu0 0.0
  %4756 = vmatpush1.msra.mxu0 0.0
  %4757 = vmatprep.subr.mxu0 0.0
  %4758 = vmatpush1.msra.mxu0 0.0
  %4759 = vmatprep.subr.mxu0 0.0
  %4760 = vmatpush1.msra.mxu0 0.0
  %4761 = vmatprep.subr.mxu0 0.0
  %4762 = vmatpush1.msra.mxu0 0.0
  %4763 = vmatprep.subr.mxu0 0.0
  %4764 = vmatpush1.msra.mxu0 0.0
  %4765 = vmatprep.subr.mxu0 0.0
  %4766 = vmatpush1.msra.mxu0 0.0
  %4767 = vmatprep.subr.mxu0 0.0
  %4768 = vmatpush1.msra.mxu0 0.0
  %4769 = vmatprep.subr.mxu0 0.0
  %4770 = vmatpush1.msra.mxu0 0.0
  %4771 = vmatprep.subr.mxu0 0.0
  %4772 = vmatpush1.msra.mxu0 0.0
  %4773 = vmatprep.subr.mxu0 0.0
  %4774 = vmatpush1.msra.mxu0 0.0
  %4775 = vmatprep.subr.mxu0 0.0
  %4776 = vmatpush1.msra.mxu0 0.0
  %4777 = vmatprep.subr.mxu0 0.0
  %4778 = vmatpush1.msra.mxu0 0.0
  %4779 = vmatprep.subr.mxu0 0.0
  %4780 = vmatpush1.msra.mxu0 0.0
  %4781 = vmatprep.subr.mxu0 0.0
  %4782 = vmatpush1.msra.mxu0 0.0
  %4783 = vmatprep.subr.mxu0 0.0
  %4784 = vmatpush1.msra.mxu0 0.0
  %4785 = vmatprep.subr.mxu0 0.0
  %4786 = vmatpush1.msra.mxu0 0.0
  %4787 = vmatprep.subr.mxu0 0.0
  %4788 = vmatpush1.msra.mxu0 0.0
  %4789 = vmatprep.mubr.f32.mxu0 0.0
  %4790 = vmatmul.mubr.f32.gmra.mrb[0].mxu0 %v4723
  %v4791 = vpop.f32.mrb[0].mxu0
  %v4792 = vadd.f32 %v4718, %v4791
  %v4793 = vpop.f32.mrb[0].mxu0
  %4794 = vdwg.mxu0
  %4795 = vrot.lane.b32.xlu0 %v4192, 108
  %v4796 = vpop.permute.xlu0 %4795
  %v4797 = vsel %vm4197, %v4796, 0
  %4799 = vmatprep.subr.mxu0 0.0
  %4800 = vmatpush1.msra.mxu0 %v4203
  %4801 = vmatprep.subr.mxu0 0.0
  %4802 = vmatpush1.msra.mxu0 0.0
  %4803 = vmatprep.subr.mxu0 0.0
  %4804 = vmatpush1.msra.mxu0 0.0
  %4805 = vmatprep.subr.mxu0 0.0
  %4806 = vmatpush1.msra.mxu0 0.0
  %4807 = vmatprep.subr.mxu0 0.0
  %4808 = vmatpush1.msra.mxu0 0.0
  %4809 = vmatprep.subr.mxu0 0.0
  %4810 = vmatpush1.msra.mxu0 0.0
  %4811 = vmatprep.subr.mxu0 0.0
  %4812 = vmatpush1.msra.mxu0 0.0
  %4813 = vmatprep.subr.mxu0 0.0
  %4814 = vmatpush1.msra.mxu0 0.0
  %4815 = vmatprep.subr.mxu0 0.0
  %4816 = vmatpush1.msra.mxu0 0.0
  %4817 = vmatprep.subr.mxu0 0.0
  %4818 = vmatpush1.msra.mxu0 0.0
  %4819 = vmatprep.subr.mxu0 0.0
  %4820 = vmatpush1.msra.mxu0 0.0
  %4821 = vmatprep.subr.mxu0 0.0
  %4822 = vmatpush1.msra.mxu0 0.0
  %4823 = vmatprep.subr.mxu0 0.0
  %4824 = vmatpush1.msra.mxu0 0.0
  %4825 = vmatprep.subr.mxu0 0.0
  %4826 = vmatpush1.msra.mxu0 0.0
  %4827 = vmatprep.subr.mxu0 0.0
  %4828 = vmatpush1.msra.mxu0 0.0
  %4829 = vmatprep.subr.mxu0 0.0
  %4830 = vmatpush1.msra.mxu0 0.0
  %4831 = vmatprep.subr.mxu0 0.0
  %4832 = vmatpush1.msra.mxu0 0.0
  %4833 = vmatprep.subr.mxu0 0.0
  %4834 = vmatpush1.msra.mxu0 0.0
  %4835 = vmatprep.subr.mxu0 0.0
  %4836 = vmatpush1.msra.mxu0 0.0
  %4837 = vmatprep.subr.mxu0 0.0
  %4838 = vmatpush1.msra.mxu0 0.0
  %4839 = vmatprep.subr.mxu0 0.0
  %4840 = vmatpush1.msra.mxu0 0.0
  %4841 = vmatprep.subr.mxu0 0.0
  %4842 = vmatpush1.msra.mxu0 0.0
  %4843 = vmatprep.subr.mxu0 0.0
  %4844 = vmatpush1.msra.mxu0 0.0
  %4845 = vmatprep.subr.mxu0 0.0
  %4846 = vmatpush1.msra.mxu0 0.0
  %4847 = vmatprep.subr.mxu0 0.0
  %4848 = vmatpush1.msra.mxu0 0.0
  %4849 = vmatprep.subr.mxu0 0.0
  %4850 = vmatpush1.msra.mxu0 0.0
  %4851 = vmatprep.subr.mxu0 0.0
  %4852 = vmatpush1.msra.mxu0 0.0
  %4853 = vmatprep.subr.mxu0 0.0
  %4854 = vmatpush1.msra.mxu0 0.0
  %4855 = vmatprep.subr.mxu0 0.0
  %4856 = vmatpush1.msra.mxu0 0.0
  %4857 = vmatprep.subr.mxu0 0.0
  %4858 = vmatpush1.msra.mxu0 0.0
  %4859 = vmatprep.subr.mxu0 0.0
  %4860 = vmatpush1.msra.mxu0 0.0
  %4861 = vmatprep.subr.mxu0 0.0
  %4862 = vmatpush1.msra.mxu0 0.0
  %4863 = vmatprep.mubr.f32.mxu0 0.0
  %4864 = vmatmul.mubr.f32.gmra.mrb[0].mxu0 %v4797
  %v4865 = vpop.f32.mrb[0].mxu0
  %v4866 = vadd.f32 0.0, %v4865
  %v4867 = vpop.f32.mrb[0].mxu0
  %4868 = vdwg.mxu0
  %4869 = vrot.lane.b32.xlu0 %v4187, 108
  %v4870 = vpop.permute.xlu0 %4869
  %v4871 = vsel %vm4197, %v4870, 0
  %4873 = vmatprep.subr.mxu0 0.0
  %4874 = vmatpush1.msra.mxu0 %v4279
  %4875 = vmatprep.subr.mxu0 0.0
  %4876 = vmatpush1.msra.mxu0 0.0
  %4877 = vmatprep.subr.mxu0 0.0
  %4878 = vmatpush1.msra.mxu0 0.0
  %4879 = vmatprep.subr.mxu0 0.0
  %4880 = vmatpush1.msra.mxu0 0.0
  %4881 = vmatprep.subr.mxu0 0.0
  %4882 = vmatpush1.msra.mxu0 0.0
  %4883 = vmatprep.subr.mxu0 0.0
  %4884 = vmatpush1.msra.mxu0 0.0
  %4885 = vmatprep.subr.mxu0 0.0
  %4886 = vmatpush1.msra.mxu0 0.0
  %4887 = vmatprep.subr.mxu0 0.0
  %4888 = vmatpush1.msra.mxu0 0.0
  %4889 = vmatprep.subr.mxu0 0.0
  %4890 = vmatpush1.msra.mxu0 0.0
  %4891 = vmatprep.subr.mxu0 0.0
  %4892 = vmatpush1.msra.mxu0 0.0
  %4893 = vmatprep.subr.mxu0 0.0
  %4894 = vmatpush1.msra.mxu0 0.0
  %4895 = vmatprep.subr.mxu0 0.0
  %4896 = vmatpush1.msra.mxu0 0.0
  %4897 = vmatprep.subr.mxu0 0.0
  %4898 = vmatpush1.msra.mxu0 0.0
  %4899 = vmatprep.subr.mxu0 0.0
  %4900 = vmatpush1.msra.mxu0 0.0
  %4901 = vmatprep.subr.mxu0 0.0
  %4902 = vmatpush1.msra.mxu0 0.0
  %4903 = vmatprep.subr.mxu0 0.0
  %4904 = vmatpush1.msra.mxu0 0.0
  %4905 = vmatprep.subr.mxu0 0.0
  %4906 = vmatpush1.msra.mxu0 0.0
  %4907 = vmatprep.subr.mxu0 0.0
  %4908 = vmatpush1.msra.mxu0 0.0
  %4909 = vmatprep.subr.mxu0 0.0
  %4910 = vmatpush1.msra.mxu0 0.0
  %4911 = vmatprep.subr.mxu0 0.0
  %4912 = vmatpush1.msra.mxu0 0.0
  %4913 = vmatprep.subr.mxu0 0.0
  %4914 = vmatpush1.msra.mxu0 0.0
  %4915 = vmatprep.subr.mxu0 0.0
  %4916 = vmatpush1.msra.mxu0 0.0
  %4917 = vmatprep.subr.mxu0 0.0
  %4918 = vmatpush1.msra.mxu0 0.0
  %4919 = vmatprep.subr.mxu0 0.0
  %4920 = vmatpush1.msra.mxu0 0.0
  %4921 = vmatprep.subr.mxu0 0.0
  %4922 = vmatpush1.msra.mxu0 0.0
  %4923 = vmatprep.subr.mxu0 0.0
  %4924 = vmatpush1.msra.mxu0 0.0
  %4925 = vmatprep.subr.mxu0 0.0
  %4926 = vmatpush1.msra.mxu0 0.0
  %4927 = vmatprep.subr.mxu0 0.0
  %4928 = vmatpush1.msra.mxu0 0.0
  %4929 = vmatprep.subr.mxu0 0.0
  %4930 = vmatpush1.msra.mxu0 0.0
  %4931 = vmatprep.subr.mxu0 0.0
  %4932 = vmatpush1.msra.mxu0 0.0
  %4933 = vmatprep.subr.mxu0 0.0
  %4934 = vmatpush1.msra.mxu0 0.0
  %4935 = vmatprep.subr.mxu0 0.0
  %4936 = vmatpush1.msra.mxu0 0.0
  %4937 = vmatprep.mubr.f32.mxu0 0.0
  %4938 = vmatmul.mubr.f32.gmra.mrb[0].mxu0 %v4871
  %v4939 = vpop.f32.mrb[0].mxu0
  %v4940 = vadd.f32 %v4866, %v4939
  %v4941 = vpop.f32.mrb[0].mxu0
  %4942 = vdwg.mxu0
  %4943 = vrot.lane.b32.xlu0 %v4192, 103
  %v4944 = vpop.permute.xlu0 %4943
  %v4945 = vsel %vm4197, %v4944, 0
  %4947 = vmatprep.subr.mxu0 0.0
  %4948 = vmatpush1.msra.mxu0 %v4203
  %4949 = vmatprep.subr.mxu0 0.0
  %4950 = vmatpush1.msra.mxu0 0.0
  %4951 = vmatprep.subr.mxu0 0.0
  %4952 = vmatpush1.msra.mxu0 0.0
  %4953 = vmatprep.subr.mxu0 0.0
  %4954 = vmatpush1.msra.mxu0 0.0
  %4955 = vmatprep.subr.mxu0 0.0
  %4956 = vmatpush1.msra.mxu0 0.0
  %4957 = vmatprep.subr.mxu0 0.0
  %4958 = vmatpush1.msra.mxu0 0.0
  %4959 = vmatprep.subr.mxu0 0.0
  %4960 = vmatpush1.msra.mxu0 0.0
  %4961 = vmatprep.subr.mxu0 0.0
  %4962 = vmatpush1.msra.mxu0 0.0
  %4963 = vmatprep.subr.mxu0 0.0
  %4964 = vmatpush1.msra.mxu0 0.0
  %4965 = vmatprep.subr.mxu0 0.0
  %4966 = vmatpush1.msra.mxu0 0.0
  %4967 = vmatprep.subr.mxu0 0.0
  %4968 = vmatpush1.msra.mxu0 0.0
  %4969 = vmatprep.subr.mxu0 0.0
  %4970 = vmatpush1.msra.mxu0 0.0
  %4971 = vmatprep.subr.mxu0 0.0
  %4972 = vmatpush1.msra.mxu0 0.0
  %4973 = vmatprep.subr.mxu0 0.0
  %4974 = vmatpush1.msra.mxu0 0.0
  %4975 = vmatprep.subr.mxu0 0.0
  %4976 = vmatpush1.msra.mxu0 0.0
  %4977 = vmatprep.subr.mxu0 0.0
  %4978 = vmatpush1.msra.mxu0 0.0
  %4979 = vmatprep.subr.mxu0 0.0
  %4980 = vmatpush1.msra.mxu0 0.0
  %4981 = vmatprep.subr.mxu0 0.0
  %4982 = vmatpush1.msra.mxu0 0.0
  %4983 = vmatprep.subr.mxu0 0.0
  %4984 = vmatpush1.msra.mxu0 0.0
  %4985 = vmatprep.subr.mxu0 0.0
  %4986 = vmatpush1.msra.mxu0 0.0
  %4987 = vmatprep.subr.mxu0 0.0
  %4988 = vmatpush1.msra.mxu0 0.0
  %4989 = vmatprep.subr.mxu0 0.0
  %4990 = vmatpush1.msra.mxu0 0.0
  %4991 = vmatprep.subr.mxu0 0.0
  %4992 = vmatpush1.msra.mxu0 0.0
  %4993 = vmatprep.subr.mxu0 0.0
  %4994 = vmatpush1.msra.mxu0 0.0
  %4995 = vmatprep.subr.mxu0 0.0
  %4996 = vmatpush1.msra.mxu0 0.0
  %4997 = vmatprep.subr.mxu0 0.0
  %4998 = vmatpush1.msra.mxu0 0.0
  %4999 = vmatprep.subr.mxu0 0.0
  %5000 = vmatpush1.msra.mxu0 0.0
  %5001 = vmatprep.subr.mxu0 0.0
  %5002 = vmatpush1.msra.mxu0 0.0
  %5003 = vmatprep.subr.mxu0 0.0
  %5004 = vmatpush1.msra.mxu0 0.0
  %5005 = vmatprep.subr.mxu0 0.0
  %5006 = vmatpush1.msra.mxu0 0.0
  %5007 = vmatprep.subr.mxu0 0.0
  %5008 = vmatpush1.msra.mxu0 0.0
  %5009 = vmatprep.subr.mxu0 0.0
  %5010 = vmatpush1.msra.mxu0 0.0
  %5011 = vmatprep.mubr.f32.mxu0 0.0
  %5012 = vmatmul.mubr.f32.gmra.mrb[0].mxu0 %v4945
  %v5013 = vpop.f32.mrb[0].mxu0
  %v5014 = vadd.f32 0.0, %v5013
  %v5015 = vpop.f32.mrb[0].mxu0
  %5016 = vdwg.mxu0
  %5017 = vrot.lane.b32.xlu0 %v4187, 103
  %v5018 = vpop.permute.xlu0 %5017
  %v5019 = vsel %vm4197, %v5018, 0
  %5021 = vmatprep.subr.mxu0 0.0
  %5022 = vmatpush1.msra.mxu0 %v4279
  %5023 = vmatprep.subr.mxu0 0.0
  %5024 = vmatpush1.msra.mxu0 0.0
  %5025 = vmatprep.subr.mxu0 0.0
  %5026 = vmatpush1.msra.mxu0 0.0
  %5027 = vmatprep.subr.mxu0 0.0
  %5028 = vmatpush1.msra.mxu0 0.0
  %5029 = vmatprep.subr.mxu0 0.0
  %5030 = vmatpush1.msra.mxu0 0.0
  %5031 = vmatprep.subr.mxu0 0.0
  %5032 = vmatpush1.msra.mxu0 0.0
  %5033 = vmatprep.subr.mxu0 0.0
  %5034 = vmatpush1.msra.mxu0 0.0
  %5035 = vmatprep.subr.mxu0 0.0
  %5036 = vmatpush1.msra.mxu0 0.0
  %5037 = vmatprep.subr.mxu0 0.0
  %5038 = vmatpush1.msra.mxu0 0.0
  %5039 = vmatprep.subr.mxu0 0.0
  %5040 = vmatpush1.msra.mxu0 0.0
  %5041 = vmatprep.subr.mxu0 0.0
  %5042 = vmatpush1.msra.mxu0 0.0
  %5043 = vmatprep.subr.mxu0 0.0
  %5044 = vmatpush1.msra.mxu0 0.0
  %5045 = vmatprep.subr.mxu0 0.0
  %5046 = vmatpush1.msra.mxu0 0.0
  %5047 = vmatprep.subr.mxu0 0.0
  %5048 = vmatpush1.msra.mxu0 0.0
  %5049 = vmatprep.subr.mxu0 0.0
  %5050 = vmatpush1.msra.mxu0 0.0
  %5051 = vmatprep.subr.mxu0 0.0
  %5052 = vmatpush1.msra.mxu0 0.0
  %5053 = vmatprep.subr.mxu0 0.0
  %5054 = vmatpush1.msra.mxu0 0.0
  %5055 = vmatprep.subr.mxu0 0.0
  %5056 = vmatpush1.msra.mxu0 0.0
  %5057 = vmatprep.subr.mxu0 0.0
  %5058 = vmatpush1.msra.mxu0 0.0
  %5059 = vmatprep.subr.mxu0 0.0
  %5060 = vmatpush1.msra.mxu0 0.0
  %5061 = vmatprep.subr.mxu0 0.0
  %5062 = vmatpush1.msra.mxu0 0.0
  %5063 = vmatprep.subr.mxu0 0.0
  %5064 = vmatpush1.msra.mxu0 0.0
  %5065 = vmatprep.subr.mxu0 0.0
  %5066 = vmatpush1.msra.mxu0 0.0
  %5067 = vmatprep.subr.mxu0 0.0
  %5068 = vmatpush1.msra.mxu0 0.0
  %5069 = vmatprep.subr.mxu0 0.0
  %5070 = vmatpush1.msra.mxu0 0.0
  %5071 = vmatprep.subr.mxu0 0.0
  %5072 = vmatpush1.msra.mxu0 0.0
  %5073 = vmatprep.subr.mxu0 0.0
  %5074 = vmatpush1.msra.mxu0 0.0
  %5075 = vmatprep.subr.mxu0 0.0
  %5076 = vmatpush1.msra.mxu0 0.0
  %5077 = vmatprep.subr.mxu0 0.0
  %5078 = vmatpush1.msra.mxu0 0.0
  %5079 = vmatprep.subr.mxu0 0.0
  %5080 = vmatpush1.msra.mxu0 0.0
  %5081 = vmatprep.subr.mxu0 0.0
  %5082 = vmatpush1.msra.mxu0 0.0
  %5083 = vmatprep.subr.mxu0 0.0
  %5084 = vmatpush1.msra.mxu0 0.0
  %5085 = vmatprep.mubr.f32.mxu0 0.0
  %5086 = vmatmul.mubr.f32.gmra.mrb[0].mxu0 %v5019
  %v5087 = vpop.f32.mrb[0].mxu0
  %v5088 = vadd.f32 %v5014, %v5087
  %v5089 = vpop.f32.mrb[0].mxu0
  %5090 = vdwg.mxu0
  %5091 = vrot.lane.b32.xlu0 %v4192, 98
  %v5092 = vpop.permute.xlu0 %5091
  %v5093 = vsel %vm4197, %v5092, 0
  %5095 = vmatprep.subr.mxu0 0.0
  %5096 = vmatpush1.msra.mxu0 %v4203
  %5097 = vmatprep.subr.mxu0 0.0
  %5098 = vmatpush1.msra.mxu0 0.0
  %5099 = vmatprep.subr.mxu0 0.0
  %5100 = vmatpush1.msra.mxu0 0.0
  %5101 = vmatprep.subr.mxu0 0.0
  %5102 = vmatpush1.msra.mxu0 0.0
  %5103 = vmatprep.subr.mxu0 0.0
  %5104 = vmatpush1.msra.mxu0 0.0
  %5105 = vmatprep.subr.mxu0 0.0
  %5106 = vmatpush1.msra.mxu0 0.0
  %5107 = vmatprep.subr.mxu0 0.0
  %5108 = vmatpush1.msra.mxu0 0.0
  %5109 = vmatprep.subr.mxu0 0.0
  %5110 = vmatpush1.msra.mxu0 0.0
  %5111 = vmatprep.subr.mxu0 0.0
  %5112 = vmatpush1.msra.mxu0 0.0
  %5113 = vmatprep.subr.mxu0 0.0
  %5114 = vmatpush1.msra.mxu0 0.0
  %5115 = vmatprep.subr.mxu0 0.0
  %5116 = vmatpush1.msra.mxu0 0.0
  %5117 = vmatprep.subr.mxu0 0.0
  %5118 = vmatpush1.msra.mxu0 0.0
  %5119 = vmatprep.subr.mxu0 0.0
  %5120 = vmatpush1.msra.mxu0 0.0
  %5121 = vmatprep.subr.mxu0 0.0
  %5122 = vmatpush1.msra.mxu0 0.0
  %5123 = vmatprep.subr.mxu0 0.0
  %5124 = vmatpush1.msra.mxu0 0.0
  %5125 = vmatprep.subr.mxu0 0.0
  %5126 = vmatpush1.msra.mxu0 0.0
  %5127 = vmatprep.subr.mxu0 0.0
  %5128 = vmatpush1.msra.mxu0 0.0
  %5129 = vmatprep.subr.mxu0 0.0
  %5130 = vmatpush1.msra.mxu0 0.0
  %5131 = vmatprep.subr.mxu0 0.0
  %5132 = vmatpush1.msra.mxu0 0.0
  %5133 = vmatprep.subr.mxu0 0.0
  %5134 = vmatpush1.msra.mxu0 0.0
  %5135 = vmatprep.subr.mxu0 0.0
  %5136 = vmatpush1.msra.mxu0 0.0
  %5137 = vmatprep.subr.mxu0 0.0
  %5138 = vmatpush1.msra.mxu0 0.0
  %5139 = vmatprep.subr.mxu0 0.0
  %5140 = vmatpush1.msra.mxu0 0.0
  %5141 = vmatprep.subr.mxu0 0.0
  %5142 = vmatpush1.msra.mxu0 0.0
  %5143 = vmatprep.subr.mxu0 0.0
  %5144 = vmatpush1.msra.mxu0 0.0
  %5145 = vmatprep.subr.mxu0 0.0
  %5146 = vmatpush1.msra.mxu0 0.0
  %5147 = vmatprep.subr.mxu0 0.0
  %5148 = vmatpush1.msra.mxu0 0.0
  %5149 = vmatprep.subr.mxu0 0.0
  %5150 = vmatpush1.msra.mxu0 0.0
  %5151 = vmatprep.subr.mxu0 0.0
  %5152 = vmatpush1.msra.mxu0 0.0
  %5153 = vmatprep.subr.mxu0 0.0
  %5154 = vmatpush1.msra.mxu0 0.0
  %5155 = vmatprep.subr.mxu0 0.0
  %5156 = vmatpush1.msra.mxu0 0.0
  %5157 = vmatprep.subr.mxu0 0.0
  %5158 = vmatpush1.msra.mxu0 0.0
  %5159 = vmatprep.mubr.f32.mxu0 0.0
  %5160 = vmatmul.mubr.f32.gmra.mrb[0].mxu0 %v5093
  %v5161 = vpop.f32.mrb[0].mxu0
  %v5162 = vadd.f32 0.0, %v5161
  %v5163 = vpop.f32.mrb[0].mxu0
  %5164 = vdwg.mxu0
  %5165 = vrot.lane.b32.xlu0 %v4187, 98
  %v5166 = vpop.permute.xlu0 %5165
  %v5167 = vsel %vm4197, %v5166, 0
  %5169 = vmatprep.subr.mxu0 0.0
  %5170 = vmatpush1.msra.mxu0 %v4279
  %5171 = vmatprep.subr.mxu0 0.0
  %5172 = vmatpush1.msra.mxu0 0.0
  %5173 = vmatprep.subr.mxu0 0.0
  %5174 = vmatpush1.msra.mxu0 0.0
  %5175 = vmatprep.subr.mxu0 0.0
  %5176 = vmatpush1.msra.mxu0 0.0
  %5177 = vmatprep.subr.mxu0 0.0
  %5178 = vmatpush1.msra.mxu0 0.0
  %5179 = vmatprep.subr.mxu0 0.0
  %5180 = vmatpush1.msra.mxu0 0.0
  %5181 = vmatprep.subr.mxu0 0.0
  %5182 = vmatpush1.msra.mxu0 0.0
  %5183 = vmatprep.subr.mxu0 0.0
  %5184 = vmatpush1.msra.mxu0 0.0
  %5185 = vmatprep.subr.mxu0 0.0
  %5186 = vmatpush1.msra.mxu0 0.0
  %5187 = vmatprep.subr.mxu0 0.0
  %5188 = vmatpush1.msra.mxu0 0.0
  %5189 = vmatprep.subr.mxu0 0.0
  %5190 = vmatpush1.msra.mxu0 0.0
  %5191 = vmatprep.subr.mxu0 0.0
  %5192 = vmatpush1.msra.mxu0 0.0
  %5193 = vmatprep.subr.mxu0 0.0
  %5194 = vmatpush1.msra.mxu0 0.0
  %5195 = vmatprep.subr.mxu0 0.0
  %5196 = vmatpush1.msra.mxu0 0.0
  %5197 = vmatprep.subr.mxu0 0.0
  %5198 = vmatpush1.msra.mxu0 0.0
  %5199 = vmatprep.subr.mxu0 0.0
  %5200 = vmatpush1.msra.mxu0 0.0
  %5201 = vmatprep.subr.mxu0 0.0
  %5202 = vmatpush1.msra.mxu0 0.0
  %5203 = vmatprep.subr.mxu0 0.0
  %5204 = vmatpush1.msra.mxu0 0.0
  %5205 = vmatprep.subr.mxu0 0.0
  %5206 = vmatpush1.msra.mxu0 0.0
  %5207 = vmatprep.subr.mxu0 0.0
  %5208 = vmatpush1.msra.mxu0 0.0
  %5209 = vmatprep.subr.mxu0 0.0
  %5210 = vmatpush1.msra.mxu0 0.0
  %5211 = vmatprep.subr.mxu0 0.0
  %5212 = vmatpush1.msra.mxu0 0.0
  %5213 = vmatprep.subr.mxu0 0.0
  %5214 = vmatpush1.msra.mxu0 0.0
  %5215 = vmatprep.subr.mxu0 0.0
  %5216 = vmatpush1.msra.mxu0 0.0
  %5217 = vmatprep.subr.mxu0 0.0
  %5218 = vmatpush1.msra.mxu0 0.0
  %5219 = vmatprep.subr.mxu0 0.0
  %5220 = vmatpush1.msra.mxu0 0.0
  %5221 = vmatprep.subr.mxu0 0.0
  %5222 = vmatpush1.msra.mxu0 0.0
  %5223 = vmatprep.subr.mxu0 0.0
  %5224 = vmatpush1.msra.mxu0 0.0
  %5225 = vmatprep.subr.mxu0 0.0
  %5226 = vmatpush1.msra.mxu0 0.0
  %5227 = vmatprep.subr.mxu0 0.0
  %5228 = vmatpush1.msra.mxu0 0.0
  %5229 = vmatprep.subr.mxu0 0.0
  %5230 = vmatpush1.msra.mxu0 0.0
  %5231 = vmatprep.subr.mxu0 0.0
  %5232 = vmatpush1.msra.mxu0 0.0
  %5233 = vmatprep.mubr.f32.mxu0 0.0
  %5234 = vmatmul.mubr.f32.gmra.mrb[0].mxu0 %v5167
  %v5235 = vpop.f32.mrb[0].mxu0
  %v5236 = vadd.f32 %v5162, %v5235
  %v5237 = vpop.f32.mrb[0].mxu0
  %5238 = vdwg.mxu0
  %5239 = vrot.lane.b32.xlu0 %v4192, 93
  %v5240 = vpop.permute.xlu0 %5239
  %v5241 = vsel %vm4197, %v5240, 0
  %5243 = vmatprep.subr.mxu0 0.0
  %5244 = vmatpush1.msra.mxu0 %v4203
  %5245 = vmatprep.subr.mxu0 0.0
  %5246 = vmatpush1.msra.mxu0 0.0
  %5247 = vmatprep.subr.mxu0 0.0
  %5248 = vmatpush1.msra.mxu0 0.0
  %5249 = vmatprep.subr.mxu0 0.0
  %5250 = vmatpush1.msra.mxu0 0.0
  %5251 = vmatprep.subr.mxu0 0.0
  %5252 = vmatpush1.msra.mxu0 0.0
  %5253 = vmatprep.subr.mxu0 0.0
  %5254 = vmatpush1.msra.mxu0 0.0
  %5255 = vmatprep.subr.mxu0 0.0
  %5256 = vmatpush1.msra.mxu0 0.0
  %5257 = vmatprep.subr.mxu0 0.0
  %5258 = vmatpush1.msra.mxu0 0.0
  %5259 = vmatprep.subr.mxu0 0.0
  %5260 = vmatpush1.msra.mxu0 0.0
  %5261 = vmatprep.subr.mxu0 0.0
  %5262 = vmatpush1.msra.mxu0 0.0
  %5263 = vmatprep.subr.mxu0 0.0
  %5264 = vmatpush1.msra.mxu0 0.0
  %5265 = vmatprep.subr.mxu0 0.0
  %5266 = vmatpush1.msra.mxu0 0.0
  %5267 = vmatprep.subr.mxu0 0.0
  %5268 = vmatpush1.msra.mxu0 0.0
  %5269 = vmatprep.subr.mxu0 0.0
  %5270 = vmatpush1.msra.mxu0 0.0
  %5271 = vmatprep.subr.mxu0 0.0
  %5272 = vmatpush1.msra.mxu0 0.0
  %5273 = vmatprep.subr.mxu0 0.0
  %5274 = vmatpush1.msra.mxu0 0.0
  %5275 = vmatprep.subr.mxu0 0.0
  %5276 = vmatpush1.msra.mxu0 0.0
  %5277 = vmatprep.subr.mxu0 0.0
  %5278 = vmatpush1.msra.mxu0 0.0
  %5279 = vmatprep.subr.mxu0 0.0
  %5280 = vmatpush1.msra.mxu0 0.0
  %5281 = vmatprep.subr.mxu0 0.0
  %5282 = vmatpush1.msra.mxu0 0.0
  %5283 = vmatprep.subr.mxu0 0.0
  %5284 = vmatpush1.msra.mxu0 0.0
  %5285 = vmatprep.subr.mxu0 0.0
  %5286 = vmatpush1.msra.mxu0 0.0
  %5287 = vmatprep.subr.mxu0 0.0
  %5288 = vmatpush1.msra.mxu0 0.0
  %5289 = vmatprep.subr.mxu0 0.0
  %5290 = vmatpush1.msra.mxu0 0.0
  %5291 = vmatprep.subr.mxu0 0.0
  %5292 = vmatpush1.msra.mxu0 0.0
  %5293 = vmatprep.subr.mxu0 0.0
  %5294 = vmatpush1.msra.mxu0 0.0
  %5295 = vmatprep.subr.mxu0 0.0
  %5296 = vmatpush1.msra.mxu0 0.0
  %5297 = vmatprep.subr.mxu0 0.0
  %5298 = vmatpush1.msra.mxu0 0.0
  %5299 = vmatprep.subr.mxu0 0.0
  %5300 = vmatpush1.msra.mxu0 0.0
  %5301 = vmatprep.subr.mxu0 0.0
  %5302 = vmatpush1.msra.mxu0 0.0
  %5303 = vmatprep.subr.mxu0 0.0
  %5304 = vmatpush1.msra.mxu0 0.0
  %5305 = vmatprep.subr.mxu0 0.0
  %5306 = vmatpush1.msra.mxu0 0.0
  %5307 = vmatprep.mubr.f32.mxu0 0.0
  %5308 = vmatmul.mubr.f32.gmra.mrb[0].mxu0 %v5241
  %v5309 = vpop.f32.mrb[0].mxu0
  %v5310 = vadd.f32 0.0, %v5309
  %v5311 = vpop.f32.mrb[0].mxu0
  %5312 = vdwg.mxu0
  %5313 = vrot.lane.b32.xlu0 %v4187, 93
  %v5314 = vpop.permute.xlu0 %5313
  %v5315 = vsel %vm4197, %v5314, 0
  %5317 = vmatprep.subr.mxu0 0.0
  %5318 = vmatpush1.msra.mxu0 %v4279
  %5319 = vmatprep.subr.mxu0 0.0
  %5320 = vmatpush1.msra.mxu0 0.0
  %5321 = vmatprep.subr.mxu0 0.0
  %5322 = vmatpush1.msra.mxu0 0.0
  %5323 = vmatprep.subr.mxu0 0.0
  %5324 = vmatpush1.msra.mxu0 0.0
  %5325 = vmatprep.subr.mxu0 0.0
  %5326 = vmatpush1.msra.mxu0 0.0
  %5327 = vmatprep.subr.mxu0 0.0
  %5328 = vmatpush1.msra.mxu0 0.0
  %5329 = vmatprep.subr.mxu0 0.0
  %5330 = vmatpush1.msra.mxu0 0.0
  %5331 = vmatprep.subr.mxu0 0.0
  %5332 = vmatpush1.msra.mxu0 0.0
  %5333 = vmatprep.subr.mxu0 0.0
  %5334 = vmatpush1.msra.mxu0 0.0
  %5335 = vmatprep.subr.mxu0 0.0
  %5336 = vmatpush1.msra.mxu0 0.0
  %5337 = vmatprep.subr.mxu0 0.0
  %5338 = vmatpush1.msra.mxu0 0.0
  %5339 = vmatprep.subr.mxu0 0.0
  %5340 = vmatpush1.msra.mxu0 0.0
  %5341 = vmatprep.subr.mxu0 0.0
  %5342 = vmatpush1.msra.mxu0 0.0
  %5343 = vmatprep.subr.mxu0 0.0
  %5344 = vmatpush1.msra.mxu0 0.0
  %5345 = vmatprep.subr.mxu0 0.0
  %5346 = vmatpush1.msra.mxu0 0.0
  %5347 = vmatprep.subr.mxu0 0.0
  %5348 = vmatpush1.msra.mxu0 0.0
  %5349 = vmatprep.subr.mxu0 0.0
  %5350 = vmatpush1.msra.mxu0 0.0
  %5351 = vmatprep.subr.mxu0 0.0
  %5352 = vmatpush1.msra.mxu0 0.0
  %5353 = vmatprep.subr.mxu0 0.0
  %5354 = vmatpush1.msra.mxu0 0.0
  %5355 = vmatprep.subr.mxu0 0.0
  %5356 = vmatpush1.msra.mxu0 0.0
  %5357 = vmatprep.subr.mxu0 0.0
  %5358 = vmatpush1.msra.mxu0 0.0
  %5359 = vmatprep.subr.mxu0 0.0
  %5360 = vmatpush1.msra.mxu0 0.0
  %5361 = vmatprep.subr.mxu0 0.0
  %5362 = vmatpush1.msra.mxu0 0.0
  %5363 = vmatprep.subr.mxu0 0.0
  %5364 = vmatpush1.msra.mxu0 0.0
  %5365 = vmatprep.subr.mxu0 0.0
  %5366 = vmatpush1.msra.mxu0 0.0
  %5367 = vmatprep.subr.mxu0 0.0
  %5368 = vmatpush1.msra.mxu0 0.0
  %5369 = vmatprep.subr.mxu0 0.0
  %5370 = vmatpush1.msra.mxu0 0.0
  %5371 = vmatprep.subr.mxu0 0.0
  %5372 = vmatpush1.msra.mxu0 0.0
  %5373 = vmatprep.subr.mxu0 0.0
  %5374 = vmatpush1.msra.mxu0 0.0
  %5375 = vmatprep.subr.mxu0 0.0
  %5376 = vmatpush1.msra.mxu0 0.0
  %5377 = vmatprep.subr.mxu0 0.0
  %5378 = vmatpush1.msra.mxu0 0.0
  %5379 = vmatprep.subr.mxu0 0.0
  %5380 = vmatpush1.msra.mxu0 0.0
  %5381 = vmatprep.mubr.f32.mxu0 0.0
  %5382 = vmatmul.mubr.f32.gmra.mrb[0].mxu0 %v5315
  %v5383 = vpop.f32.mrb[0].mxu0
  %v5384 = vadd.f32 %v5310, %v5383
  %v5385 = vpop.f32.mrb[0].mxu0
  %5386 = vdwg.mxu0
  %5387 = vrot.lane.b32.xlu0 %v4192, 88
  %v5388 = vpop.permute.xlu0 %5387
  %v5389 = vsel %vm4197, %v5388, 0
  %5391 = vmatprep.subr.mxu0 0.0
  %5392 = vmatpush1.msra.mxu0 %v4203
  %5393 = vmatprep.subr.mxu0 0.0
  %5394 = vmatpush1.msra.mxu0 0.0
  %5395 = vmatprep.subr.mxu0 0.0
  %5396 = vmatpush1.msra.mxu0 0.0
  %5397 = vmatprep.subr.mxu0 0.0
  %5398 = vmatpush1.msra.mxu0 0.0
  %5399 = vmatprep.subr.mxu0 0.0
  %5400 = vmatpush1.msra.mxu0 0.0
  %5401 = vmatprep.subr.mxu0 0.0
  %5402 = vmatpush1.msra.mxu0 0.0
  %5403 = vmatprep.subr.mxu0 0.0
  %5404 = vmatpush1.msra.mxu0 0.0
  %5405 = vmatprep.subr.mxu0 0.0
  %5406 = vmatpush1.msra.mxu0 0.0
  %5407 = vmatprep.subr.mxu0 0.0
  %5408 = vmatpush1.msra.mxu0 0.0
  %5409 = vmatprep.subr.mxu0 0.0
  %5410 = vmatpush1.msra.mxu0 0.0
  %5411 = vmatprep.subr.mxu0 0.0
  %5412 = vmatpush1.msra.mxu0 0.0
  %5413 = vmatprep.subr.mxu0 0.0
  %5414 = vmatpush1.msra.mxu0 0.0
  %5415 = vmatprep.subr.mxu0 0.0
  %5416 = vmatpush1.msra.mxu0 0.0
  %5417 = vmatprep.subr.mxu0 0.0
  %5418 = vmatpush1.msra.mxu0 0.0
  %5419 = vmatprep.subr.mxu0 0.0
  %5420 = vmatpush1.msra.mxu0 0.0
  %5421 = vmatprep.subr.mxu0 0.0
  %5422 = vmatpush1.msra.mxu0 0.0
  %5423 = vmatprep.subr.mxu0 0.0
  %5424 = vmatpush1.msra.mxu0 0.0
  %5425 = vmatprep.subr.mxu0 0.0
  %5426 = vmatpush1.msra.mxu0 0.0
  %5427 = vmatprep.subr.mxu0 0.0
  %5428 = vmatpush1.msra.mxu0 0.0
  %5429 = vmatprep.subr.mxu0 0.0
  %5430 = vmatpush1.msra.mxu0 0.0
  %5431 = vmatprep.subr.mxu0 0.0
  %5432 = vmatpush1.msra.mxu0 0.0
  %5433 = vmatprep.subr.mxu0 0.0
  %5434 = vmatpush1.msra.mxu0 0.0
  %5435 = vmatprep.subr.mxu0 0.0
  %5436 = vmatpush1.msra.mxu0 0.0
  %5437 = vmatprep.subr.mxu0 0.0
  %5438 = vmatpush1.msra.mxu0 0.0
  %5439 = vmatprep.subr.mxu0 0.0
  %5440 = vmatpush1.msra.mxu0 0.0
  %5441 = vmatprep.subr.mxu0 0.0
  %5442 = vmatpush1.msra.mxu0 0.0
  %5443 = vmatprep.subr.mxu0 0.0
  %5444 = vmatpush1.msra.mxu0 0.0
  %5445 = vmatprep.subr.mxu0 0.0
  %5446 = vmatpush1.msra.mxu0 0.0
  %5447 = vmatprep.subr.mxu0 0.0
  %5448 = vmatpush1.msra.mxu0 0.0
  %5449 = vmatprep.subr.mxu0 0.0
  %5450 = vmatpush1.msra.mxu0 0.0
  %5451 = vmatprep.subr.mxu0 0.0
  %5452 = vmatpush1.msra.mxu0 0.0
  %5453 = vmatprep.subr.mxu0 0.0
  %5454 = vmatpush1.msra.mxu0 0.0
  %5455 = vmatprep.mubr.f32.mxu0 0.0
  %5456 = vmatmul.mubr.f32.gmra.mrb[0].mxu0 %v5389
  %v5457 = vpop.f32.mrb[0].mxu0
  %v5458 = vadd.f32 0.0, %v5457
  %v5459 = vpop.f32.mrb[0].mxu0
  %5460 = vdwg.mxu0
  %5461 = vrot.lane.b32.xlu0 %v4187, 88
  %v5462 = vpop.permute.xlu0 %5461
  %v5463 = vsel %vm4197, %v5462, 0
  %5465 = vmatprep.subr.mxu0 0.0
  %5466 = vmatpush1.msra.mxu0 %v4279
  %5467 = vmatprep.subr.mxu0 0.0
  %5468 = vmatpush1.msra.mxu0 0.0
  %5469 = vmatprep.subr.mxu0 0.0
  %5470 = vmatpush1.msra.mxu0 0.0
  %5471 = vmatprep.subr.mxu0 0.0
  %5472 = vmatpush1.msra.mxu0 0.0
  %5473 = vmatprep.subr.mxu0 0.0
  %5474 = vmatpush1.msra.mxu0 0.0
  %5475 = vmatprep.subr.mxu0 0.0
  %5476 = vmatpush1.msra.mxu0 0.0
  %5477 = vmatprep.subr.mxu0 0.0
  %5478 = vmatpush1.msra.mxu0 0.0
  %5479 = vmatprep.subr.mxu0 0.0
  %5480 = vmatpush1.msra.mxu0 0.0
  %5481 = vmatprep.subr.mxu0 0.0
  %5482 = vmatpush1.msra.mxu0 0.0
  %5483 = vmatprep.subr.mxu0 0.0
  %5484 = vmatpush1.msra.mxu0 0.0
  %5485 = vmatprep.subr.mxu0 0.0
  %5486 = vmatpush1.msra.mxu0 0.0
  %5487 = vmatprep.subr.mxu0 0.0
  %5488 = vmatpush1.msra.mxu0 0.0
  %5489 = vmatprep.subr.mxu0 0.0
  %5490 = vmatpush1.msra.mxu0 0.0
  %5491 = vmatprep.subr.mxu0 0.0
  %5492 = vmatpush1.msra.mxu0 0.0
  %5493 = vmatprep.subr.mxu0 0.0
  %5494 = vmatpush1.msra.mxu0 0.0
  %5495 = vmatprep.subr.mxu0 0.0
  %5496 = vmatpush1.msra.mxu0 0.0
  %5497 = vmatprep.subr.mxu0 0.0
  %5498 = vmatpush1.msra.mxu0 0.0
  %5499 = vmatprep.subr.mxu0 0.0
  %5500 = vmatpush1.msra.mxu0 0.0
  %5501 = vmatprep.subr.mxu0 0.0
  %5502 = vmatpush1.msra.mxu0 0.0
  %5503 = vmatprep.subr.mxu0 0.0
  %5504 = vmatpush1.msra.mxu0 0.0
  %5505 = vmatprep.subr.mxu0 0.0
  %5506 = vmatpush1.msra.mxu0 0.0
  %5507 = vmatprep.subr.mxu0 0.0
  %5508 = vmatpush1.msra.mxu0 0.0
  %5509 = vmatprep.subr.mxu0 0.0
  %5510 = vmatpush1.msra.mxu0 0.0
  %5511 = vmatprep.subr.mxu0 0.0
  %5512 = vmatpush1.msra.mxu0 0.0
  %5513 = vmatprep.subr.mxu0 0.0
  %5514 = vmatpush1.msra.mxu0 0.0
  %5515 = vmatprep.subr.mxu0 0.0
  %5516 = vmatpush1.msra.mxu0 0.0
  %5517 = vmatprep.subr.mxu0 0.0
  %5518 = vmatpush1.msra.mxu0 0.0
  %5519 = vmatprep.subr.mxu0 0.0
  %5520 = vmatpush1.msra.mxu0 0.0
  %5521 = vmatprep.subr.mxu0 0.0
  %5522 = vmatpush1.msra.mxu0 0.0
  %5523 = vmatprep.subr.mxu0 0.0
  %5524 = vmatpush1.msra.mxu0 0.0
  %5525 = vmatprep.subr.mxu0 0.0
  %5526 = vmatpush1.msra.mxu0 0.0
  %5527 = vmatprep.subr.mxu0 0.0
  %5528 = vmatpush1.msra.mxu0 0.0
  %5529 = vmatprep.mubr.f32.mxu0 0.0
  %5530 = vmatmul.mubr.f32.gmra.mrb[0].mxu0 %v5463
  %v5531 = vpop.f32.mrb[0].mxu0
  %v5532 = vadd.f32 %v5458, %v5531
  %v5533 = vpop.f32.mrb[0].mxu0
  %5534 = vdwg.mxu0
  %5535 = vrot.lane.b32.xlu0 %v4192, 83
  %v5536 = vpop.permute.xlu0 %5535
  %v5537 = vsel %vm4197, %v5536, 0
  %5539 = vmatprep.subr.mxu0 0.0
  %5540 = vmatpush1.msra.mxu0 %v4203
  %5541 = vmatprep.subr.mxu0 0.0
  %5542 = vmatpush1.msra.mxu0 0.0
  %5543 = vmatprep.subr.mxu0 0.0
  %5544 = vmatpush1.msra.mxu0 0.0
  %5545 = vmatprep.subr.mxu0 0.0
  %5546 = vmatpush1.msra.mxu0 0.0
  %5547 = vmatprep.subr.mxu0 0.0
  %5548 = vmatpush1.msra.mxu0 0.0
  %5549 = vmatprep.subr.mxu0 0.0
  %5550 = vmatpush1.msra.mxu0 0.0
  %5551 = vmatprep.subr.mxu0 0.0
  %5552 = vmatpush1.msra.mxu0 0.0
  %5553 = vmatprep.subr.mxu0 0.0
  %5554 = vmatpush1.msra.mxu0 0.0
  %5555 = vmatprep.subr.mxu0 0.0
  %5556 = vmatpush1.msra.mxu0 0.0
  %5557 = vmatprep.subr.mxu0 0.0
  %5558 = vmatpush1.msra.mxu0 0.0
  %5559 = vmatprep.subr.mxu0 0.0
  %5560 = vmatpush1.msra.mxu0 0.0
  %5561 = vmatprep.subr.mxu0 0.0
  %5562 = vmatpush1.msra.mxu0 0.0
  %5563 = vmatprep.subr.mxu0 0.0
  %5564 = vmatpush1.msra.mxu0 0.0
  %5565 = vmatprep.subr.mxu0 0.0
  %5566 = vmatpush1.msra.mxu0 0.0
  %5567 = vmatprep.subr.mxu0 0.0
  %5568 = vmatpush1.msra.mxu0 0.0
  %5569 = vmatprep.subr.mxu0 0.0
  %5570 = vmatpush1.msra.mxu0 0.0
  %5571 = vmatprep.subr.mxu0 0.0
  %5572 = vmatpush1.msra.mxu0 0.0
  %5573 = vmatprep.subr.mxu0 0.0
  %5574 = vmatpush1.msra.mxu0 0.0
  %5575 = vmatprep.subr.mxu0 0.0
  %5576 = vmatpush1.msra.mxu0 0.0
  %5577 = vmatprep.subr.mxu0 0.0
  %5578 = vmatpush1.msra.mxu0 0.0
  %5579 = vmatprep.subr.mxu0 0.0
  %5580 = vmatpush1.msra.mxu0 0.0
  %5581 = vmatprep.subr.mxu0 0.0
  %5582 = vmatpush1.msra.mxu0 0.0
  %5583 = vmatprep.subr.mxu0 0.0
  %5584 = vmatpush1.msra.mxu0 0.0
  %5585 = vmatprep.subr.mxu0 0.0
  %5586 = vmatpush1.msra.mxu0 0.0
  %5587 = vmatprep.subr.mxu0 0.0
  %5588 = vmatpush1.msra.mxu0 0.0
  %5589 = vmatprep.subr.mxu0 0.0
  %5590 = vmatpush1.msra.mxu0 0.0
  %5591 = vmatprep.subr.mxu0 0.0
  %5592 = vmatpush1.msra.mxu0 0.0
  %5593 = vmatprep.subr.mxu0 0.0
  %5594 = vmatpush1.msra.mxu0 0.0
  %5595 = vmatprep.subr.mxu0 0.0
  %5596 = vmatpush1.msra.mxu0 0.0
  %5597 = vmatprep.subr.mxu0 0.0
  %5598 = vmatpush1.msra.mxu0 0.0
  %5599 = vmatprep.subr.mxu0 0.0
  %5600 = vmatpush1.msra.mxu0 0.0
  %5601 = vmatprep.subr.mxu0 0.0
  %5602 = vmatpush1.msra.mxu0 0.0
  %5603 = vmatprep.mubr.f32.mxu0 0.0
  %5604 = vmatmul.mubr.f32.gmra.mrb[0].mxu0 %v5537
  %v5605 = vpop.f32.mrb[0].mxu0
  %v5606 = vadd.f32 0.0, %v5605
  %v5607 = vpop.f32.mrb[0].mxu0
  %5608 = vdwg.mxu0
  %5609 = vrot.lane.b32.xlu0 %v4187, 83
  %v5610 = vpop.permute.xlu0 %5609
  %v5611 = vsel %vm4197, %v5610, 0
  %5613 = vmatprep.subr.mxu0 0.0
  %5614 = vmatpush1.msra.mxu0 %v4279
  %5615 = vmatprep.subr.mxu0 0.0
  %5616 = vmatpush1.msra.mxu0 0.0
  %5617 = vmatprep.subr.mxu0 0.0
  %5618 = vmatpush1.msra.mxu0 0.0
  %5619 = vmatprep.subr.mxu0 0.0
  %5620 = vmatpush1.msra.mxu0 0.0
  %5621 = vmatprep.subr.mxu0 0.0
  %5622 = vmatpush1.msra.mxu0 0.0
  %5623 = vmatprep.subr.mxu0 0.0
  %5624 = vmatpush1.msra.mxu0 0.0
  %5625 = vmatprep.subr.mxu0 0.0
  %5626 = vmatpush1.msra.mxu0 0.0
  %5627 = vmatprep.subr.mxu0 0.0
  %5628 = vmatpush1.msra.mxu0 0.0
  %5629 = vmatprep.subr.mxu0 0.0
  %5630 = vmatpush1.msra.mxu0 0.0
  %5631 = vmatprep.subr.mxu0 0.0
  %5632 = vmatpush1.msra.mxu0 0.0
  %5633 = vmatprep.subr.mxu0 0.0
  %5634 = vmatpush1.msra.mxu0 0.0
  %5635 = vmatprep.subr.mxu0 0.0
  %5636 = vmatpush1.msra.mxu0 0.0
  %5637 = vmatprep.subr.mxu0 0.0
  %5638 = vmatpush1.msra.mxu0 0.0
  %5639 = vmatprep.subr.mxu0 0.0
  %5640 = vmatpush1.msra.mxu0 0.0
  %5641 = vmatprep.subr.mxu0 0.0
  %5642 = vmatpush1.msra.mxu0 0.0
  %5643 = vmatprep.subr.mxu0 0.0
  %5644 = vmatpush1.msra.mxu0 0.0
  %5645 = vmatprep.subr.mxu0 0.0
  %5646 = vmatpush1.msra.mxu0 0.0
  %5647 = vmatprep.subr.mxu0 0.0
  %5648 = vmatpush1.msra.mxu0 0.0
  %5649 = vmatprep.subr.mxu0 0.0
  %5650 = vmatpush1.msra.mxu0 0.0
  %5651 = vmatprep.subr.mxu0 0.0
  %5652 = vmatpush1.msra.mxu0 0.0
  %5653 = vmatprep.subr.mxu0 0.0
  %5654 = vmatpush1.msra.mxu0 0.0
  %5655 = vmatprep.subr.mxu0 0.0
  %5656 = vmatpush1.msra.mxu0 0.0
  %5657 = vmatprep.subr.mxu0 0.0
  %5658 = vmatpush1.msra.mxu0 0.0
  %5659 = vmatprep.subr.mxu0 0.0
  %5660 = vmatpush1.msra.mxu0 0.0
  %5661 = vmatprep.subr.mxu0 0.0
  %5662 = vmatpush1.msra.mxu0 0.0
  %5663 = vmatprep.subr.mxu0 0.0
  %5664 = vmatpush1.msra.mxu0 0.0
  %5665 = vmatprep.subr.mxu0 0.0
  %5666 = vmatpush1.msra.mxu0 0.0
  %5667 = vmatprep.subr.mxu0 0.0
  %5668 = vmatpush1.msra.mxu0 0.0
  %5669 = vmatprep.subr.mxu0 0.0
  %5670 = vmatpush1.msra.mxu0 0.0
  %5671 = vmatprep.subr.mxu0 0.0
  %5672 = vmatpush1.msra.mxu0 0.0
  %5673 = vmatprep.subr.mxu0 0.0
  %5674 = vmatpush1.msra.mxu0 0.0
  %5675 = vmatprep.subr.mxu0 0.0
  %5676 = vmatpush1.msra.mxu0 0.0
  %5677 = vmatprep.mubr.f32.mxu0 0.0
  %5678 = vmatmul.mubr.f32.gmra.mrb[0].mxu0 %v5611
  %v5679 = vpop.f32.mrb[0].mxu0
  %v5680 = vadd.f32 %v5606, %v5679
  %v5681 = vpop.f32.mrb[0].mxu0
  %5682 = vdwg.mxu0
  %5683 = vrot.lane.b32.xlu0 %v4192, 78
  %v5684 = vpop.permute.xlu0 %5683
  %v5685 = vsel %vm4197, %v5684, 0
  %5687 = vmatprep.subr.mxu0 0.0
  %5688 = vmatpush1.msra.mxu0 %v4203
  %5689 = vmatprep.subr.mxu0 0.0
  %5690 = vmatpush1.msra.mxu0 0.0
  %5691 = vmatprep.subr.mxu0 0.0
  %5692 = vmatpush1.msra.mxu0 0.0
  %5693 = vmatprep.subr.mxu0 0.0
  %5694 = vmatpush1.msra.mxu0 0.0
  %5695 = vmatprep.subr.mxu0 0.0
  %5696 = vmatpush1.msra.mxu0 0.0
  %5697 = vmatprep.subr.mxu0 0.0
  %5698 = vmatpush1.msra.mxu0 0.0
  %5699 = vmatprep.subr.mxu0 0.0
  %5700 = vmatpush1.msra.mxu0 0.0
  %5701 = vmatprep.subr.mxu0 0.0
  %5702 = vmatpush1.msra.mxu0 0.0
  %5703 = vmatprep.subr.mxu0 0.0
  %5704 = vmatpush1.msra.mxu0 0.0
  %5705 = vmatprep.subr.mxu0 0.0
  %5706 = vmatpush1.msra.mxu0 0.0
  %5707 = vmatprep.subr.mxu0 0.0
  %5708 = vmatpush1.msra.mxu0 0.0
  %5709 = vmatprep.subr.mxu0 0.0
  %5710 = vmatpush1.msra.mxu0 0.0
  %5711 = vmatprep.subr.mxu0 0.0
  %5712 = vmatpush1.msra.mxu0 0.0
  %5713 = vmatprep.subr.mxu0 0.0
  %5714 = vmatpush1.msra.mxu0 0.0
  %5715 = vmatprep.subr.mxu0 0.0
  %5716 = vmatpush1.msra.mxu0 0.0
  %5717 = vmatprep.subr.mxu0 0.0
  %5718 = vmatpush1.msra.mxu0 0.0
  %5719 = vmatprep.subr.mxu0 0.0
  %5720 = vmatpush1.msra.mxu0 0.0
  %5721 = vmatprep.subr.mxu0 0.0
  %5722 = vmatpush1.msra.mxu0 0.0
  %5723 = vmatprep.subr.mxu0 0.0
  %5724 = vmatpush1.msra.mxu0 0.0
  %5725 = vmatprep.subr.mxu0 0.0
  %5726 = vmatpush1.msra.mxu0 0.0
  %5727 = vmatprep.subr.mxu0 0.0
  %5728 = vmatpush1.msra.mxu0 0.0
  %5729 = vmatprep.subr.mxu0 0.0
  %5730 = vmatpush1.msra.mxu0 0.0
  %5731 = vmatprep.subr.mxu0 0.0
  %5732 = vmatpush1.msra.mxu0 0.0
  %5733 = vmatprep.subr.mxu0 0.0
  %5734 = vmatpush1.msra.mxu0 0.0
  %5735 = vmatprep.subr.mxu0 0.0
  %5736 = vmatpush1.msra.mxu0 0.0
  %5737 = vmatprep.subr.mxu0 0.0
  %5738 = vmatpush1.msra.mxu0 0.0
  %5739 = vmatprep.subr.mxu0 0.0
  %5740 = vmatpush1.msra.mxu0 0.0
  %5741 = vmatprep.subr.mxu0 0.0
  %5742 = vmatpush1.msra.mxu0 0.0
  %5743 = vmatprep.subr.mxu0 0.0
  %5744 = vmatpush1.msra.mxu0 0.0
  %5745 = vmatprep.subr.mxu0 0.0
  %5746 = vmatpush1.msra.mxu0 0.0
  %5747 = vmatprep.subr.mxu0 0.0
  %5748 = vmatpush1.msra.mxu0 0.0
  %5749 = vmatprep.subr.mxu0 0.0
  %5750 = vmatpush1.msra.mxu0 0.0
  %5751 = vmatprep.mubr.f32.mxu0 0.0
  %5752 = vmatmul.mubr.f32.gmra.mrb[0].mxu0 %v5685
  %v5753 = vpop.f32.mrb[0].mxu0
  %v5754 = vadd.f32 0.0, %v5753
  %v5755 = vpop.f32.mrb[0].mxu0
  %5756 = vdwg.mxu0
  %5757 = vrot.lane.b32.xlu0 %v4187, 78
  %v5758 = vpop.permute.xlu0 %5757
  %v5759 = vsel %vm4197, %v5758, 0
  %5761 = vmatprep.subr.mxu0 0.0
  %5762 = vmatpush1.msra.mxu0 %v4279
  %5763 = vmatprep.subr.mxu0 0.0
  %5764 = vmatpush1.msra.mxu0 0.0
  %5765 = vmatprep.subr.mxu0 0.0
  %5766 = vmatpush1.msra.mxu0 0.0
  %5767 = vmatprep.subr.mxu0 0.0
  %5768 = vmatpush1.msra.mxu0 0.0
  %5769 = vmatprep.subr.mxu0 0.0
  %5770 = vmatpush1.msra.mxu0 0.0
  %5771 = vmatprep.subr.mxu0 0.0
  %5772 = vmatpush1.msra.mxu0 0.0
  %5773 = vmatprep.subr.mxu0 0.0
  %5774 = vmatpush1.msra.mxu0 0.0
  %5775 = vmatprep.subr.mxu0 0.0
  %5776 = vmatpush1.msra.mxu0 0.0
  %5777 = vmatprep.subr.mxu0 0.0
  %5778 = vmatpush1.msra.mxu0 0.0
  %5779 = vmatprep.subr.mxu0 0.0
  %5780 = vmatpush1.msra.mxu0 0.0
  %5781 = vmatprep.subr.mxu0 0.0
  %5782 = vmatpush1.msra.mxu0 0.0
  %5783 = vmatprep.subr.mxu0 0.0
  %5784 = vmatpush1.msra.mxu0 0.0
  %5785 = vmatprep.subr.mxu0 0.0
  %5786 = vmatpush1.msra.mxu0 0.0
  %5787 = vmatprep.subr.mxu0 0.0
  %5788 = vmatpush1.msra.mxu0 0.0
  %5789 = vmatprep.subr.mxu0 0.0
  %5790 = vmatpush1.msra.mxu0 0.0
  %5791 = vmatprep.subr.mxu0 0.0
  %5792 = vmatpush1.msra.mxu0 0.0
  %5793 = vmatprep.subr.mxu0 0.0
  %5794 = vmatpush1.msra.mxu0 0.0
  %5795 = vmatprep.subr.mxu0 0.0
  %5796 = vmatpush1.msra.mxu0 0.0
  %5797 = vmatprep.subr.mxu0 0.0
  %5798 = vmatpush1.msra.mxu0 0.0
  %5799 = vmatprep.subr.mxu0 0.0
  %5800 = vmatpush1.msra.mxu0 0.0
  %5801 = vmatprep.subr.mxu0 0.0
  %5802 = vmatpush1.msra.mxu0 0.0
  %5803 = vmatprep.subr.mxu0 0.0
  %5804 = vmatpush1.msra.mxu0 0.0
  %5805 = vmatprep.subr.mxu0 0.0
  %5806 = vmatpush1.msra.mxu0 0.0
  %5807 = vmatprep.subr.mxu0 0.0
  %5808 = vmatpush1.msra.mxu0 0.0
  %5809 = vmatprep.subr.mxu0 0.0
  %5810 = vmatpush1.msra.mxu0 0.0
  %5811 = vmatprep.subr.mxu0 0.0
  %5812 = vmatpush1.msra.mxu0 0.0
  %5813 = vmatprep.subr.mxu0 0.0
  %5814 = vmatpush1.msra.mxu0 0.0
  %5815 = vmatprep.subr.mxu0 0.0
  %5816 = vmatpush1.msra.mxu0 0.0
  %5817 = vmatprep.subr.mxu0 0.0
  %5818 = vmatpush1.msra.mxu0 0.0
  %5819 = vmatprep.subr.mxu0 0.0
  %5820 = vmatpush1.msra.mxu0 0.0
  %5821 = vmatprep.subr.mxu0 0.0
  %5822 = vmatpush1.msra.mxu0 0.0
  %5823 = vmatprep.subr.mxu0 0.0
  %5824 = vmatpush1.msra.mxu0 0.0
  %5825 = vmatprep.mubr.f32.mxu0 0.0
  %5826 = vmatmul.mubr.f32.gmra.mrb[0].mxu0 %v5759
  %v5827 = vpop.f32.mrb[0].mxu0
  %v5828 = vadd.f32 %v5754, %v5827
  %v5829 = vpop.f32.mrb[0].mxu0
  %5830 = vdwg.mxu0
  %5831 = vrot.lane.b32.xlu0 %v4192, 73
  %v5832 = vpop.permute.xlu0 %5831
  %v5833 = vsel %vm4197, %v5832, 0
  %5835 = vmatprep.subr.mxu0 0.0
  %5836 = vmatpush1.msra.mxu0 %v4203
  %5837 = vmatprep.subr.mxu0 0.0
  %5838 = vmatpush1.msra.mxu0 0.0
  %5839 = vmatprep.subr.mxu0 0.0
  %5840 = vmatpush1.msra.mxu0 0.0
  %5841 = vmatprep.subr.mxu0 0.0
  %5842 = vmatpush1.msra.mxu0 0.0
  %5843 = vmatprep.subr.mxu0 0.0
  %5844 = vmatpush1.msra.mxu0 0.0
  %5845 = vmatprep.subr.mxu0 0.0
  %5846 = vmatpush1.msra.mxu0 0.0
  %5847 = vmatprep.subr.mxu0 0.0
  %5848 = vmatpush1.msra.mxu0 0.0
  %5849 = vmatprep.subr.mxu0 0.0
  %5850 = vmatpush1.msra.mxu0 0.0
  %5851 = vmatprep.subr.mxu0 0.0
  %5852 = vmatpush1.msra.mxu0 0.0
  %5853 = vmatprep.subr.mxu0 0.0
  %5854 = vmatpush1.msra.mxu0 0.0
  %5855 = vmatprep.subr.mxu0 0.0
  %5856 = vmatpush1.msra.mxu0 0.0
  %5857 = vmatprep.subr.mxu0 0.0
  %5858 = vmatpush1.msra.mxu0 0.0
  %5859 = vmatprep.subr.mxu0 0.0
  %5860 = vmatpush1.msra.mxu0 0.0
  %5861 = vmatprep.subr.mxu0 0.0
  %5862 = vmatpush1.msra.mxu0 0.0
  %5863 = vmatprep.subr.mxu0 0.0
  %5864 = vmatpush1.msra.mxu0 0.0
  %5865 = vmatprep.subr.mxu0 0.0
  %5866 = vmatpush1.msra.mxu0 0.0
  %5867 = vmatprep.subr.mxu0 0.0
  %5868 = vmatpush1.msra.mxu0 0.0
  %5869 = vmatprep.subr.mxu0 0.0
  %5870 = vmatpush1.msra.mxu0 0.0
  %5871 = vmatprep.subr.mxu0 0.0
  %5872 = vmatpush1.msra.mxu0 0.0
  %5873 = vmatprep.subr.mxu0 0.0
  %5874 = vmatpush1.msra.mxu0 0.0
  %5875 = vmatprep.subr.mxu0 0.0
  %5876 = vmatpush1.msra.mxu0 0.0
  %5877 = vmatprep.subr.mxu0 0.0
  %5878 = vmatpush1.msra.mxu0 0.0
  %5879 = vmatprep.subr.mxu0 0.0
  %5880 = vmatpush1.msra.mxu0 0.0
  %5881 = vmatprep.subr.mxu0 0.0
  %5882 = vmatpush1.msra.mxu0 0.0
  %5883 = vmatprep.subr.mxu0 0.0
  %5884 = vmatpush1.msra.mxu0 0.0
  %5885 = vmatprep.subr.mxu0 0.0
  %5886 = vmatpush1.msra.mxu0 0.0
  %5887 = vmatprep.subr.mxu0 0.0
  %5888 = vmatpush1.msra.mxu0 0.0
  %5889 = vmatprep.subr.mxu0 0.0
  %5890 = vmatpush1.msra.mxu0 0.0
  %5891 = vmatprep.subr.mxu0 0.0
  %5892 = vmatpush1.msra.mxu0 0.0
  %5893 = vmatprep.subr.mxu0 0.0
  %5894 = vmatpush1.msra.mxu0 0.0
  %5895 = vmatprep.subr.mxu0 0.0
  %5896 = vmatpush1.msra.mxu0 0.0
  %5897 = vmatprep.subr.mxu0 0.0
  %5898 = vmatpush1.msra.mxu0 0.0
  %5899 = vmatprep.mubr.f32.mxu0 0.0
  %5900 = vmatmul.mubr.f32.gmra.mrb[0].mxu0 %v5833
  %v5901 = vpop.f32.mrb[0].mxu0
  %v5902 = vadd.f32 0.0, %v5901
  %v5903 = vpop.f32.mrb[0].mxu0
  %5904 = vdwg.mxu0
  %5905 = vrot.lane.b32.xlu0 %v4187, 73
  %v5906 = vpop.permute.xlu0 %5905
  %v5907 = vsel %vm4197, %v5906, 0
  %5909 = vmatprep.subr.mxu0 0.0
  %5910 = vmatpush1.msra.mxu0 %v4279
  %5911 = vmatprep.subr.mxu0 0.0
  %5912 = vmatpush1.msra.mxu0 0.0
  %5913 = vmatprep.subr.mxu0 0.0
  %5914 = vmatpush1.msra.mxu0 0.0
  %5915 = vmatprep.subr.mxu0 0.0
  %5916 = vmatpush1.msra.mxu0 0.0
  %5917 = vmatprep.subr.mxu0 0.0
  %5918 = vmatpush1.msra.mxu0 0.0
  %5919 = vmatprep.subr.mxu0 0.0
  %5920 = vmatpush1.msra.mxu0 0.0
  %5921 = vmatprep.subr.mxu0 0.0
  %5922 = vmatpush1.msra.mxu0 0.0
  %5923 = vmatprep.subr.mxu0 0.0
  %5924 = vmatpush1.msra.mxu0 0.0
  %5925 = vmatprep.subr.mxu0 0.0
  %5926 = vmatpush1.msra.mxu0 0.0
  %5927 = vmatprep.subr.mxu0 0.0
  %5928 = vmatpush1.msra.mxu0 0.0
  %5929 = vmatprep.subr.mxu0 0.0
  %5930 = vmatpush1.msra.mxu0 0.0
  %5931 = vmatprep.subr.mxu0 0.0
  %5932 = vmatpush1.msra.mxu0 0.0
  %5933 = vmatprep.subr.mxu0 0.0
  %5934 = vmatpush1.msra.mxu0 0.0
  %5935 = vmatprep.subr.mxu0 0.0
  %5936 = vmatpush1.msra.mxu0 0.0
  %5937 = vmatprep.subr.mxu0 0.0
  %5938 = vmatpush1.msra.mxu0 0.0
  %5939 = vmatprep.subr.mxu0 0.0
  %5940 = vmatpush1.msra.mxu0 0.0
  %5941 = vmatprep.subr.mxu0 0.0
  %5942 = vmatpush1.msra.mxu0 0.0
  %5943 = vmatprep.subr.mxu0 0.0
  %5944 = vmatpush1.msra.mxu0 0.0
  %5945 = vmatprep.subr.mxu0 0.0
  %5946 = vmatpush1.msra.mxu0 0.0
  %5947 = vmatprep.subr.mxu0 0.0
  %5948 = vmatpush1.msra.mxu0 0.0
  %5949 = vmatprep.subr.mxu0 0.0
  %5950 = vmatpush1.msra.mxu0 0.0
  %5951 = vmatprep.subr.mxu0 0.0
  %5952 = vmatpush1.msra.mxu0 0.0
  %5953 = vmatprep.subr.mxu0 0.0
  %5954 = vmatpush1.msra.mxu0 0.0
  %5955 = vmatprep.subr.mxu0 0.0
  %5956 = vmatpush1.msra.mxu0 0.0
  %5957 = vmatprep.subr.mxu0 0.0
  %5958 = vmatpush1.msra.mxu0 0.0
  %5959 = vmatprep.subr.mxu0 0.0
  %5960 = vmatpush1.msra.mxu0 0.0
  %5961 = vmatprep.subr.mxu0 0.0
  %5962 = vmatpush1.msra.mxu0 0.0
  %5963 = vmatprep.subr.mxu0 0.0
  %5964 = vmatpush1.msra.mxu0 0.0
  %5965 = vmatprep.subr.mxu0 0.0
  %5966 = vmatpush1.msra.mxu0 0.0
  %5967 = vmatprep.subr.mxu0 0.0
  %5968 = vmatpush1.msra.mxu0 0.0
  %5969 = vmatprep.subr.mxu0 0.0
  %5970 = vmatpush1.msra.mxu0 0.0
  %5971 = vmatprep.subr.mxu0 0.0
  %5972 = vmatpush1.msra.mxu0 0.0
  %5973 = vmatprep.mubr.f32.mxu0 0.0
  %5974 = vmatmul.mubr.f32.gmra.mrb[0].mxu0 %v5907
  %v5975 = vpop.f32.mrb[0].mxu0
  %v5976 = vadd.f32 %v5902, %v5975
  %v5977 = vpop.f32.mrb[0].mxu0
  %5978 = vdwg.mxu0
  %5979 = vrot.lane.b32.xlu0 %v4192, 68
  %v5980 = vpop.permute.xlu0 %5979
  %v5981 = vsel %vm4197, %v5980, 0
  %5983 = vmatprep.subr.mxu0 0.0
  %5984 = vmatpush1.msra.mxu0 %v4203
  %5985 = vmatprep.subr.mxu0 0.0
  %5986 = vmatpush1.msra.mxu0 0.0
  %5987 = vmatprep.subr.mxu0 0.0
  %5988 = vmatpush1.msra.mxu0 0.0
  %5989 = vmatprep.subr.mxu0 0.0
  %5990 = vmatpush1.msra.mxu0 0.0
  %5991 = vmatprep.subr.mxu0 0.0
  %5992 = vmatpush1.msra.mxu0 0.0
  %5993 = vmatprep.subr.mxu0 0.0
  %5994 = vmatpush1.msra.mxu0 0.0
  %5995 = vmatprep.subr.mxu0 0.0
  %5996 = vmatpush1.msra.mxu0 0.0
  %5997 = vmatprep.subr.mxu0 0.0
  %5998 = vmatpush1.msra.mxu0 0.0
  %5999 = vmatprep.subr.mxu0 0.0
  %6000 = vmatpush1.msra.mxu0 0.0
  %6001 = vmatprep.subr.mxu0 0.0
  %6002 = vmatpush1.msra.mxu0 0.0
  %6003 = vmatprep.subr.mxu0 0.0
  %6004 = vmatpush1.msra.mxu0 0.0
  %6005 = vmatprep.subr.mxu0 0.0
  %6006 = vmatpush1.msra.mxu0 0.0
  %6007 = vmatprep.subr.mxu0 0.0
  %6008 = vmatpush1.msra.mxu0 0.0
  %6009 = vmatprep.subr.mxu0 0.0
  %6010 = vmatpush1.msra.mxu0 0.0
  %6011 = vmatprep.subr.mxu0 0.0
  %6012 = vmatpush1.msra.mxu0 0.0
  %6013 = vmatprep.subr.mxu0 0.0
  %6014 = vmatpush1.msra.mxu0 0.0
  %6015 = vmatprep.subr.mxu0 0.0
  %6016 = vmatpush1.msra.mxu0 0.0
  %6017 = vmatprep.subr.mxu0 0.0
  %6018 = vmatpush1.msra.mxu0 0.0
  %6019 = vmatprep.subr.mxu0 0.0
  %6020 = vmatpush1.msra.mxu0 0.0
  %6021 = vmatprep.subr.mxu0 0.0
  %6022 = vmatpush1.msra.mxu0 0.0
  %6023 = vmatprep.subr.mxu0 0.0
  %6024 = vmatpush1.msra.mxu0 0.0
  %6025 = vmatprep.subr.mxu0 0.0
  %6026 = vmatpush1.msra.mxu0 0.0
  %6027 = vmatprep.subr.mxu0 0.0
  %6028 = vmatpush1.msra.mxu0 0.0
  %6029 = vmatprep.subr.mxu0 0.0
  %6030 = vmatpush1.msra.mxu0 0.0
  %6031 = vmatprep.subr.mxu0 0.0
  %6032 = vmatpush1.msra.mxu0 0.0
  %6033 = vmatprep.subr.mxu0 0.0
  %6034 = vmatpush1.msra.mxu0 0.0
  %6035 = vmatprep.subr.mxu0 0.0
  %6036 = vmatpush1.msra.mxu0 0.0
  %6037 = vmatprep.subr.mxu0 0.0
  %6038 = vmatpush1.msra.mxu0 0.0
  %6039 = vmatprep.subr.mxu0 0.0
  %6040 = vmatpush1.msra.mxu0 0.0
  %6041 = vmatprep.subr.mxu0 0.0
  %6042 = vmatpush1.msra.mxu0 0.0
  %6043 = vmatprep.subr.mxu0 0.0
  %6044 = vmatpush1.msra.mxu0 0.0
  %6045 = vmatprep.subr.mxu0 0.0
  %6046 = vmatpush1.msra.mxu0 0.0
  %6047 = vmatprep.mubr.f32.mxu0 0.0
  %6048 = vmatmul.mubr.f32.gmra.mrb[0].mxu0 %v5981
  %v6049 = vpop.f32.mrb[0].mxu0
  %v6050 = vadd.f32 0.0, %v6049
  %v6051 = vpop.f32.mrb[0].mxu0
  %6052 = vdwg.mxu0
  %6053 = vrot.lane.b32.xlu0 %v4187, 68
  %v6054 = vpop.permute.xlu0 %6053
  %v6055 = vsel %vm4197, %v6054, 0
  %6057 = vmatprep.subr.mxu0 0.0
  %6058 = vmatpush1.msra.mxu0 %v4279
  %6059 = vmatprep.subr.mxu0 0.0
  %6060 = vmatpush1.msra.mxu0 0.0
  %6061 = vmatprep.subr.mxu0 0.0
  %6062 = vmatpush1.msra.mxu0 0.0
  %6063 = vmatprep.subr.mxu0 0.0
  %6064 = vmatpush1.msra.mxu0 0.0
  %6065 = vmatprep.subr.mxu0 0.0
  %6066 = vmatpush1.msra.mxu0 0.0
  %6067 = vmatprep.subr.mxu0 0.0
  %6068 = vmatpush1.msra.mxu0 0.0
  %6069 = vmatprep.subr.mxu0 0.0
  %6070 = vmatpush1.msra.mxu0 0.0
  %6071 = vmatprep.subr.mxu0 0.0
  %6072 = vmatpush1.msra.mxu0 0.0
  %6073 = vmatprep.subr.mxu0 0.0
  %6074 = vmatpush1.msra.mxu0 0.0
  %6075 = vmatprep.subr.mxu0 0.0
  %6076 = vmatpush1.msra.mxu0 0.0
  %6077 = vmatprep.subr.mxu0 0.0
  %6078 = vmatpush1.msra.mxu0 0.0
  %6079 = vmatprep.subr.mxu0 0.0
  %6080 = vmatpush1.msra.mxu0 0.0
  %6081 = vmatprep.subr.mxu0 0.0
  %6082 = vmatpush1.msra.mxu0 0.0
  %6083 = vmatprep.subr.mxu0 0.0
  %6084 = vmatpush1.msra.mxu0 0.0
  %6085 = vmatprep.subr.mxu0 0.0
  %6086 = vmatpush1.msra.mxu0 0.0
  %6087 = vmatprep.subr.mxu0 0.0
  %6088 = vmatpush1.msra.mxu0 0.0
  %6089 = vmatprep.subr.mxu0 0.0
  %6090 = vmatpush1.msra.mxu0 0.0
  %6091 = vmatprep.subr.mxu0 0.0
  %6092 = vmatpush1.msra.mxu0 0.0
  %6093 = vmatprep.subr.mxu0 0.0
  %6094 = vmatpush1.msra.mxu0 0.0
  %6095 = vmatprep.subr.mxu0 0.0
  %6096 = vmatpush1.msra.mxu0 0.0
  %6097 = vmatprep.subr.mxu0 0.0
  %6098 = vmatpush1.msra.mxu0 0.0
  %6099 = vmatprep.subr.mxu0 0.0
  %6100 = vmatpush1.msra.mxu0 0.0
  %6101 = vmatprep.subr.mxu0 0.0
  %6102 = vmatpush1.msra.mxu0 0.0
  %6103 = vmatprep.subr.mxu0 0.0
  %6104 = vmatpush1.msra.mxu0 0.0
  %6105 = vmatprep.subr.mxu0 0.0
  %6106 = vmatpush1.msra.mxu0 0.0
  %6107 = vmatprep.subr.mxu0 0.0
  %6108 = vmatpush1.msra.mxu0 0.0
  %6109 = vmatprep.subr.mxu0 0.0
  %6110 = vmatpush1.msra.mxu0 0.0
  %6111 = vmatprep.subr.mxu0 0.0
  %6112 = vmatpush1.msra.mxu0 0.0
  %6113 = vmatprep.subr.mxu0 0.0
  %6114 = vmatpush1.msra.mxu0 0.0
  %6115 = vmatprep.subr.mxu0 0.0
  %6116 = vmatpush1.msra.mxu0 0.0
  %6117 = vmatprep.subr.mxu0 0.0
  %6118 = vmatpush1.msra.mxu0 0.0
  %6119 = vmatprep.subr.mxu0 0.0
  %6120 = vmatpush1.msra.mxu0 0.0
  %6121 = vmatprep.mubr.f32.mxu0 0.0
  %6122 = vmatmul.mubr.f32.gmra.mrb[0].mxu0 %v6055
  %v6123 = vpop.f32.mrb[0].mxu0
  %v6124 = vadd.f32 %v6050, %v6123
  %v6125 = vpop.f32.mrb[0].mxu0
  %6126 = vdwg.mxu0
  %6127 = vrot.lane.b32.xlu0 %v4192, 63
  %v6128 = vpop.permute.xlu0 %6127
  %v6129 = vsel %vm4197, %v6128, 0
  %6131 = vmatprep.subr.mxu0 0.0
  %6132 = vmatpush1.msra.mxu0 %v4203
  %6133 = vmatprep.subr.mxu0 0.0
  %6134 = vmatpush1.msra.mxu0 0.0
  %6135 = vmatprep.subr.mxu0 0.0
  %6136 = vmatpush1.msra.mxu0 0.0
  %6137 = vmatprep.subr.mxu0 0.0
  %6138 = vmatpush1.msra.mxu0 0.0
  %6139 = vmatprep.subr.mxu0 0.0
  %6140 = vmatpush1.msra.mxu0 0.0
  %6141 = vmatprep.subr.mxu0 0.0
  %6142 = vmatpush1.msra.mxu0 0.0
  %6143 = vmatprep.subr.mxu0 0.0
  %6144 = vmatpush1.msra.mxu0 0.0
  %6145 = vmatprep.subr.mxu0 0.0
  %6146 = vmatpush1.msra.mxu0 0.0
  %6147 = vmatprep.subr.mxu0 0.0
  %6148 = vmatpush1.msra.mxu0 0.0
  %6149 = vmatprep.subr.mxu0 0.0
  %6150 = vmatpush1.msra.mxu0 0.0
  %6151 = vmatprep.subr.mxu0 0.0
  %6152 = vmatpush1.msra.mxu0 0.0
  %6153 = vmatprep.subr.mxu0 0.0
  %6154 = vmatpush1.msra.mxu0 0.0
  %6155 = vmatprep.subr.mxu0 0.0
  %6156 = vmatpush1.msra.mxu0 0.0
  %6157 = vmatprep.subr.mxu0 0.0
  %6158 = vmatpush1.msra.mxu0 0.0
  %6159 = vmatprep.subr.mxu0 0.0
  %6160 = vmatpush1.msra.mxu0 0.0
  %6161 = vmatprep.subr.mxu0 0.0
  %6162 = vmatpush1.msra.mxu0 0.0
  %6163 = vmatprep.subr.mxu0 0.0
  %6164 = vmatpush1.msra.mxu0 0.0
  %6165 = vmatprep.subr.mxu0 0.0
  %6166 = vmatpush1.msra.mxu0 0.0
  %6167 = vmatprep.subr.mxu0 0.0
  %6168 = vmatpush1.msra.mxu0 0.0
  %6169 = vmatprep.subr.mxu0 0.0
  %6170 = vmatpush1.msra.mxu0 0.0
  %6171 = vmatprep.subr.mxu0 0.0
  %6172 = vmatpush1.msra.mxu0 0.0
  %6173 = vmatprep.subr.mxu0 0.0
  %6174 = vmatpush1.msra.mxu0 0.0
  %6175 = vmatprep.subr.mxu0 0.0
  %6176 = vmatpush1.msra.mxu0 0.0
  %6177 = vmatprep.subr.mxu0 0.0
  %6178 = vmatpush1.msra.mxu0 0.0
  %6179 = vmatprep.subr.mxu0 0.0
  %6180 = vmatpush1.msra.mxu0 0.0
  %6181 = vmatprep.subr.mxu0 0.0
  %6182 = vmatpush1.msra.mxu0 0.0
  %6183 = vmatprep.subr.mxu0 0.0
  %6184 = vmatpush1.msra.mxu0 0.0
  %6185 = vmatprep.subr.mxu0 0.0
  %6186 = vmatpush1.msra.mxu0 0.0
  %6187 = vmatprep.subr.mxu0 0.0
  %6188 = vmatpush1.msra.mxu0 0.0
  %6189 = vmatprep.subr.mxu0 0.0
  %6190 = vmatpush1.msra.mxu0 0.0
  %6191 = vmatprep.subr.mxu0 0.0
  %6192 = vmatpush1.msra.mxu0 0.0
  %6193 = vmatprep.subr.mxu0 0.0
  %6194 = vmatpush1.msra.mxu0 0.0
  %6195 = vmatprep.mubr.f32.mxu0 0.0
  %6196 = vmatmul.mubr.f32.gmra.mrb[0].mxu0 %v6129
  %v6197 = vpop.f32.mrb[0].mxu0
  %v6198 = vadd.f32 0.0, %v6197
  %v6199 = vpop.f32.mrb[0].mxu0
  %6200 = vdwg.mxu0
  %6201 = vrot.lane.b32.xlu0 %v4187, 63
  %v6202 = vpop.permute.xlu0 %6201
  %v6203 = vsel %vm4197, %v6202, 0
  %6205 = vmatprep.subr.mxu0 0.0
  %6206 = vmatpush1.msra.mxu0 %v4279
  %6207 = vmatprep.subr.mxu0 0.0
  %6208 = vmatpush1.msra.mxu0 0.0
  %6209 = vmatprep.subr.mxu0 0.0
  %6210 = vmatpush1.msra.mxu0 0.0
  %6211 = vmatprep.subr.mxu0 0.0
  %6212 = vmatpush1.msra.mxu0 0.0
  %6213 = vmatprep.subr.mxu0 0.0
  %6214 = vmatpush1.msra.mxu0 0.0
  %6215 = vmatprep.subr.mxu0 0.0
  %6216 = vmatpush1.msra.mxu0 0.0
  %6217 = vmatprep.subr.mxu0 0.0
  %6218 = vmatpush1.msra.mxu0 0.0
  %6219 = vmatprep.subr.mxu0 0.0
  %6220 = vmatpush1.msra.mxu0 0.0
  %6221 = vmatprep.subr.mxu0 0.0
  %6222 = vmatpush1.msra.mxu0 0.0
  %6223 = vmatprep.subr.mxu0 0.0
  %6224 = vmatpush1.msra.mxu0 0.0
  %6225 = vmatprep.subr.mxu0 0.0
  %6226 = vmatpush1.msra.mxu0 0.0
  %6227 = vmatprep.subr.mxu0 0.0
  %6228 = vmatpush1.msra.mxu0 0.0
  %6229 = vmatprep.subr.mxu0 0.0
  %6230 = vmatpush1.msra.mxu0 0.0
  %6231 = vmatprep.subr.mxu0 0.0
  %6232 = vmatpush1.msra.mxu0 0.0
  %6233 = vmatprep.subr.mxu0 0.0
  %6234 = vmatpush1.msra.mxu0 0.0
  %6235 = vmatprep.subr.mxu0 0.0
  %6236 = vmatpush1.msra.mxu0 0.0
  %6237 = vmatprep.subr.mxu0 0.0
  %6238 = vmatpush1.msra.mxu0 0.0
  %6239 = vmatprep.subr.mxu0 0.0
  %6240 = vmatpush1.msra.mxu0 0.0
  %6241 = vmatprep.subr.mxu0 0.0
  %6242 = vmatpush1.msra.mxu0 0.0
  %6243 = vmatprep.subr.mxu0 0.0
  %6244 = vmatpush1.msra.mxu0 0.0
  %6245 = vmatprep.subr.mxu0 0.0
  %6246 = vmatpush1.msra.mxu0 0.0
  %6247 = vmatprep.subr.mxu0 0.0
  %6248 = vmatpush1.msra.mxu0 0.0
  %6249 = vmatprep.subr.mxu0 0.0
  %6250 = vmatpush1.msra.mxu0 0.0
  %6251 = vmatprep.subr.mxu0 0.0
  %6252 = vmatpush1.msra.mxu0 0.0
  %6253 = vmatprep.subr.mxu0 0.0
  %6254 = vmatpush1.msra.mxu0 0.0
  %6255 = vmatprep.subr.mxu0 0.0
  %6256 = vmatpush1.msra.mxu0 0.0
  %6257 = vmatprep.subr.mxu0 0.0
  %6258 = vmatpush1.msra.mxu0 0.0
  %6259 = vmatprep.subr.mxu0 0.0
  %6260 = vmatpush1.msra.mxu0 0.0
  %6261 = vmatprep.subr.mxu0 0.0
  %6262 = vmatpush1.msra.mxu0 0.0
  %6263 = vmatprep.subr.mxu0 0.0
  %6264 = vmatpush1.msra.mxu0 0.0
  %6265 = vmatprep.subr.mxu0 0.0
  %6266 = vmatpush1.msra.mxu0 0.0
  %6267 = vmatprep.subr.mxu0 0.0
  %6268 = vmatpush1.msra.mxu0 0.0
  %6269 = vmatprep.mubr.f32.mxu0 0.0
  %6270 = vmatmul.mubr.f32.gmra.mrb[0].mxu0 %v6203
  %v6271 = vpop.f32.mrb[0].mxu0
  %v6272 = vadd.f32 %v6198, %v6271
  %v6273 = vpop.f32.mrb[0].mxu0
  %6274 = vdwg.mxu0
  %6275 = vrot.lane.b32.xlu0 %v4192, 58
  %v6276 = vpop.permute.xlu0 %6275
  %v6277 = vsel %vm4197, %v6276, 0
  %6279 = vmatprep.subr.mxu0 0.0
  %6280 = vmatpush1.msra.mxu0 %v4203
  %6281 = vmatprep.subr.mxu0 0.0
  %6282 = vmatpush1.msra.mxu0 0.0
  %6283 = vmatprep.subr.mxu0 0.0
  %6284 = vmatpush1.msra.mxu0 0.0
  %6285 = vmatprep.subr.mxu0 0.0
  %6286 = vmatpush1.msra.mxu0 0.0
  %6287 = vmatprep.subr.mxu0 0.0
  %6288 = vmatpush1.msra.mxu0 0.0
  %6289 = vmatprep.subr.mxu0 0.0
  %6290 = vmatpush1.msra.mxu0 0.0
  %6291 = vmatprep.subr.mxu0 0.0
  %6292 = vmatpush1.msra.mxu0 0.0
  %6293 = vmatprep.subr.mxu0 0.0
  %6294 = vmatpush1.msra.mxu0 0.0
  %6295 = vmatprep.subr.mxu0 0.0
  %6296 = vmatpush1.msra.mxu0 0.0
  %6297 = vmatprep.subr.mxu0 0.0
  %6298 = vmatpush1.msra.mxu0 0.0
  %6299 = vmatprep.subr.mxu0 0.0
  %6300 = vmatpush1.msra.mxu0 0.0
  %6301 = vmatprep.subr.mxu0 0.0
  %6302 = vmatpush1.msra.mxu0 0.0
  %6303 = vmatprep.subr.mxu0 0.0
  %6304 = vmatpush1.msra.mxu0 0.0
  %6305 = vmatprep.subr.mxu0 0.0
  %6306 = vmatpush1.msra.mxu0 0.0
  %6307 = vmatprep.subr.mxu0 0.0
  %6308 = vmatpush1.msra.mxu0 0.0
  %6309 = vmatprep.subr.mxu0 0.0
  %6310 = vmatpush1.msra.mxu0 0.0
  %6311 = vmatprep.subr.mxu0 0.0
  %6312 = vmatpush1.msra.mxu0 0.0
  %6313 = vmatprep.subr.mxu0 0.0
  %6314 = vmatpush1.msra.mxu0 0.0
  %6315 = vmatprep.subr.mxu0 0.0
  %6316 = vmatpush1.msra.mxu0 0.0
  %6317 = vmatprep.subr.mxu0 0.0
  %6318 = vmatpush1.msra.mxu0 0.0
  %6319 = vmatprep.subr.mxu0 0.0
  %6320 = vmatpush1.msra.mxu0 0.0
  %6321 = vmatprep.subr.mxu0 0.0
  %6322 = vmatpush1.msra.mxu0 0.0
  %6323 = vmatprep.subr.mxu0 0.0
  %6324 = vmatpush1.msra.mxu0 0.0
  %6325 = vmatprep.subr.mxu0 0.0
  %6326 = vmatpush1.msra.mxu0 0.0
  %6327 = vmatprep.subr.mxu0 0.0
  %6328 = vmatpush1.msra.mxu0 0.0
  %6329 = vmatprep.subr.mxu0 0.0
  %6330 = vmatpush1.msra.mxu0 0.0
  %6331 = vmatprep.subr.mxu0 0.0
  %6332 = vmatpush1.msra.mxu0 0.0
  %6333 = vmatprep.subr.mxu0 0.0
  %6334 = vmatpush1.msra.mxu0 0.0
  %6335 = vmatprep.subr.mxu0 0.0
  %6336 = vmatpush1.msra.mxu0 0.0
  %6337 = vmatprep.subr.mxu0 0.0
  %6338 = vmatpush1.msra.mxu0 0.0
  %6339 = vmatprep.subr.mxu0 0.0
  %6340 = vmatpush1.msra.mxu0 0.0
  %6341 = vmatprep.subr.mxu0 0.0
  %6342 = vmatpush1.msra.mxu0 0.0
  %6343 = vmatprep.mubr.f32.mxu0 0.0
  %6344 = vmatmul.mubr.f32.gmra.mrb[0].mxu0 %v6277
  %v6345 = vpop.f32.mrb[0].mxu0
  %v6346 = vadd.f32 0.0, %v6345
  %v6347 = vpop.f32.mrb[0].mxu0
  %6348 = vdwg.mxu0
  %6349 = vrot.lane.b32.xlu0 %v4187, 58
  %v6350 = vpop.permute.xlu0 %6349
  %v6351 = vsel %vm4197, %v6350, 0
  %6353 = vmatprep.subr.mxu0 0.0
  %6354 = vmatpush1.msra.mxu0 %v4279
  %6355 = vmatprep.subr.mxu0 0.0
  %6356 = vmatpush1.msra.mxu0 0.0
  %6357 = vmatprep.subr.mxu0 0.0
  %6358 = vmatpush1.msra.mxu0 0.0
  %6359 = vmatprep.subr.mxu0 0.0
  %6360 = vmatpush1.msra.mxu0 0.0
  %6361 = vmatprep.subr.mxu0 0.0
  %6362 = vmatpush1.msra.mxu0 0.0
  %6363 = vmatprep.subr.mxu0 0.0
  %6364 = vmatpush1.msra.mxu0 0.0
  %6365 = vmatprep.subr.mxu0 0.0
  %6366 = vmatpush1.msra.mxu0 0.0
  %6367 = vmatprep.subr.mxu0 0.0
  %6368 = vmatpush1.msra.mxu0 0.0
  %6369 = vmatprep.subr.mxu0 0.0
  %6370 = vmatpush1.msra.mxu0 0.0
  %6371 = vmatprep.subr.mxu0 0.0
  %6372 = vmatpush1.msra.mxu0 0.0
  %6373 = vmatprep.subr.mxu0 0.0
  %6374 = vmatpush1.msra.mxu0 0.0
  %6375 = vmatprep.subr.mxu0 0.0
  %6376 = vmatpush1.msra.mxu0 0.0
  %6377 = vmatprep.subr.mxu0 0.0
  %6378 = vmatpush1.msra.mxu0 0.0
  %6379 = vmatprep.subr.mxu0 0.0
  %6380 = vmatpush1.msra.mxu0 0.0
  %6381 = vmatprep.subr.mxu0 0.0
  %6382 = vmatpush1.msra.mxu0 0.0
  %6383 = vmatprep.subr.mxu0 0.0
  %6384 = vmatpush1.msra.mxu0 0.0
  %6385 = vmatprep.subr.mxu0 0.0
  %6386 = vmatpush1.msra.mxu0 0.0
  %6387 = vmatprep.subr.mxu0 0.0
  %6388 = vmatpush1.msra.mxu0 0.0
  %6389 = vmatprep.subr.mxu0 0.0
  %6390 = vmatpush1.msra.mxu0 0.0
  %6391 = vmatprep.subr.mxu0 0.0
  %6392 = vmatpush1.msra.mxu0 0.0
  %6393 = vmatprep.subr.mxu0 0.0
  %6394 = vmatpush1.msra.mxu0 0.0
  %6395 = vmatprep.subr.mxu0 0.0
  %6396 = vmatpush1.msra.mxu0 0.0
  %6397 = vmatprep.subr.mxu0 0.0
  %6398 = vmatpush1.msra.mxu0 0.0
  %6399 = vmatprep.subr.mxu0 0.0
  %6400 = vmatpush1.msra.mxu0 0.0
  %6401 = vmatprep.subr.mxu0 0.0
  %6402 = vmatpush1.msra.mxu0 0.0
  %6403 = vmatprep.subr.mxu0 0.0
  %6404 = vmatpush1.msra.mxu0 0.0
  %6405 = vmatprep.subr.mxu0 0.0
  %6406 = vmatpush1.msra.mxu0 0.0
  %6407 = vmatprep.subr.mxu0 0.0
  %6408 = vmatpush1.msra.mxu0 0.0
  %6409 = vmatprep.subr.mxu0 0.0
  %6410 = vmatpush1.msra.mxu0 0.0
  %6411 = vmatprep.subr.mxu0 0.0
  %6412 = vmatpush1.msra.mxu0 0.0
  %6413 = vmatprep.subr.mxu0 0.0
  %6414 = vmatpush1.msra.mxu0 0.0
  %6415 = vmatprep.subr.mxu0 0.0
  %6416 = vmatpush1.msra.mxu0 0.0
  %6417 = vmatprep.mubr.f32.mxu0 0.0
  %6418 = vmatmul.mubr.f32.gmra.mrb[0].mxu0 %v6351
  %v6419 = vpop.f32.mrb[0].mxu0
  %v6420 = vadd.f32 %v6346, %v6419
  %v6421 = vpop.f32.mrb[0].mxu0
  %6422 = vdwg.mxu0
  %6423 = vrot.lane.b32.xlu0 %v4192, 53
  %v6424 = vpop.permute.xlu0 %6423
  %v6425 = vsel %vm4197, %v6424, 0
  %6427 = vmatprep.subr.mxu0 0.0
  %6428 = vmatpush1.msra.mxu0 %v4203
  %6429 = vmatprep.subr.mxu0 0.0
  %6430 = vmatpush1.msra.mxu0 0.0
  %6431 = vmatprep.subr.mxu0 0.0
  %6432 = vmatpush1.msra.mxu0 0.0
  %6433 = vmatprep.subr.mxu0 0.0
  %6434 = vmatpush1.msra.mxu0 0.0
  %6435 = vmatprep.subr.mxu0 0.0
  %6436 = vmatpush1.msra.mxu0 0.0
  %6437 = vmatprep.subr.mxu0 0.0
  %6438 = vmatpush1.msra.mxu0 0.0
  %6439 = vmatprep.subr.mxu0 0.0
  %6440 = vmatpush1.msra.mxu0 0.0
  %6441 = vmatprep.subr.mxu0 0.0
  %6442 = vmatpush1.msra.mxu0 0.0
  %6443 = vmatprep.subr.mxu0 0.0
  %6444 = vmatpush1.msra.mxu0 0.0
  %6445 = vmatprep.subr.mxu0 0.0
  %6446 = vmatpush1.msra.mxu0 0.0
  %6447 = vmatprep.subr.mxu0 0.0
  %6448 = vmatpush1.msra.mxu0 0.0
  %6449 = vmatprep.subr.mxu0 0.0
  %6450 = vmatpush1.msra.mxu0 0.0
  %6451 = vmatprep.subr.mxu0 0.0
  %6452 = vmatpush1.msra.mxu0 0.0
  %6453 = vmatprep.subr.mxu0 0.0
  %6454 = vmatpush1.msra.mxu0 0.0
  %6455 = vmatprep.subr.mxu0 0.0
  %6456 = vmatpush1.msra.mxu0 0.0
  %6457 = vmatprep.subr.mxu0 0.0
  %6458 = vmatpush1.msra.mxu0 0.0
  %6459 = vmatprep.subr.mxu0 0.0
  %6460 = vmatpush1.msra.mxu0 0.0
  %6461 = vmatprep.subr.mxu0 0.0
  %6462 = vmatpush1.msra.mxu0 0.0
  %6463 = vmatprep.subr.mxu0 0.0
  %6464 = vmatpush1.msra.mxu0 0.0
  %6465 = vmatprep.subr.mxu0 0.0
  %6466 = vmatpush1.msra.mxu0 0.0
  %6467 = vmatprep.subr.mxu0 0.0
  %6468 = vmatpush1.msra.mxu0 0.0
  %6469 = vmatprep.subr.mxu0 0.0
  %6470 = vmatpush1.msra.mxu0 0.0
  %6471 = vmatprep.subr.mxu0 0.0
  %6472 = vmatpush1.msra.mxu0 0.0
  %6473 = vmatprep.subr.mxu0 0.0
  %6474 = vmatpush1.msra.mxu0 0.0
  %6475 = vmatprep.subr.mxu0 0.0
  %6476 = vmatpush1.msra.mxu0 0.0
  %6477 = vmatprep.subr.mxu0 0.0
  %6478 = vmatpush1.msra.mxu0 0.0
  %6479 = vmatprep.subr.mxu0 0.0
  %6480 = vmatpush1.msra.mxu0 0.0
  %6481 = vmatprep.subr.mxu0 0.0
  %6482 = vmatpush1.msra.mxu0 0.0
  %6483 = vmatprep.subr.mxu0 0.0
  %6484 = vmatpush1.msra.mxu0 0.0
  %6485 = vmatprep.subr.mxu0 0.0
  %6486 = vmatpush1.msra.mxu0 0.0
  %6487 = vmatprep.subr.mxu0 0.0
  %6488 = vmatpush1.msra.mxu0 0.0
  %6489 = vmatprep.subr.mxu0 0.0
  %6490 = vmatpush1.msra.mxu0 0.0
  %6491 = vmatprep.mubr.f32.mxu0 0.0
  %6492 = vmatmul.mubr.f32.gmra.mrb[0].mxu0 %v6425
  %v6493 = vpop.f32.mrb[0].mxu0
  %v6494 = vadd.f32 0.0, %v6493
  %v6495 = vpop.f32.mrb[0].mxu0
  %6496 = vdwg.mxu0
  %6497 = vrot.lane.b32.xlu0 %v4187, 53
  %v6498 = vpop.permute.xlu0 %6497
  %v6499 = vsel %vm4197, %v6498, 0
  %6501 = vmatprep.subr.mxu0 0.0
  %6502 = vmatpush1.msra.mxu0 %v4279
  %6503 = vmatprep.subr.mxu0 0.0
  %6504 = vmatpush1.msra.mxu0 0.0
  %6505 = vmatprep.subr.mxu0 0.0
  %6506 = vmatpush1.msra.mxu0 0.0
  %6507 = vmatprep.subr.mxu0 0.0
  %6508 = vmatpush1.msra.mxu0 0.0
  %6509 = vmatprep.subr.mxu0 0.0
  %6510 = vmatpush1.msra.mxu0 0.0
  %6511 = vmatprep.subr.mxu0 0.0
  %6512 = vmatpush1.msra.mxu0 0.0
  %6513 = vmatprep.subr.mxu0 0.0
  %6514 = vmatpush1.msra.mxu0 0.0
  %6515 = vmatprep.subr.mxu0 0.0
  %6516 = vmatpush1.msra.mxu0 0.0
  %6517 = vmatprep.subr.mxu0 0.0
  %6518 = vmatpush1.msra.mxu0 0.0
  %6519 = vmatprep.subr.mxu0 0.0
  %6520 = vmatpush1.msra.mxu0 0.0
  %6521 = vmatprep.subr.mxu0 0.0
  %6522 = vmatpush1.msra.mxu0 0.0
  %6523 = vmatprep.subr.mxu0 0.0
  %6524 = vmatpush1.msra.mxu0 0.0
  %6525 = vmatprep.subr.mxu0 0.0
  %6526 = vmatpush1.msra.mxu0 0.0
  %6527 = vmatprep.subr.mxu0 0.0
  %6528 = vmatpush1.msra.mxu0 0.0
  %6529 = vmatprep.subr.mxu0 0.0
  %6530 = vmatpush1.msra.mxu0 0.0
  %6531 = vmatprep.subr.mxu0 0.0
  %6532 = vmatpush1.msra.mxu0 0.0
  %6533 = vmatprep.subr.mxu0 0.0
  %6534 = vmatpush1.msra.mxu0 0.0
  %6535 = vmatprep.subr.mxu0 0.0
  %6536 = vmatpush1.msra.mxu0 0.0
  %6537 = vmatprep.subr.mxu0 0.0
  %6538 = vmatpush1.msra.mxu0 0.0
  %6539 = vmatprep.subr.mxu0 0.0
  %6540 = vmatpush1.msra.mxu0 0.0
  %6541 = vmatprep.subr.mxu0 0.0
  %6542 = vmatpush1.msra.mxu0 0.0
  %6543 = vmatprep.subr.mxu0 0.0
  %6544 = vmatpush1.msra.mxu0 0.0
  %6545 = vmatprep.subr.mxu0 0.0
  %6546 = vmatpush1.msra.mxu0 0.0
  %6547 = vmatprep.subr.mxu0 0.0
  %6548 = vmatpush1.msra.mxu0 0.0
  %6549 = vmatprep.subr.mxu0 0.0
  %6550 = vmatpush1.msra.mxu0 0.0
  %6551 = vmatprep.subr.mxu0 0.0
  %6552 = vmatpush1.msra.mxu0 0.0
  %6553 = vmatprep.subr.mxu0 0.0
  %6554 = vmatpush1.msra.mxu0 0.0
  %6555 = vmatprep.subr.mxu0 0.0
  %6556 = vmatpush1.msra.mxu0 0.0
  %6557 = vmatprep.subr.mxu0 0.0
  %6558 = vmatpush1.msra.mxu0 0.0
  %6559 = vmatprep.subr.mxu0 0.0
  %6560 = vmatpush1.msra.mxu0 0.0
  %6561 = vmatprep.subr.mxu0 0.0
  %6562 = vmatpush1.msra.mxu0 0.0
  %6563 = vmatprep.subr.mxu0 0.0
  %6564 = vmatpush1.msra.mxu0 0.0
  %6565 = vmatprep.mubr.f32.mxu0 0.0
  %6566 = vmatmul.mubr.f32.gmra.mrb[0].mxu0 %v6499
  %v6567 = vpop.f32.mrb[0].mxu0
  %v6568 = vadd.f32 %v6494, %v6567
  %v6569 = vpop.f32.mrb[0].mxu0
  %6570 = vdwg.mxu0
  %6572 = vrot.lane.b32.xlu0 %v4496, 8
  %v6573 = vpop.permute.xlu0 %6572
  %6576 = vrot.lane.b32.xlu0 %v4644, 16
  %v6577 = vpop.permute.xlu0 %6576
  %6580 = vrot.lane.b32.xlu0 %v4792, 24
  %v6581 = vpop.permute.xlu0 %6580
  %6584 = vrot.lane.b32.xlu0 %v4940, 32
  %v6585 = vpop.permute.xlu0 %6584
  %6588 = vrot.lane.b32.xlu0 %v5088, 40
  %v6589 = vpop.permute.xlu0 %6588
  %6592 = vrot.lane.b32.xlu0 %v5236, 48
  %v6593 = vpop.permute.xlu0 %6592
  %6596 = vrot.lane.b32.xlu0 %v5384, 56
  %v6597 = vpop.permute.xlu0 %6596
  %6600 = vrot.lane.b32.xlu0 %v5532, 64
  %v6601 = vpop.permute.xlu0 %6600
  %6604 = vrot.lane.b32.xlu0 %v5680, 72
  %v6605 = vpop.permute.xlu0 %6604
  %6608 = vrot.lane.b32.xlu0 %v5828, 80
  %v6609 = vpop.permute.xlu0 %6608
  %6612 = vrot.lane.b32.xlu0 %v5976, 88
  %v6613 = vpop.permute.xlu0 %6612
  %6616 = vrot.lane.b32.xlu0 %v6124, 96
  %v6617 = vpop.permute.xlu0 %6616
  %6620 = vrot.lane.b32.xlu0 %v6272, 104
  %v6621 = vpop.permute.xlu0 %6620
  %6624 = vrot.lane.b32.xlu0 %v6420, 112
  %v6625 = vpop.permute.xlu0 %6624
  %6628 = vrot.lane.b32.xlu0 %v6568, 120
  %v6629 = vpop.permute.xlu0 %6628
  %vm6631 = vcmask 64512
  %v6632 = vsel %vm6631, %v4348, %v6573
  %v6633 = vsel %vm1542, %v6632, %v6577
  %vm6634 = vcmask 195584
  %v6635 = vsel %vm6634, %v6633, %v6581
  %v6636 = vsel %vm52, %v6635, %v6585
  %vm6637 = vcmask 326656
  %v6638 = vsel %vm6637, %v6636, %v6589
  %v6639 = vsel %vm1547, %v6638, %v6593
  %vm6640 = vcmask 457728
  %v6641 = vsel %vm6640, %v6639, %v6597
  %v6642 = vsel %vm1550, %v6641, %v6601
  %vm6643 = vcmask 588800
  %v6644 = vsel %vm6643, %v6642, %v6605
  %v6645 = vsel %vm1553, %v6644, %v6609
  %vm6646 = vcmask 719872
  %v6647 = vsel %vm6646, %v6645, %v6613
  %v6648 = vsel %vm1556, %v6647, %v6617
  %vm6649 = vcmask 850944
  %v6650 = vsel %vm6649, %v6648, %v6621
  %v6651 = vsel %vm1559, %v6650, %v6625
  %vm6652 = vcmask 982016
  %v6653 = vsel %vm6652, %v6651, %v6629
  %6654 = vst [vmem:[%s14] sm:$0xff] %v6653
  // Predicated region
  $region50: #{model_forward.1} parent=0 // pred_check
    _
  $region51: #{model_forward.1} parent=0 // pred_check_branch
    %6656 = sbr.rel (0) target = $region53
  $region52: #{model_forward.1} parent=0 // pred_region
    _
  $region53: #{model_forward.1} parent=0 // pred_fallthru
    _
  // Predicated region
  $region54: #{model_forward.1} parent=0 // pred_check
    _
  $region55: #{model_forward.1} parent=0 // pred_check_branch
    %6658 = sbr.rel (0) target = $region57
  $region56: #{model_forward.1} parent=0 // pred_region
    _
  $region57: #{model_forward.1} parent=0 // pred_fallthru
    _
  // Predicated region
  $region58: #{model_forward.1} parent=0 // pred_check
    _
  $region59: #{model_forward.1} parent=0 // pred_check_branch
    %6660 = sbr.rel (0) target = $region61
  $region60: #{model_forward.1} parent=0 // pred_region
    _
  $region61: #{model_forward.1} parent=0 // pred_fallthru
    _
  // Predicated region
  $region62: #{model_forward.1} parent=0 // pred_check
    _
  $region63: #{model_forward.1} parent=0 // pred_check_branch
    %6662 = sbr.rel (0) target = $region65
  $region64: #{model_forward.1} parent=0 // pred_region
    _
  $region65: #{model_forward.1} parent=0 // pred_fallthru
    _
  // Predicated region
  $region66: #{model_forward.1} parent=0 // pred_check
    _
  $region67: #{model_forward.1} parent=0 // pred_check_branch
    %6664 = sbr.rel (0) target = $region69
  $region68: #{model_forward.1} parent=0 // pred_region
    _
  $region69: #{model_forward.1} parent=0 // pred_fallthru
    _
  // Predicated region
  $region70: #{model_forward.1} parent=0 // pred_check
    _
  $region71: #{model_forward.1} parent=0 // pred_check_branch
    %6666 = sbr.rel (0) target = $region73
  $region72: #{model_forward.1} parent=0 // pred_region
    _
  $region73: #{model_forward.1} parent=0 // pred_fallthru
    _

</llo_original>
